<compile_context>
chip_gen: v7x
topology: tpu7x:2x2x1
jax: 0.10.0
libtpu: 0.0.40
codegen_flags: <defaults>
</compile_context>

<pallas_src>
import math
from functools import partial

import numpy as np
import jax
import jax.numpy as jnp
from jax.experimental import pallas as pl
from jax.experimental.pallas import tpu as pltpu


# ---------------------------------------------------------------------------
# Fused kernel: one grid step == Bb conversations.
# ---------------------------------------------------------------------------
def _interaction_kernel(x_ref, ev_ref, cske_ref, cska_ref, adj_ref, tinfo_ref,
                        W_ref, Wc_ref, Wq_ref, Wkv_ref, Wwe_ref, Wwa_ref,
                        rows_ref, bq_ref, bkv_ref,
                        out_ref, probs_ref,
                        *, t_idx, alpha, scale):
    Bb, N, Dp = x_ref.shape          # N is a multiple of 8 -> reshapes below are free
    BN = Bb * N

    x3 = x_ref[...]                                          # (Bb, N, Dp) f32
    x2 = x3.reshape(BN, Dp)
    x2b = x2.astype(jnp.bfloat16)

    bc2   = rows_ref[0:1, :]          # 2 * csk_weight bias (after+before fold)
    a1    = rows_ref[1:2, :]
    a2    = rows_ref[2:3, :]
    wqecs = rows_ref[3:4, :]          # colsum(Wq_emo): target-emotion fold
    bwe   = rows_ref[4:5, :]
    bwa   = rows_ref[5:6, :]

    # ------------------- GAT over the flattened utterance axis -------------
    h2 = jnp.dot(x2b, W_ref[...], preferred_element_type=jnp.float32)        # (BN, Dp)
    ev2b = ev_ref[...].reshape(BN, Dp).astype(jnp.bfloat16)
    evp2 = jnp.dot(ev2b, Wc_ref[...], preferred_element_type=jnp.float32) + bc2
    hj2 = h2 + evp2

    # e[i, j] = leakyrelu(h[i]@a1 + hj[j]@a2)  -- VPU mul + lane reduce (no MXU)
    s1 = jnp.sum(h2 * a1, axis=-1, keepdims=True)                            # (BN, 1)
    s2 = jnp.sum(hj2 * a2, axis=-1)[None, :]                                 # (1, BN)
    e_pre = s1 + s2                                                          # (BN, BN)
    e_lr = jnp.where(e_pre >= 0, e_pre, alpha * e_pre)                       # LeakyReLU

    # adj: block-diagonal per-conversation mask values; cross-conversation
    # entries are -1 (sentinel) -> -1e30 so exp()==0 even when a whole
    # within-conversation row is masked (exact per-conversation softmax).
    adj = adj_ref[0]                                                         # (BN, BN)
    e_m = jnp.where(adj < 0.0, jnp.float32(-1e30),
                    jnp.where(adj == 0.0, jnp.float32(-1e9), e_lr * adj))
    m = jnp.max(e_m, axis=-1, keepdims=True)
    p = jnp.exp(e_m - m)
    attn = p / jnp.sum(p, axis=-1, keepdims=True)                            # (BN, BN)
    h_prime2 = jnp.dot(attn, h2, preferred_element_type=jnp.float32)         # (BN, Dp)
    h_prime3 = h_prime2.reshape(Bb, N, Dp)

    # ------------------- merged emo / act CSK_Measure ----------------------
    hpb = h_prime2.astype(jnp.bfloat16)
    kv = jnp.dot(hpb, Wkv_ref[...],
                 preferred_element_type=jnp.float32) + bkv_ref[...]          # (BN, 4Dp)
    kv3 = kv.reshape(Bb, N, 4 * Dp)
    k_e = kv3[..., 0 * Dp:1 * Dp]
    v_e = kv3[..., 1 * Dp:2 * Dp]
    k_a = kv3[..., 2 * Dp:3 * Dp]
    v_a = kv3[..., 3 * Dp:4 * Dp]

    # queries: project ALL rows (weight streaming dominates the pass anyway),
    # slice the static target row t -> (Bb, 1, Dp) with no relayout.
    qq = jnp.dot(x2b, Wq_ref[...],
                 preferred_element_type=jnp.float32) + bq_ref[...]           # (BN, 2Dp)
    qq3 = qq.reshape(Bb, N, 2 * Dp)

    tinfo = tinfo_ref[...]                                                   # (Bb, N, 3)
    tic = tinfo[:, :, 0:1]            # target-row intra mask (column)
    tec = tinfo[:, :, 1:2]            # target-row inter mask (column)
    te = tinfo[:, 0:1, 2:3]           # target emotion scalar (Bb, 1, 1)

    q_e = qq3[:, t_idx:t_idx + 1, 0:Dp] + te * wqecs                         # (Bb, 1, Dp)
    q_a = qq3[:, t_idx:t_idx + 1, Dp:2 * Dp]                                 # (Bb, 1, Dp)

    # csk "weight" projections: two dedicated (no wasted halves) matmuls.
    cwe = jnp.dot(cske_ref[...].reshape(2 * BN, Dp).astype(jnp.bfloat16),
                  Wwe_ref[...], preferred_element_type=jnp.float32) + bwe    # (2BN, Dp)
    cwa = jnp.dot(cska_ref[...].reshape(2 * BN, Dp).astype(jnp.bfloat16),
                  Wwa_ref[...], preferred_element_type=jnp.float32) + bwa
    cwe3 = cwe.reshape(Bb, 2 * N, Dp)
    cwa3 = cwa.reshape(Bb, 2 * N, Dp)
    w_ie = cwe3[:, :N, :]
    w_ee = cwe3[:, N:, :]
    w_ia = cwa3[:, :N, :]
    w_ea = cwa3[:, N:, :]

    mask_col = tic + tec

    def csk_block(q, k, v, w_i, w_x):
        # scale*(q.k_i)*tic + scale*(q.k_x)*tec == scale * q.(k_i*tic + k_x*tec)
        k_comb = (k + w_i) * tic + (k + w_x) * tec                           # (Bb, N, Dp)
        s = jnp.sum(k_comb * q, axis=-1, keepdims=True) * scale              # (Bb, N, 1)
        s = jnp.where(mask_col == 0.0, jnp.float32(-1e9), s)
        mm = jnp.max(s, axis=1, keepdims=True)
        pp = jnp.exp(s - mm)
        probs = pp / jnp.sum(pp, axis=1, keepdims=True)                      # (Bb, N, 1)
        p_i = probs * tic
        p_x = probs * tec
        # target_enhanced + csk_enhanced
        conn = (p_i + p_x) * q + p_i * (v + w_i) + p_x * (v + w_x)           # (Bb, N, Dp)
        return conn, probs

    emo_conn, emo_probs = csk_block(q_e, k_e, v_e, w_ie, w_ee)
    act_conn, act_probs = csk_block(q_a, k_a, v_a, w_ia, w_ea)

    # ------------------------------ combine --------------------------------
    out_ref[...] = jnp.maximum(h_prime3 + x3 + emo_conn + act_conn, 0.0)
    # Both probability vectors packed into one output stream (wrapper
    # transposes the tiny (N,2) slab to (1,N) per block).
    probs_ref[...] = jnp.concatenate([emo_probs, act_probs], axis=-1)        # (Bb, N, 2)


# ---------------------------------------------------------------------------
# Wrapper: pad D -> Dp (multiple of 128), batch Bb conversations per grid step,
# build the block-diagonal adjacency and launch the fused kernel.
# ---------------------------------------------------------------------------
@partial(jax.jit, static_argnames=("conv_len", "alpha"))
def interaction_forward(packed, inp, emo_vector,
                        event_csk_before, event_csk_after,
                        emo_intra_csk, emo_inter_csk,
                        int_intra_csk, int_inter_csk,
                        intra_mask, inter_mask, *, conv_len, alpha):
    B, N, D = inp.shape
    Dp = packed['W'].shape[0]
    scale = 1.0 / math.sqrt(D)          # self.d == out_features == D (true dim)
    t = conv_len - 1                    # static (conv_len.item() - 1)

    # Conversations per step: flattened M = Bb*N targets 256 rows (full MXU on
    # v6e/v7x, >=128 for v5e).  With large B, nsteps >= 2 so ("parallel",)
    # still shards across v7x's two TensorCores.
    Bb = int(min(B, max(1, 256 // N)))
    nsteps = -(-B // Bb)
    Bp = nsteps * Bb
    padB = Bp - B                       # zero-padded convs are exactly neutral

    def pad_feat(x):                    # (B, n, D) -> (Bp, n, Dp)
        return jnp.pad(x, ((0, padB), (0, 0), (0, Dp - D)))

    inp_p = pad_feat(inp)
    ev_p = pad_feat(event_csk_after + event_csk_before)   # csk_weight fold
    cske = pad_feat(jnp.concatenate([emo_intra_csk, emo_inter_csk], axis=1))
    cska = pad_feat(jnp.concatenate([int_intra_csk, int_inter_csk], axis=1))

    # Block-diagonal adjacency per step; cross-conversation entries = -1.
    adj = jnp.pad(intra_mask + inter_mask, ((0, padB), (0, 0), (0, 0)))
    adj_r = adj.reshape(nsteps, Bb, N, N)
    eyeb = jnp.eye(Bb, dtype=adj.dtype)
    adj_bd = jnp.einsum('sbij,bc->sbicj', adj_r, eyeb).reshape(
        nsteps, Bb * N, Bb * N)
    blk = jnp.kron(eyeb, jnp.ones((N, N), adj.dtype))      # (Bb*N, Bb*N)
    adj_bd = jnp.where(blk[None] > 0, adj_bd, -1.0)

    # tic / tec / target-emotion consolidated into one tiny input.
    tinfo = jnp.stack([intra_mask[:, t, :], inter_mask[:, t, :],
                       jnp.broadcast_to(emo_vector[:, t:t + 1], (B, N))],
                      axis=-1)                              # (B, N, 3)
    tinfo = jnp.pad(tinfo, ((0, padB), (0, 0), (0, 0)))

    perstep = lambda shape: pl.BlockSpec(shape, lambda s: (s, 0, 0))
    const = lambda shape: pl.BlockSpec(shape, lambda s: (0, 0))

    out_p, probs = pl.pallas_call(
        partial(_interaction_kernel, t_idx=t, alpha=alpha, scale=scale),
        out_shape=(jax.ShapeDtypeStruct((Bp, N, Dp), jnp.float32),
                   jax.ShapeDtypeStruct((Bp, N, 2), jnp.float32)),
        grid=(nsteps,),
        in_specs=[
            perstep((Bb, N, Dp)),          # inp (padded)
            perstep((Bb, N, Dp)),          # event csk after+before (padded)
            perstep((Bb, 2 * N, Dp)),      # [emo_intra; emo_inter] csk
            perstep((Bb, 2 * N, Dp)),      # [int_intra; int_inter] csk
            perstep((1, Bb * N, Bb * N)),  # block-diag adjacency
            perstep((Bb, N, 3)),           # [tic | tec | target emotion]
            const((Dp, Dp)),               # W (GAT)                   bf16
            const((Dp, Dp)),               # csk_weight W              bf16
            const((Dp, 2 * Dp)),           # [Wq_emo | Wq_act]         bf16
            const((Dp, 4 * Dp)),           # [Wk_e|Wv_e|Wk_a|Wv_a]     bf16
            const((Dp, Dp)),               # Ww_emo                    bf16
            const((Dp, Dp)),               # Ww_act                    bf16
            const((6, Dp)),                # packed (1,Dp) row params  f32
            const((1, 2 * Dp)),            # [bq_emo | bq_act]
            const((1, 4 * Dp)),            # [bk_e|bv_e|bk_a|bv_a]
        ],
        out_specs=(perstep((Bb, N, Dp)), perstep((Bb, N, 2))),
        compiler_params=pltpu.CompilerParams(
            dimension_semantics=("parallel",),
            vmem_limit_bytes=40 * 1024 * 1024),   # ~2x est. peak at Bb=32, < v7x 64MiB
    )(inp_p, ev_p, cske, cska, adj_bd, tinfo,
      packed['W'], packed['Wc'], packed['Wq'], packed['Wkv'],
      packed['Wwe'], packed['Wwa'], packed['rows'], packed['bq'], packed['bkv'])

    out = out_p[:B, :, :D]
    emo_probs = jnp.swapaxes(probs[:B, :, 0:1], 1, 2)       # (B, 1, N)
    act_probs = jnp.swapaxes(probs[:B, :, 1:2], 1, 2)       # (B, 1, N)
    return out, emo_probs, act_probs


# ---------------------------------------------------------------------------
# One-time packing: zero-pad D -> Dp (multiple of 128), concatenate emo/act
# projections for wide MXU passes, cast matmul weights to bf16 (exact padding).
# ---------------------------------------------------------------------------
def pack_params(params, D):
    Dp = (D + 127) // 128 * 128

    def padw(w):
        return jnp.pad(w, ((0, Dp - w.shape[0]), (0, Dp - w.shape[1])))

    def padr(r):
        return jnp.pad(r, ((0, 0), (0, Dp - r.shape[1])))

    bf = lambda w: w.astype(jnp.bfloat16)

    emo, act = params['emo'], params['act']
    rows = jnp.concatenate([
        padr(2.0 * params['bc']),                            # 0: 2*csk_weight bias
        padr(params['a1'].reshape(1, -1)),                   # 1: a[:D] row
        padr(params['a2'].reshape(1, -1)),                   # 2: a[D:] row
        padr(jnp.sum(emo['Wq'], axis=0, keepdims=True)),     # 3: colsum(Wq_emo)
        padr(emo['bw']),                                     # 4: emo Ww bias
        padr(act['bw']),                                     # 5: act Ww bias
    ], axis=0)                                               # (6, Dp) f32

    return dict(
        W=bf(padw(params['W'])),
        Wc=bf(padw(params['Wc_t'])),
        Wq=bf(jnp.concatenate([padw(emo['Wq']), padw(act['Wq'])], axis=1)),
        Wkv=bf(jnp.concatenate([padw(emo['Wk']), padw(emo['Wv']),
                                padw(act['Wk']), padw(act['Wv'])], axis=1)),
        Wwe=bf(padw(emo['Ww'])),
        Wwa=bf(padw(act['Ww'])),
        rows=rows,
        bq=jnp.concatenate([padr(emo['bq']), padr(act['bq'])], axis=1),
        bkv=jnp.concatenate([padr(emo['bk']), padr(emo['bv']),
                             padr(act['bk']), padr(act['bv'])], axis=1),
    )


# ---------------------------------------------------------------------------
# Deterministic synthetic parameters (shapes match the PyTorch __init__;
# weights stored pre-transposed as (in_features, out_features)).
# ---------------------------------------------------------------------------
def init_params(key, D):
    keys = jax.random.split(key, 12)

    def xavier(k, shape, gain):
        bound = gain * math.sqrt(6.0 / (shape[0] + shape[1]))
        return jax.random.uniform(k, shape, jnp.float32, -bound, bound)

    def linear(k, din, dout):
        k1, k2 = jax.random.split(k)
        bound = 1.0 / math.sqrt(din)
        Wt = jax.random.uniform(k1, (din, dout), jnp.float32, -bound, bound)
        b = jax.random.uniform(k2, (1, dout), jnp.float32, -bound, bound)
        return Wt, b

    W = xavier(keys[0], (D, D), 1.414)        # self.W
    a = xavier(keys[1], (2 * D, 1), 1.414)    # self.a
    Wc_t, bc = linear(keys[2], D, D)          # csk_weight

    def csk_params(kq, kk, kv, kw):
        Wq, bq = linear(kq, D, D)
        Wk, bk = linear(kk, D, D)
        Wv, bv = linear(kv, D, D)
        Ww, bw = linear(kw, D, D)
        return dict(Wq=Wq, bq=bq, Wk=Wk, bk=bk, Wv=Wv, bv=bv, Ww=Ww, bw=bw)

    emo = csk_params(keys[3], keys[4], keys[5], keys[6])
    act = csk_params(keys[7], keys[8], keys[9], keys[10])
    return dict(W=W, a1=a[:D], a2=a[D:], Wc_t=Wc_t, bc=bc, emo=emo, act=act)


# ---------------------------------------------------------------------------
# Pure-JAX reference mirroring the PyTorch forward (f32, eval-mode dropout).
# Used only for the in-script correctness check.
# ---------------------------------------------------------------------------
def _reference_forward(params, inp, conv_len, emo_vector,
                       event_csk_before, event_csk_after,
                       emo_intra_csk, emo_inter_csk,
                       int_intra_csk, int_inter_csk,
                       intra_mask, inter_mask, alpha):
    hp = jax.lax.Precision.HIGHEST
    B, N, D = inp.shape
    t = conv_len - 1

    h = jnp.matmul(inp, params['W'], precision=hp)
    ca = jnp.matmul(event_csk_after, params['Wc_t'], precision=hp) + params['bc']
    cb = jnp.matmul(event_csk_before, params['Wc_t'], precision=hp) + params['bc']
    hj = h + ca + cb
    s1 = jnp.matmul(h, params['a1'], precision=hp)                  # (B,N,1)
    s2 = jnp.matmul(hj, params['a2'], precision=hp)                 # (B,N,1)
    e_pre = s1 + jnp.swapaxes(s2, 1, 2)
    e_lr = jnp.where(e_pre >= 0, e_pre, alpha * e_pre)
    e = e_lr * intra_mask + e_lr * inter_mask
    adj = intra_mask + inter_mask
    attn = jax.nn.softmax(jnp.where(adj == 0, -1e9, e), axis=-1)
    h_prime = jnp.matmul(attn, h, precision=hp)

    tv = inp[:, t:t + 1, :]
    te = emo_vector[:, t].reshape(B, 1, 1)
    tim = intra_mask[:, t:t + 1, :]
    tem = inter_mask[:, t:t + 1, :]

    def csk(p, q_in, icsk, ecsk):
        q = jnp.matmul(q_in, p['Wq'], precision=hp) + p['bq']
        w_i = jnp.matmul(icsk, p['Ww'], precision=hp) + p['bw']
        w_x = jnp.matmul(ecsk, p['Ww'], precision=hp) + p['bw']
        k = jnp.matmul(h_prime, p['Wk'], precision=hp) + p['bk']
        v = jnp.matmul(h_prime, p['Wv'], precision=hp) + p['bv']
        k_i, v_i = k + w_i, v + w_i
        k_x, v_x = k + w_x, v + w_x
        s_i = jnp.matmul(q, jnp.swapaxes(k_i, 1, 2), precision=hp) / math.sqrt(D) * tim
        s_x = jnp.matmul(q, jnp.swapaxes(k_x, 1, 2), precision=hp) / math.sqrt(D) * tem
        mask = tim + tem
        probs = jax.nn.softmax(jnp.where(mask == 0, -1e9, s_i + s_x), axis=-1)
        t_enh = jnp.swapaxes(probs * tim, 1, 2) * q + jnp.swapaxes(probs * tem, 1, 2) * q
        c_enh = jnp.swapaxes(probs * tim, 1, 2) * v_i + jnp.swapaxes(probs * tem, 1, 2) * v_x
        return t_enh + c_enh, probs

    te_full = jnp.broadcast_to(te, (B, 1, D))
    emo_conn, emo_p = csk(params['emo'], tv + te_full, emo_intra_csk, emo_inter_csk)
    act_conn, act_p = csk(params['act'], tv, int_intra_csk, int_inter_csk)
    out = jax.nn.relu(h_prime + inp + emo_conn + act_conn)
    return out, emo_p, act_p


if __name__ == "__main__":
    # in_features == out_features == 300 is forced by the module (target_emotion
    # is repeated to 300 and h_prime is fed back through Linear(in_features,.)).
    B, N, D = 2, 8, 300
    conv_len = 5
    alpha = 0.2

    key = jax.random.PRNGKey(0)
    ks = jax.random.split(key, 10)

    inp = jax.random.normal(ks[0], (B, N, D), jnp.float32)
    emo_vector = jax.random.normal(ks[1], (B, N), jnp.float32)
    event_csk_before = jax.random.normal(ks[2], (B, N, D), jnp.float32)
    event_csk_after = jax.random.normal(ks[3], (B, N, D), jnp.float32)
    emo_intra_csk = jax.random.normal(ks[4], (B, N, D), jnp.float32)
    emo_inter_csk = jax.random.normal(ks[5], (B, N, D), jnp.float32)
    int_intra_csk = jax.random.normal(ks[6], (B, N, D), jnp.float32)
    int_inter_csk = jax.random.normal(ks[7], (B, N, D), jnp.float32)

    tri_low = jnp.tril(jnp.ones((N, N), jnp.float32))
    tri_up = jnp.triu(jnp.ones((N, N), jnp.float32), 1)
    intra_mask = jnp.broadcast_to(tri_low, (B, N, N))
    inter_mask = jnp.broadcast_to(tri_up, (B, N, N))

    params = init_params(ks[8], D)
    packed = pack_params(params, D)

    out, emo_probs, act_probs = interaction_forward(
        packed, inp, emo_vector, event_csk_before, event_csk_after,
        emo_intra_csk, emo_inter_csk, int_intra_csk, int_inter_csk,
        intra_mask, inter_mask, conv_len=conv_len, alpha=alpha)
    jax.block_until_ready((out, emo_probs, act_probs))

    assert out.shape == (B, N, D)
    assert emo_probs.shape == (B, 1, N)
    assert act_probs.shape == (B, 1, N)

    # Correctness check vs a pure-JAX mirror of the PyTorch forward.
    # Tolerance unchanged from the f32 version: bf16 weight rounding contributes
    # ~O(1e-2) absolute error at worst on O(1) outputs, well inside 3e-2+3e-2*|x|.
    ref_out, ref_ep, ref_ap = _reference_forward(
        params, inp, conv_len, emo_vector, event_csk_before, event_csk_after,
        emo_intra_csk, emo_inter_csk, int_intra_csk, int_inter_csk,
        intra_mask, inter_mask, alpha)
    np.testing.assert_allclose(np.asarray(out), np.asarray(ref_out),
                               rtol=3e-2, atol=3e-2)
    np.testing.assert_allclose(np.asarray(emo_probs), np.asarray(ref_ep),
                               rtol=3e-2, atol=3e-2)
    np.testing.assert_allclose(np.asarray(act_probs), np.asarray(ref_ap),
                               rtol=3e-2, atol=3e-2)

    print("KERNEL_OK")
</pallas_src>

<mosaic_0001>
module attributes {stable_mosaic.version = 11 : i64} {
  func.func @_interaction_kernel(%arg0: i32, %arg1: memref<2x8x384xf32, #tpu.memory_space<vmem>>, %arg2: memref<2x8x384xf32, #tpu.memory_space<vmem>>, %arg3: memref<2x16x384xf32, #tpu.memory_space<vmem>>, %arg4: memref<2x16x384xf32, #tpu.memory_space<vmem>>, %arg5: memref<1x16x16xf32, #tpu.memory_space<vmem>>, %arg6: memref<2x8x3xf32, #tpu.memory_space<vmem>>, %arg7: memref<384x384xbf16, #tpu.memory_space<vmem>>, %arg8: memref<384x384xbf16, #tpu.memory_space<vmem>>, %arg9: memref<384x768xbf16, #tpu.memory_space<vmem>>, %arg10: memref<384x1536xbf16, #tpu.memory_space<vmem>>, %arg11: memref<384x384xbf16, #tpu.memory_space<vmem>>, %arg12: memref<384x384xbf16, #tpu.memory_space<vmem>>, %arg13: memref<6x384xf32, #tpu.memory_space<vmem>>, %arg14: memref<1x768xf32, #tpu.memory_space<vmem>>, %arg15: memref<1x1536xf32, #tpu.memory_space<vmem>>, %arg16: memref<2x8x384xf32, #tpu.memory_space<vmem>>, %arg17: memref<2x8x2xf32, #tpu.memory_space<vmem>>) attributes {dimension_semantics = [#tpu.dimension_semantics<parallel>], iteration_bounds = array<i64: 1>, scalar_prefetch = 0 : i64, scratch_operands = 0 : i64, tpu.core_type = #tpu.core_type<tc>, window_params = [{transform_indices = @transform_0, window_bounds = array<i64: 2, 8, 384>}, {transform_indices = @transform_1, window_bounds = array<i64: 2, 8, 384>}, {transform_indices = @transform_2, window_bounds = array<i64: 2, 16, 384>}, {transform_indices = @transform_3, window_bounds = array<i64: 2, 16, 384>}, {transform_indices = @transform_4, window_bounds = array<i64: 1, 16, 16>}, {transform_indices = @transform_5, window_bounds = array<i64: 2, 8, 3>}, {pipeline_mode = #tpu.pipeline_mode<synchronous>, transform_indices = @transform_6, window_bounds = array<i64: 384, 384>}, {pipeline_mode = #tpu.pipeline_mode<synchronous>, transform_indices = @transform_7, window_bounds = array<i64: 384, 384>}, {pipeline_mode = #tpu.pipeline_mode<synchronous>, transform_indices = @transform_8, window_bounds = array<i64: 384, 768>}, {pipeline_mode = #tpu.pipeline_mode<synchronous>, transform_indices = @transform_9, window_bounds = array<i64: 384, 1536>}, {pipeline_mode = #tpu.pipeline_mode<synchronous>, transform_indices = @transform_10, window_bounds = array<i64: 384, 384>}, {pipeline_mode = #tpu.pipeline_mode<synchronous>, transform_indices = @transform_11, window_bounds = array<i64: 384, 384>}, {pipeline_mode = #tpu.pipeline_mode<synchronous>, transform_indices = @transform_12, window_bounds = array<i64: 6, 384>}, {pipeline_mode = #tpu.pipeline_mode<synchronous>, transform_indices = @transform_13, window_bounds = array<i64: 1, 768>}, {pipeline_mode = #tpu.pipeline_mode<synchronous>, transform_indices = @transform_14, window_bounds = array<i64: 1, 1536>}, {transform_indices = @transform_15, window_bounds = array<i64: 2, 8, 384>}, {transform_indices = @transform_16, window_bounds = array<i64: 2, 8, 2>}]} {
    %c0 = arith.constant 0 : index
    %c0_0 = arith.constant 0 : index
    %c0_1 = arith.constant 0 : index
    %0 = vector.load %arg1[%c0, %c0_0, %c0_1] : memref<2x8x384xf32, #tpu.memory_space<vmem>>, vector<2x8x384xf32>
    %1 = vector.shape_cast %0 : vector<2x8x384xf32> to vector<16x384xf32>
    %2 = arith.truncf %1 : vector<16x384xf32> to vector<16x384xbf16>
    %c0_2 = arith.constant 0 : index
    %c0_3 = arith.constant 0 : index
    %3 = vector.load %arg13[%c0_2, %c0_3] : memref<6x384xf32, #tpu.memory_space<vmem>>, vector<1x384xf32>
    %c1 = arith.constant 1 : index
    %c0_4 = arith.constant 0 : index
    %4 = vector.load %arg13[%c1, %c0_4] : memref<6x384xf32, #tpu.memory_space<vmem>>, vector<1x384xf32>
    %c2 = arith.constant 2 : index
    %c0_5 = arith.constant 0 : index
    %5 = vector.load %arg13[%c2, %c0_5] : memref<6x384xf32, #tpu.memory_space<vmem>>, vector<1x384xf32>
    %c3 = arith.constant 3 : index
    %c0_6 = arith.constant 0 : index
    %6 = vector.load %arg13[%c3, %c0_6] : memref<6x384xf32, #tpu.memory_space<vmem>>, vector<1x384xf32>
    %c4 = arith.constant 4 : index
    %c0_7 = arith.constant 0 : index
    %7 = vector.load %arg13[%c4, %c0_7] : memref<6x384xf32, #tpu.memory_space<vmem>>, vector<1x384xf32>
    %c5 = arith.constant 5 : index
    %c0_8 = arith.constant 0 : index
    %8 = vector.load %arg13[%c5, %c0_8] : memref<6x384xf32, #tpu.memory_space<vmem>>, vector<1x384xf32>
    %c0_9 = arith.constant 0 : index
    %c0_10 = arith.constant 0 : index
    %9 = vector.load %arg7[%c0_9, %c0_10] : memref<384x384xbf16, #tpu.memory_space<vmem>>, vector<384x384xbf16>
    %cst = arith.constant dense<0.000000e+00> : vector<16x384xf32>
    %10 = tpu.matmul %2, %9, %cst {dimension_numbers = #tpu.dot_dimension_numbers<[1], [0], [0], [1], [0, 0, 1, 1], [], []>} : vector<16x384xbf16>, vector<384x384xbf16>, vector<16x384xf32> -> vector<16x384xf32>
    %c0_11 = arith.constant 0 : index
    %c0_12 = arith.constant 0 : index
    %c0_13 = arith.constant 0 : index
    %11 = vector.load %arg2[%c0_11, %c0_12, %c0_13] : memref<2x8x384xf32, #tpu.memory_space<vmem>>, vector<2x8x384xf32>
    %12 = vector.shape_cast %11 : vector<2x8x384xf32> to vector<16x384xf32>
    %13 = arith.truncf %12 : vector<16x384xf32> to vector<16x384xbf16>
    %c0_14 = arith.constant 0 : index
    %c0_15 = arith.constant 0 : index
    %14 = vector.load %arg8[%c0_14, %c0_15] : memref<384x384xbf16, #tpu.memory_space<vmem>>, vector<384x384xbf16>
    %cst_16 = arith.constant dense<0.000000e+00> : vector<16x384xf32>
    %15 = tpu.matmul %13, %14, %cst_16 {dimension_numbers = #tpu.dot_dimension_numbers<[1], [0], [0], [1], [0, 0, 1, 1], [], []>} : vector<16x384xbf16>, vector<384x384xbf16>, vector<16x384xf32> -> vector<16x384xf32>
    %16 = vector.broadcast %3 : vector<1x384xf32> to vector<16x384xf32>
    %17 = arith.addf %15, %16 : vector<16x384xf32>
    %18 = arith.addf %10, %17 : vector<16x384xf32>
    %19 = vector.broadcast %4 : vector<1x384xf32> to vector<16x384xf32>
    %20 = arith.mulf %10, %19 : vector<16x384xf32>
    %cst_17 = arith.constant dense<0.000000e+00> : vector<16xf32>
    %21 = vector.multi_reduction <add>, %20, %cst_17 [1] : vector<16x384xf32> to vector<16xf32>
    %22 = vector.shape_cast %21 : vector<16xf32> to vector<16x1xf32>
    %23 = vector.broadcast %5 : vector<1x384xf32> to vector<16x384xf32>
    %24 = arith.mulf %18, %23 : vector<16x384xf32>
    %cst_18 = arith.constant dense<0.000000e+00> : vector<16xf32>
    %25 = vector.multi_reduction <add>, %24, %cst_18 [1] : vector<16x384xf32> to vector<16xf32>
    %26 = vector.shape_cast %25 : vector<16xf32> to vector<1x16xf32>
    %27 = vector.broadcast %22 : vector<16x1xf32> to vector<16x16xf32>
    %28 = vector.broadcast %26 : vector<1x16xf32> to vector<16x16xf32>
    %29 = arith.addf %27, %28 : vector<16x16xf32>
    %cst_19 = arith.constant 0.000000e+00 : f32
    %30 = vector.broadcast %cst_19 : f32 to vector<16x16xf32>
    %31 = arith.cmpf oge, %29, %30 : vector<16x16xf32>
    %cst_20 = arith.constant 2.000000e-01 : f32
    %32 = vector.broadcast %cst_20 : f32 to vector<16x16xf32>
    %33 = arith.mulf %32, %29 : vector<16x16xf32>
    %34 = arith.select %31, %29, %33 : vector<16x16xi1>, vector<16x16xf32>
    %c0_21 = arith.constant 0 : index
    %c0_22 = arith.constant 0 : index
    %c0_23 = arith.constant 0 : index
    %35 = vector.load %arg5[%c0_21, %c0_22, %c0_23] : memref<1x16x16xf32, #tpu.memory_space<vmem>>, vector<1x16x16xf32>
    %36 = vector.shape_cast %35 : vector<1x16x16xf32> to vector<16x16xf32>
    %cst_24 = arith.constant 0.000000e+00 : f32
    %37 = vector.broadcast %cst_24 : f32 to vector<16x16xf32>
    %38 = arith.cmpf olt, %36, %37 : vector<16x16xf32>
    %cst_25 = arith.constant 0.000000e+00 : f32
    %39 = vector.broadcast %cst_25 : f32 to vector<16x16xf32>
    %40 = arith.cmpf oeq, %36, %39 : vector<16x16xf32>
    %41 = arith.mulf %34, %36 : vector<16x16xf32>
    %cst_26 = arith.constant -1.000000e+09 : f32
    %42 = vector.broadcast %cst_26 : f32 to vector<16x16xf32>
    %43 = arith.select %40, %42, %41 : vector<16x16xi1>, vector<16x16xf32>
    %cst_27 = arith.constant -1.000000e+30 : f32
    %44 = vector.broadcast %cst_27 : f32 to vector<16x16xf32>
    %45 = arith.select %38, %44, %43 : vector<16x16xi1>, vector<16x16xf32>
    %cst_28 = arith.constant dense<0xFF800000> : vector<16xf32>
    %46 = vector.multi_reduction <maximumf>, %45, %cst_28 [1] : vector<16x16xf32> to vector<16xf32>
    %47 = vector.shape_cast %46 : vector<16xf32> to vector<16x1xf32>
    %48 = vector.broadcast %47 : vector<16x1xf32> to vector<16x16xf32>
    %49 = arith.subf %45, %48 : vector<16x16xf32>
    %50 = math.exp %49 : vector<16x16xf32>
    %cst_29 = arith.constant dense<0.000000e+00> : vector<16xf32>
    %51 = vector.multi_reduction <add>, %50, %cst_29 [1] : vector<16x16xf32> to vector<16xf32>
    %52 = vector.shape_cast %51 : vector<16xf32> to vector<16x1xf32>
    %53 = vector.broadcast %52 : vector<16x1xf32> to vector<16x16xf32>
    %54 = arith.divf %50, %53 : vector<16x16xf32>
    %cst_30 = arith.constant dense<0.000000e+00> : vector<16x384xf32>
    %55 = tpu.matmul %54, %10, %cst_30 {dimension_numbers = #tpu.dot_dimension_numbers<[1], [0], [0], [1], [0, 0, 1, 1], [], []>} : vector<16x16xf32>, vector<16x384xf32>, vector<16x384xf32> -> vector<16x384xf32>
    %56 = vector.shape_cast %55 : vector<16x384xf32> to vector<2x8x384xf32>
    %57 = arith.truncf %55 : vector<16x384xf32> to vector<16x384xbf16>
    %c0_31 = arith.constant 0 : index
    %c0_32 = arith.constant 0 : index
    %58 = vector.load %arg10[%c0_31, %c0_32] : memref<384x1536xbf16, #tpu.memory_space<vmem>>, vector<384x1536xbf16>
    %cst_33 = arith.constant dense<0.000000e+00> : vector<16x1536xf32>
    %59 = tpu.matmul %57, %58, %cst_33 {dimension_numbers = #tpu.dot_dimension_numbers<[1], [0], [0], [1], [0, 0, 1, 1], [], []>} : vector<16x384xbf16>, vector<384x1536xbf16>, vector<16x1536xf32> -> vector<16x1536xf32>
    %c0_34 = arith.constant 0 : index
    %c0_35 = arith.constant 0 : index
    %60 = vector.load %arg15[%c0_34, %c0_35] : memref<1x1536xf32, #tpu.memory_space<vmem>>, vector<1x1536xf32>
    %61 = vector.broadcast %60 : vector<1x1536xf32> to vector<16x1536xf32>
    %62 = arith.addf %59, %61 : vector<16x1536xf32>
    %63 = vector.shape_cast %62 : vector<16x1536xf32> to vector<2x8x1536xf32>
    %64 = vector.extract_strided_slice %63 {offsets = [0, 0, 0], sizes = [2, 8, 384], strides = [1, 1, 1]} : vector<2x8x1536xf32> to vector<2x8x384xf32>
    %65 = vector.extract_strided_slice %63 {offsets = [0, 0, 384], sizes = [2, 8, 384], strides = [1, 1, 1]} : vector<2x8x1536xf32> to vector<2x8x384xf32>
    %66 = vector.extract_strided_slice %63 {offsets = [0, 0, 768], sizes = [2, 8, 384], strides = [1, 1, 1]} : vector<2x8x1536xf32> to vector<2x8x384xf32>
    %67 = vector.extract_strided_slice %63 {offsets = [0, 0, 1152], sizes = [2, 8, 384], strides = [1, 1, 1]} : vector<2x8x1536xf32> to vector<2x8x384xf32>
    %c0_36 = arith.constant 0 : index
    %c0_37 = arith.constant 0 : index
    %68 = vector.load %arg9[%c0_36, %c0_37] : memref<384x768xbf16, #tpu.memory_space<vmem>>, vector<384x768xbf16>
    %cst_38 = arith.constant dense<0.000000e+00> : vector<16x768xf32>
    %69 = tpu.matmul %2, %68, %cst_38 {dimension_numbers = #tpu.dot_dimension_numbers<[1], [0], [0], [1], [0, 0, 1, 1], [], []>} : vector<16x384xbf16>, vector<384x768xbf16>, vector<16x768xf32> -> vector<16x768xf32>
    %c0_39 = arith.constant 0 : index
    %c0_40 = arith.constant 0 : index
    %70 = vector.load %arg14[%c0_39, %c0_40] : memref<1x768xf32, #tpu.memory_space<vmem>>, vector<1x768xf32>
    %71 = vector.broadcast %70 : vector<1x768xf32> to vector<16x768xf32>
    %72 = arith.addf %69, %71 : vector<16x768xf32>
    %73 = vector.shape_cast %72 : vector<16x768xf32> to vector<2x8x768xf32>
    %c0_41 = arith.constant 0 : index
    %c0_42 = arith.constant 0 : index
    %c0_43 = arith.constant 0 : index
    %74 = vector.load %arg6[%c0_41, %c0_42, %c0_43] : memref<2x8x3xf32, #tpu.memory_space<vmem>>, vector<2x8x3xf32>
    %75 = vector.extract_strided_slice %74 {offsets = [0, 0, 0], sizes = [2, 8, 1], strides = [1, 1, 1]} : vector<2x8x3xf32> to vector<2x8x1xf32>
    %76 = vector.extract_strided_slice %74 {offsets = [0, 0, 1], sizes = [2, 8, 1], strides = [1, 1, 1]} : vector<2x8x3xf32> to vector<2x8x1xf32>
    %77 = vector.extract_strided_slice %74 {offsets = [0, 0, 2], sizes = [2, 1, 1], strides = [1, 1, 1]} : vector<2x8x3xf32> to vector<2x1x1xf32>
    %78 = vector.extract_strided_slice %73 {offsets = [0, 4, 0], sizes = [2, 1, 384], strides = [1, 1, 1]} : vector<2x8x768xf32> to vector<2x1x384xf32>
    %79 = vector.shape_cast %6 : vector<1x384xf32> to vector<1x1x384xf32>
    %80 = vector.broadcast %77 : vector<2x1x1xf32> to vector<2x1x384xf32>
    %81 = vector.broadcast %79 : vector<1x1x384xf32> to vector<2x1x384xf32>
    %82 = arith.mulf %80, %81 : vector<2x1x384xf32>
    %83 = arith.addf %78, %82 : vector<2x1x384xf32>
    %84 = vector.extract_strided_slice %73 {offsets = [0, 4, 384], sizes = [2, 1, 384], strides = [1, 1, 1]} : vector<2x8x768xf32> to vector<2x1x384xf32>
    %c0_44 = arith.constant 0 : index
    %c0_45 = arith.constant 0 : index
    %c0_46 = arith.constant 0 : index
    %85 = vector.load %arg3[%c0_44, %c0_45, %c0_46] : memref<2x16x384xf32, #tpu.memory_space<vmem>>, vector<2x16x384xf32>
    %86 = vector.shape_cast %85 : vector<2x16x384xf32> to vector<32x384xf32>
    %87 = arith.truncf %86 : vector<32x384xf32> to vector<32x384xbf16>
    %c0_47 = arith.constant 0 : index
    %c0_48 = arith.constant 0 : index
    %88 = vector.load %arg11[%c0_47, %c0_48] : memref<384x384xbf16, #tpu.memory_space<vmem>>, vector<384x384xbf16>
    %cst_49 = arith.constant dense<0.000000e+00> : vector<32x384xf32>
    %89 = tpu.matmul %87, %88, %cst_49 {dimension_numbers = #tpu.dot_dimension_numbers<[1], [0], [0], [1], [0, 0, 1, 1], [], []>} : vector<32x384xbf16>, vector<384x384xbf16>, vector<32x384xf32> -> vector<32x384xf32>
    %90 = vector.broadcast %7 : vector<1x384xf32> to vector<32x384xf32>
    %91 = arith.addf %89, %90 : vector<32x384xf32>
    %c0_50 = arith.constant 0 : index
    %c0_51 = arith.constant 0 : index
    %c0_52 = arith.constant 0 : index
    %92 = vector.load %arg4[%c0_50, %c0_51, %c0_52] : memref<2x16x384xf32, #tpu.memory_space<vmem>>, vector<2x16x384xf32>
    %93 = vector.shape_cast %92 : vector<2x16x384xf32> to vector<32x384xf32>
    %94 = arith.truncf %93 : vector<32x384xf32> to vector<32x384xbf16>
    %c0_53 = arith.constant 0 : index
    %c0_54 = arith.constant 0 : index
    %95 = vector.load %arg12[%c0_53, %c0_54] : memref<384x384xbf16, #tpu.memory_space<vmem>>, vector<384x384xbf16>
    %cst_55 = arith.constant dense<0.000000e+00> : vector<32x384xf32>
    %96 = tpu.matmul %94, %95, %cst_55 {dimension_numbers = #tpu.dot_dimension_numbers<[1], [0], [0], [1], [0, 0, 1, 1], [], []>} : vector<32x384xbf16>, vector<384x384xbf16>, vector<32x384xf32> -> vector<32x384xf32>
    %97 = vector.broadcast %8 : vector<1x384xf32> to vector<32x384xf32>
    %98 = arith.addf %96, %97 : vector<32x384xf32>
    %99 = vector.shape_cast %91 : vector<32x384xf32> to vector<2x16x384xf32>
    %100 = vector.shape_cast %98 : vector<32x384xf32> to vector<2x16x384xf32>
    %101 = vector.extract_strided_slice %99 {offsets = [0, 0, 0], sizes = [2, 8, 384], strides = [1, 1, 1]} : vector<2x16x384xf32> to vector<2x8x384xf32>
    %102 = vector.extract_strided_slice %99 {offsets = [0, 8, 0], sizes = [2, 8, 384], strides = [1, 1, 1]} : vector<2x16x384xf32> to vector<2x8x384xf32>
    %103 = vector.extract_strided_slice %100 {offsets = [0, 0, 0], sizes = [2, 8, 384], strides = [1, 1, 1]} : vector<2x16x384xf32> to vector<2x8x384xf32>
    %104 = vector.extract_strided_slice %100 {offsets = [0, 8, 0], sizes = [2, 8, 384], strides = [1, 1, 1]} : vector<2x16x384xf32> to vector<2x8x384xf32>
    %105 = arith.addf %75, %76 : vector<2x8x1xf32>
    %106 = arith.addf %64, %101 : vector<2x8x384xf32>
    %107 = vector.broadcast %75 : vector<2x8x1xf32> to vector<2x8x384xf32>
    %108 = arith.mulf %106, %107 : vector<2x8x384xf32>
    %109 = arith.addf %64, %102 : vector<2x8x384xf32>
    %110 = vector.broadcast %76 : vector<2x8x1xf32> to vector<2x8x384xf32>
    %111 = arith.mulf %109, %110 : vector<2x8x384xf32>
    %112 = arith.addf %108, %111 : vector<2x8x384xf32>
    %113 = vector.broadcast %83 : vector<2x1x384xf32> to vector<2x8x384xf32>
    %114 = arith.mulf %112, %113 : vector<2x8x384xf32>
    %cst_56 = arith.constant dense<0.000000e+00> : vector<2x8xf32>
    %115 = vector.multi_reduction <add>, %114, %cst_56 [2] : vector<2x8x384xf32> to vector<2x8xf32>
    %116 = vector.shape_cast %115 : vector<2x8xf32> to vector<2x8x1xf32>
    %cst_57 = arith.constant 0.0577350259 : f32
    %117 = vector.broadcast %cst_57 : f32 to vector<2x8x1xf32>
    %118 = arith.mulf %116, %117 : vector<2x8x1xf32>
    %cst_58 = arith.constant 0.000000e+00 : f32
    %119 = vector.broadcast %cst_58 : f32 to vector<2x8x1xf32>
    %120 = arith.cmpf oeq, %105, %119 : vector<2x8x1xf32>
    %cst_59 = arith.constant -1.000000e+09 : f32
    %121 = vector.broadcast %cst_59 : f32 to vector<2x8x1xf32>
    %122 = arith.select %120, %121, %118 : vector<2x8x1xi1>, vector<2x8x1xf32>
    %cst_60 = arith.constant dense<0xFF800000> : vector<2x1xf32>
    %123 = vector.multi_reduction <maximumf>, %122, %cst_60 [1] : vector<2x8x1xf32> to vector<2x1xf32>
    %124 = vector.shape_cast %123 : vector<2x1xf32> to vector<2x1x1xf32>
    %125 = vector.broadcast %124 : vector<2x1x1xf32> to vector<2x8x1xf32>
    %126 = arith.subf %122, %125 : vector<2x8x1xf32>
    %127 = math.exp %126 : vector<2x8x1xf32>
    %cst_61 = arith.constant dense<0.000000e+00> : vector<2x1xf32>
    %128 = vector.multi_reduction <add>, %127, %cst_61 [1] : vector<2x8x1xf32> to vector<2x1xf32>
    %129 = vector.shape_cast %128 : vector<2x1xf32> to vector<2x1x1xf32>
    %130 = vector.broadcast %129 : vector<2x1x1xf32> to vector<2x8x1xf32>
    %131 = arith.divf %127, %130 : vector<2x8x1xf32>
    %132 = arith.mulf %131, %75 : vector<2x8x1xf32>
    %133 = arith.mulf %131, %76 : vector<2x8x1xf32>
    %134 = arith.addf %132, %133 : vector<2x8x1xf32>
    %135 = vector.broadcast %134 : vector<2x8x1xf32> to vector<2x8x384xf32>
    %136 = vector.broadcast %83 : vector<2x1x384xf32> to vector<2x8x384xf32>
    %137 = arith.mulf %135, %136 : vector<2x8x384xf32>
    %138 = arith.addf %65, %101 : vector<2x8x384xf32>
    %139 = vector.broadcast %132 : vector<2x8x1xf32> to vector<2x8x384xf32>
    %140 = arith.mulf %139, %138 : vector<2x8x384xf32>
    %141 = arith.addf %137, %140 : vector<2x8x384xf32>
    %142 = arith.addf %65, %102 : vector<2x8x384xf32>
    %143 = vector.broadcast %133 : vector<2x8x1xf32> to vector<2x8x384xf32>
    %144 = arith.mulf %143, %142 : vector<2x8x384xf32>
    %145 = arith.addf %141, %144 : vector<2x8x384xf32>
    %146 = arith.addf %66, %103 : vector<2x8x384xf32>
    %147 = vector.broadcast %75 : vector<2x8x1xf32> to vector<2x8x384xf32>
    %148 = arith.mulf %146, %147 : vector<2x8x384xf32>
    %149 = arith.addf %66, %104 : vector<2x8x384xf32>
    %150 = vector.broadcast %76 : vector<2x8x1xf32> to vector<2x8x384xf32>
    %151 = arith.mulf %149, %150 : vector<2x8x384xf32>
    %152 = arith.addf %148, %151 : vector<2x8x384xf32>
    %153 = vector.broadcast %84 : vector<2x1x384xf32> to vector<2x8x384xf32>
    %154 = arith.mulf %152, %153 : vector<2x8x384xf32>
    %cst_62 = arith.constant dense<0.000000e+00> : vector<2x8xf32>
    %155 = vector.multi_reduction <add>, %154, %cst_62 [2] : vector<2x8x384xf32> to vector<2x8xf32>
    %156 = vector.shape_cast %155 : vector<2x8xf32> to vector<2x8x1xf32>
    %cst_63 = arith.constant 0.0577350259 : f32
    %157 = vector.broadcast %cst_63 : f32 to vector<2x8x1xf32>
    %158 = arith.mulf %156, %157 : vector<2x8x1xf32>
    %cst_64 = arith.constant 0.000000e+00 : f32
    %159 = vector.broadcast %cst_64 : f32 to vector<2x8x1xf32>
    %160 = arith.cmpf oeq, %105, %159 : vector<2x8x1xf32>
    %cst_65 = arith.constant -1.000000e+09 : f32
    %161 = vector.broadcast %cst_65 : f32 to vector<2x8x1xf32>
    %162 = arith.select %160, %161, %158 : vector<2x8x1xi1>, vector<2x8x1xf32>
    %cst_66 = arith.constant dense<0xFF800000> : vector<2x1xf32>
    %163 = vector.multi_reduction <maximumf>, %162, %cst_66 [1] : vector<2x8x1xf32> to vector<2x1xf32>
    %164 = vector.shape_cast %163 : vector<2x1xf32> to vector<2x1x1xf32>
    %165 = vector.broadcast %164 : vector<2x1x1xf32> to vector<2x8x1xf32>
    %166 = arith.subf %162, %165 : vector<2x8x1xf32>
    %167 = math.exp %166 : vector<2x8x1xf32>
    %cst_67 = arith.constant dense<0.000000e+00> : vector<2x1xf32>
    %168 = vector.multi_reduction <add>, %167, %cst_67 [1] : vector<2x8x1xf32> to vector<2x1xf32>
    %169 = vector.shape_cast %168 : vector<2x1xf32> to vector<2x1x1xf32>
    %170 = vector.broadcast %169 : vector<2x1x1xf32> to vector<2x8x1xf32>
    %171 = arith.divf %167, %170 : vector<2x8x1xf32>
    %172 = arith.mulf %171, %75 : vector<2x8x1xf32>
    %173 = arith.mulf %171, %76 : vector<2x8x1xf32>
    %174 = arith.addf %172, %173 : vector<2x8x1xf32>
    %175 = vector.broadcast %174 : vector<2x8x1xf32> to vector<2x8x384xf32>
    %176 = vector.broadcast %84 : vector<2x1x384xf32> to vector<2x8x384xf32>
    %177 = arith.mulf %175, %176 : vector<2x8x384xf32>
    %178 = arith.addf %67, %103 : vector<2x8x384xf32>
    %179 = vector.broadcast %172 : vector<2x8x1xf32> to vector<2x8x384xf32>
    %180 = arith.mulf %179, %178 : vector<2x8x384xf32>
    %181 = arith.addf %177, %180 : vector<2x8x384xf32>
    %182 = arith.addf %67, %104 : vector<2x8x384xf32>
    %183 = vector.broadcast %173 : vector<2x8x1xf32> to vector<2x8x384xf32>
    %184 = arith.mulf %183, %182 : vector<2x8x384xf32>
    %185 = arith.addf %181, %184 : vector<2x8x384xf32>
    %186 = arith.addf %56, %0 : vector<2x8x384xf32>
    %187 = arith.addf %186, %145 : vector<2x8x384xf32>
    %188 = arith.addf %187, %185 : vector<2x8x384xf32>
    %cst_68 = arith.constant 0.000000e+00 : f32
    %189 = vector.broadcast %cst_68 : f32 to vector<2x8x384xf32>
    %190 = arith.maximumf %188, %189 : vector<2x8x384xf32>
    %c0_69 = arith.constant 0 : index
    %c0_70 = arith.constant 0 : index
    %c0_71 = arith.constant 0 : index
    %191 = vector.load %arg16[%c0_69, %c0_70, %c0_71] : memref<2x8x384xf32, #tpu.memory_space<vmem>>, vector<2x8x384xf32>
    tpu.vector_store %arg16[%c0_69, %c0_70, %c0_71], %190 {strides = array<i32>} : memref<2x8x384xf32, #tpu.memory_space<vmem>>, vector<2x8x384xf32>,
    %192 = tpu.concatenate %131, %171 in 2 : vector<2x8x1xf32>, vector<2x8x1xf32> -> vector<2x8x2xf32>
    %c0_72 = arith.constant 0 : index
    %c0_73 = arith.constant 0 : index
    %c0_74 = arith.constant 0 : index
    %193 = vector.load %arg17[%c0_72, %c0_73, %c0_74] : memref<2x8x2xf32, #tpu.memory_space<vmem>>, vector<2x8x2xf32>
    tpu.vector_store %arg17[%c0_72, %c0_73, %c0_74], %192 {strides = array<i32>} : memref<2x8x2xf32, #tpu.memory_space<vmem>>, vector<2x8x2xf32>,
    return
  }
  func.func @transform_0(%arg0: i32) -> (i32, i32, i32) {
    %c0_i32 = arith.constant 0 : i32
    %c0_i32_0 = arith.constant 0 : i32
    %c0_i32_1 = arith.constant 0 : i32
    return %arg0, %c0_i32, %c0_i32_0 : i32, i32, i32
  }
  func.func @transform_1(%arg0: i32) -> (i32, i32, i32) {
    %c0_i32 = arith.constant 0 : i32
    %c0_i32_0 = arith.constant 0 : i32
    %c0_i32_1 = arith.constant 0 : i32
    return %arg0, %c0_i32, %c0_i32_0 : i32, i32, i32
  }
  func.func @transform_2(%arg0: i32) -> (i32, i32, i32) {
    %c0_i32 = arith.constant 0 : i32
    %c0_i32_0 = arith.constant 0 : i32
    %c0_i32_1 = arith.constant 0 : i32
    return %arg0, %c0_i32, %c0_i32_0 : i32, i32, i32
  }
  func.func @transform_3(%arg0: i32) -> (i32, i32, i32) {
    %c0_i32 = arith.constant 0 : i32
    %c0_i32_0 = arith.constant 0 : i32
    %c0_i32_1 = arith.constant 0 : i32
    return %arg0, %c0_i32, %c0_i32_0 : i32, i32, i32
  }
  func.func @transform_4(%arg0: i32) -> (i32, i32, i32) {
    %c0_i32 = arith.constant 0 : i32
    %c0_i32_0 = arith.constant 0 : i32
    %c0_i32_1 = arith.constant 0 : i32
    return %arg0, %c0_i32, %c0_i32_0 : i32, i32, i32
  }
  func.func @transform_5(%arg0: i32) -> (i32, i32, i32) {
    %c0_i32 = arith.constant 0 : i32
    %c0_i32_0 = arith.constant 0 : i32
    %c0_i32_1 = arith.constant 0 : i32
    return %arg0, %c0_i32, %c0_i32_0 : i32, i32, i32
  }
  func.func @transform_6(%arg0: i32) -> (i32, i32) {
    %c0_i32 = arith.constant 0 : i32
    %c0_i32_0 = arith.constant 0 : i32
    %c0_i32_1 = arith.constant 0 : i32
    return %c0_i32, %c0_i32_0 : i32, i32
  }
  func.func @transform_7(%arg0: i32) -> (i32, i32) {
    %c0_i32 = arith.constant 0 : i32
    %c0_i32_0 = arith.constant 0 : i32
    %c0_i32_1 = arith.constant 0 : i32
    return %c0_i32, %c0_i32_0 : i32, i32
  }
  func.func @transform_8(%arg0: i32) -> (i32, i32) {
    %c0_i32 = arith.constant 0 : i32
    %c0_i32_0 = arith.constant 0 : i32
    %c0_i32_1 = arith.constant 0 : i32
    return %c0_i32, %c0_i32_0 : i32, i32
  }
  func.func @transform_9(%arg0: i32) -> (i32, i32) {
    %c0_i32 = arith.constant 0 : i32
    %c0_i32_0 = arith.constant 0 : i32
    %c0_i32_1 = arith.constant 0 : i32
    return %c0_i32, %c0_i32_0 : i32, i32
  }
  func.func @transform_10(%arg0: i32) -> (i32, i32) {
    %c0_i32 = arith.constant 0 : i32
    %c0_i32_0 = arith.constant 0 : i32
    %c0_i32_1 = arith.constant 0 : i32
    return %c0_i32, %c0_i32_0 : i32, i32
  }
  func.func @transform_11(%arg0: i32) -> (i32, i32) {
    %c0_i32 = arith.constant 0 : i32
    %c0_i32_0 = arith.constant 0 : i32
    %c0_i32_1 = arith.constant 0 : i32
    return %c0_i32, %c0_i32_0 : i32, i32
  }
  func.func @transform_12(%arg0: i32) -> (i32, i32) {
    %c0_i32 = arith.constant 0 : i32
    %c0_i32_0 = arith.constant 0 : i32
    %c0_i32_1 = arith.constant 0 : i32
    return %c0_i32, %c0_i32_0 : i32, i32
  }
  func.func @transform_13(%arg0: i32) -> (i32, i32) {
    %c0_i32 = arith.constant 0 : i32
    %c0_i32_0 = arith.constant 0 : i32
    %c0_i32_1 = arith.constant 0 : i32
    return %c0_i32, %c0_i32_0 : i32, i32
  }
  func.func @transform_14(%arg0: i32) -> (i32, i32) {
    %c0_i32 = arith.constant 0 : i32
    %c0_i32_0 = arith.constant 0 : i32
    %c0_i32_1 = arith.constant 0 : i32
    return %c0_i32, %c0_i32_0 : i32, i32
  }
  func.func @transform_15(%arg0: i32) -> (i32, i32, i32) {
    %c0_i32 = arith.constant 0 : i32
    %c0_i32_0 = arith.constant 0 : i32
    %c0_i32_1 = arith.constant 0 : i32
    return %arg0, %c0_i32, %c0_i32_0 : i32, i32, i32
  }
  func.func @transform_16(%arg0: i32) -> (i32, i32, i32) {
    %c0_i32 = arith.constant 0 : i32
    %c0_i32_0 = arith.constant 0 : i32
    %c0_i32_1 = arith.constant 0 : i32
    return %arg0, %c0_i32, %c0_i32_0 : i32, i32, i32
  }
}

</mosaic_0001>

<llo_original>
// kernel: interaction_forward.1
$region0: #{interaction_forward.1}
  #allocation0 [shape = 'u32[]', space=smem, size = 0x4, offset = 0x4, fixed_abs, tag = 'smem constant byte address 0x4 - core index']
  #allocation1 [shape = 'u32[144,128]{1,0:T(1,128)}', space=vmem, size = 0x12000, scoped, tag = 'internal scratch']
  %s0 = inlined_call_operand.vmem [shape: f32[2,8,384], index: 0, kind: input, shape index: {}]
  %s1 = inlined_call_operand.vmem [shape: f32[2,8,384], index: 1, kind: input, shape index: {}]
  %s2 = inlined_call_operand.vmem [shape: f32[2,16,384], index: 2, kind: input, shape index: {}]
  %s3 = inlined_call_operand.vmem [shape: f32[2,16,384], index: 3, kind: input, shape index: {}]
  %s4 = inlined_call_operand.vmem [shape: f32[1,16,16], index: 4, kind: input, shape index: {}]
  %s5 = inlined_call_operand.vmem [shape: f32[2,8,3], index: 5, kind: input, shape index: {}]
  %s6 = inlined_call_operand.hbm [shape: bf16[384,384], index: 6, kind: input, shape index: {}]
  %s7 = inlined_call_operand.hbm [shape: bf16[384,384], index: 7, kind: input, shape index: {}]
  %s8 = inlined_call_operand.hbm [shape: bf16[384,768], index: 8, kind: input, shape index: {}]
  %s9 = inlined_call_operand.hbm [shape: bf16[384,1536], index: 9, kind: input, shape index: {}]
  %s10 = inlined_call_operand.hbm [shape: bf16[384,384], index: 10, kind: input, shape index: {}]
  %s11 = inlined_call_operand.hbm [shape: bf16[384,384], index: 11, kind: input, shape index: {}]
  %s12 = inlined_call_operand.hbm [shape: f32[6,384], index: 12, kind: input, shape index: {}]
  %s13 = inlined_call_operand.hbm [shape: f32[1,768], index: 13, kind: input, shape index: {}]
  %s14 = inlined_call_operand.hbm [shape: f32[1,1536], index: 14, kind: input, shape index: {}]
  %s15 = inlined_call_operand.hbm [shape: f32[2,8,384], index: 15, kind: output, shape index: {0}]
  %s16 = inlined_call_operand.vmem [shape: f32[2,8,2], index: 16, kind: output, shape index: {1}]
  %17 = xla_tuple %s15, %s16
  %s18 = sld [smem:[#allocation0]]
  $region114: #{interaction_forward.1} parent=0
    _
  %s20 = ssub.s32 1, %s18
  %s21 = scalar_select 0, %s20, %s18
  $region1: #{interaction_forward.1} parent=0
    #allocation2 [shape = 'u8[294912]{0}', space=vmem, size = 0x48000, scoped, tag = 'input window, operand 6, single buffered']
    #allocation3 [shape = 's32[1]{0}', space=sflag, size = 0x4, scoped, tag = 'scoped memory for interaction_forward.1']
    #allocation4 [shape = 's32[1]{0}', space=sflag, size = 0x4, scoped, tag = 'scoped memory for interaction_forward.1']
    #allocation5 [shape = 'u8[294912]{0}', space=vmem, size = 0x48000, scoped, tag = 'input window, operand 7, single buffered']
    #allocation6 [shape = 's32[1]{0}', space=sflag, size = 0x4, scoped, tag = 'scoped memory for interaction_forward.1']
    #allocation7 [shape = 'u8[589824]{0}', space=vmem, size = 0x90000, scoped, tag = 'input window, operand 8, single buffered']
    #allocation8 [shape = 'u8[1179648]{0}', space=vmem, size = 0x120000, scoped, tag = 'input window, operand 9, single buffered']
    #allocation9 [shape = 's32[1]{0}', space=sflag, size = 0x4, scoped, tag = 'scoped memory for interaction_forward.1']
    #allocation10 [shape = 'u8[294912]{0}', space=vmem, size = 0x48000, scoped, tag = 'input window, operand 10, single buffered']
    #allocation11 [shape = 'u8[294912]{0}', space=vmem, size = 0x48000, scoped, tag = 'input window, operand 11, single buffered']
    #allocation12 [shape = 's32[1]{0}', space=sflag, size = 0x4, scoped, tag = 'scoped memory for interaction_forward.1']
    #allocation13 [shape = 'u8[12288]{0}', space=vmem, size = 0x3000, scoped, tag = 'input window, operand 12, single buffered']
    #allocation14 [shape = 'u8[3072]{0}', space=vmem, size = 0xc00, scoped, tag = 'input window, operand 13, single buffered']
    #allocation15 [shape = 's32[1]{0}', space=sflag, size = 0x4, scoped, tag = 'scoped memory for interaction_forward.1']
    #allocation16 [shape = 'u8[6144]{0}', space=vmem, size = 0x1800, scoped, tag = 'input window, operand 14, single buffered']
    #allocation17 [shape = 'u8[24576]{0}', space=vmem, size = 0x6000, scoped, tag = 'output window, operand 0, single buffered']
    %22 = vsyncpa [#allocation3], 0
    %23 = vsyncpa [#allocation6], 0
    %24 = vsyncpa [#allocation9], 0
    %25 = vsyncpa [#allocation12], 0
    %26 = vsyncpa [#allocation15], 0
    %27 = vsyncpa [#allocation4], 0
    // Predicated region
    $region2: #{interaction_forward.1} parent=1 // pred_check
      _
    $region3: #{interaction_forward.1} parent=1 // pred_check_branch
      %29 = sbr.rel (0) target = $region5
    $region4: #{interaction_forward.1} parent=1 // pred_region
      _
    $region5: #{interaction_forward.1} parent=1 // pred_fallthru
      _
    // Predicated region
    $region6: #{interaction_forward.1} parent=1 // pred_check
      _
    $region7: #{interaction_forward.1} parent=1 // pred_check_branch
      %31 = sbr.rel (0) target = $region9
    $region8: #{interaction_forward.1} parent=1 // pred_region
      _
    $region9: #{interaction_forward.1} parent=1 // pred_fallthru
      _
    // Predicated region
    $region10: #{interaction_forward.1} parent=1 // pred_check
      _
    $region11: #{interaction_forward.1} parent=1 // pred_check_branch
      %33 = sbr.rel (0) target = $region13
    $region12: #{interaction_forward.1} parent=1 // pred_region
      _
    $region13: #{interaction_forward.1} parent=1 // pred_fallthru
      _
    // Predicated region
    $region14: #{interaction_forward.1} parent=1 // pred_check
      _
    $region15: #{interaction_forward.1} parent=1 // pred_check_branch
      %35 = sbr.rel (0) target = $region17
    $region16: #{interaction_forward.1} parent=1 // pred_region
      _
    $region17: #{interaction_forward.1} parent=1 // pred_fallthru
      _
    // Predicated region
    $region18: #{interaction_forward.1} parent=1 // pred_check
      _
    $region19: #{interaction_forward.1} parent=1 // pred_check_branch
      %37 = sbr.rel (0) target = $region21
    $region20: #{interaction_forward.1} parent=1 // pred_region
      _
    $region21: #{interaction_forward.1} parent=1 // pred_fallthru
      _
    // Predicated region
    $region22: #{interaction_forward.1} parent=1 // pred_check
      _
    $region23: #{interaction_forward.1} parent=1 // pred_check_branch
      %39 = sbr.rel (0) target = $region25
    $region24: #{interaction_forward.1} parent=1 // pred_region
      _
    $region25: #{interaction_forward.1} parent=1 // pred_fallthru
      _
    // Predicated region
    $region26: #{interaction_forward.1} parent=1 // pred_check
      _
    $region27: #{interaction_forward.1} parent=1 // pred_check_branch
      %41 = sbr.rel (0) target = $region29
    $region28: #{interaction_forward.1} parent=1 // pred_region
      %s43 = ssub.s32 9216, 9216
      %44 = vsyncadd [#allocation3], %s43
      %s45 = sshll.u32 [#allocation2], 4
      %s46 = int_to_ptr.vmem [resolvable:$true] %s45
      %51 = dma.hbm_to_vmem [thread:$0]  %s6, 9216, %s46, [#allocation3], 192, 192, 12
    $region29: #{interaction_forward.1} parent=1 // pred_fallthru
      _
    // Predicated region
    $region30: #{interaction_forward.1} parent=1 // pred_check
      _
    $region31: #{interaction_forward.1} parent=1 // pred_check_branch
      %53 = sbr.rel (0) target = $region33
    $region32: #{interaction_forward.1} parent=1 // pred_region
      %s55 = ssub.s32 9216, 9216
      %56 = vsyncadd [#allocation6], %s55
      %s57 = sshll.u32 [#allocation5], 4
      %s58 = int_to_ptr.vmem [resolvable:$true] %s57
      %63 = dma.hbm_to_vmem [thread:$0]  %s7, 9216, %s58, [#allocation6], 192, 192, 12
    $region33: #{interaction_forward.1} parent=1 // pred_fallthru
      _
    // Predicated region
    $region34: #{interaction_forward.1} parent=1 // pred_check
      _
    $region35: #{interaction_forward.1} parent=1 // pred_check_branch
      %65 = sbr.rel (0) target = $region37
    $region36: #{interaction_forward.1} parent=1 // pred_region
      %s67 = ssub.s32 18432, 18432
      %68 = vsyncadd [#allocation6], %s67
      %s69 = sshll.u32 [#allocation7], 4
      %s70 = int_to_ptr.vmem [resolvable:$true] %s69
      %75 = dma.hbm_to_vmem [thread:$0]  %s8, 18432, %s70, [#allocation6], 384, 384, 24
    $region37: #{interaction_forward.1} parent=1 // pred_fallthru
      _
    // Predicated region
    $region38: #{interaction_forward.1} parent=1 // pred_check
      _
    $region39: #{interaction_forward.1} parent=1 // pred_check_branch
      %77 = sbr.rel (0) target = $region41
    $region40: #{interaction_forward.1} parent=1 // pred_region
      %s79 = ssub.s32 36864, 36864
      %80 = vsyncadd [#allocation9], %s79
      %s81 = sshll.u32 [#allocation8], 4
      %s82 = int_to_ptr.vmem [resolvable:$true] %s81
      %87 = dma.hbm_to_vmem [thread:$0]  %s9, 36864, %s82, [#allocation9], 768, 768, 48
    $region41: #{interaction_forward.1} parent=1 // pred_fallthru
      _
    // Predicated region
    $region42: #{interaction_forward.1} parent=1 // pred_check
      _
    $region43: #{interaction_forward.1} parent=1 // pred_check_branch
      %89 = sbr.rel (0) target = $region45
    $region44: #{interaction_forward.1} parent=1 // pred_region
      %s91 = ssub.s32 9216, 9216
      %92 = vsyncadd [#allocation9], %s91
      %s93 = sshll.u32 [#allocation10], 4
      %s94 = int_to_ptr.vmem [resolvable:$true] %s93
      %99 = dma.hbm_to_vmem [thread:$0]  %s10, 9216, %s94, [#allocation9], 192, 192, 12
    $region45: #{interaction_forward.1} parent=1 // pred_fallthru
      _
    // Predicated region
    $region46: #{interaction_forward.1} parent=1 // pred_check
      _
    $region47: #{interaction_forward.1} parent=1 // pred_check_branch
      %101 = sbr.rel (0) target = $region49
    $region48: #{interaction_forward.1} parent=1 // pred_region
      %s103 = ssub.s32 9216, 9216
      %104 = vsyncadd [#allocation12], %s103
      %s105 = sshll.u32 [#allocation11], 4
      %s106 = int_to_ptr.vmem [resolvable:$true] %s105
      %111 = dma.hbm_to_vmem [thread:$0]  %s11, 9216, %s106, [#allocation12], 192, 192, 12
    $region49: #{interaction_forward.1} parent=1 // pred_fallthru
      _
    // Predicated region
    $region50: #{interaction_forward.1} parent=1 // pred_check
      _
    $region51: #{interaction_forward.1} parent=1 // pred_check_branch
      %113 = sbr.rel (0) target = $region53
    $region52: #{interaction_forward.1} parent=1 // pred_region
      %s115 = ssub.s32 384, 384
      %116 = vsyncadd [#allocation12], %s115
      %s118 = sshll.u32 [#allocation13], 4
      %s119 = int_to_ptr.vmem [resolvable:$true] %s118
      %121 = dma.hbm_to_vmem [thread:$0]  %s12, 384, %s119, [#allocation12]
    $region53: #{interaction_forward.1} parent=1 // pred_fallthru
      _
    // Predicated region
    $region54: #{interaction_forward.1} parent=1 // pred_check
      _
    $region55: #{interaction_forward.1} parent=1 // pred_check_branch
      %123 = sbr.rel (0) target = $region57
    $region56: #{interaction_forward.1} parent=1 // pred_region
      %s125 = ssub.s32 96, 96
      %126 = vsyncadd [#allocation15], %s125
      %s128 = sshll.u32 [#allocation14], 4
      %s129 = int_to_ptr.vmem [resolvable:$true] %s128
      %131 = dma.hbm_to_vmem [thread:$0]  %s13, 96, %s129, [#allocation15]
    $region57: #{interaction_forward.1} parent=1 // pred_fallthru
      _
    // Predicated region
    $region58: #{interaction_forward.1} parent=1 // pred_check
      _
    $region59: #{interaction_forward.1} parent=1 // pred_check_branch
      %133 = sbr.rel (0) target = $region61
    $region60: #{interaction_forward.1} parent=1 // pred_region
      %s135 = ssub.s32 192, 192
      %136 = vsyncadd [#allocation15], %s135
      %s138 = sshll.u32 [#allocation16], 4
      %s139 = int_to_ptr.vmem [resolvable:$true] %s138
      %141 = dma.hbm_to_vmem [thread:$0]  %s14, 192, %s139, [#allocation15]
    $region61: #{interaction_forward.1} parent=1 // pred_fallthru
      _
    // Predicated region
    $region62: #{interaction_forward.1} parent=1 // pred_check
      _
    $region63: #{interaction_forward.1} parent=1 // pred_check_branch
      %143 = sbr.rel (0) target = $region65
    $region64: #{interaction_forward.1} parent=1 // pred_region
      %144 = dma.done [#allocation3], 9216
    $region65: #{interaction_forward.1} parent=1 // pred_fallthru
      _
    // Predicated region
    $region66: #{interaction_forward.1} parent=1 // pred_check
      _
    $region67: #{interaction_forward.1} parent=1 // pred_check_branch
      %146 = sbr.rel (0) target = $region69
    $region68: #{interaction_forward.1} parent=1 // pred_region
      %147 = dma.done [#allocation6], 9216
    $region69: #{interaction_forward.1} parent=1 // pred_fallthru
      _
    // Predicated region
    $region70: #{interaction_forward.1} parent=1 // pred_check
      _
    $region71: #{interaction_forward.1} parent=1 // pred_check_branch
      %149 = sbr.rel (0) target = $region73
    $region72: #{interaction_forward.1} parent=1 // pred_region
      %150 = dma.done [#allocation6], 18432
    $region73: #{interaction_forward.1} parent=1 // pred_fallthru
      _
    // Predicated region
    $region74: #{interaction_forward.1} parent=1 // pred_check
      _
    $region75: #{interaction_forward.1} parent=1 // pred_check_branch
      %152 = sbr.rel (0) target = $region77
    $region76: #{interaction_forward.1} parent=1 // pred_region
      %153 = dma.done [#allocation9], 36864
    $region77: #{interaction_forward.1} parent=1 // pred_fallthru
      _
    // Predicated region
    $region78: #{interaction_forward.1} parent=1 // pred_check
      _
    $region79: #{interaction_forward.1} parent=1 // pred_check_branch
      %155 = sbr.rel (0) target = $region81
    $region80: #{interaction_forward.1} parent=1 // pred_region
      %156 = dma.done [#allocation9], 9216
    $region81: #{interaction_forward.1} parent=1 // pred_fallthru
      _
    // Predicated region
    $region82: #{interaction_forward.1} parent=1 // pred_check
      _
    $region83: #{interaction_forward.1} parent=1 // pred_check_branch
      %158 = sbr.rel (0) target = $region85
    $region84: #{interaction_forward.1} parent=1 // pred_region
      %159 = dma.done [#allocation12], 9216
    $region85: #{interaction_forward.1} parent=1 // pred_fallthru
      _
    // Predicated region
    $region86: #{interaction_forward.1} parent=1 // pred_check
      _
    $region87: #{interaction_forward.1} parent=1 // pred_check_branch
      %161 = sbr.rel (0) target = $region89
    $region88: #{interaction_forward.1} parent=1 // pred_region
      %162 = dma.done [#allocation12], 384
    $region89: #{interaction_forward.1} parent=1 // pred_fallthru
      _
    // Predicated region
    $region90: #{interaction_forward.1} parent=1 // pred_check
      _
    $region91: #{interaction_forward.1} parent=1 // pred_check_branch
      %164 = sbr.rel (0) target = $region93
    $region92: #{interaction_forward.1} parent=1 // pred_region
      %165 = dma.done [#allocation15], 96
    $region93: #{interaction_forward.1} parent=1 // pred_fallthru
      _
    // Predicated region
    $region94: #{interaction_forward.1} parent=1 // pred_check
      _
    $region95: #{interaction_forward.1} parent=1 // pred_check_branch
      %167 = sbr.rel (0) target = $region97
    $region96: #{interaction_forward.1} parent=1 // pred_region
      %168 = dma.done [#allocation15], 192
    $region97: #{interaction_forward.1} parent=1 // pred_fallthru
      _
    %v170 = vld [vmem:[%s0] sm:$0xff]
    %v171 = vld [vmem:[%s0 + $0x8] sm:$0xff]
    %v172 = vld [vmem:[%s0 + $0x10] sm:$0xff]
    %v173 = vld [vmem:[%s0 + $0x18] sm:$0xff]
    %v174 = vld [vmem:[%s0 + $0x20] sm:$0xff]
    %v175 = vld [vmem:[%s0 + $0x28] sm:$0xff]
    %v176 = vpack.c.bf16 %v173, %v170
    %v177 = vpack.c.bf16 %v174, %v171
    %v178 = vpack.c.bf16 %v175, %v172
    %v179 = vld [vmem:[#allocation13] ss:$8 sm:$0x7]
    %s180 = scalar_lea.vmem [#allocation13], 1
    %v181 = vld [vmem:[%s180] ss:$8 sm:$0x7]
    %s182 = scalar_lea.vmem [#allocation13], 2
    %v183 = vld [vmem:[%s182] ss:$8 sm:$0x7]
    %s184 = scalar_lea.vmem [#allocation13], 3
    %v185 = vld [vmem:[%s184] ss:$8 sm:$0x7]
    %s186 = scalar_lea.vmem [#allocation13], 4
    %v187 = vld [vmem:[%s186] ss:$8 sm:$0x7]
    %s188 = scalar_lea.vmem [#allocation13], 5
    %v189 = vld [vmem:[%s188] ss:$8 sm:$0x7]
    %v190 = vld [vmem:[#allocation2] sm:$0xff]
    %v191 = vld [vmem:[#allocation2 + $0x8] sm:$0xf]
    %v192 = vld [vmem:[#allocation2 + $0xc] sm:$0xff]
    %v193 = vld [vmem:[#allocation2 + $0x14] sm:$0xf]
    %v194 = vld [vmem:[#allocation2 + $0x18] sm:$0xff]
    %v195 = vld [vmem:[#allocation2 + $0x20] sm:$0xf]
    %v196 = vld [vmem:[#allocation2 + $0x24] sm:$0xff]
    %v197 = vld [vmem:[#allocation2 + $0x2c] sm:$0xf]
    %v198 = vld [vmem:[#allocation2 + $0x30] sm:$0xff]
    %v199 = vld [vmem:[#allocation2 + $0x38] sm:$0xf]
    %v200 = vld [vmem:[#allocation2 + $0x3c] sm:$0xff]
    %v201 = vld [vmem:[#allocation2 + $0x44] sm:$0xf]
    %v202 = vld [vmem:[#allocation2 + $0x48] sm:$0xff]
    %v203 = vld [vmem:[#allocation2 + $0x50] sm:$0xf]
    %v204 = vld [vmem:[#allocation2 + $0x54] sm:$0xff]
    %v205 = vld [vmem:[#allocation2 + $0x5c] sm:$0xf]
    %v206 = vld [vmem:[#allocation2 + $0x60] sm:$0xff]
    %v207 = vld [vmem:[#allocation2 + $0x68] sm:$0xf]
    %v208 = vld [vmem:[#allocation2 + $0x6c] sm:$0xff]
    %v209 = vld [vmem:[#allocation2 + $0x74] sm:$0xf]
    %v210 = vld [vmem:[#allocation2 + $0x78] sm:$0xff]
    %v211 = vld [vmem:[#allocation2 + $0x80] sm:$0xf]
    %v212 = vld [vmem:[#allocation2 + $0x84] sm:$0xff]
    %v213 = vld [vmem:[#allocation2 + $0x8c] sm:$0xf]
    %v214 = vld [vmem:[#allocation2 + $0x90] sm:$0xff]
    %v215 = vld [vmem:[#allocation2 + $0x98] sm:$0xf]
    %v216 = vld [vmem:[#allocation2 + $0x9c] sm:$0xff]
    %v217 = vld [vmem:[#allocation2 + $0xa4] sm:$0xf]
    %v218 = vld [vmem:[#allocation2 + $0xa8] sm:$0xff]
    %v219 = vld [vmem:[#allocation2 + $0xb0] sm:$0xf]
    %v220 = vld [vmem:[#allocation2 + $0xb4] sm:$0xff]
    %v221 = vld [vmem:[#allocation2 + $0xbc] sm:$0xf]
    %v222 = vld [vmem:[#allocation2 + $0xc0] sm:$0xff]
    %v223 = vld [vmem:[#allocation2 + $0xc8] sm:$0xf]
    %v224 = vld [vmem:[#allocation2 + $0xcc] sm:$0xff]
    %v225 = vld [vmem:[#allocation2 + $0xd4] sm:$0xf]
    %v226 = vld [vmem:[#allocation2 + $0xd8] sm:$0xff]
    %v227 = vld [vmem:[#allocation2 + $0xe0] sm:$0xf]
    %v228 = vld [vmem:[#allocation2 + $0xe4] sm:$0xff]
    %v229 = vld [vmem:[#allocation2 + $0xec] sm:$0xf]
    %v230 = vld [vmem:[#allocation2 + $0xf0] sm:$0xff]
    %v231 = vld [vmem:[#allocation2 + $0xf8] sm:$0xf]
    %v232 = vld [vmem:[#allocation2 + $0xfc] sm:$0xff]
    %v233 = vld [vmem:[#allocation2 + $0x104] sm:$0xf]
    %v234 = vld [vmem:[#allocation2 + $0x108] sm:$0xff]
    %v235 = vld [vmem:[#allocation2 + $0x110] sm:$0xf]
    %v236 = vld [vmem:[#allocation2 + $0x114] sm:$0xff]
    %v237 = vld [vmem:[#allocation2 + $0x11c] sm:$0xf]
    %v238 = vld [vmem:[#allocation2 + $0x120] sm:$0xff]
    %v239 = vld [vmem:[#allocation2 + $0x128] sm:$0xf]
    %v240 = vld [vmem:[#allocation2 + $0x12c] sm:$0xff]
    %v241 = vld [vmem:[#allocation2 + $0x134] sm:$0xf]
    %v242 = vld [vmem:[#allocation2 + $0x138] sm:$0xff]
    %v243 = vld [vmem:[#allocation2 + $0x140] sm:$0xf]
    %v244 = vld [vmem:[#allocation2 + $0x144] sm:$0xff]
    %v245 = vld [vmem:[#allocation2 + $0x14c] sm:$0xf]
    %v246 = vld [vmem:[#allocation2 + $0x150] sm:$0xff]
    %v247 = vld [vmem:[#allocation2 + $0x158] sm:$0xf]
    %v248 = vld [vmem:[#allocation2 + $0x15c] sm:$0xff]
    %v249 = vld [vmem:[#allocation2 + $0x164] sm:$0xf]
    %v250 = vld [vmem:[#allocation2 + $0x168] sm:$0xff]
    %v251 = vld [vmem:[#allocation2 + $0x170] sm:$0xf]
    %v252 = vld [vmem:[#allocation2 + $0x174] sm:$0xff]
    %v253 = vld [vmem:[#allocation2 + $0x17c] sm:$0xf]
    %v254 = vld [vmem:[#allocation2 + $0x180] sm:$0xff]
    %v255 = vld [vmem:[#allocation2 + $0x188] sm:$0xf]
    %v256 = vld [vmem:[#allocation2 + $0x18c] sm:$0xff]
    %v257 = vld [vmem:[#allocation2 + $0x194] sm:$0xf]
    %v258 = vld [vmem:[#allocation2 + $0x198] sm:$0xff]
    %v259 = vld [vmem:[#allocation2 + $0x1a0] sm:$0xf]
    %v260 = vld [vmem:[#allocation2 + $0x1a4] sm:$0xff]
    %v261 = vld [vmem:[#allocation2 + $0x1ac] sm:$0xf]
    %v262 = vld [vmem:[#allocation2 + $0x1b0] sm:$0xff]
    %v263 = vld [vmem:[#allocation2 + $0x1b8] sm:$0xf]
    %v264 = vld [vmem:[#allocation2 + $0x1bc] sm:$0xff]
    %v265 = vld [vmem:[#allocation2 + $0x1c4] sm:$0xf]
    %v266 = vld [vmem:[#allocation2 + $0x1c8] sm:$0xff]
    %v267 = vld [vmem:[#allocation2 + $0x1d0] sm:$0xf]
    %v268 = vld [vmem:[#allocation2 + $0x1d4] sm:$0xff]
    %v269 = vld [vmem:[#allocation2 + $0x1dc] sm:$0xf]
    %v270 = vld [vmem:[#allocation2 + $0x1e0] sm:$0xff]
    %v271 = vld [vmem:[#allocation2 + $0x1e8] sm:$0xf]
    %v272 = vld [vmem:[#allocation2 + $0x1ec] sm:$0xff]
    %v273 = vld [vmem:[#allocation2 + $0x1f4] sm:$0xf]
    %v274 = vld [vmem:[#allocation2 + $0x1f8] sm:$0xff]
    %v275 = vld [vmem:[#allocation2 + $0x200] sm:$0xf]
    %v276 = vld [vmem:[#allocation2 + $0x204] sm:$0xff]
    %v277 = vld [vmem:[#allocation2 + $0x20c] sm:$0xf]
    %v278 = vld [vmem:[#allocation2 + $0x210] sm:$0xff]
    %v279 = vld [vmem:[#allocation2 + $0x218] sm:$0xf]
    %v280 = vld [vmem:[#allocation2 + $0x21c] sm:$0xff]
    %v281 = vld [vmem:[#allocation2 + $0x224] sm:$0xf]
    %v282 = vld [vmem:[#allocation2 + $0x228] sm:$0xff]
    %v283 = vld [vmem:[#allocation2 + $0x230] sm:$0xf]
    %v284 = vld [vmem:[#allocation2 + $0x234] sm:$0xff]
    %v285 = vld [vmem:[#allocation2 + $0x23c] sm:$0xf]
    %v382 = vunpack.c.l.b16 %v190
    %v383 = vunpack.c.h.b16 %v190
    %v384 = vunpack.c.l.b16 %v191
    %v385 = vunpack.c.l.b16 %v192
    %v386 = vunpack.c.h.b16 %v192
    %v387 = vunpack.c.l.b16 %v193
    %v388 = vunpack.c.l.b16 %v194
    %v389 = vunpack.c.h.b16 %v194
    %v390 = vunpack.c.l.b16 %v195
    %v391 = vunpack.c.l.b16 %v196
    %v392 = vunpack.c.h.b16 %v196
    %v393 = vunpack.c.l.b16 %v197
    %v394 = vunpack.c.l.b16 %v198
    %v395 = vunpack.c.h.b16 %v198
    %v396 = vunpack.c.l.b16 %v199
    %v397 = vunpack.c.l.b16 %v200
    %v398 = vunpack.c.h.b16 %v200
    %v399 = vunpack.c.l.b16 %v201
    %v400 = vunpack.c.l.b16 %v202
    %v401 = vunpack.c.h.b16 %v202
    %v402 = vunpack.c.l.b16 %v203
    %v403 = vunpack.c.l.b16 %v204
    %v404 = vunpack.c.h.b16 %v204
    %v405 = vunpack.c.l.b16 %v205
    %v406 = vunpack.c.l.b16 %v206
    %v407 = vunpack.c.h.b16 %v206
    %v408 = vunpack.c.l.b16 %v207
    %v409 = vunpack.c.l.b16 %v208
    %v410 = vunpack.c.h.b16 %v208
    %v411 = vunpack.c.l.b16 %v209
    %v412 = vunpack.c.l.b16 %v210
    %v413 = vunpack.c.h.b16 %v210
    %v414 = vunpack.c.l.b16 %v211
    %v415 = vunpack.c.l.b16 %v212
    %v416 = vunpack.c.h.b16 %v212
    %v417 = vunpack.c.l.b16 %v213
    %v418 = vunpack.c.l.b16 %v214
    %v419 = vunpack.c.h.b16 %v214
    %v420 = vunpack.c.l.b16 %v215
    %v421 = vunpack.c.l.b16 %v216
    %v422 = vunpack.c.h.b16 %v216
    %v423 = vunpack.c.l.b16 %v217
    %v424 = vunpack.c.l.b16 %v218
    %v425 = vunpack.c.h.b16 %v218
    %v426 = vunpack.c.l.b16 %v219
    %v427 = vunpack.c.l.b16 %v220
    %v428 = vunpack.c.h.b16 %v220
    %v429 = vunpack.c.l.b16 %v221
    %v430 = vunpack.c.l.b16 %v222
    %v431 = vunpack.c.h.b16 %v222
    %v432 = vunpack.c.l.b16 %v223
    %v433 = vunpack.c.l.b16 %v224
    %v434 = vunpack.c.h.b16 %v224
    %v435 = vunpack.c.l.b16 %v225
    %v436 = vunpack.c.l.b16 %v226
    %v437 = vunpack.c.h.b16 %v226
    %v438 = vunpack.c.l.b16 %v227
    %v439 = vunpack.c.l.b16 %v228
    %v440 = vunpack.c.h.b16 %v228
    %v441 = vunpack.c.l.b16 %v229
    %v442 = vunpack.c.l.b16 %v230
    %v443 = vunpack.c.h.b16 %v230
    %v444 = vunpack.c.l.b16 %v231
    %v445 = vunpack.c.l.b16 %v232
    %v446 = vunpack.c.h.b16 %v232
    %v447 = vunpack.c.l.b16 %v233
    %v448 = vunpack.c.l.b16 %v234
    %v449 = vunpack.c.h.b16 %v234
    %v450 = vunpack.c.l.b16 %v235
    %v451 = vunpack.c.l.b16 %v236
    %v452 = vunpack.c.h.b16 %v236
    %v453 = vunpack.c.l.b16 %v237
    %v454 = vunpack.c.l.b16 %v238
    %v455 = vunpack.c.h.b16 %v238
    %v456 = vunpack.c.l.b16 %v239
    %v457 = vunpack.c.l.b16 %v240
    %v458 = vunpack.c.h.b16 %v240
    %v459 = vunpack.c.l.b16 %v241
    %v460 = vunpack.c.l.b16 %v242
    %v461 = vunpack.c.h.b16 %v242
    %v462 = vunpack.c.l.b16 %v243
    %v463 = vunpack.c.l.b16 %v244
    %v464 = vunpack.c.h.b16 %v244
    %v465 = vunpack.c.l.b16 %v245
    %v466 = vunpack.c.l.b16 %v246
    %v467 = vunpack.c.h.b16 %v246
    %v468 = vunpack.c.l.b16 %v247
    %v469 = vunpack.c.l.b16 %v248
    %v470 = vunpack.c.h.b16 %v248
    %v471 = vunpack.c.l.b16 %v249
    %v472 = vunpack.c.l.b16 %v250
    %v473 = vunpack.c.h.b16 %v250
    %v474 = vunpack.c.l.b16 %v251
    %v475 = vunpack.c.l.b16 %v252
    %v476 = vunpack.c.h.b16 %v252
    %v477 = vunpack.c.l.b16 %v253
    %v478 = vunpack.c.l.b16 %v254
    %v479 = vunpack.c.h.b16 %v254
    %v480 = vunpack.c.l.b16 %v255
    %v481 = vunpack.c.l.b16 %v256
    %v482 = vunpack.c.h.b16 %v256
    %v483 = vunpack.c.l.b16 %v257
    %v484 = vunpack.c.l.b16 %v258
    %v485 = vunpack.c.h.b16 %v258
    %v486 = vunpack.c.l.b16 %v259
    %v487 = vunpack.c.l.b16 %v260
    %v488 = vunpack.c.h.b16 %v260
    %v489 = vunpack.c.l.b16 %v261
    %v490 = vunpack.c.l.b16 %v262
    %v491 = vunpack.c.h.b16 %v262
    %v492 = vunpack.c.l.b16 %v263
    %v493 = vunpack.c.l.b16 %v264
    %v494 = vunpack.c.h.b16 %v264
    %v495 = vunpack.c.l.b16 %v265
    %v496 = vunpack.c.l.b16 %v266
    %v497 = vunpack.c.h.b16 %v266
    %v498 = vunpack.c.l.b16 %v267
    %v499 = vunpack.c.l.b16 %v268
    %v500 = vunpack.c.h.b16 %v268
    %v501 = vunpack.c.l.b16 %v269
    %v502 = vunpack.c.l.b16 %v270
    %v503 = vunpack.c.h.b16 %v270
    %v504 = vunpack.c.l.b16 %v271
    %v505 = vunpack.c.l.b16 %v272
    %v506 = vunpack.c.h.b16 %v272
    %v507 = vunpack.c.l.b16 %v273
    %v508 = vunpack.c.l.b16 %v274
    %v509 = vunpack.c.h.b16 %v274
    %v510 = vunpack.c.l.b16 %v275
    %v511 = vunpack.c.l.b16 %v276
    %v512 = vunpack.c.h.b16 %v276
    %v513 = vunpack.c.l.b16 %v277
    %v514 = vunpack.c.l.b16 %v278
    %v515 = vunpack.c.h.b16 %v278
    %v516 = vunpack.c.l.b16 %v279
    %v517 = vunpack.c.l.b16 %v280
    %v518 = vunpack.c.h.b16 %v280
    %v519 = vunpack.c.l.b16 %v281
    %v520 = vunpack.c.l.b16 %v282
    %v521 = vunpack.c.h.b16 %v282
    %v522 = vunpack.c.l.b16 %v283
    %v523 = vunpack.c.l.b16 %v284
    %v524 = vunpack.c.h.b16 %v284
    %v525 = vunpack.c.l.b16 %v285
    %v526 = vpack.c.b16 %v385, %v382
    %v527 = vpack.c.b16 %v386, %v383
    %v528 = vpack.c.b16 %v387, %v384
    %v529 = vpack.c.b16 %v391, %v388
    %v530 = vpack.c.b16 %v392, %v389
    %v531 = vpack.c.b16 %v393, %v390
    %v532 = vpack.c.b16 %v397, %v394
    %v533 = vpack.c.b16 %v398, %v395
    %v534 = vpack.c.b16 %v399, %v396
    %v535 = vpack.c.b16 %v403, %v400
    %v536 = vpack.c.b16 %v404, %v401
    %v537 = vpack.c.b16 %v405, %v402
    %v538 = vpack.c.b16 %v409, %v406
    %v539 = vpack.c.b16 %v410, %v407
    %v540 = vpack.c.b16 %v411, %v408
    %v541 = vpack.c.b16 %v415, %v412
    %v542 = vpack.c.b16 %v416, %v413
    %v543 = vpack.c.b16 %v417, %v414
    %v544 = vpack.c.b16 %v421, %v418
    %v545 = vpack.c.b16 %v422, %v419
    %v546 = vpack.c.b16 %v423, %v420
    %v547 = vpack.c.b16 %v427, %v424
    %v548 = vpack.c.b16 %v428, %v425
    %v549 = vpack.c.b16 %v429, %v426
    %v550 = vpack.c.b16 %v433, %v430
    %v551 = vpack.c.b16 %v434, %v431
    %v552 = vpack.c.b16 %v435, %v432
    %v553 = vpack.c.b16 %v439, %v436
    %v554 = vpack.c.b16 %v440, %v437
    %v555 = vpack.c.b16 %v441, %v438
    %v556 = vpack.c.b16 %v445, %v442
    %v557 = vpack.c.b16 %v446, %v443
    %v558 = vpack.c.b16 %v447, %v444
    %v559 = vpack.c.b16 %v451, %v448
    %v560 = vpack.c.b16 %v452, %v449
    %v561 = vpack.c.b16 %v453, %v450
    %v562 = vpack.c.b16 %v457, %v454
    %v563 = vpack.c.b16 %v458, %v455
    %v564 = vpack.c.b16 %v459, %v456
    %v565 = vpack.c.b16 %v463, %v460
    %v566 = vpack.c.b16 %v464, %v461
    %v567 = vpack.c.b16 %v465, %v462
    %v568 = vpack.c.b16 %v469, %v466
    %v569 = vpack.c.b16 %v470, %v467
    %v570 = vpack.c.b16 %v471, %v468
    %v571 = vpack.c.b16 %v475, %v472
    %v572 = vpack.c.b16 %v476, %v473
    %v573 = vpack.c.b16 %v477, %v474
    %v574 = vpack.c.b16 %v481, %v478
    %v575 = vpack.c.b16 %v482, %v479
    %v576 = vpack.c.b16 %v483, %v480
    %v577 = vpack.c.b16 %v487, %v484
    %v578 = vpack.c.b16 %v488, %v485
    %v579 = vpack.c.b16 %v489, %v486
    %v580 = vpack.c.b16 %v493, %v490
    %v581 = vpack.c.b16 %v494, %v491
    %v582 = vpack.c.b16 %v495, %v492
    %v583 = vpack.c.b16 %v499, %v496
    %v584 = vpack.c.b16 %v500, %v497
    %v585 = vpack.c.b16 %v501, %v498
    %v586 = vpack.c.b16 %v505, %v502
    %v587 = vpack.c.b16 %v506, %v503
    %v588 = vpack.c.b16 %v507, %v504
    %v589 = vpack.c.b16 %v511, %v508
    %v590 = vpack.c.b16 %v512, %v509
    %v591 = vpack.c.b16 %v513, %v510
    %v592 = vpack.c.b16 %v517, %v514
    %v593 = vpack.c.b16 %v518, %v515
    %v594 = vpack.c.b16 %v519, %v516
    %v595 = vpack.c.b16 %v523, %v520
    %v596 = vpack.c.b16 %v524, %v521
    %v597 = vpack.c.b16 %v525, %v522
    %670 = vmatprep.subr.bf16.mxu0 %v527
    %671 = vmatpush1.bf16.msra.mxu0 %v526
    %672 = vmatprep.subr.bf16.mxu0 %v530
    %673 = vmatpush1.bf16.msra.mxu0 %v529
    %674 = vmatprep.subr.bf16.mxu0 %v533
    %675 = vmatpush1.bf16.msra.mxu0 %v532
    %676 = vmatprep.subr.bf16.mxu0 %v536
    %677 = vmatpush1.bf16.msra.mxu0 %v535
    %678 = vmatprep.subr.bf16.mxu0 %v539
    %679 = vmatpush1.bf16.msra.mxu0 %v538
    %680 = vmatprep.subr.bf16.mxu0 %v542
    %681 = vmatpush1.bf16.msra.mxu0 %v541
    %682 = vmatprep.subr.bf16.mxu0 %v545
    %683 = vmatpush1.bf16.msra.mxu0 %v544
    %684 = vmatprep.subr.bf16.mxu0 %v548
    %685 = vmatpush1.bf16.msra.mxu0 %v547
    %686 = vmatprep.subr.bf16.mxu0 %v551
    %687 = vmatpush1.bf16.msra.mxu0 %v550
    %688 = vmatprep.subr.bf16.mxu0 %v554
    %689 = vmatpush1.bf16.msra.mxu0 %v553
    %690 = vmatprep.subr.bf16.mxu0 %v557
    %691 = vmatpush1.bf16.msra.mxu0 %v556
    %692 = vmatprep.subr.bf16.mxu0 %v560
    %693 = vmatpush1.bf16.msra.mxu0 %v559
    %694 = vmatprep.subr.bf16.mxu0 %v563
    %695 = vmatpush1.bf16.msra.mxu0 %v562
    %696 = vmatprep.subr.bf16.mxu0 %v566
    %697 = vmatpush1.bf16.msra.mxu0 %v565
    %698 = vmatprep.subr.bf16.mxu0 %v569
    %699 = vmatpush1.bf16.msra.mxu0 %v568
    %700 = vmatprep.subr.bf16.mxu0 %v572
    %701 = vmatpush1.bf16.msra.mxu0 %v571
    %702 = vmatprep.mubr.bf16.mxu0 %v177
    %703 = vmatmul.mubr.bf16.gmra.mrb[0].mxu0 %v176
    %v704 = vpop.f32.mrb[0].mxu0
    %v705 = vadd.f32 0.0, %v704
    %v706 = vpop.f32.mrb[0].mxu0
    %v707 = vadd.f32 0.0, %v706
    %v708 = vpop.f32.mrb[0].mxu0
    %v709 = vadd.f32 0.0, %v708
    %v710 = vpop.f32.mrb[0].mxu0
    %v711 = vadd.f32 0.0, %v710
    %712 = vdwg.mxu0
    %713 = vmatprep.subr.bf16.mxu0 %v575
    %714 = vmatpush1.bf16.msra.mxu0 %v574
    %715 = vmatprep.subr.bf16.mxu0 %v578
    %716 = vmatpush1.bf16.msra.mxu0 %v577
    %717 = vmatprep.subr.bf16.mxu0 %v581
    %718 = vmatpush1.bf16.msra.mxu0 %v580
    %719 = vmatprep.subr.bf16.mxu0 %v584
    %720 = vmatpush1.bf16.msra.mxu0 %v583
    %721 = vmatprep.subr.bf16.mxu0 %v587
    %722 = vmatpush1.bf16.msra.mxu0 %v586
    %723 = vmatprep.subr.bf16.mxu0 %v590
    %724 = vmatpush1.bf16.msra.mxu0 %v589
    %725 = vmatprep.subr.bf16.mxu0 %v593
    %726 = vmatpush1.bf16.msra.mxu0 %v592
    %727 = vmatprep.subr.bf16.mxu0 %v596
    %728 = vmatpush1.bf16.msra.mxu0 %v595
    %729 = vmatprep.subr.bf16.mxu0 0
    %730 = vmatpush1.bf16.msra.mxu0 0
    %731 = vmatprep.subr.bf16.mxu0 0
    %732 = vmatpush1.bf16.msra.mxu0 0
    %733 = vmatprep.subr.bf16.mxu0 0
    %734 = vmatpush1.bf16.msra.mxu0 0
    %735 = vmatprep.subr.bf16.mxu0 0
    %736 = vmatpush1.bf16.msra.mxu0 0
    %737 = vmatprep.subr.bf16.mxu0 0
    %738 = vmatpush1.bf16.msra.mxu0 0
    %739 = vmatprep.subr.bf16.mxu0 0
    %740 = vmatpush1.bf16.msra.mxu0 0
    %741 = vmatprep.subr.bf16.mxu0 0
    %742 = vmatpush1.bf16.msra.mxu0 0
    %743 = vmatprep.subr.bf16.mxu0 0
    %744 = vmatpush1.bf16.msra.mxu0 0
    %745 = vmatprep.mubr.bf16.mxu0 0
    %746 = vmatmul.mubr.bf16.gmra.mrb[0].mxu0 %v178
    %v747 = vpop.f32.mrb[0].mxu0
    %v748 = vadd.f32 %v705, %v747
    %v749 = vpop.f32.mrb[0].mxu0
    %v750 = vadd.f32 %v707, %v749
    %v751 = vpop.f32.mrb[0].mxu0
    %v752 = vadd.f32 %v709, %v751
    %v753 = vpop.f32.mrb[0].mxu0
    %v754 = vadd.f32 %v711, %v753
    %755 = vdwg.mxu0
    %756 = vmatprep.subr.bf16.mxu0 0
    %757 = vmatpush1.bf16.msra.mxu0 %v528
    %758 = vmatprep.subr.bf16.mxu0 0
    %759 = vmatpush1.bf16.msra.mxu0 %v531
    %760 = vmatprep.subr.bf16.mxu0 0
    %761 = vmatpush1.bf16.msra.mxu0 %v534
    %762 = vmatprep.subr.bf16.mxu0 0
    %763 = vmatpush1.bf16.msra.mxu0 %v537
    %764 = vmatprep.subr.bf16.mxu0 0
    %765 = vmatpush1.bf16.msra.mxu0 %v540
    %766 = vmatprep.subr.bf16.mxu0 0
    %767 = vmatpush1.bf16.msra.mxu0 %v543
    %768 = vmatprep.subr.bf16.mxu0 0
    %769 = vmatpush1.bf16.msra.mxu0 %v546
    %770 = vmatprep.subr.bf16.mxu0 0
    %771 = vmatpush1.bf16.msra.mxu0 %v549
    %772 = vmatprep.subr.bf16.mxu0 0
    %773 = vmatpush1.bf16.msra.mxu0 %v552
    %774 = vmatprep.subr.bf16.mxu0 0
    %775 = vmatpush1.bf16.msra.mxu0 %v555
    %776 = vmatprep.subr.bf16.mxu0 0
    %777 = vmatpush1.bf16.msra.mxu0 %v558
    %778 = vmatprep.subr.bf16.mxu0 0
    %779 = vmatpush1.bf16.msra.mxu0 %v561
    %780 = vmatprep.subr.bf16.mxu0 0
    %781 = vmatpush1.bf16.msra.mxu0 %v564
    %782 = vmatprep.subr.bf16.mxu0 0
    %783 = vmatpush1.bf16.msra.mxu0 %v567
    %784 = vmatprep.subr.bf16.mxu0 0
    %785 = vmatpush1.bf16.msra.mxu0 %v570
    %786 = vmatprep.subr.bf16.mxu0 0
    %787 = vmatpush1.bf16.msra.mxu0 %v573
    %788 = vmatprep.mubr.bf16.mxu0 %v177
    %789 = vmatmul.mubr.bf16.gmra.mrb[0].mxu0 %v176
    %v790 = vpop.f32.mrb[0].mxu0
    %v791 = vadd.f32 0.0, %v790
    %v792 = vpop.f32.mrb[0].mxu0
    %v793 = vpop.f32.mrb[0].mxu0
    %v794 = vadd.f32 0.0, %v793
    %v795 = vpop.f32.mrb[0].mxu0
    %796 = vdwg.mxu0
    %797 = vmatprep.subr.bf16.mxu0 0
    %798 = vmatpush1.bf16.msra.mxu0 %v576
    %799 = vmatprep.subr.bf16.mxu0 0
    %800 = vmatpush1.bf16.msra.mxu0 %v579
    %801 = vmatprep.subr.bf16.mxu0 0
    %802 = vmatpush1.bf16.msra.mxu0 %v582
    %803 = vmatprep.subr.bf16.mxu0 0
    %804 = vmatpush1.bf16.msra.mxu0 %v585
    %805 = vmatprep.subr.bf16.mxu0 0
    %806 = vmatpush1.bf16.msra.mxu0 %v588
    %807 = vmatprep.subr.bf16.mxu0 0
    %808 = vmatpush1.bf16.msra.mxu0 %v591
    %809 = vmatprep.subr.bf16.mxu0 0
    %810 = vmatpush1.bf16.msra.mxu0 %v594
    %811 = vmatprep.subr.bf16.mxu0 0
    %812 = vmatpush1.bf16.msra.mxu0 %v597
    %813 = vmatprep.subr.bf16.mxu0 0
    %814 = vmatpush1.bf16.msra.mxu0 0
    %815 = vmatprep.subr.bf16.mxu0 0
    %816 = vmatpush1.bf16.msra.mxu0 0
    %817 = vmatprep.subr.bf16.mxu0 0
    %818 = vmatpush1.bf16.msra.mxu0 0
    %819 = vmatprep.subr.bf16.mxu0 0
    %820 = vmatpush1.bf16.msra.mxu0 0
    %821 = vmatprep.subr.bf16.mxu0 0
    %822 = vmatpush1.bf16.msra.mxu0 0
    %823 = vmatprep.subr.bf16.mxu0 0
    %824 = vmatpush1.bf16.msra.mxu0 0
    %825 = vmatprep.subr.bf16.mxu0 0
    %826 = vmatpush1.bf16.msra.mxu0 0
    %827 = vmatprep.subr.bf16.mxu0 0
    %828 = vmatpush1.bf16.msra.mxu0 0
    %829 = vmatprep.mubr.bf16.mxu0 0
    %830 = vmatmul.mubr.bf16.gmra.mrb[0].mxu0 %v178
    %v831 = vpop.f32.mrb[0].mxu0
    %v832 = vadd.f32 %v791, %v831
    %v833 = vpop.f32.mrb[0].mxu0
    %v834 = vpop.f32.mrb[0].mxu0
    %v835 = vadd.f32 %v794, %v834
    %v836 = vpop.f32.mrb[0].mxu0
    %837 = vdwg.mxu0
    %v838 = vld [vmem:[%s1] sm:$0xff]
    %v839 = vld [vmem:[%s1 + $0x8] sm:$0xff]
    %v840 = vld [vmem:[%s1 + $0x10] sm:$0xff]
    %v841 = vld [vmem:[%s1 + $0x18] sm:$0xff]
    %v842 = vld [vmem:[%s1 + $0x20] sm:$0xff]
    %v843 = vld [vmem:[%s1 + $0x28] sm:$0xff]
    %v844 = vpack.c.bf16 %v841, %v838
    %v845 = vpack.c.bf16 %v842, %v839
    %v846 = vpack.c.bf16 %v843, %v840
    %v847 = vld [vmem:[#allocation5] sm:$0xff]
    %v848 = vld [vmem:[#allocation5 + $0x8] sm:$0xf]
    %v849 = vld [vmem:[#allocation5 + $0xc] sm:$0xff]
    %v850 = vld [vmem:[#allocation5 + $0x14] sm:$0xf]
    %v851 = vld [vmem:[#allocation5 + $0x18] sm:$0xff]
    %v852 = vld [vmem:[#allocation5 + $0x20] sm:$0xf]
    %v853 = vld [vmem:[#allocation5 + $0x24] sm:$0xff]
    %v854 = vld [vmem:[#allocation5 + $0x2c] sm:$0xf]
    %v855 = vld [vmem:[#allocation5 + $0x30] sm:$0xff]
    %v856 = vld [vmem:[#allocation5 + $0x38] sm:$0xf]
    %v857 = vld [vmem:[#allocation5 + $0x3c] sm:$0xff]
    %v858 = vld [vmem:[#allocation5 + $0x44] sm:$0xf]
    %v859 = vld [vmem:[#allocation5 + $0x48] sm:$0xff]
    %v860 = vld [vmem:[#allocation5 + $0x50] sm:$0xf]
    %v861 = vld [vmem:[#allocation5 + $0x54] sm:$0xff]
    %v862 = vld [vmem:[#allocation5 + $0x5c] sm:$0xf]
    %v863 = vld [vmem:[#allocation5 + $0x60] sm:$0xff]
    %v864 = vld [vmem:[#allocation5 + $0x68] sm:$0xf]
    %v865 = vld [vmem:[#allocation5 + $0x6c] sm:$0xff]
    %v866 = vld [vmem:[#allocation5 + $0x74] sm:$0xf]
    %v867 = vld [vmem:[#allocation5 + $0x78] sm:$0xff]
    %v868 = vld [vmem:[#allocation5 + $0x80] sm:$0xf]
    %v869 = vld [vmem:[#allocation5 + $0x84] sm:$0xff]
    %v870 = vld [vmem:[#allocation5 + $0x8c] sm:$0xf]
    %v871 = vld [vmem:[#allocation5 + $0x90] sm:$0xff]
    %v872 = vld [vmem:[#allocation5 + $0x98] sm:$0xf]
    %v873 = vld [vmem:[#allocation5 + $0x9c] sm:$0xff]
    %v874 = vld [vmem:[#allocation5 + $0xa4] sm:$0xf]
    %v875 = vld [vmem:[#allocation5 + $0xa8] sm:$0xff]
    %v876 = vld [vmem:[#allocation5 + $0xb0] sm:$0xf]
    %v877 = vld [vmem:[#allocation5 + $0xb4] sm:$0xff]
    %v878 = vld [vmem:[#allocation5 + $0xbc] sm:$0xf]
    %v879 = vld [vmem:[#allocation5 + $0xc0] sm:$0xff]
    %v880 = vld [vmem:[#allocation5 + $0xc8] sm:$0xf]
    %v881 = vld [vmem:[#allocation5 + $0xcc] sm:$0xff]
    %v882 = vld [vmem:[#allocation5 + $0xd4] sm:$0xf]
    %v883 = vld [vmem:[#allocation5 + $0xd8] sm:$0xff]
    %v884 = vld [vmem:[#allocation5 + $0xe0] sm:$0xf]
    %v885 = vld [vmem:[#allocation5 + $0xe4] sm:$0xff]
    %v886 = vld [vmem:[#allocation5 + $0xec] sm:$0xf]
    %v887 = vld [vmem:[#allocation5 + $0xf0] sm:$0xff]
    %v888 = vld [vmem:[#allocation5 + $0xf8] sm:$0xf]
    %v889 = vld [vmem:[#allocation5 + $0xfc] sm:$0xff]
    %v890 = vld [vmem:[#allocation5 + $0x104] sm:$0xf]
    %v891 = vld [vmem:[#allocation5 + $0x108] sm:$0xff]
    %v892 = vld [vmem:[#allocation5 + $0x110] sm:$0xf]
    %v893 = vld [vmem:[#allocation5 + $0x114] sm:$0xff]
    %v894 = vld [vmem:[#allocation5 + $0x11c] sm:$0xf]
    %v895 = vld [vmem:[#allocation5 + $0x120] sm:$0xff]
    %v896 = vld [vmem:[#allocation5 + $0x128] sm:$0xf]
    %v897 = vld [vmem:[#allocation5 + $0x12c] sm:$0xff]
    %v898 = vld [vmem:[#allocation5 + $0x134] sm:$0xf]
    %v899 = vld [vmem:[#allocation5 + $0x138] sm:$0xff]
    %v900 = vld [vmem:[#allocation5 + $0x140] sm:$0xf]
    %v901 = vld [vmem:[#allocation5 + $0x144] sm:$0xff]
    %v902 = vld [vmem:[#allocation5 + $0x14c] sm:$0xf]
    %v903 = vld [vmem:[#allocation5 + $0x150] sm:$0xff]
    %v904 = vld [vmem:[#allocation5 + $0x158] sm:$0xf]
    %v905 = vld [vmem:[#allocation5 + $0x15c] sm:$0xff]
    %v906 = vld [vmem:[#allocation5 + $0x164] sm:$0xf]
    %v907 = vld [vmem:[#allocation5 + $0x168] sm:$0xff]
    %v908 = vld [vmem:[#allocation5 + $0x170] sm:$0xf]
    %v909 = vld [vmem:[#allocation5 + $0x174] sm:$0xff]
    %v910 = vld [vmem:[#allocation5 + $0x17c] sm:$0xf]
    %v911 = vld [vmem:[#allocation5 + $0x180] sm:$0xff]
    %v912 = vld [vmem:[#allocation5 + $0x188] sm:$0xf]
    %v913 = vld [vmem:[#allocation5 + $0x18c] sm:$0xff]
    %v914 = vld [vmem:[#allocation5 + $0x194] sm:$0xf]
    %v915 = vld [vmem:[#allocation5 + $0x198] sm:$0xff]
    %v916 = vld [vmem:[#allocation5 + $0x1a0] sm:$0xf]
    %v917 = vld [vmem:[#allocation5 + $0x1a4] sm:$0xff]
    %v918 = vld [vmem:[#allocation5 + $0x1ac] sm:$0xf]
    %v919 = vld [vmem:[#allocation5 + $0x1b0] sm:$0xff]
    %v920 = vld [vmem:[#allocation5 + $0x1b8] sm:$0xf]
    %v921 = vld [vmem:[#allocation5 + $0x1bc] sm:$0xff]
    %v922 = vld [vmem:[#allocation5 + $0x1c4] sm:$0xf]
    %v923 = vld [vmem:[#allocation5 + $0x1c8] sm:$0xff]
    %v924 = vld [vmem:[#allocation5 + $0x1d0] sm:$0xf]
    %v925 = vld [vmem:[#allocation5 + $0x1d4] sm:$0xff]
    %v926 = vld [vmem:[#allocation5 + $0x1dc] sm:$0xf]
    %v927 = vld [vmem:[#allocation5 + $0x1e0] sm:$0xff]
    %v928 = vld [vmem:[#allocation5 + $0x1e8] sm:$0xf]
    %v929 = vld [vmem:[#allocation5 + $0x1ec] sm:$0xff]
    %v930 = vld [vmem:[#allocation5 + $0x1f4] sm:$0xf]
    %v931 = vld [vmem:[#allocation5 + $0x1f8] sm:$0xff]
    %v932 = vld [vmem:[#allocation5 + $0x200] sm:$0xf]
    %v933 = vld [vmem:[#allocation5 + $0x204] sm:$0xff]
    %v934 = vld [vmem:[#allocation5 + $0x20c] sm:$0xf]
    %v935 = vld [vmem:[#allocation5 + $0x210] sm:$0xff]
    %v936 = vld [vmem:[#allocation5 + $0x218] sm:$0xf]
    %v937 = vld [vmem:[#allocation5 + $0x21c] sm:$0xff]
    %v938 = vld [vmem:[#allocation5 + $0x224] sm:$0xf]
    %v939 = vld [vmem:[#allocation5 + $0x228] sm:$0xff]
    %v940 = vld [vmem:[#allocation5 + $0x230] sm:$0xf]
    %v941 = vld [vmem:[#allocation5 + $0x234] sm:$0xff]
    %v942 = vld [vmem:[#allocation5 + $0x23c] sm:$0xf]
    %v944 = vlaneseq
    %v945 = vshrl.u32 %v944, 7
    %v946 = vsub.s32 0, %v945
    %v947 = vrot.slane %v179, %v946
    %v948 = vlaneseq
    %v949 = vshrl.u32 %v948, 7
    %v950 = vsub.s32 1, %v949
    %v951 = vrot.slane %v179, %v950
    %v952 = vlaneseq
    %v953 = vshrl.u32 %v952, 7
    %v954 = vsub.s32 2, %v953
    %v955 = vrot.slane %v179, %v954
    %v1055 = vunpack.c.l.b16 %v847
    %v1056 = vunpack.c.h.b16 %v847
    %v1057 = vunpack.c.l.b16 %v848
    %v1058 = vunpack.c.l.b16 %v849
    %v1059 = vunpack.c.h.b16 %v849
    %v1060 = vunpack.c.l.b16 %v850
    %v1061 = vunpack.c.l.b16 %v851
    %v1062 = vunpack.c.h.b16 %v851
    %v1063 = vunpack.c.l.b16 %v852
    %v1064 = vunpack.c.l.b16 %v853
    %v1065 = vunpack.c.h.b16 %v853
    %v1066 = vunpack.c.l.b16 %v854
    %v1067 = vunpack.c.l.b16 %v855
    %v1068 = vunpack.c.h.b16 %v855
    %v1069 = vunpack.c.l.b16 %v856
    %v1070 = vunpack.c.l.b16 %v857
    %v1071 = vunpack.c.h.b16 %v857
    %v1072 = vunpack.c.l.b16 %v858
    %v1073 = vunpack.c.l.b16 %v859
    %v1074 = vunpack.c.h.b16 %v859
    %v1075 = vunpack.c.l.b16 %v860
    %v1076 = vunpack.c.l.b16 %v861
    %v1077 = vunpack.c.h.b16 %v861
    %v1078 = vunpack.c.l.b16 %v862
    %v1079 = vunpack.c.l.b16 %v863
    %v1080 = vunpack.c.h.b16 %v863
    %v1081 = vunpack.c.l.b16 %v864
    %v1082 = vunpack.c.l.b16 %v865
    %v1083 = vunpack.c.h.b16 %v865
    %v1084 = vunpack.c.l.b16 %v866
    %v1085 = vunpack.c.l.b16 %v867
    %v1086 = vunpack.c.h.b16 %v867
    %v1087 = vunpack.c.l.b16 %v868
    %v1088 = vunpack.c.l.b16 %v869
    %v1089 = vunpack.c.h.b16 %v869
    %v1090 = vunpack.c.l.b16 %v870
    %v1091 = vunpack.c.l.b16 %v871
    %v1092 = vunpack.c.h.b16 %v871
    %v1093 = vunpack.c.l.b16 %v872
    %v1094 = vunpack.c.l.b16 %v873
    %v1095 = vunpack.c.h.b16 %v873
    %v1096 = vunpack.c.l.b16 %v874
    %v1097 = vunpack.c.l.b16 %v875
    %v1098 = vunpack.c.h.b16 %v875
    %v1099 = vunpack.c.l.b16 %v876
    %v1100 = vunpack.c.l.b16 %v877
    %v1101 = vunpack.c.h.b16 %v877
    %v1102 = vunpack.c.l.b16 %v878
    %v1103 = vunpack.c.l.b16 %v879
    %v1104 = vunpack.c.h.b16 %v879
    %v1105 = vunpack.c.l.b16 %v880
    %v1106 = vunpack.c.l.b16 %v881
    %v1107 = vunpack.c.h.b16 %v881
    %v1108 = vunpack.c.l.b16 %v882
    %v1109 = vunpack.c.l.b16 %v883
    %v1110 = vunpack.c.h.b16 %v883
    %v1111 = vunpack.c.l.b16 %v884
    %v1112 = vunpack.c.l.b16 %v885
    %v1113 = vunpack.c.h.b16 %v885
    %v1114 = vunpack.c.l.b16 %v886
    %v1115 = vunpack.c.l.b16 %v887
    %v1116 = vunpack.c.h.b16 %v887
    %v1117 = vunpack.c.l.b16 %v888
    %v1118 = vunpack.c.l.b16 %v889
    %v1119 = vunpack.c.h.b16 %v889
    %v1120 = vunpack.c.l.b16 %v890
    %v1121 = vunpack.c.l.b16 %v891
    %v1122 = vunpack.c.h.b16 %v891
    %v1123 = vunpack.c.l.b16 %v892
    %v1124 = vunpack.c.l.b16 %v893
    %v1125 = vunpack.c.h.b16 %v893
    %v1126 = vunpack.c.l.b16 %v894
    %v1127 = vunpack.c.l.b16 %v895
    %v1128 = vunpack.c.h.b16 %v895
    %v1129 = vunpack.c.l.b16 %v896
    %v1130 = vunpack.c.l.b16 %v897
    %v1131 = vunpack.c.h.b16 %v897
    %v1132 = vunpack.c.l.b16 %v898
    %v1133 = vunpack.c.l.b16 %v899
    %v1134 = vunpack.c.h.b16 %v899
    %v1135 = vunpack.c.l.b16 %v900
    %v1136 = vunpack.c.l.b16 %v901
    %v1137 = vunpack.c.h.b16 %v901
    %v1138 = vunpack.c.l.b16 %v902
    %v1139 = vunpack.c.l.b16 %v903
    %v1140 = vunpack.c.h.b16 %v903
    %v1141 = vunpack.c.l.b16 %v904
    %v1142 = vunpack.c.l.b16 %v905
    %v1143 = vunpack.c.h.b16 %v905
    %v1144 = vunpack.c.l.b16 %v906
    %v1145 = vunpack.c.l.b16 %v907
    %v1146 = vunpack.c.h.b16 %v907
    %v1147 = vunpack.c.l.b16 %v908
    %v1148 = vunpack.c.l.b16 %v909
    %v1149 = vunpack.c.h.b16 %v909
    %v1150 = vunpack.c.l.b16 %v910
    %v1151 = vunpack.c.l.b16 %v911
    %v1152 = vunpack.c.h.b16 %v911
    %v1153 = vunpack.c.l.b16 %v912
    %v1154 = vunpack.c.l.b16 %v913
    %v1155 = vunpack.c.h.b16 %v913
    %v1156 = vunpack.c.l.b16 %v914
    %v1157 = vunpack.c.l.b16 %v915
    %v1158 = vunpack.c.h.b16 %v915
    %v1159 = vunpack.c.l.b16 %v916
    %v1160 = vunpack.c.l.b16 %v917
    %v1161 = vunpack.c.h.b16 %v917
    %v1162 = vunpack.c.l.b16 %v918
    %v1163 = vunpack.c.l.b16 %v919
    %v1164 = vunpack.c.h.b16 %v919
    %v1165 = vunpack.c.l.b16 %v920
    %v1166 = vunpack.c.l.b16 %v921
    %v1167 = vunpack.c.h.b16 %v921
    %v1168 = vunpack.c.l.b16 %v922
    %v1169 = vunpack.c.l.b16 %v923
    %v1170 = vunpack.c.h.b16 %v923
    %v1171 = vunpack.c.l.b16 %v924
    %v1172 = vunpack.c.l.b16 %v925
    %v1173 = vunpack.c.h.b16 %v925
    %v1174 = vunpack.c.l.b16 %v926
    %v1175 = vunpack.c.l.b16 %v927
    %v1176 = vunpack.c.h.b16 %v927
    %v1177 = vunpack.c.l.b16 %v928
    %v1178 = vunpack.c.l.b16 %v929
    %v1179 = vunpack.c.h.b16 %v929
    %v1180 = vunpack.c.l.b16 %v930
    %v1181 = vunpack.c.l.b16 %v931
    %v1182 = vunpack.c.h.b16 %v931
    %v1183 = vunpack.c.l.b16 %v932
    %v1184 = vunpack.c.l.b16 %v933
    %v1185 = vunpack.c.h.b16 %v933
    %v1186 = vunpack.c.l.b16 %v934
    %v1187 = vunpack.c.l.b16 %v935
    %v1188 = vunpack.c.h.b16 %v935
    %v1189 = vunpack.c.l.b16 %v936
    %v1190 = vunpack.c.l.b16 %v937
    %v1191 = vunpack.c.h.b16 %v937
    %v1192 = vunpack.c.l.b16 %v938
    %v1193 = vunpack.c.l.b16 %v939
    %v1194 = vunpack.c.h.b16 %v939
    %v1195 = vunpack.c.l.b16 %v940
    %v1196 = vunpack.c.l.b16 %v941
    %v1197 = vunpack.c.h.b16 %v941
    %v1198 = vunpack.c.l.b16 %v942
    %v1199 = vpack.c.b16 %v1058, %v1055
    %v1200 = vpack.c.b16 %v1059, %v1056
    %v1201 = vpack.c.b16 %v1060, %v1057
    %v1202 = vpack.c.b16 %v1064, %v1061
    %v1203 = vpack.c.b16 %v1065, %v1062
    %v1204 = vpack.c.b16 %v1066, %v1063
    %v1205 = vpack.c.b16 %v1070, %v1067
    %v1206 = vpack.c.b16 %v1071, %v1068
    %v1207 = vpack.c.b16 %v1072, %v1069
    %v1208 = vpack.c.b16 %v1076, %v1073
    %v1209 = vpack.c.b16 %v1077, %v1074
    %v1210 = vpack.c.b16 %v1078, %v1075
    %v1211 = vpack.c.b16 %v1082, %v1079
    %v1212 = vpack.c.b16 %v1083, %v1080
    %v1213 = vpack.c.b16 %v1084, %v1081
    %v1214 = vpack.c.b16 %v1088, %v1085
    %v1215 = vpack.c.b16 %v1089, %v1086
    %v1216 = vpack.c.b16 %v1090, %v1087
    %v1217 = vpack.c.b16 %v1094, %v1091
    %v1218 = vpack.c.b16 %v1095, %v1092
    %v1219 = vpack.c.b16 %v1096, %v1093
    %v1220 = vpack.c.b16 %v1100, %v1097
    %v1221 = vpack.c.b16 %v1101, %v1098
    %v1222 = vpack.c.b16 %v1102, %v1099
    %v1223 = vpack.c.b16 %v1106, %v1103
    %v1224 = vpack.c.b16 %v1107, %v1104
    %v1225 = vpack.c.b16 %v1108, %v1105
    %v1226 = vpack.c.b16 %v1112, %v1109
    %v1227 = vpack.c.b16 %v1113, %v1110
    %v1228 = vpack.c.b16 %v1114, %v1111
    %v1229 = vpack.c.b16 %v1118, %v1115
    %v1230 = vpack.c.b16 %v1119, %v1116
    %v1231 = vpack.c.b16 %v1120, %v1117
    %v1232 = vpack.c.b16 %v1124, %v1121
    %v1233 = vpack.c.b16 %v1125, %v1122
    %v1234 = vpack.c.b16 %v1126, %v1123
    %v1235 = vpack.c.b16 %v1130, %v1127
    %v1236 = vpack.c.b16 %v1131, %v1128
    %v1237 = vpack.c.b16 %v1132, %v1129
    %v1238 = vpack.c.b16 %v1136, %v1133
    %v1239 = vpack.c.b16 %v1137, %v1134
    %v1240 = vpack.c.b16 %v1138, %v1135
    %v1241 = vpack.c.b16 %v1142, %v1139
    %v1242 = vpack.c.b16 %v1143, %v1140
    %v1243 = vpack.c.b16 %v1144, %v1141
    %v1244 = vpack.c.b16 %v1148, %v1145
    %v1245 = vpack.c.b16 %v1149, %v1146
    %v1246 = vpack.c.b16 %v1150, %v1147
    %v1247 = vpack.c.b16 %v1154, %v1151
    %v1248 = vpack.c.b16 %v1155, %v1152
    %v1249 = vpack.c.b16 %v1156, %v1153
    %v1250 = vpack.c.b16 %v1160, %v1157
    %v1251 = vpack.c.b16 %v1161, %v1158
    %v1252 = vpack.c.b16 %v1162, %v1159
    %v1253 = vpack.c.b16 %v1166, %v1163
    %v1254 = vpack.c.b16 %v1167, %v1164
    %v1255 = vpack.c.b16 %v1168, %v1165
    %v1256 = vpack.c.b16 %v1172, %v1169
    %v1257 = vpack.c.b16 %v1173, %v1170
    %v1258 = vpack.c.b16 %v1174, %v1171
    %v1259 = vpack.c.b16 %v1178, %v1175
    %v1260 = vpack.c.b16 %v1179, %v1176
    %v1261 = vpack.c.b16 %v1180, %v1177
    %v1262 = vpack.c.b16 %v1184, %v1181
    %v1263 = vpack.c.b16 %v1185, %v1182
    %v1264 = vpack.c.b16 %v1186, %v1183
    %v1265 = vpack.c.b16 %v1190, %v1187
    %v1266 = vpack.c.b16 %v1191, %v1188
    %v1267 = vpack.c.b16 %v1192, %v1189
    %v1268 = vpack.c.b16 %v1196, %v1193
    %v1269 = vpack.c.b16 %v1197, %v1194
    %v1270 = vpack.c.b16 %v1198, %v1195
    %1343 = vmatprep.subr.bf16.mxu0 %v1200
    %1344 = vmatpush1.bf16.msra.mxu0 %v1199
    %1345 = vmatprep.subr.bf16.mxu0 %v1203
    %1346 = vmatpush1.bf16.msra.mxu0 %v1202
    %1347 = vmatprep.subr.bf16.mxu0 %v1206
    %1348 = vmatpush1.bf16.msra.mxu0 %v1205
    %1349 = vmatprep.subr.bf16.mxu0 %v1209
    %1350 = vmatpush1.bf16.msra.mxu0 %v1208
    %1351 = vmatprep.subr.bf16.mxu0 %v1212
    %1352 = vmatpush1.bf16.msra.mxu0 %v1211
    %1353 = vmatprep.subr.bf16.mxu0 %v1215
    %1354 = vmatpush1.bf16.msra.mxu0 %v1214
    %1355 = vmatprep.subr.bf16.mxu0 %v1218
    %1356 = vmatpush1.bf16.msra.mxu0 %v1217
    %1357 = vmatprep.subr.bf16.mxu0 %v1221
    %1358 = vmatpush1.bf16.msra.mxu0 %v1220
    %1359 = vmatprep.subr.bf16.mxu0 %v1224
    %1360 = vmatpush1.bf16.msra.mxu0 %v1223
    %1361 = vmatprep.subr.bf16.mxu0 %v1227
    %1362 = vmatpush1.bf16.msra.mxu0 %v1226
    %1363 = vmatprep.subr.bf16.mxu0 %v1230
    %1364 = vmatpush1.bf16.msra.mxu0 %v1229
    %1365 = vmatprep.subr.bf16.mxu0 %v1233
    %1366 = vmatpush1.bf16.msra.mxu0 %v1232
    %1367 = vmatprep.subr.bf16.mxu0 %v1236
    %1368 = vmatpush1.bf16.msra.mxu0 %v1235
    %1369 = vmatprep.subr.bf16.mxu0 %v1239
    %1370 = vmatpush1.bf16.msra.mxu0 %v1238
    %1371 = vmatprep.subr.bf16.mxu0 %v1242
    %1372 = vmatpush1.bf16.msra.mxu0 %v1241
    %1373 = vmatprep.subr.bf16.mxu0 %v1245
    %1374 = vmatpush1.bf16.msra.mxu0 %v1244
    %1375 = vmatprep.mubr.bf16.mxu0 %v845
    %1376 = vmatmul.mubr.bf16.gmra.mrb[0].mxu0 %v844
    %v1377 = vpop.f32.mrb[0].mxu0
    %v1378 = vadd.f32 %v947, %v1377
    %v1379 = vpop.f32.mrb[0].mxu0
    %v1380 = vadd.f32 %v951, %v1379
    %v1381 = vpop.f32.mrb[0].mxu0
    %v1382 = vadd.f32 %v947, %v1381
    %v1383 = vpop.f32.mrb[0].mxu0
    %v1384 = vadd.f32 %v951, %v1383
    %1385 = vdwg.mxu0
    %1386 = vmatprep.subr.bf16.mxu0 %v1248
    %1387 = vmatpush1.bf16.msra.mxu0 %v1247
    %1388 = vmatprep.subr.bf16.mxu0 %v1251
    %1389 = vmatpush1.bf16.msra.mxu0 %v1250
    %1390 = vmatprep.subr.bf16.mxu0 %v1254
    %1391 = vmatpush1.bf16.msra.mxu0 %v1253
    %1392 = vmatprep.subr.bf16.mxu0 %v1257
    %1393 = vmatpush1.bf16.msra.mxu0 %v1256
    %1394 = vmatprep.subr.bf16.mxu0 %v1260
    %1395 = vmatpush1.bf16.msra.mxu0 %v1259
    %1396 = vmatprep.subr.bf16.mxu0 %v1263
    %1397 = vmatpush1.bf16.msra.mxu0 %v1262
    %1398 = vmatprep.subr.bf16.mxu0 %v1266
    %1399 = vmatpush1.bf16.msra.mxu0 %v1265
    %1400 = vmatprep.subr.bf16.mxu0 %v1269
    %1401 = vmatpush1.bf16.msra.mxu0 %v1268
    %1402 = vmatprep.subr.bf16.mxu0 0
    %1403 = vmatpush1.bf16.msra.mxu0 0
    %1404 = vmatprep.subr.bf16.mxu0 0
    %1405 = vmatpush1.bf16.msra.mxu0 0
    %1406 = vmatprep.subr.bf16.mxu0 0
    %1407 = vmatpush1.bf16.msra.mxu0 0
    %1408 = vmatprep.subr.bf16.mxu0 0
    %1409 = vmatpush1.bf16.msra.mxu0 0
    %1410 = vmatprep.subr.bf16.mxu0 0
    %1411 = vmatpush1.bf16.msra.mxu0 0
    %1412 = vmatprep.subr.bf16.mxu0 0
    %1413 = vmatpush1.bf16.msra.mxu0 0
    %1414 = vmatprep.subr.bf16.mxu0 0
    %1415 = vmatpush1.bf16.msra.mxu0 0
    %1416 = vmatprep.subr.bf16.mxu0 0
    %1417 = vmatpush1.bf16.msra.mxu0 0
    %1418 = vmatprep.mubr.bf16.mxu0 0
    %1419 = vmatmul.mubr.bf16.gmra.mrb[0].mxu0 %v846
    %v1420 = vpop.f32.mrb[0].mxu0
    %v1421 = vadd.f32 %v1378, %v1420
    %v1422 = vpop.f32.mrb[0].mxu0
    %v1423 = vadd.f32 %v1380, %v1422
    %v1424 = vpop.f32.mrb[0].mxu0
    %v1425 = vadd.f32 %v1382, %v1424
    %v1426 = vpop.f32.mrb[0].mxu0
    %v1427 = vadd.f32 %v1384, %v1426
    %1428 = vdwg.mxu0
    %1429 = vmatprep.subr.bf16.mxu0 0
    %1430 = vmatpush1.bf16.msra.mxu0 %v1201
    %1431 = vmatprep.subr.bf16.mxu0 0
    %1432 = vmatpush1.bf16.msra.mxu0 %v1204
    %1433 = vmatprep.subr.bf16.mxu0 0
    %1434 = vmatpush1.bf16.msra.mxu0 %v1207
    %1435 = vmatprep.subr.bf16.mxu0 0
    %1436 = vmatpush1.bf16.msra.mxu0 %v1210
    %1437 = vmatprep.subr.bf16.mxu0 0
    %1438 = vmatpush1.bf16.msra.mxu0 %v1213
    %1439 = vmatprep.subr.bf16.mxu0 0
    %1440 = vmatpush1.bf16.msra.mxu0 %v1216
    %1441 = vmatprep.subr.bf16.mxu0 0
    %1442 = vmatpush1.bf16.msra.mxu0 %v1219
    %1443 = vmatprep.subr.bf16.mxu0 0
    %1444 = vmatpush1.bf16.msra.mxu0 %v1222
    %1445 = vmatprep.subr.bf16.mxu0 0
    %1446 = vmatpush1.bf16.msra.mxu0 %v1225
    %1447 = vmatprep.subr.bf16.mxu0 0
    %1448 = vmatpush1.bf16.msra.mxu0 %v1228
    %1449 = vmatprep.subr.bf16.mxu0 0
    %1450 = vmatpush1.bf16.msra.mxu0 %v1231
    %1451 = vmatprep.subr.bf16.mxu0 0
    %1452 = vmatpush1.bf16.msra.mxu0 %v1234
    %1453 = vmatprep.subr.bf16.mxu0 0
    %1454 = vmatpush1.bf16.msra.mxu0 %v1237
    %1455 = vmatprep.subr.bf16.mxu0 0
    %1456 = vmatpush1.bf16.msra.mxu0 %v1240
    %1457 = vmatprep.subr.bf16.mxu0 0
    %1458 = vmatpush1.bf16.msra.mxu0 %v1243
    %1459 = vmatprep.subr.bf16.mxu0 0
    %1460 = vmatpush1.bf16.msra.mxu0 %v1246
    %1461 = vmatprep.mubr.bf16.mxu0 %v845
    %1462 = vmatmul.mubr.bf16.gmra.mrb[0].mxu0 %v844
    %v1463 = vpop.f32.mrb[0].mxu0
    %v1464 = vadd.f32 %v955, %v1463
    %v1465 = vpop.f32.mrb[0].mxu0
    %v1466 = vpop.f32.mrb[0].mxu0
    %v1467 = vadd.f32 %v955, %v1466
    %v1468 = vpop.f32.mrb[0].mxu0
    %1469 = vdwg.mxu0
    %1470 = vmatprep.subr.bf16.mxu0 0
    %1471 = vmatpush1.bf16.msra.mxu0 %v1249
    %1472 = vmatprep.subr.bf16.mxu0 0
    %1473 = vmatpush1.bf16.msra.mxu0 %v1252
    %1474 = vmatprep.subr.bf16.mxu0 0
    %1475 = vmatpush1.bf16.msra.mxu0 %v1255
    %1476 = vmatprep.subr.bf16.mxu0 0
    %1477 = vmatpush1.bf16.msra.mxu0 %v1258
    %1478 = vmatprep.subr.bf16.mxu0 0
    %1479 = vmatpush1.bf16.msra.mxu0 %v1261
    %1480 = vmatprep.subr.bf16.mxu0 0
    %1481 = vmatpush1.bf16.msra.mxu0 %v1264
    %1482 = vmatprep.subr.bf16.mxu0 0
    %1483 = vmatpush1.bf16.msra.mxu0 %v1267
    %1484 = vmatprep.subr.bf16.mxu0 0
    %1485 = vmatpush1.bf16.msra.mxu0 %v1270
    %1486 = vmatprep.subr.bf16.mxu0 0
    %1487 = vmatpush1.bf16.msra.mxu0 0
    %1488 = vmatprep.subr.bf16.mxu0 0
    %1489 = vmatpush1.bf16.msra.mxu0 0
    %1490 = vmatprep.subr.bf16.mxu0 0
    %1491 = vmatpush1.bf16.msra.mxu0 0
    %1492 = vmatprep.subr.bf16.mxu0 0
    %1493 = vmatpush1.bf16.msra.mxu0 0
    %1494 = vmatprep.subr.bf16.mxu0 0
    %1495 = vmatpush1.bf16.msra.mxu0 0
    %1496 = vmatprep.subr.bf16.mxu0 0
    %1497 = vmatpush1.bf16.msra.mxu0 0
    %1498 = vmatprep.subr.bf16.mxu0 0
    %1499 = vmatpush1.bf16.msra.mxu0 0
    %1500 = vmatprep.subr.bf16.mxu0 0
    %1501 = vmatpush1.bf16.msra.mxu0 0
    %1502 = vmatprep.mubr.bf16.mxu0 0
    %1503 = vmatmul.mubr.bf16.gmra.mrb[0].mxu0 %v846
    %v1504 = vpop.f32.mrb[0].mxu0
    %v1505 = vadd.f32 %v1464, %v1504
    %v1506 = vpop.f32.mrb[0].mxu0
    %v1507 = vpop.f32.mrb[0].mxu0
    %v1508 = vadd.f32 %v1467, %v1507
    %v1509 = vpop.f32.mrb[0].mxu0
    %1510 = vdwg.mxu0
    %v1511 = vadd.f32 %v748, %v1421
    %v1512 = vadd.f32 %v750, %v1423
    %v1513 = vadd.f32 %v832, %v1505
    %v1514 = vadd.f32 %v752, %v1425
    %v1515 = vadd.f32 %v754, %v1427
    %v1516 = vadd.f32 %v835, %v1508
    %v1518 = vlaneseq
    %v1519 = vshrl.u32 %v1518, 7
    %v1520 = vsub.s32 0, %v1519
    %v1521 = vrot.slane %v181, %v1520
    %v1522 = vlaneseq
    %v1523 = vshrl.u32 %v1522, 7
    %v1524 = vsub.s32 1, %v1523
    %v1525 = vrot.slane %v181, %v1524
    %v1526 = vlaneseq
    %v1527 = vshrl.u32 %v1526, 7
    %v1528 = vsub.s32 2, %v1527
    %v1529 = vrot.slane %v181, %v1528
    %v1533 = vmul.f32 %v748, %v1521
    %v1534 = vmul.f32 %v750, %v1525
    %v1535 = vmul.f32 %v832, %v1529
    %v1536 = vmul.f32 %v752, %v1521
    %v1537 = vmul.f32 %v754, %v1525
    %v1538 = vmul.f32 %v835, %v1529
    %v1539 = vadd.f32 %v1533, %v1534
    %v1540 = vadd.f32 %v1539, %v1535
    %1541 = vadd.xlane.f32.xlu0 %v1540
    %v1542 = vpop.xlane.xlu0 %1541
    %v1543 = vadd.f32 %v1536, %v1537
    %v1544 = vadd.f32 %v1543, %v1538
    %1545 = vadd.xlane.f32.xlu0 %v1544
    %v1546 = vpop.xlane.xlu0 %1545
    %v1548 = vlaneseq
    %v1549 = vshrl.u32 %v1548, 7
    %v1550 = vsub.s32 0, %v1549
    %v1551 = vrot.slane %v183, %v1550
    %v1552 = vlaneseq
    %v1553 = vshrl.u32 %v1552, 7
    %v1554 = vsub.s32 1, %v1553
    %v1555 = vrot.slane %v183, %v1554
    %v1556 = vlaneseq
    %v1557 = vshrl.u32 %v1556, 7
    %v1558 = vsub.s32 2, %v1557
    %v1559 = vrot.slane %v183, %v1558
    %v1563 = vmul.f32 %v1511, %v1551
    %v1564 = vmul.f32 %v1512, %v1555
    %v1565 = vmul.f32 %v1513, %v1559
    %v1566 = vmul.f32 %v1514, %v1551
    %v1567 = vmul.f32 %v1515, %v1555
    %v1568 = vmul.f32 %v1516, %v1559
    %v1569 = vadd.f32 %v1563, %v1564
    %v1570 = vadd.f32 %v1569, %v1565
    %1571 = vadd.xlane.f32.xlu0 %v1570
    %v1572 = vpop.xlane.xlu0 %1571
    %v1573 = vadd.f32 %v1566, %v1567
    %v1574 = vadd.f32 %v1573, %v1568
    %1575 = vadd.xlane.f32.xlu0 %v1574
    %v1576 = vpop.xlane.xlu0 %1575
    %v1579 = vlaneseq
    %v1580 = vand.u32 %v1579, 127
    %v1581 = vlaneseq
    %v1582 = vshrl.u32 %v1581, 7
    %v1583 = vsub.s32 %v1580, %v1582
    %v1584 = vrot.slane %v1572, %v1583
    %v1585 = vadd.s32 %v1580, 4294967288
    %v1586 = vlaneseq
    %v1587 = vshrl.u32 %v1586, 7
    %v1588 = vsub.s32 %v1585, %v1587
    %v1589 = vrot.slane %v1576, %v1588
    %vm1590 = vcmask 130112
    %v1591 = vsel %vm1590, %v1589, %v1584
    %vm1592 = vcmask 1042434
    %v1593 = vsel %vm1592, %v1591, %v1591
    %vm1594 = vcmask 1043459
    %v1595 = vsel %vm1594, %v1591, %v1593
    %vm1596 = vcmask 1044484
    %v1597 = vsel %vm1596, %v1591, %v1595
    %vm1598 = vcmask 1045509
    %v1599 = vsel %vm1598, %v1591, %v1597
    %vm1600 = vcmask 1046534
    %v1601 = vsel %vm1600, %v1591, %v1599
    %vm1602 = vcmask 1047559
    %v1603 = vsel %vm1602, %v1591, %v1601
    %v1605 = vadd.f32 %v1542, %v1603
    %v1606 = vadd.f32 %v1546, %v1603
    %vm1607 = vcmp.ge.f32.partialorder %v1605, 0.0
    %vm1608 = vcmp.ge.f32.partialorder %v1606, 0.0
    %v1609 = vmul.f32 %v1605, 0.2
    %v1610 = vmul.f32 %v1606, 0.2
    %v1611 = vsel %vm1607, %v1605, %v1609
    %v1612 = vsel %vm1608, %v1606, %v1610
    %v1613 = vld [vmem:[%s4] sm:$0xff]
    %v1614 = vld [vmem:[%s4 + $0x8] sm:$0xff]
    %vm1615 = vcmp.lt.f32.partialorder %v1613, 0.0
    %vm1616 = vcmp.lt.f32.partialorder %v1614, 0.0
    %vm1617 = vcmp.eq.f32.partialorder %v1613, 0.0
    %vm1618 = vcmp.eq.f32.partialorder %v1614, 0.0
    %v1619 = vmul.f32 %v1611, %v1613
    %v1620 = vmul.f32 %v1612, %v1614
    %v1621 = vsel %vm1617, -1e+09, %v1619
    %v1622 = vsel %vm1618, -1e+09, %v1620
    %v1623 = vsel %vm1615, -1e+30, %v1621
    %v1624 = vsel %vm1616, -1e+30, %v1622
    %vm1625 = vcmask 130048
    %v1626 = vsel %vm1625, %v1623, -inf
    %1627 = vmax.xlane.f32.xlu0 %v1626
    %v1628 = vpop.xlane.xlu0 %1627
    %v1629 = vsel %vm1625, %v1624, -inf
    %1630 = vmax.xlane.f32.xlu0 %v1629
    %v1631 = vpop.xlane.xlu0 %1630
    %v1632 = vsub.f32 %v1623, %v1628
    %v1633 = vsub.f32 %v1624, %v1631
    %v1634 = vmul.f32 %v1632, 1.442695
    %v1635 = vpow.pop %v1634
    %v1636 = vmul.f32 %v1633, 1.442695
    %v1637 = vpow.pop %v1636
    %v1638 = vsel %vm1625, %v1635, 0.0
    %1639 = vadd.xlane.f32.xlu0 %v1638
    %v1640 = vpop.xlane.xlu0 %1639
    %v1641 = vsel %vm1625, %v1637, 0.0
    %1642 = vadd.xlane.f32.xlu0 %v1641
    %v1643 = vpop.xlane.xlu0 %1642
    %v1644 = vrcp.pop %v1640
    %v1645 = vmul.f32 %v1635, %v1644
    %v1646 = vrcp.pop %v1643
    %v1647 = vmul.f32 %v1637, %v1646
    %v1649 = vsel %vm1625, %v1645, 0
    %v1652 = vsel %vm1625, %v1647, 0
    %1654 = vmatprep.subr.mxu0 %v750
    %1655 = vmatpush1.msra.mxu0 %v748
    %1656 = vmatprep.subr.mxu0 %v754
    %1657 = vmatpush1.msra.mxu0 %v752
    %1658 = vmatprep.subr.mxu0 0.0
    %1659 = vmatpush1.msra.mxu0 0.0
    %1660 = vmatprep.subr.mxu0 0.0
    %1661 = vmatpush1.msra.mxu0 0.0
    %1662 = vmatprep.subr.mxu0 0.0
    %1663 = vmatpush1.msra.mxu0 0.0
    %1664 = vmatprep.subr.mxu0 0.0
    %1665 = vmatpush1.msra.mxu0 0.0
    %1666 = vmatprep.subr.mxu0 0.0
    %1667 = vmatpush1.msra.mxu0 0.0
    %1668 = vmatprep.subr.mxu0 0.0
    %1669 = vmatpush1.msra.mxu0 0.0
    %1670 = vmatprep.subr.mxu0 0.0
    %1671 = vmatpush1.msra.mxu0 0.0
    %1672 = vmatprep.subr.mxu0 0.0
    %1673 = vmatpush1.msra.mxu0 0.0
    %1674 = vmatprep.subr.mxu0 0.0
    %1675 = vmatpush1.msra.mxu0 0.0
    %1676 = vmatprep.subr.mxu0 0.0
    %1677 = vmatpush1.msra.mxu0 0.0
    %1678 = vmatprep.subr.mxu0 0.0
    %1679 = vmatpush1.msra.mxu0 0.0
    %1680 = vmatprep.subr.mxu0 0.0
    %1681 = vmatpush1.msra.mxu0 0.0
    %1682 = vmatprep.subr.mxu0 0.0
    %1683 = vmatpush1.msra.mxu0 0.0
    %1684 = vmatprep.subr.mxu0 0.0
    %1685 = vmatpush1.msra.mxu0 0.0
    %1686 = vmatprep.subr.mxu0 0.0
    %1687 = vmatpush1.msra.mxu0 0.0
    %1688 = vmatprep.subr.mxu0 0.0
    %1689 = vmatpush1.msra.mxu0 0.0
    %1690 = vmatprep.subr.mxu0 0.0
    %1691 = vmatpush1.msra.mxu0 0.0
    %1692 = vmatprep.subr.mxu0 0.0
    %1693 = vmatpush1.msra.mxu0 0.0
    %1694 = vmatprep.subr.mxu0 0.0
    %1695 = vmatpush1.msra.mxu0 0.0
    %1696 = vmatprep.subr.mxu0 0.0
    %1697 = vmatpush1.msra.mxu0 0.0
    %1698 = vmatprep.subr.mxu0 0.0
    %1699 = vmatpush1.msra.mxu0 0.0
    %1700 = vmatprep.subr.mxu0 0.0
    %1701 = vmatpush1.msra.mxu0 0.0
    %1702 = vmatprep.subr.mxu0 0.0
    %1703 = vmatpush1.msra.mxu0 0.0
    %1704 = vmatprep.subr.mxu0 0.0
    %1705 = vmatpush1.msra.mxu0 0.0
    %1706 = vmatprep.subr.mxu0 0.0
    %1707 = vmatpush1.msra.mxu0 0.0
    %1708 = vmatprep.subr.mxu0 0.0
    %1709 = vmatpush1.msra.mxu0 0.0
    %1710 = vmatprep.subr.mxu0 0.0
    %1711 = vmatpush1.msra.mxu0 0.0
    %1712 = vmatprep.subr.mxu0 0.0
    %1713 = vmatpush1.msra.mxu0 0.0
    %1714 = vmatprep.subr.mxu0 0.0
    %1715 = vmatpush1.msra.mxu0 0.0
    %1716 = vmatprep.subr.mxu0 0.0
    %1717 = vmatpush1.msra.mxu0 0.0
    %1718 = vmatprep.mubr.f32.mxu0 0.0
    %1719 = vmatmul.mubr.f32.gmra.mrb[0].mxu0 %v1649
    %v1720 = vpop.f32.mrb[0].mxu0
    %v1721 = vadd.f32 0.0, %v1720
    %v1722 = vpop.f32.mrb[0].mxu0
    %v1723 = vadd.f32 0.0, %v1722
    %1724 = vmatprep.mubr.f32.mxu0 0.0
    %1725 = vmatmul.mubr.f32.gmra.mrb[0].mxu0 %v1652
    %v1726 = vpop.f32.mrb[0].mxu0
    %v1727 = vadd.f32 0.0, %v1726
    %v1728 = vpop.f32.mrb[0].mxu0
    %v1729 = vadd.f32 0.0, %v1728
    %1730 = vdwg.mxu0
    %1731 = vmatprep.subr.mxu0 0.0
    %1732 = vmatpush1.msra.mxu0 %v832
    %1733 = vmatprep.subr.mxu0 0.0
    %1734 = vmatpush1.msra.mxu0 %v835
    %1735 = vmatprep.subr.mxu0 0.0
    %1736 = vmatpush1.msra.mxu0 0.0
    %1737 = vmatprep.subr.mxu0 0.0
    %1738 = vmatpush1.msra.mxu0 0.0
    %1739 = vmatprep.subr.mxu0 0.0
    %1740 = vmatpush1.msra.mxu0 0.0
    %1741 = vmatprep.subr.mxu0 0.0
    %1742 = vmatpush1.msra.mxu0 0.0
    %1743 = vmatprep.subr.mxu0 0.0
    %1744 = vmatpush1.msra.mxu0 0.0
    %1745 = vmatprep.subr.mxu0 0.0
    %1746 = vmatpush1.msra.mxu0 0.0
    %1747 = vmatprep.subr.mxu0 0.0
    %1748 = vmatpush1.msra.mxu0 0.0
    %1749 = vmatprep.subr.mxu0 0.0
    %1750 = vmatpush1.msra.mxu0 0.0
    %1751 = vmatprep.subr.mxu0 0.0
    %1752 = vmatpush1.msra.mxu0 0.0
    %1753 = vmatprep.subr.mxu0 0.0
    %1754 = vmatpush1.msra.mxu0 0.0
    %1755 = vmatprep.subr.mxu0 0.0
    %1756 = vmatpush1.msra.mxu0 0.0
    %1757 = vmatprep.subr.mxu0 0.0
    %1758 = vmatpush1.msra.mxu0 0.0
    %1759 = vmatprep.subr.mxu0 0.0
    %1760 = vmatpush1.msra.mxu0 0.0
    %1761 = vmatprep.subr.mxu0 0.0
    %1762 = vmatpush1.msra.mxu0 0.0
    %1763 = vmatprep.subr.mxu0 0.0
    %1764 = vmatpush1.msra.mxu0 0.0
    %1765 = vmatprep.subr.mxu0 0.0
    %1766 = vmatpush1.msra.mxu0 0.0
    %1767 = vmatprep.subr.mxu0 0.0
    %1768 = vmatpush1.msra.mxu0 0.0
    %1769 = vmatprep.subr.mxu0 0.0
    %1770 = vmatpush1.msra.mxu0 0.0
    %1771 = vmatprep.subr.mxu0 0.0
    %1772 = vmatpush1.msra.mxu0 0.0
    %1773 = vmatprep.subr.mxu0 0.0
    %1774 = vmatpush1.msra.mxu0 0.0
    %1775 = vmatprep.subr.mxu0 0.0
    %1776 = vmatpush1.msra.mxu0 0.0
    %1777 = vmatprep.subr.mxu0 0.0
    %1778 = vmatpush1.msra.mxu0 0.0
    %1779 = vmatprep.subr.mxu0 0.0
    %1780 = vmatpush1.msra.mxu0 0.0
    %1781 = vmatprep.subr.mxu0 0.0
    %1782 = vmatpush1.msra.mxu0 0.0
    %1783 = vmatprep.subr.mxu0 0.0
    %1784 = vmatpush1.msra.mxu0 0.0
    %1785 = vmatprep.subr.mxu0 0.0
    %1786 = vmatpush1.msra.mxu0 0.0
    %1787 = vmatprep.subr.mxu0 0.0
    %1788 = vmatpush1.msra.mxu0 0.0
    %1789 = vmatprep.subr.mxu0 0.0
    %1790 = vmatpush1.msra.mxu0 0.0
    %1791 = vmatprep.subr.mxu0 0.0
    %1792 = vmatpush1.msra.mxu0 0.0
    %1793 = vmatprep.subr.mxu0 0.0
    %1794 = vmatpush1.msra.mxu0 0.0
    %1795 = vmatprep.mubr.f32.mxu0 0.0
    %1796 = vmatmul.mubr.f32.gmra.mrb[0].mxu0 %v1649
    %v1797 = vpop.f32.mrb[0].mxu0
    %v1798 = vadd.f32 0.0, %v1797
    %v1799 = vpop.f32.mrb[0].mxu0
    %1800 = vmatprep.mubr.f32.mxu0 0.0
    %1801 = vmatmul.mubr.f32.gmra.mrb[0].mxu0 %v1652
    %v1802 = vpop.f32.mrb[0].mxu0
    %v1803 = vadd.f32 0.0, %v1802
    %v1804 = vpop.f32.mrb[0].mxu0
    %1805 = vdwg.mxu0
    %v1806 = vpack.c.bf16 %v1727, %v1721
    %v1807 = vpack.c.bf16 %v1729, %v1723
    %v1808 = vpack.c.bf16 %v1803, %v1798
    %v1809 = vld [vmem:[#allocation8] sm:$0xff]
    %v1810 = vld [vmem:[#allocation8 + $0x8] sm:$0xff]
    %v1811 = vld [vmem:[#allocation8 + $0x10] sm:$0xff]
    %v1812 = vld [vmem:[#allocation8 + $0x18] sm:$0xff]
    %v1813 = vld [vmem:[#allocation8 + $0x20] sm:$0xff]
    %v1814 = vld [vmem:[#allocation8 + $0x28] sm:$0xff]
    %v1815 = vld [vmem:[#allocation8 + $0x30] sm:$0xff]
    %v1816 = vld [vmem:[#allocation8 + $0x38] sm:$0xff]
    %v1817 = vld [vmem:[#allocation8 + $0x40] sm:$0xff]
    %v1818 = vld [vmem:[#allocation8 + $0x48] sm:$0xff]
    %v1819 = vld [vmem:[#allocation8 + $0x50] sm:$0xff]
    %v1820 = vld [vmem:[#allocation8 + $0x58] sm:$0xff]
    %v1821 = vld [vmem:[#allocation8 + $0x60] sm:$0xff]
    %v1822 = vld [vmem:[#allocation8 + $0x68] sm:$0xff]
    %v1823 = vld [vmem:[#allocation8 + $0x70] sm:$0xff]
    %v1824 = vld [vmem:[#allocation8 + $0x78] sm:$0xff]
    %v1825 = vld [vmem:[#allocation8 + $0x80] sm:$0xff]
    %v1826 = vld [vmem:[#allocation8 + $0x88] sm:$0xff]
    %v1827 = vld [vmem:[#allocation8 + $0x90] sm:$0xff]
    %v1828 = vld [vmem:[#allocation8 + $0x98] sm:$0xff]
    %v1829 = vld [vmem:[#allocation8 + $0xa0] sm:$0xff]
    %v1830 = vld [vmem:[#allocation8 + $0xa8] sm:$0xff]
    %v1831 = vld [vmem:[#allocation8 + $0xb0] sm:$0xff]
    %v1832 = vld [vmem:[#allocation8 + $0xb8] sm:$0xff]
    %v1833 = vld [vmem:[#allocation8 + $0xc0] sm:$0xff]
    %v1834 = vld [vmem:[#allocation8 + $0xc8] sm:$0xff]
    %v1835 = vld [vmem:[#allocation8 + $0xd0] sm:$0xff]
    %v1836 = vld [vmem:[#allocation8 + $0xd8] sm:$0xff]
    %v1837 = vld [vmem:[#allocation8 + $0xe0] sm:$0xff]
    %v1838 = vld [vmem:[#allocation8 + $0xe8] sm:$0xff]
    %v1839 = vld [vmem:[#allocation8 + $0xf0] sm:$0xff]
    %v1840 = vld [vmem:[#allocation8 + $0xf8] sm:$0xff]
    %v1841 = vld [vmem:[#allocation8 + $0x100] sm:$0xff]
    %v1842 = vld [vmem:[#allocation8 + $0x108] sm:$0xff]
    %v1843 = vld [vmem:[#allocation8 + $0x110] sm:$0xff]
    %v1844 = vld [vmem:[#allocation8 + $0x118] sm:$0xff]
    %v1845 = vld [vmem:[#allocation8 + $0x120] sm:$0xff]
    %v1846 = vld [vmem:[#allocation8 + $0x128] sm:$0xff]
    %v1847 = vld [vmem:[#allocation8 + $0x130] sm:$0xff]
    %v1848 = vld [vmem:[#allocation8 + $0x138] sm:$0xff]
    %v1849 = vld [vmem:[#allocation8 + $0x140] sm:$0xff]
    %v1850 = vld [vmem:[#allocation8 + $0x148] sm:$0xff]
    %v1851 = vld [vmem:[#allocation8 + $0x150] sm:$0xff]
    %v1852 = vld [vmem:[#allocation8 + $0x158] sm:$0xff]
    %v1853 = vld [vmem:[#allocation8 + $0x160] sm:$0xff]
    %v1854 = vld [vmem:[#allocation8 + $0x168] sm:$0xff]
    %v1855 = vld [vmem:[#allocation8 + $0x170] sm:$0xff]
    %v1856 = vld [vmem:[#allocation8 + $0x178] sm:$0xff]
    %v1857 = vld [vmem:[#allocation8 + $0x180] sm:$0xff]
    %v1858 = vld [vmem:[#allocation8 + $0x188] sm:$0xff]
    %v1859 = vld [vmem:[#allocation8 + $0x190] sm:$0xff]
    %v1860 = vld [vmem:[#allocation8 + $0x198] sm:$0xff]
    %v1861 = vld [vmem:[#allocation8 + $0x1a0] sm:$0xff]
    %v1862 = vld [vmem:[#allocation8 + $0x1a8] sm:$0xff]
    %v1863 = vld [vmem:[#allocation8 + $0x1b0] sm:$0xff]
    %v1864 = vld [vmem:[#allocation8 + $0x1b8] sm:$0xff]
    %v1865 = vld [vmem:[#allocation8 + $0x1c0] sm:$0xff]
    %v1866 = vld [vmem:[#allocation8 + $0x1c8] sm:$0xff]
    %v1867 = vld [vmem:[#allocation8 + $0x1d0] sm:$0xff]
    %v1868 = vld [vmem:[#allocation8 + $0x1d8] sm:$0xff]
    %v1869 = vld [vmem:[#allocation8 + $0x1e0] sm:$0xff]
    %v1870 = vld [vmem:[#allocation8 + $0x1e8] sm:$0xff]
    %v1871 = vld [vmem:[#allocation8 + $0x1f0] sm:$0xff]
    %v1872 = vld [vmem:[#allocation8 + $0x1f8] sm:$0xff]
    %v1873 = vld [vmem:[#allocation8 + $0x200] sm:$0xff]
    %v1874 = vld [vmem:[#allocation8 + $0x208] sm:$0xff]
    %v1875 = vld [vmem:[#allocation8 + $0x210] sm:$0xff]
    %v1876 = vld [vmem:[#allocation8 + $0x218] sm:$0xff]
    %v1877 = vld [vmem:[#allocation8 + $0x220] sm:$0xff]
    %v1878 = vld [vmem:[#allocation8 + $0x228] sm:$0xff]
    %v1879 = vld [vmem:[#allocation8 + $0x230] sm:$0xff]
    %v1880 = vld [vmem:[#allocation8 + $0x238] sm:$0xff]
    %v1881 = vld [vmem:[#allocation8 + $0x240] sm:$0xff]
    %v1882 = vld [vmem:[#allocation8 + $0x248] sm:$0xff]
    %v1883 = vld [vmem:[#allocation8 + $0x250] sm:$0xff]
    %v1884 = vld [vmem:[#allocation8 + $0x258] sm:$0xff]
    %v1885 = vld [vmem:[#allocation8 + $0x260] sm:$0xff]
    %v1886 = vld [vmem:[#allocation8 + $0x268] sm:$0xff]
    %v1887 = vld [vmem:[#allocation8 + $0x270] sm:$0xff]
    %v1888 = vld [vmem:[#allocation8 + $0x278] sm:$0xff]
    %v1889 = vld [vmem:[#allocation8 + $0x280] sm:$0xff]
    %v1890 = vld [vmem:[#allocation8 + $0x288] sm:$0xff]
    %v1891 = vld [vmem:[#allocation8 + $0x290] sm:$0xff]
    %v1892 = vld [vmem:[#allocation8 + $0x298] sm:$0xff]
    %v1893 = vld [vmem:[#allocation8 + $0x2a0] sm:$0xff]
    %v1894 = vld [vmem:[#allocation8 + $0x2a8] sm:$0xff]
    %v1895 = vld [vmem:[#allocation8 + $0x2b0] sm:$0xff]
    %v1896 = vld [vmem:[#allocation8 + $0x2b8] sm:$0xff]
    %v1897 = vld [vmem:[#allocation8 + $0x2c0] sm:$0xff]
    %v1898 = vld [vmem:[#allocation8 + $0x2c8] sm:$0xff]
    %v1899 = vld [vmem:[#allocation8 + $0x2d0] sm:$0xff]
    %v1900 = vld [vmem:[#allocation8 + $0x2d8] sm:$0xff]
    %v1901 = vld [vmem:[#allocation8 + $0x2e0] sm:$0xff]
    %v1902 = vld [vmem:[#allocation8 + $0x2e8] sm:$0xff]
    %v1903 = vld [vmem:[#allocation8 + $0x2f0] sm:$0xff]
    %v1904 = vld [vmem:[#allocation8 + $0x2f8] sm:$0xff]
    %v1905 = vld [vmem:[#allocation8 + $0x300] sm:$0xff]
    %v1906 = vld [vmem:[#allocation8 + $0x308] sm:$0xff]
    %v1907 = vld [vmem:[#allocation8 + $0x310] sm:$0xff]
    %v1908 = vld [vmem:[#allocation8 + $0x318] sm:$0xff]
    %v1909 = vld [vmem:[#allocation8 + $0x320] sm:$0xff]
    %v1910 = vld [vmem:[#allocation8 + $0x328] sm:$0xff]
    %v1911 = vld [vmem:[#allocation8 + $0x330] sm:$0xff]
    %v1912 = vld [vmem:[#allocation8 + $0x338] sm:$0xff]
    %v1913 = vld [vmem:[#allocation8 + $0x340] sm:$0xff]
    %v1914 = vld [vmem:[#allocation8 + $0x348] sm:$0xff]
    %v1915 = vld [vmem:[#allocation8 + $0x350] sm:$0xff]
    %v1916 = vld [vmem:[#allocation8 + $0x358] sm:$0xff]
    %v1917 = vld [vmem:[#allocation8 + $0x360] sm:$0xff]
    %v1918 = vld [vmem:[#allocation8 + $0x368] sm:$0xff]
    %v1919 = vld [vmem:[#allocation8 + $0x370] sm:$0xff]
    %v1920 = vld [vmem:[#allocation8 + $0x378] sm:$0xff]
    %v1921 = vld [vmem:[#allocation8 + $0x380] sm:$0xff]
    %v1922 = vld [vmem:[#allocation8 + $0x388] sm:$0xff]
    %v1923 = vld [vmem:[#allocation8 + $0x390] sm:$0xff]
    %v1924 = vld [vmem:[#allocation8 + $0x398] sm:$0xff]
    %v1925 = vld [vmem:[#allocation8 + $0x3a0] sm:$0xff]
    %v1926 = vld [vmem:[#allocation8 + $0x3a8] sm:$0xff]
    %v1927 = vld [vmem:[#allocation8 + $0x3b0] sm:$0xff]
    %v1928 = vld [vmem:[#allocation8 + $0x3b8] sm:$0xff]
    %v1929 = vld [vmem:[#allocation8 + $0x3c0] sm:$0xff]
    %v1930 = vld [vmem:[#allocation8 + $0x3c8] sm:$0xff]
    %v1931 = vld [vmem:[#allocation8 + $0x3d0] sm:$0xff]
    %v1932 = vld [vmem:[#allocation8 + $0x3d8] sm:$0xff]
    %v1933 = vld [vmem:[#allocation8 + $0x3e0] sm:$0xff]
    %v1934 = vld [vmem:[#allocation8 + $0x3e8] sm:$0xff]
    %v1935 = vld [vmem:[#allocation8 + $0x3f0] sm:$0xff]
    %v1936 = vld [vmem:[#allocation8 + $0x3f8] sm:$0xff]
    %v1937 = vld [vmem:[#allocation8 + $0x400] sm:$0xff]
    %v1938 = vld [vmem:[#allocation8 + $0x408] sm:$0xff]
    %v1939 = vld [vmem:[#allocation8 + $0x410] sm:$0xff]
    %v1940 = vld [vmem:[#allocation8 + $0x418] sm:$0xff]
    %v1941 = vld [vmem:[#allocation8 + $0x420] sm:$0xff]
    %v1942 = vld [vmem:[#allocation8 + $0x428] sm:$0xff]
    %v1943 = vld [vmem:[#allocation8 + $0x430] sm:$0xff]
    %v1944 = vld [vmem:[#allocation8 + $0x438] sm:$0xff]
    %v1945 = vld [vmem:[#allocation8 + $0x440] sm:$0xff]
    %v1946 = vld [vmem:[#allocation8 + $0x448] sm:$0xff]
    %v1947 = vld [vmem:[#allocation8 + $0x450] sm:$0xff]
    %v1948 = vld [vmem:[#allocation8 + $0x458] sm:$0xff]
    %v1949 = vld [vmem:[#allocation8 + $0x460] sm:$0xff]
    %v1950 = vld [vmem:[#allocation8 + $0x468] sm:$0xff]
    %v1951 = vld [vmem:[#allocation8 + $0x470] sm:$0xff]
    %v1952 = vld [vmem:[#allocation8 + $0x478] sm:$0xff]
    %v1953 = vld [vmem:[#allocation8 + $0x480] sm:$0xff]
    %v1954 = vld [vmem:[#allocation8 + $0x488] sm:$0xff]
    %v1955 = vld [vmem:[#allocation8 + $0x490] sm:$0xff]
    %v1956 = vld [vmem:[#allocation8 + $0x498] sm:$0xff]
    %v1957 = vld [vmem:[#allocation8 + $0x4a0] sm:$0xff]
    %v1958 = vld [vmem:[#allocation8 + $0x4a8] sm:$0xff]
    %v1959 = vld [vmem:[#allocation8 + $0x4b0] sm:$0xff]
    %v1960 = vld [vmem:[#allocation8 + $0x4b8] sm:$0xff]
    %v1961 = vld [vmem:[#allocation8 + $0x4c0] sm:$0xff]
    %v1962 = vld [vmem:[#allocation8 + $0x4c8] sm:$0xff]
    %v1963 = vld [vmem:[#allocation8 + $0x4d0] sm:$0xff]
    %v1964 = vld [vmem:[#allocation8 + $0x4d8] sm:$0xff]
    %v1965 = vld [vmem:[#allocation8 + $0x4e0] sm:$0xff]
    %v1966 = vld [vmem:[#allocation8 + $0x4e8] sm:$0xff]
    %v1967 = vld [vmem:[#allocation8 + $0x4f0] sm:$0xff]
    %v1968 = vld [vmem:[#allocation8 + $0x4f8] sm:$0xff]
    %v1969 = vld [vmem:[#allocation8 + $0x500] sm:$0xff]
    %v1970 = vld [vmem:[#allocation8 + $0x508] sm:$0xff]
    %v1971 = vld [vmem:[#allocation8 + $0x510] sm:$0xff]
    %v1972 = vld [vmem:[#allocation8 + $0x518] sm:$0xff]
    %v1973 = vld [vmem:[#allocation8 + $0x520] sm:$0xff]
    %v1974 = vld [vmem:[#allocation8 + $0x528] sm:$0xff]
    %v1975 = vld [vmem:[#allocation8 + $0x530] sm:$0xff]
    %v1976 = vld [vmem:[#allocation8 + $0x538] sm:$0xff]
    %v1977 = vld [vmem:[#allocation8 + $0x540] sm:$0xff]
    %v1978 = vld [vmem:[#allocation8 + $0x548] sm:$0xff]
    %v1979 = vld [vmem:[#allocation8 + $0x550] sm:$0xff]
    %v1980 = vld [vmem:[#allocation8 + $0x558] sm:$0xff]
    %v1981 = vld [vmem:[#allocation8 + $0x560] sm:$0xff]
    %v1982 = vld [vmem:[#allocation8 + $0x568] sm:$0xff]
    %v1983 = vld [vmem:[#allocation8 + $0x570] sm:$0xff]
    %v1984 = vld [vmem:[#allocation8 + $0x578] sm:$0xff]
    %v1985 = vld [vmem:[#allocation8 + $0x580] sm:$0xff]
    %v1986 = vld [vmem:[#allocation8 + $0x588] sm:$0xff]
    %v1987 = vld [vmem:[#allocation8 + $0x590] sm:$0xff]
    %v1988 = vld [vmem:[#allocation8 + $0x598] sm:$0xff]
    %v1989 = vld [vmem:[#allocation8 + $0x5a0] sm:$0xff]
    %v1990 = vld [vmem:[#allocation8 + $0x5a8] sm:$0xff]
    %v1991 = vld [vmem:[#allocation8 + $0x5b0] sm:$0xff]
    %v1992 = vld [vmem:[#allocation8 + $0x5b8] sm:$0xff]
    %v1993 = vld [vmem:[#allocation8 + $0x5c0] sm:$0xff]
    %v1994 = vld [vmem:[#allocation8 + $0x5c8] sm:$0xff]
    %v1995 = vld [vmem:[#allocation8 + $0x5d0] sm:$0xff]
    %v1996 = vld [vmem:[#allocation8 + $0x5d8] sm:$0xff]
    %v1997 = vld [vmem:[#allocation8 + $0x5e0] sm:$0xff]
    %v1998 = vld [vmem:[#allocation8 + $0x5e8] sm:$0xff]
    %v1999 = vld [vmem:[#allocation8 + $0x5f0] sm:$0xff]
    %v2000 = vld [vmem:[#allocation8 + $0x5f8] sm:$0xff]
    %v2001 = vld [vmem:[#allocation8 + $0x600] sm:$0xff]
    %v2002 = vld [vmem:[#allocation8 + $0x608] sm:$0xff]
    %v2003 = vld [vmem:[#allocation8 + $0x610] sm:$0xff]
    %v2004 = vld [vmem:[#allocation8 + $0x618] sm:$0xff]
    %v2005 = vld [vmem:[#allocation8 + $0x620] sm:$0xff]
    %v2006 = vld [vmem:[#allocation8 + $0x628] sm:$0xff]
    %v2007 = vld [vmem:[#allocation8 + $0x630] sm:$0xff]
    %v2008 = vld [vmem:[#allocation8 + $0x638] sm:$0xff]
    %v2009 = vld [vmem:[#allocation8 + $0x640] sm:$0xff]
    %v2010 = vld [vmem:[#allocation8 + $0x648] sm:$0xff]
    %v2011 = vld [vmem:[#allocation8 + $0x650] sm:$0xff]
    %v2012 = vld [vmem:[#allocation8 + $0x658] sm:$0xff]
    %v2013 = vld [vmem:[#allocation8 + $0x660] sm:$0xff]
    %v2014 = vld [vmem:[#allocation8 + $0x668] sm:$0xff]
    %v2015 = vld [vmem:[#allocation8 + $0x670] sm:$0xff]
    %v2016 = vld [vmem:[#allocation8 + $0x678] sm:$0xff]
    %v2017 = vld [vmem:[#allocation8 + $0x680] sm:$0xff]
    %v2018 = vld [vmem:[#allocation8 + $0x688] sm:$0xff]
    %v2019 = vld [vmem:[#allocation8 + $0x690] sm:$0xff]
    %v2020 = vld [vmem:[#allocation8 + $0x698] sm:$0xff]
    %v2021 = vld [vmem:[#allocation8 + $0x6a0] sm:$0xff]
    %v2022 = vld [vmem:[#allocation8 + $0x6a8] sm:$0xff]
    %v2023 = vld [vmem:[#allocation8 + $0x6b0] sm:$0xff]
    %v2024 = vld [vmem:[#allocation8 + $0x6b8] sm:$0xff]
    %v2025 = vld [vmem:[#allocation8 + $0x6c0] sm:$0xff]
    %v2026 = vld [vmem:[#allocation8 + $0x6c8] sm:$0xff]
    %v2027 = vld [vmem:[#allocation8 + $0x6d0] sm:$0xff]
    %v2028 = vld [vmem:[#allocation8 + $0x6d8] sm:$0xff]
    %v2029 = vld [vmem:[#allocation8 + $0x6e0] sm:$0xff]
    %v2030 = vld [vmem:[#allocation8 + $0x6e8] sm:$0xff]
    %v2031 = vld [vmem:[#allocation8 + $0x6f0] sm:$0xff]
    %v2032 = vld [vmem:[#allocation8 + $0x6f8] sm:$0xff]
    %v2033 = vld [vmem:[#allocation8 + $0x700] sm:$0xff]
    %v2034 = vld [vmem:[#allocation8 + $0x708] sm:$0xff]
    %v2035 = vld [vmem:[#allocation8 + $0x710] sm:$0xff]
    %v2036 = vld [vmem:[#allocation8 + $0x718] sm:$0xff]
    %v2037 = vld [vmem:[#allocation8 + $0x720] sm:$0xff]
    %v2038 = vld [vmem:[#allocation8 + $0x728] sm:$0xff]
    %v2039 = vld [vmem:[#allocation8 + $0x730] sm:$0xff]
    %v2040 = vld [vmem:[#allocation8 + $0x738] sm:$0xff]
    %v2041 = vld [vmem:[#allocation8 + $0x740] sm:$0xff]
    %v2042 = vld [vmem:[#allocation8 + $0x748] sm:$0xff]
    %v2043 = vld [vmem:[#allocation8 + $0x750] sm:$0xff]
    %v2044 = vld [vmem:[#allocation8 + $0x758] sm:$0xff]
    %v2045 = vld [vmem:[#allocation8 + $0x760] sm:$0xff]
    %v2046 = vld [vmem:[#allocation8 + $0x768] sm:$0xff]
    %v2047 = vld [vmem:[#allocation8 + $0x770] sm:$0xff]
    %v2048 = vld [vmem:[#allocation8 + $0x778] sm:$0xff]
    %v2049 = vld [vmem:[#allocation8 + $0x780] sm:$0xff]
    %v2050 = vld [vmem:[#allocation8 + $0x788] sm:$0xff]
    %v2051 = vld [vmem:[#allocation8 + $0x790] sm:$0xff]
    %v2052 = vld [vmem:[#allocation8 + $0x798] sm:$0xff]
    %v2053 = vld [vmem:[#allocation8 + $0x7a0] sm:$0xff]
    %v2054 = vld [vmem:[#allocation8 + $0x7a8] sm:$0xff]
    %v2055 = vld [vmem:[#allocation8 + $0x7b0] sm:$0xff]
    %v2056 = vld [vmem:[#allocation8 + $0x7b8] sm:$0xff]
    %v2057 = vld [vmem:[#allocation8 + $0x7c0] sm:$0xff]
    %v2058 = vld [vmem:[#allocation8 + $0x7c8] sm:$0xff]
    %v2059 = vld [vmem:[#allocation8 + $0x7d0] sm:$0xff]
    %v2060 = vld [vmem:[#allocation8 + $0x7d8] sm:$0xff]
    %v2061 = vld [vmem:[#allocation8 + $0x7e0] sm:$0xff]
    %v2062 = vld [vmem:[#allocation8 + $0x7e8] sm:$0xff]
    %v2063 = vld [vmem:[#allocation8 + $0x7f0] sm:$0xff]
    %v2064 = vld [vmem:[#allocation8 + $0x7f8] sm:$0xff]
    %v2065 = vld [vmem:[#allocation8 + $0x800] sm:$0xff]
    %v2066 = vld [vmem:[#allocation8 + $0x808] sm:$0xff]
    %v2067 = vld [vmem:[#allocation8 + $0x810] sm:$0xff]
    %v2068 = vld [vmem:[#allocation8 + $0x818] sm:$0xff]
    %v2069 = vld [vmem:[#allocation8 + $0x820] sm:$0xff]
    %v2070 = vld [vmem:[#allocation8 + $0x828] sm:$0xff]
    %v2071 = vld [vmem:[#allocation8 + $0x830] sm:$0xff]
    %v2072 = vld [vmem:[#allocation8 + $0x838] sm:$0xff]
    %v2073 = vld [vmem:[#allocation8 + $0x840] sm:$0xff]
    %v2074 = vld [vmem:[#allocation8 + $0x848] sm:$0xff]
    %v2075 = vld [vmem:[#allocation8 + $0x850] sm:$0xff]
    %v2076 = vld [vmem:[#allocation8 + $0x858] sm:$0xff]
    %v2077 = vld [vmem:[#allocation8 + $0x860] sm:$0xff]
    %v2078 = vld [vmem:[#allocation8 + $0x868] sm:$0xff]
    %v2079 = vld [vmem:[#allocation8 + $0x870] sm:$0xff]
    %v2080 = vld [vmem:[#allocation8 + $0x878] sm:$0xff]
    %v2081 = vld [vmem:[#allocation8 + $0x880] sm:$0xff]
    %v2082 = vld [vmem:[#allocation8 + $0x888] sm:$0xff]
    %v2083 = vld [vmem:[#allocation8 + $0x890] sm:$0xff]
    %v2084 = vld [vmem:[#allocation8 + $0x898] sm:$0xff]
    %v2085 = vld [vmem:[#allocation8 + $0x8a0] sm:$0xff]
    %v2086 = vld [vmem:[#allocation8 + $0x8a8] sm:$0xff]
    %v2087 = vld [vmem:[#allocation8 + $0x8b0] sm:$0xff]
    %v2088 = vld [vmem:[#allocation8 + $0x8b8] sm:$0xff]
    %v2089 = vld [vmem:[#allocation8 + $0x8c0] sm:$0xff]
    %v2090 = vld [vmem:[#allocation8 + $0x8c8] sm:$0xff]
    %v2091 = vld [vmem:[#allocation8 + $0x8d0] sm:$0xff]
    %v2092 = vld [vmem:[#allocation8 + $0x8d8] sm:$0xff]
    %v2093 = vld [vmem:[#allocation8 + $0x8e0] sm:$0xff]
    %v2094 = vld [vmem:[#allocation8 + $0x8e8] sm:$0xff]
    %v2095 = vld [vmem:[#allocation8 + $0x8f0] sm:$0xff]
    %v2096 = vld [vmem:[#allocation8 + $0x8f8] sm:$0xff]
    %v2097 = vld [vmem:[#allocation16] sm:$0xff]
    %v2098 = vld [vmem:[#allocation16 + $0x8] sm:$0xf]
    %v2101 = vlaneseq
    %v2102 = vshrl.u32 %v2101, 7
    %v2103 = vsub.s32 0, %v2102
    %v2104 = vrot.slane %v2097, %v2103
    %v2105 = vlaneseq
    %v2106 = vshrl.u32 %v2105, 7
    %v2107 = vsub.s32 1, %v2106
    %v2108 = vrot.slane %v2097, %v2107
    %v2109 = vlaneseq
    %v2110 = vshrl.u32 %v2109, 7
    %v2111 = vsub.s32 2, %v2110
    %v2112 = vrot.slane %v2097, %v2111
    %v2113 = vlaneseq
    %v2114 = vshrl.u32 %v2113, 7
    %v2115 = vsub.s32 3, %v2114
    %v2116 = vrot.slane %v2097, %v2115
    %v2117 = vlaneseq
    %v2118 = vshrl.u32 %v2117, 7
    %v2119 = vsub.s32 4, %v2118
    %v2120 = vrot.slane %v2097, %v2119
    %v2121 = vlaneseq
    %v2122 = vshrl.u32 %v2121, 7
    %v2123 = vsub.s32 5, %v2122
    %v2124 = vrot.slane %v2097, %v2123
    %v2125 = vlaneseq
    %v2126 = vshrl.u32 %v2125, 7
    %v2127 = vsub.s32 6, %v2126
    %v2128 = vrot.slane %v2097, %v2127
    %v2129 = vlaneseq
    %v2130 = vshrl.u32 %v2129, 7
    %v2131 = vsub.s32 7, %v2130
    %v2132 = vrot.slane %v2097, %v2131
    %v2133 = vlaneseq
    %v2134 = vshrl.u32 %v2133, 7
    %v2135 = vsub.s32 0, %v2134
    %v2136 = vrot.slane %v2098, %v2135
    %v2137 = vlaneseq
    %v2138 = vshrl.u32 %v2137, 7
    %v2139 = vsub.s32 1, %v2138
    %v2140 = vrot.slane %v2098, %v2139
    %v2141 = vlaneseq
    %v2142 = vshrl.u32 %v2141, 7
    %v2143 = vsub.s32 2, %v2142
    %v2144 = vrot.slane %v2098, %v2143
    %v2145 = vlaneseq
    %v2146 = vshrl.u32 %v2145, 7
    %v2147 = vsub.s32 3, %v2146
    %v2148 = vrot.slane %v2098, %v2147
    %v2449 = vunpack.c.l.b16 %v1809
    %v2450 = vunpack.c.h.b16 %v1809
    %v2451 = vunpack.c.l.b16 %v1810
    %v2452 = vunpack.c.h.b16 %v1810
    %v2453 = vunpack.c.l.b16 %v1811
    %v2454 = vunpack.c.h.b16 %v1811
    %v2455 = vunpack.c.l.b16 %v1812
    %v2456 = vunpack.c.h.b16 %v1812
    %v2457 = vunpack.c.l.b16 %v1813
    %v2458 = vunpack.c.h.b16 %v1813
    %v2459 = vunpack.c.l.b16 %v1814
    %v2460 = vunpack.c.h.b16 %v1814
    %v2461 = vunpack.c.l.b16 %v1815
    %v2462 = vunpack.c.h.b16 %v1815
    %v2463 = vunpack.c.l.b16 %v1816
    %v2464 = vunpack.c.h.b16 %v1816
    %v2465 = vunpack.c.l.b16 %v1817
    %v2466 = vunpack.c.h.b16 %v1817
    %v2467 = vunpack.c.l.b16 %v1818
    %v2468 = vunpack.c.h.b16 %v1818
    %v2469 = vunpack.c.l.b16 %v1819
    %v2470 = vunpack.c.h.b16 %v1819
    %v2471 = vunpack.c.l.b16 %v1820
    %v2472 = vunpack.c.h.b16 %v1820
    %v2473 = vunpack.c.l.b16 %v1821
    %v2474 = vunpack.c.h.b16 %v1821
    %v2475 = vunpack.c.l.b16 %v1822
    %v2476 = vunpack.c.h.b16 %v1822
    %v2477 = vunpack.c.l.b16 %v1823
    %v2478 = vunpack.c.h.b16 %v1823
    %v2479 = vunpack.c.l.b16 %v1824
    %v2480 = vunpack.c.h.b16 %v1824
    %v2481 = vunpack.c.l.b16 %v1825
    %v2482 = vunpack.c.h.b16 %v1825
    %v2483 = vunpack.c.l.b16 %v1826
    %v2484 = vunpack.c.h.b16 %v1826
    %v2485 = vunpack.c.l.b16 %v1827
    %v2486 = vunpack.c.h.b16 %v1827
    %v2487 = vunpack.c.l.b16 %v1828
    %v2488 = vunpack.c.h.b16 %v1828
    %v2489 = vunpack.c.l.b16 %v1829
    %v2490 = vunpack.c.h.b16 %v1829
    %v2491 = vunpack.c.l.b16 %v1830
    %v2492 = vunpack.c.h.b16 %v1830
    %v2493 = vunpack.c.l.b16 %v1831
    %v2494 = vunpack.c.h.b16 %v1831
    %v2495 = vunpack.c.l.b16 %v1832
    %v2496 = vunpack.c.h.b16 %v1832
    %v2497 = vunpack.c.l.b16 %v1833
    %v2498 = vunpack.c.h.b16 %v1833
    %v2499 = vunpack.c.l.b16 %v1834
    %v2500 = vunpack.c.h.b16 %v1834
    %v2501 = vunpack.c.l.b16 %v1835
    %v2502 = vunpack.c.h.b16 %v1835
    %v2503 = vunpack.c.l.b16 %v1836
    %v2504 = vunpack.c.h.b16 %v1836
    %v2505 = vunpack.c.l.b16 %v1837
    %v2506 = vunpack.c.h.b16 %v1837
    %v2507 = vunpack.c.l.b16 %v1838
    %v2508 = vunpack.c.h.b16 %v1838
    %v2509 = vunpack.c.l.b16 %v1839
    %v2510 = vunpack.c.h.b16 %v1839
    %v2511 = vunpack.c.l.b16 %v1840
    %v2512 = vunpack.c.h.b16 %v1840
    %v2513 = vunpack.c.l.b16 %v1841
    %v2514 = vunpack.c.h.b16 %v1841
    %v2515 = vunpack.c.l.b16 %v1842
    %v2516 = vunpack.c.h.b16 %v1842
    %v2517 = vunpack.c.l.b16 %v1843
    %v2518 = vunpack.c.h.b16 %v1843
    %v2519 = vunpack.c.l.b16 %v1844
    %v2520 = vunpack.c.h.b16 %v1844
    %v2521 = vunpack.c.l.b16 %v1845
    %v2522 = vunpack.c.h.b16 %v1845
    %v2523 = vunpack.c.l.b16 %v1846
    %v2524 = vunpack.c.h.b16 %v1846
    %v2525 = vunpack.c.l.b16 %v1847
    %v2526 = vunpack.c.h.b16 %v1847
    %v2527 = vunpack.c.l.b16 %v1848
    %v2528 = vunpack.c.h.b16 %v1848
    %v2529 = vunpack.c.l.b16 %v1849
    %v2530 = vunpack.c.h.b16 %v1849
    %v2531 = vunpack.c.l.b16 %v1850
    %v2532 = vunpack.c.h.b16 %v1850
    %v2533 = vunpack.c.l.b16 %v1851
    %v2534 = vunpack.c.h.b16 %v1851
    %v2535 = vunpack.c.l.b16 %v1852
    %v2536 = vunpack.c.h.b16 %v1852
    %v2537 = vunpack.c.l.b16 %v1853
    %v2538 = vunpack.c.h.b16 %v1853
    %v2539 = vunpack.c.l.b16 %v1854
    %v2540 = vunpack.c.h.b16 %v1854
    %v2541 = vunpack.c.l.b16 %v1855
    %v2542 = vunpack.c.h.b16 %v1855
    %v2543 = vunpack.c.l.b16 %v1856
    %v2544 = vunpack.c.h.b16 %v1856
    %v2545 = vunpack.c.l.b16 %v1857
    %v2546 = vunpack.c.h.b16 %v1857
    %v2547 = vunpack.c.l.b16 %v1858
    %v2548 = vunpack.c.h.b16 %v1858
    %v2549 = vunpack.c.l.b16 %v1859
    %v2550 = vunpack.c.h.b16 %v1859
    %v2551 = vunpack.c.l.b16 %v1860
    %v2552 = vunpack.c.h.b16 %v1860
    %v2553 = vunpack.c.l.b16 %v1861
    %v2554 = vunpack.c.h.b16 %v1861
    %v2555 = vunpack.c.l.b16 %v1862
    %v2556 = vunpack.c.h.b16 %v1862
    %v2557 = vunpack.c.l.b16 %v1863
    %v2558 = vunpack.c.h.b16 %v1863
    %v2559 = vunpack.c.l.b16 %v1864
    %v2560 = vunpack.c.h.b16 %v1864
    %v2561 = vunpack.c.l.b16 %v1865
    %v2562 = vunpack.c.h.b16 %v1865
    %v2563 = vunpack.c.l.b16 %v1866
    %v2564 = vunpack.c.h.b16 %v1866
    %v2565 = vunpack.c.l.b16 %v1867
    %v2566 = vunpack.c.h.b16 %v1867
    %v2567 = vunpack.c.l.b16 %v1868
    %v2568 = vunpack.c.h.b16 %v1868
    %v2569 = vunpack.c.l.b16 %v1869
    %v2570 = vunpack.c.h.b16 %v1869
    %v2571 = vunpack.c.l.b16 %v1870
    %v2572 = vunpack.c.h.b16 %v1870
    %v2573 = vunpack.c.l.b16 %v1871
    %v2574 = vunpack.c.h.b16 %v1871
    %v2575 = vunpack.c.l.b16 %v1872
    %v2576 = vunpack.c.h.b16 %v1872
    %v2577 = vunpack.c.l.b16 %v1873
    %v2578 = vunpack.c.h.b16 %v1873
    %v2579 = vunpack.c.l.b16 %v1874
    %v2580 = vunpack.c.h.b16 %v1874
    %v2581 = vunpack.c.l.b16 %v1875
    %v2582 = vunpack.c.h.b16 %v1875
    %v2583 = vunpack.c.l.b16 %v1876
    %v2584 = vunpack.c.h.b16 %v1876
    %v2585 = vunpack.c.l.b16 %v1877
    %v2586 = vunpack.c.h.b16 %v1877
    %v2587 = vunpack.c.l.b16 %v1878
    %v2588 = vunpack.c.h.b16 %v1878
    %v2589 = vunpack.c.l.b16 %v1879
    %v2590 = vunpack.c.h.b16 %v1879
    %v2591 = vunpack.c.l.b16 %v1880
    %v2592 = vunpack.c.h.b16 %v1880
    %v2593 = vunpack.c.l.b16 %v1881
    %v2594 = vunpack.c.h.b16 %v1881
    %v2595 = vunpack.c.l.b16 %v1882
    %v2596 = vunpack.c.h.b16 %v1882
    %v2597 = vunpack.c.l.b16 %v1883
    %v2598 = vunpack.c.h.b16 %v1883
    %v2599 = vunpack.c.l.b16 %v1884
    %v2600 = vunpack.c.h.b16 %v1884
    %v2601 = vunpack.c.l.b16 %v1885
    %v2602 = vunpack.c.h.b16 %v1885
    %v2603 = vunpack.c.l.b16 %v1886
    %v2604 = vunpack.c.h.b16 %v1886
    %v2605 = vunpack.c.l.b16 %v1887
    %v2606 = vunpack.c.h.b16 %v1887
    %v2607 = vunpack.c.l.b16 %v1888
    %v2608 = vunpack.c.h.b16 %v1888
    %v2609 = vunpack.c.l.b16 %v1889
    %v2610 = vunpack.c.h.b16 %v1889
    %v2611 = vunpack.c.l.b16 %v1890
    %v2612 = vunpack.c.h.b16 %v1890
    %v2613 = vunpack.c.l.b16 %v1891
    %v2614 = vunpack.c.h.b16 %v1891
    %v2615 = vunpack.c.l.b16 %v1892
    %v2616 = vunpack.c.h.b16 %v1892
    %v2617 = vunpack.c.l.b16 %v1893
    %v2618 = vunpack.c.h.b16 %v1893
    %v2619 = vunpack.c.l.b16 %v1894
    %v2620 = vunpack.c.h.b16 %v1894
    %v2621 = vunpack.c.l.b16 %v1895
    %v2622 = vunpack.c.h.b16 %v1895
    %v2623 = vunpack.c.l.b16 %v1896
    %v2624 = vunpack.c.h.b16 %v1896
    %v2625 = vunpack.c.l.b16 %v1897
    %v2626 = vunpack.c.h.b16 %v1897
    %v2627 = vunpack.c.l.b16 %v1898
    %v2628 = vunpack.c.h.b16 %v1898
    %v2629 = vunpack.c.l.b16 %v1899
    %v2630 = vunpack.c.h.b16 %v1899
    %v2631 = vunpack.c.l.b16 %v1900
    %v2632 = vunpack.c.h.b16 %v1900
    %v2633 = vunpack.c.l.b16 %v1901
    %v2634 = vunpack.c.h.b16 %v1901
    %v2635 = vunpack.c.l.b16 %v1902
    %v2636 = vunpack.c.h.b16 %v1902
    %v2637 = vunpack.c.l.b16 %v1903
    %v2638 = vunpack.c.h.b16 %v1903
    %v2639 = vunpack.c.l.b16 %v1904
    %v2640 = vunpack.c.h.b16 %v1904
    %v2641 = vunpack.c.l.b16 %v1905
    %v2642 = vunpack.c.h.b16 %v1905
    %v2643 = vunpack.c.l.b16 %v1906
    %v2644 = vunpack.c.h.b16 %v1906
    %v2645 = vunpack.c.l.b16 %v1907
    %v2646 = vunpack.c.h.b16 %v1907
    %v2647 = vunpack.c.l.b16 %v1908
    %v2648 = vunpack.c.h.b16 %v1908
    %v2649 = vunpack.c.l.b16 %v1909
    %v2650 = vunpack.c.h.b16 %v1909
    %v2651 = vunpack.c.l.b16 %v1910
    %v2652 = vunpack.c.h.b16 %v1910
    %v2653 = vunpack.c.l.b16 %v1911
    %v2654 = vunpack.c.h.b16 %v1911
    %v2655 = vunpack.c.l.b16 %v1912
    %v2656 = vunpack.c.h.b16 %v1912
    %v2657 = vunpack.c.l.b16 %v1913
    %v2658 = vunpack.c.h.b16 %v1913
    %v2659 = vunpack.c.l.b16 %v1914
    %v2660 = vunpack.c.h.b16 %v1914
    %v2661 = vunpack.c.l.b16 %v1915
    %v2662 = vunpack.c.h.b16 %v1915
    %v2663 = vunpack.c.l.b16 %v1916
    %v2664 = vunpack.c.h.b16 %v1916
    %v2665 = vunpack.c.l.b16 %v1917
    %v2666 = vunpack.c.h.b16 %v1917
    %v2667 = vunpack.c.l.b16 %v1918
    %v2668 = vunpack.c.h.b16 %v1918
    %v2669 = vunpack.c.l.b16 %v1919
    %v2670 = vunpack.c.h.b16 %v1919
    %v2671 = vunpack.c.l.b16 %v1920
    %v2672 = vunpack.c.h.b16 %v1920
    %v2673 = vunpack.c.l.b16 %v1921
    %v2674 = vunpack.c.h.b16 %v1921
    %v2675 = vunpack.c.l.b16 %v1922
    %v2676 = vunpack.c.h.b16 %v1922
    %v2677 = vunpack.c.l.b16 %v1923
    %v2678 = vunpack.c.h.b16 %v1923
    %v2679 = vunpack.c.l.b16 %v1924
    %v2680 = vunpack.c.h.b16 %v1924
    %v2681 = vunpack.c.l.b16 %v1925
    %v2682 = vunpack.c.h.b16 %v1925
    %v2683 = vunpack.c.l.b16 %v1926
    %v2684 = vunpack.c.h.b16 %v1926
    %v2685 = vunpack.c.l.b16 %v1927
    %v2686 = vunpack.c.h.b16 %v1927
    %v2687 = vunpack.c.l.b16 %v1928
    %v2688 = vunpack.c.h.b16 %v1928
    %v2689 = vunpack.c.l.b16 %v1929
    %v2690 = vunpack.c.h.b16 %v1929
    %v2691 = vunpack.c.l.b16 %v1930
    %v2692 = vunpack.c.h.b16 %v1930
    %v2693 = vunpack.c.l.b16 %v1931
    %v2694 = vunpack.c.h.b16 %v1931
    %v2695 = vunpack.c.l.b16 %v1932
    %v2696 = vunpack.c.h.b16 %v1932
    %v2697 = vunpack.c.l.b16 %v1933
    %v2698 = vunpack.c.h.b16 %v1933
    %v2699 = vunpack.c.l.b16 %v1934
    %v2700 = vunpack.c.h.b16 %v1934
    %v2701 = vunpack.c.l.b16 %v1935
    %v2702 = vunpack.c.h.b16 %v1935
    %v2703 = vunpack.c.l.b16 %v1936
    %v2704 = vunpack.c.h.b16 %v1936
    %v2705 = vunpack.c.l.b16 %v1937
    %v2706 = vunpack.c.h.b16 %v1937
    %v2707 = vunpack.c.l.b16 %v1938
    %v2708 = vunpack.c.h.b16 %v1938
    %v2709 = vunpack.c.l.b16 %v1939
    %v2710 = vunpack.c.h.b16 %v1939
    %v2711 = vunpack.c.l.b16 %v1940
    %v2712 = vunpack.c.h.b16 %v1940
    %v2713 = vunpack.c.l.b16 %v1941
    %v2714 = vunpack.c.h.b16 %v1941
    %v2715 = vunpack.c.l.b16 %v1942
    %v2716 = vunpack.c.h.b16 %v1942
    %v2717 = vunpack.c.l.b16 %v1943
    %v2718 = vunpack.c.h.b16 %v1943
    %v2719 = vunpack.c.l.b16 %v1944
    %v2720 = vunpack.c.h.b16 %v1944
    %v2721 = vunpack.c.l.b16 %v1945
    %v2722 = vunpack.c.h.b16 %v1945
    %v2723 = vunpack.c.l.b16 %v1946
    %v2724 = vunpack.c.h.b16 %v1946
    %v2725 = vunpack.c.l.b16 %v1947
    %v2726 = vunpack.c.h.b16 %v1947
    %v2727 = vunpack.c.l.b16 %v1948
    %v2728 = vunpack.c.h.b16 %v1948
    %v2729 = vunpack.c.l.b16 %v1949
    %v2730 = vunpack.c.h.b16 %v1949
    %v2731 = vunpack.c.l.b16 %v1950
    %v2732 = vunpack.c.h.b16 %v1950
    %v2733 = vunpack.c.l.b16 %v1951
    %v2734 = vunpack.c.h.b16 %v1951
    %v2735 = vunpack.c.l.b16 %v1952
    %v2736 = vunpack.c.h.b16 %v1952
    %v2737 = vunpack.c.l.b16 %v1953
    %v2738 = vunpack.c.h.b16 %v1953
    %v2739 = vunpack.c.l.b16 %v1954
    %v2740 = vunpack.c.h.b16 %v1954
    %v2741 = vunpack.c.l.b16 %v1955
    %v2742 = vunpack.c.h.b16 %v1955
    %v2743 = vunpack.c.l.b16 %v1956
    %v2744 = vunpack.c.h.b16 %v1956
    %v2745 = vunpack.c.l.b16 %v1957
    %v2746 = vunpack.c.h.b16 %v1957
    %v2747 = vunpack.c.l.b16 %v1958
    %v2748 = vunpack.c.h.b16 %v1958
    %v2749 = vunpack.c.l.b16 %v1959
    %v2750 = vunpack.c.h.b16 %v1959
    %v2751 = vunpack.c.l.b16 %v1960
    %v2752 = vunpack.c.h.b16 %v1960
    %v2753 = vunpack.c.l.b16 %v1961
    %v2754 = vunpack.c.h.b16 %v1961
    %v2755 = vunpack.c.l.b16 %v1962
    %v2756 = vunpack.c.h.b16 %v1962
    %v2757 = vunpack.c.l.b16 %v1963
    %v2758 = vunpack.c.h.b16 %v1963
    %v2759 = vunpack.c.l.b16 %v1964
    %v2760 = vunpack.c.h.b16 %v1964
    %v2761 = vunpack.c.l.b16 %v1965
    %v2762 = vunpack.c.h.b16 %v1965
    %v2763 = vunpack.c.l.b16 %v1966
    %v2764 = vunpack.c.h.b16 %v1966
    %v2765 = vunpack.c.l.b16 %v1967
    %v2766 = vunpack.c.h.b16 %v1967
    %v2767 = vunpack.c.l.b16 %v1968
    %v2768 = vunpack.c.h.b16 %v1968
    %v2769 = vunpack.c.l.b16 %v1969
    %v2770 = vunpack.c.h.b16 %v1969
    %v2771 = vunpack.c.l.b16 %v1970
    %v2772 = vunpack.c.h.b16 %v1970
    %v2773 = vunpack.c.l.b16 %v1971
    %v2774 = vunpack.c.h.b16 %v1971
    %v2775 = vunpack.c.l.b16 %v1972
    %v2776 = vunpack.c.h.b16 %v1972
    %v2777 = vunpack.c.l.b16 %v1973
    %v2778 = vunpack.c.h.b16 %v1973
    %v2779 = vunpack.c.l.b16 %v1974
    %v2780 = vunpack.c.h.b16 %v1974
    %v2781 = vunpack.c.l.b16 %v1975
    %v2782 = vunpack.c.h.b16 %v1975
    %v2783 = vunpack.c.l.b16 %v1976
    %v2784 = vunpack.c.h.b16 %v1976
    %v2785 = vunpack.c.l.b16 %v1977
    %v2786 = vunpack.c.h.b16 %v1977
    %v2787 = vunpack.c.l.b16 %v1978
    %v2788 = vunpack.c.h.b16 %v1978
    %v2789 = vunpack.c.l.b16 %v1979
    %v2790 = vunpack.c.h.b16 %v1979
    %v2791 = vunpack.c.l.b16 %v1980
    %v2792 = vunpack.c.h.b16 %v1980
    %v2793 = vunpack.c.l.b16 %v1981
    %v2794 = vunpack.c.h.b16 %v1981
    %v2795 = vunpack.c.l.b16 %v1982
    %v2796 = vunpack.c.h.b16 %v1982
    %v2797 = vunpack.c.l.b16 %v1983
    %v2798 = vunpack.c.h.b16 %v1983
    %v2799 = vunpack.c.l.b16 %v1984
    %v2800 = vunpack.c.h.b16 %v1984
    %v2801 = vunpack.c.l.b16 %v1985
    %v2802 = vunpack.c.h.b16 %v1985
    %v2803 = vunpack.c.l.b16 %v1986
    %v2804 = vunpack.c.h.b16 %v1986
    %v2805 = vunpack.c.l.b16 %v1987
    %v2806 = vunpack.c.h.b16 %v1987
    %v2807 = vunpack.c.l.b16 %v1988
    %v2808 = vunpack.c.h.b16 %v1988
    %v2809 = vunpack.c.l.b16 %v1989
    %v2810 = vunpack.c.h.b16 %v1989
    %v2811 = vunpack.c.l.b16 %v1990
    %v2812 = vunpack.c.h.b16 %v1990
    %v2813 = vunpack.c.l.b16 %v1991
    %v2814 = vunpack.c.h.b16 %v1991
    %v2815 = vunpack.c.l.b16 %v1992
    %v2816 = vunpack.c.h.b16 %v1992
    %v2817 = vunpack.c.l.b16 %v1993
    %v2818 = vunpack.c.h.b16 %v1993
    %v2819 = vunpack.c.l.b16 %v1994
    %v2820 = vunpack.c.h.b16 %v1994
    %v2821 = vunpack.c.l.b16 %v1995
    %v2822 = vunpack.c.h.b16 %v1995
    %v2823 = vunpack.c.l.b16 %v1996
    %v2824 = vunpack.c.h.b16 %v1996
    %v2825 = vunpack.c.l.b16 %v1997
    %v2826 = vunpack.c.h.b16 %v1997
    %v2827 = vunpack.c.l.b16 %v1998
    %v2828 = vunpack.c.h.b16 %v1998
    %v2829 = vunpack.c.l.b16 %v1999
    %v2830 = vunpack.c.h.b16 %v1999
    %v2831 = vunpack.c.l.b16 %v2000
    %v2832 = vunpack.c.h.b16 %v2000
    %v2833 = vunpack.c.l.b16 %v2001
    %v2834 = vunpack.c.h.b16 %v2001
    %v2835 = vunpack.c.l.b16 %v2002
    %v2836 = vunpack.c.h.b16 %v2002
    %v2837 = vunpack.c.l.b16 %v2003
    %v2838 = vunpack.c.h.b16 %v2003
    %v2839 = vunpack.c.l.b16 %v2004
    %v2840 = vunpack.c.h.b16 %v2004
    %v2841 = vunpack.c.l.b16 %v2005
    %v2842 = vunpack.c.h.b16 %v2005
    %v2843 = vunpack.c.l.b16 %v2006
    %v2844 = vunpack.c.h.b16 %v2006
    %v2845 = vunpack.c.l.b16 %v2007
    %v2846 = vunpack.c.h.b16 %v2007
    %v2847 = vunpack.c.l.b16 %v2008
    %v2848 = vunpack.c.h.b16 %v2008
    %v2849 = vunpack.c.l.b16 %v2009
    %v2850 = vunpack.c.h.b16 %v2009
    %v2851 = vunpack.c.l.b16 %v2010
    %v2852 = vunpack.c.h.b16 %v2010
    %v2853 = vunpack.c.l.b16 %v2011
    %v2854 = vunpack.c.h.b16 %v2011
    %v2855 = vunpack.c.l.b16 %v2012
    %v2856 = vunpack.c.h.b16 %v2012
    %v2857 = vunpack.c.l.b16 %v2013
    %v2858 = vunpack.c.h.b16 %v2013
    %v2859 = vunpack.c.l.b16 %v2014
    %v2860 = vunpack.c.h.b16 %v2014
    %v2861 = vunpack.c.l.b16 %v2015
    %v2862 = vunpack.c.h.b16 %v2015
    %v2863 = vunpack.c.l.b16 %v2016
    %v2864 = vunpack.c.h.b16 %v2016
    %v2865 = vunpack.c.l.b16 %v2017
    %v2866 = vunpack.c.h.b16 %v2017
    %v2867 = vunpack.c.l.b16 %v2018
    %v2868 = vunpack.c.h.b16 %v2018
    %v2869 = vunpack.c.l.b16 %v2019
    %v2870 = vunpack.c.h.b16 %v2019
    %v2871 = vunpack.c.l.b16 %v2020
    %v2872 = vunpack.c.h.b16 %v2020
    %v2873 = vunpack.c.l.b16 %v2021
    %v2874 = vunpack.c.h.b16 %v2021
    %v2875 = vunpack.c.l.b16 %v2022
    %v2876 = vunpack.c.h.b16 %v2022
    %v2877 = vunpack.c.l.b16 %v2023
    %v2878 = vunpack.c.h.b16 %v2023
    %v2879 = vunpack.c.l.b16 %v2024
    %v2880 = vunpack.c.h.b16 %v2024
    %v2881 = vunpack.c.l.b16 %v2025
    %v2882 = vunpack.c.h.b16 %v2025
    %v2883 = vunpack.c.l.b16 %v2026
    %v2884 = vunpack.c.h.b16 %v2026
    %v2885 = vunpack.c.l.b16 %v2027
    %v2886 = vunpack.c.h.b16 %v2027
    %v2887 = vunpack.c.l.b16 %v2028
    %v2888 = vunpack.c.h.b16 %v2028
    %v2889 = vunpack.c.l.b16 %v2029
    %v2890 = vunpack.c.h.b16 %v2029
    %v2891 = vunpack.c.l.b16 %v2030
    %v2892 = vunpack.c.h.b16 %v2030
    %v2893 = vunpack.c.l.b16 %v2031
    %v2894 = vunpack.c.h.b16 %v2031
    %v2895 = vunpack.c.l.b16 %v2032
    %v2896 = vunpack.c.h.b16 %v2032
    %v2897 = vunpack.c.l.b16 %v2033
    %v2898 = vunpack.c.h.b16 %v2033
    %v2899 = vunpack.c.l.b16 %v2034
    %v2900 = vunpack.c.h.b16 %v2034
    %v2901 = vunpack.c.l.b16 %v2035
    %v2902 = vunpack.c.h.b16 %v2035
    %v2903 = vunpack.c.l.b16 %v2036
    %v2904 = vunpack.c.h.b16 %v2036
    %v2905 = vunpack.c.l.b16 %v2037
    %v2906 = vunpack.c.h.b16 %v2037
    %v2907 = vunpack.c.l.b16 %v2038
    %v2908 = vunpack.c.h.b16 %v2038
    %v2909 = vunpack.c.l.b16 %v2039
    %v2910 = vunpack.c.h.b16 %v2039
    %v2911 = vunpack.c.l.b16 %v2040
    %v2912 = vunpack.c.h.b16 %v2040
    %v2913 = vunpack.c.l.b16 %v2041
    %v2914 = vunpack.c.h.b16 %v2041
    %v2915 = vunpack.c.l.b16 %v2042
    %v2916 = vunpack.c.h.b16 %v2042
    %v2917 = vunpack.c.l.b16 %v2043
    %v2918 = vunpack.c.h.b16 %v2043
    %v2919 = vunpack.c.l.b16 %v2044
    %v2920 = vunpack.c.h.b16 %v2044
    %v2921 = vunpack.c.l.b16 %v2045
    %v2922 = vunpack.c.h.b16 %v2045
    %v2923 = vunpack.c.l.b16 %v2046
    %v2924 = vunpack.c.h.b16 %v2046
    %v2925 = vunpack.c.l.b16 %v2047
    %v2926 = vunpack.c.h.b16 %v2047
    %v2927 = vunpack.c.l.b16 %v2048
    %v2928 = vunpack.c.h.b16 %v2048
    %v2929 = vunpack.c.l.b16 %v2049
    %v2930 = vunpack.c.h.b16 %v2049
    %v2931 = vunpack.c.l.b16 %v2050
    %v2932 = vunpack.c.h.b16 %v2050
    %v2933 = vunpack.c.l.b16 %v2051
    %v2934 = vunpack.c.h.b16 %v2051
    %v2935 = vunpack.c.l.b16 %v2052
    %v2936 = vunpack.c.h.b16 %v2052
    %v2937 = vunpack.c.l.b16 %v2053
    %v2938 = vunpack.c.h.b16 %v2053
    %v2939 = vunpack.c.l.b16 %v2054
    %v2940 = vunpack.c.h.b16 %v2054
    %v2941 = vunpack.c.l.b16 %v2055
    %v2942 = vunpack.c.h.b16 %v2055
    %v2943 = vunpack.c.l.b16 %v2056
    %v2944 = vunpack.c.h.b16 %v2056
    %v2945 = vunpack.c.l.b16 %v2057
    %v2946 = vunpack.c.h.b16 %v2057
    %v2947 = vunpack.c.l.b16 %v2058
    %v2948 = vunpack.c.h.b16 %v2058
    %v2949 = vunpack.c.l.b16 %v2059
    %v2950 = vunpack.c.h.b16 %v2059
    %v2951 = vunpack.c.l.b16 %v2060
    %v2952 = vunpack.c.h.b16 %v2060
    %v2953 = vunpack.c.l.b16 %v2061
    %v2954 = vunpack.c.h.b16 %v2061
    %v2955 = vunpack.c.l.b16 %v2062
    %v2956 = vunpack.c.h.b16 %v2062
    %v2957 = vunpack.c.l.b16 %v2063
    %v2958 = vunpack.c.h.b16 %v2063
    %v2959 = vunpack.c.l.b16 %v2064
    %v2960 = vunpack.c.h.b16 %v2064
    %v2961 = vunpack.c.l.b16 %v2065
    %v2962 = vunpack.c.h.b16 %v2065
    %v2963 = vunpack.c.l.b16 %v2066
    %v2964 = vunpack.c.h.b16 %v2066
    %v2965 = vunpack.c.l.b16 %v2067
    %v2966 = vunpack.c.h.b16 %v2067
    %v2967 = vunpack.c.l.b16 %v2068
    %v2968 = vunpack.c.h.b16 %v2068
    %v2969 = vunpack.c.l.b16 %v2069
    %v2970 = vunpack.c.h.b16 %v2069
    %v2971 = vunpack.c.l.b16 %v2070
    %v2972 = vunpack.c.h.b16 %v2070
    %v2973 = vunpack.c.l.b16 %v2071
    %v2974 = vunpack.c.h.b16 %v2071
    %v2975 = vunpack.c.l.b16 %v2072
    %v2976 = vunpack.c.h.b16 %v2072
    %v2977 = vunpack.c.l.b16 %v2073
    %v2978 = vunpack.c.h.b16 %v2073
    %v2979 = vunpack.c.l.b16 %v2074
    %v2980 = vunpack.c.h.b16 %v2074
    %v2981 = vunpack.c.l.b16 %v2075
    %v2982 = vunpack.c.h.b16 %v2075
    %v2983 = vunpack.c.l.b16 %v2076
    %v2984 = vunpack.c.h.b16 %v2076
    %v2985 = vunpack.c.l.b16 %v2077
    %v2986 = vunpack.c.h.b16 %v2077
    %v2987 = vunpack.c.l.b16 %v2078
    %v2988 = vunpack.c.h.b16 %v2078
    %v2989 = vunpack.c.l.b16 %v2079
    %v2990 = vunpack.c.h.b16 %v2079
    %v2991 = vunpack.c.l.b16 %v2080
    %v2992 = vunpack.c.h.b16 %v2080
    %v2993 = vunpack.c.l.b16 %v2081
    %v2994 = vunpack.c.h.b16 %v2081
    %v2995 = vunpack.c.l.b16 %v2082
    %v2996 = vunpack.c.h.b16 %v2082
    %v2997 = vunpack.c.l.b16 %v2083
    %v2998 = vunpack.c.h.b16 %v2083
    %v2999 = vunpack.c.l.b16 %v2084
    %v3000 = vunpack.c.h.b16 %v2084
    %v3001 = vunpack.c.l.b16 %v2085
    %v3002 = vunpack.c.h.b16 %v2085
    %v3003 = vunpack.c.l.b16 %v2086
    %v3004 = vunpack.c.h.b16 %v2086
    %v3005 = vunpack.c.l.b16 %v2087
    %v3006 = vunpack.c.h.b16 %v2087
    %v3007 = vunpack.c.l.b16 %v2088
    %v3008 = vunpack.c.h.b16 %v2088
    %v3009 = vunpack.c.l.b16 %v2089
    %v3010 = vunpack.c.h.b16 %v2089
    %v3011 = vunpack.c.l.b16 %v2090
    %v3012 = vunpack.c.h.b16 %v2090
    %v3013 = vunpack.c.l.b16 %v2091
    %v3014 = vunpack.c.h.b16 %v2091
    %v3015 = vunpack.c.l.b16 %v2092
    %v3016 = vunpack.c.h.b16 %v2092
    %v3017 = vunpack.c.l.b16 %v2093
    %v3018 = vunpack.c.h.b16 %v2093
    %v3019 = vunpack.c.l.b16 %v2094
    %v3020 = vunpack.c.h.b16 %v2094
    %v3021 = vunpack.c.l.b16 %v2095
    %v3022 = vunpack.c.h.b16 %v2095
    %v3023 = vunpack.c.l.b16 %v2096
    %v3024 = vunpack.c.h.b16 %v2096
    %v3025 = vpack.c.b16 %v2461, %v2449
    %v3026 = vpack.c.b16 %v2462, %v2450
    %v3027 = vpack.c.b16 %v2463, %v2451
    %v3028 = vpack.c.b16 %v2464, %v2452
    %v3029 = vpack.c.b16 %v2465, %v2453
    %v3030 = vpack.c.b16 %v2466, %v2454
    %v3031 = vpack.c.b16 %v2467, %v2455
    %v3032 = vpack.c.b16 %v2468, %v2456
    %v3033 = vpack.c.b16 %v2469, %v2457
    %v3034 = vpack.c.b16 %v2470, %v2458
    %v3035 = vpack.c.b16 %v2471, %v2459
    %v3036 = vpack.c.b16 %v2472, %v2460
    %v3037 = vpack.c.b16 %v2485, %v2473
    %v3038 = vpack.c.b16 %v2486, %v2474
    %v3039 = vpack.c.b16 %v2487, %v2475
    %v3040 = vpack.c.b16 %v2488, %v2476
    %v3041 = vpack.c.b16 %v2489, %v2477
    %v3042 = vpack.c.b16 %v2490, %v2478
    %v3043 = vpack.c.b16 %v2491, %v2479
    %v3044 = vpack.c.b16 %v2492, %v2480
    %v3045 = vpack.c.b16 %v2493, %v2481
    %v3046 = vpack.c.b16 %v2494, %v2482
    %v3047 = vpack.c.b16 %v2495, %v2483
    %v3048 = vpack.c.b16 %v2496, %v2484
    %v3049 = vpack.c.b16 %v2509, %v2497
    %v3050 = vpack.c.b16 %v2510, %v2498
    %v3051 = vpack.c.b16 %v2511, %v2499
    %v3052 = vpack.c.b16 %v2512, %v2500
    %v3053 = vpack.c.b16 %v2513, %v2501
    %v3054 = vpack.c.b16 %v2514, %v2502
    %v3055 = vpack.c.b16 %v2515, %v2503
    %v3056 = vpack.c.b16 %v2516, %v2504
    %v3057 = vpack.c.b16 %v2517, %v2505
    %v3058 = vpack.c.b16 %v2518, %v2506
    %v3059 = vpack.c.b16 %v2519, %v2507
    %v3060 = vpack.c.b16 %v2520, %v2508
    %v3061 = vpack.c.b16 %v2533, %v2521
    %v3062 = vpack.c.b16 %v2534, %v2522
    %v3063 = vpack.c.b16 %v2535, %v2523
    %v3064 = vpack.c.b16 %v2536, %v2524
    %v3065 = vpack.c.b16 %v2537, %v2525
    %v3066 = vpack.c.b16 %v2538, %v2526
    %v3067 = vpack.c.b16 %v2539, %v2527
    %v3068 = vpack.c.b16 %v2540, %v2528
    %v3069 = vpack.c.b16 %v2541, %v2529
    %v3070 = vpack.c.b16 %v2542, %v2530
    %v3071 = vpack.c.b16 %v2543, %v2531
    %v3072 = vpack.c.b16 %v2544, %v2532
    %v3073 = vpack.c.b16 %v2557, %v2545
    %v3074 = vpack.c.b16 %v2558, %v2546
    %v3075 = vpack.c.b16 %v2559, %v2547
    %v3076 = vpack.c.b16 %v2560, %v2548
    %v3077 = vpack.c.b16 %v2561, %v2549
    %v3078 = vpack.c.b16 %v2562, %v2550
    %v3079 = vpack.c.b16 %v2563, %v2551
    %v3080 = vpack.c.b16 %v2564, %v2552
    %v3081 = vpack.c.b16 %v2565, %v2553
    %v3082 = vpack.c.b16 %v2566, %v2554
    %v3083 = vpack.c.b16 %v2567, %v2555
    %v3084 = vpack.c.b16 %v2568, %v2556
    %v3085 = vpack.c.b16 %v2581, %v2569
    %v3086 = vpack.c.b16 %v2582, %v2570
    %v3087 = vpack.c.b16 %v2583, %v2571
    %v3088 = vpack.c.b16 %v2584, %v2572
    %v3089 = vpack.c.b16 %v2585, %v2573
    %v3090 = vpack.c.b16 %v2586, %v2574
    %v3091 = vpack.c.b16 %v2587, %v2575
    %v3092 = vpack.c.b16 %v2588, %v2576
    %v3093 = vpack.c.b16 %v2589, %v2577
    %v3094 = vpack.c.b16 %v2590, %v2578
    %v3095 = vpack.c.b16 %v2591, %v2579
    %v3096 = vpack.c.b16 %v2592, %v2580
    %v3097 = vpack.c.b16 %v2605, %v2593
    %v3098 = vpack.c.b16 %v2606, %v2594
    %v3099 = vpack.c.b16 %v2607, %v2595
    %v3100 = vpack.c.b16 %v2608, %v2596
    %v3101 = vpack.c.b16 %v2609, %v2597
    %v3102 = vpack.c.b16 %v2610, %v2598
    %v3103 = vpack.c.b16 %v2611, %v2599
    %v3104 = vpack.c.b16 %v2612, %v2600
    %v3105 = vpack.c.b16 %v2613, %v2601
    %v3106 = vpack.c.b16 %v2614, %v2602
    %v3107 = vpack.c.b16 %v2615, %v2603
    %v3108 = vpack.c.b16 %v2616, %v2604
    %v3109 = vpack.c.b16 %v2629, %v2617
    %v3110 = vpack.c.b16 %v2630, %v2618
    %v3111 = vpack.c.b16 %v2631, %v2619
    %v3112 = vpack.c.b16 %v2632, %v2620
    %v3113 = vpack.c.b16 %v2633, %v2621
    %v3114 = vpack.c.b16 %v2634, %v2622
    %v3115 = vpack.c.b16 %v2635, %v2623
    %v3116 = vpack.c.b16 %v2636, %v2624
    %v3117 = vpack.c.b16 %v2637, %v2625
    %v3118 = vpack.c.b16 %v2638, %v2626
    %v3119 = vpack.c.b16 %v2639, %v2627
    %v3120 = vpack.c.b16 %v2640, %v2628
    %v3121 = vpack.c.b16 %v2653, %v2641
    %v3122 = vpack.c.b16 %v2654, %v2642
    %v3123 = vpack.c.b16 %v2655, %v2643
    %v3124 = vpack.c.b16 %v2656, %v2644
    %v3125 = vpack.c.b16 %v2657, %v2645
    %v3126 = vpack.c.b16 %v2658, %v2646
    %v3127 = vpack.c.b16 %v2659, %v2647
    %v3128 = vpack.c.b16 %v2660, %v2648
    %v3129 = vpack.c.b16 %v2661, %v2649
    %v3130 = vpack.c.b16 %v2662, %v2650
    %v3131 = vpack.c.b16 %v2663, %v2651
    %v3132 = vpack.c.b16 %v2664, %v2652
    %v3133 = vpack.c.b16 %v2677, %v2665
    %v3134 = vpack.c.b16 %v2678, %v2666
    %v3135 = vpack.c.b16 %v2679, %v2667
    %v3136 = vpack.c.b16 %v2680, %v2668
    %v3137 = vpack.c.b16 %v2681, %v2669
    %v3138 = vpack.c.b16 %v2682, %v2670
    %v3139 = vpack.c.b16 %v2683, %v2671
    %v3140 = vpack.c.b16 %v2684, %v2672
    %v3141 = vpack.c.b16 %v2685, %v2673
    %v3142 = vpack.c.b16 %v2686, %v2674
    %v3143 = vpack.c.b16 %v2687, %v2675
    %v3144 = vpack.c.b16 %v2688, %v2676
    %v3145 = vpack.c.b16 %v2701, %v2689
    %v3146 = vpack.c.b16 %v2702, %v2690
    %v3147 = vpack.c.b16 %v2703, %v2691
    %v3148 = vpack.c.b16 %v2704, %v2692
    %v3149 = vpack.c.b16 %v2705, %v2693
    %v3150 = vpack.c.b16 %v2706, %v2694
    %v3151 = vpack.c.b16 %v2707, %v2695
    %v3152 = vpack.c.b16 %v2708, %v2696
    %v3153 = vpack.c.b16 %v2709, %v2697
    %v3154 = vpack.c.b16 %v2710, %v2698
    %v3155 = vpack.c.b16 %v2711, %v2699
    %v3156 = vpack.c.b16 %v2712, %v2700
    %v3157 = vpack.c.b16 %v2725, %v2713
    %v3158 = vpack.c.b16 %v2726, %v2714
    %v3159 = vpack.c.b16 %v2727, %v2715
    %v3160 = vpack.c.b16 %v2728, %v2716
    %v3161 = vpack.c.b16 %v2729, %v2717
    %v3162 = vpack.c.b16 %v2730, %v2718
    %v3163 = vpack.c.b16 %v2731, %v2719
    %v3164 = vpack.c.b16 %v2732, %v2720
    %v3165 = vpack.c.b16 %v2733, %v2721
    %v3166 = vpack.c.b16 %v2734, %v2722
    %v3167 = vpack.c.b16 %v2735, %v2723
    %v3168 = vpack.c.b16 %v2736, %v2724
    %v3169 = vpack.c.b16 %v2749, %v2737
    %v3170 = vpack.c.b16 %v2750, %v2738
    %v3171 = vpack.c.b16 %v2751, %v2739
    %v3172 = vpack.c.b16 %v2752, %v2740
    %v3173 = vpack.c.b16 %v2753, %v2741
    %v3174 = vpack.c.b16 %v2754, %v2742
    %v3175 = vpack.c.b16 %v2755, %v2743
    %v3176 = vpack.c.b16 %v2756, %v2744
    %v3177 = vpack.c.b16 %v2757, %v2745
    %v3178 = vpack.c.b16 %v2758, %v2746
    %v3179 = vpack.c.b16 %v2759, %v2747
    %v3180 = vpack.c.b16 %v2760, %v2748
    %v3181 = vpack.c.b16 %v2773, %v2761
    %v3182 = vpack.c.b16 %v2774, %v2762
    %v3183 = vpack.c.b16 %v2775, %v2763
    %v3184 = vpack.c.b16 %v2776, %v2764
    %v3185 = vpack.c.b16 %v2777, %v2765
    %v3186 = vpack.c.b16 %v2778, %v2766
    %v3187 = vpack.c.b16 %v2779, %v2767
    %v3188 = vpack.c.b16 %v2780, %v2768
    %v3189 = vpack.c.b16 %v2781, %v2769
    %v3190 = vpack.c.b16 %v2782, %v2770
    %v3191 = vpack.c.b16 %v2783, %v2771
    %v3192 = vpack.c.b16 %v2784, %v2772
    %v3193 = vpack.c.b16 %v2797, %v2785
    %v3194 = vpack.c.b16 %v2798, %v2786
    %v3195 = vpack.c.b16 %v2799, %v2787
    %v3196 = vpack.c.b16 %v2800, %v2788
    %v3197 = vpack.c.b16 %v2801, %v2789
    %v3198 = vpack.c.b16 %v2802, %v2790
    %v3199 = vpack.c.b16 %v2803, %v2791
    %v3200 = vpack.c.b16 %v2804, %v2792
    %v3201 = vpack.c.b16 %v2805, %v2793
    %v3202 = vpack.c.b16 %v2806, %v2794
    %v3203 = vpack.c.b16 %v2807, %v2795
    %v3204 = vpack.c.b16 %v2808, %v2796
    %v3205 = vpack.c.b16 %v2821, %v2809
    %v3206 = vpack.c.b16 %v2822, %v2810
    %v3207 = vpack.c.b16 %v2823, %v2811
    %v3208 = vpack.c.b16 %v2824, %v2812
    %v3209 = vpack.c.b16 %v2825, %v2813
    %v3210 = vpack.c.b16 %v2826, %v2814
    %v3211 = vpack.c.b16 %v2827, %v2815
    %v3212 = vpack.c.b16 %v2828, %v2816
    %v3213 = vpack.c.b16 %v2829, %v2817
    %v3214 = vpack.c.b16 %v2830, %v2818
    %v3215 = vpack.c.b16 %v2831, %v2819
    %v3216 = vpack.c.b16 %v2832, %v2820
    %v3217 = vpack.c.b16 %v2845, %v2833
    %v3218 = vpack.c.b16 %v2846, %v2834
    %v3219 = vpack.c.b16 %v2847, %v2835
    %v3220 = vpack.c.b16 %v2848, %v2836
    %v3221 = vpack.c.b16 %v2849, %v2837
    %v3222 = vpack.c.b16 %v2850, %v2838
    %v3223 = vpack.c.b16 %v2851, %v2839
    %v3224 = vpack.c.b16 %v2852, %v2840
    %v3225 = vpack.c.b16 %v2853, %v2841
    %v3226 = vpack.c.b16 %v2854, %v2842
    %v3227 = vpack.c.b16 %v2855, %v2843
    %v3228 = vpack.c.b16 %v2856, %v2844
    %v3229 = vpack.c.b16 %v2869, %v2857
    %v3230 = vpack.c.b16 %v2870, %v2858
    %v3231 = vpack.c.b16 %v2871, %v2859
    %v3232 = vpack.c.b16 %v2872, %v2860
    %v3233 = vpack.c.b16 %v2873, %v2861
    %v3234 = vpack.c.b16 %v2874, %v2862
    %v3235 = vpack.c.b16 %v2875, %v2863
    %v3236 = vpack.c.b16 %v2876, %v2864
    %v3237 = vpack.c.b16 %v2877, %v2865
    %v3238 = vpack.c.b16 %v2878, %v2866
    %v3239 = vpack.c.b16 %v2879, %v2867
    %v3240 = vpack.c.b16 %v2880, %v2868
    %v3241 = vpack.c.b16 %v2893, %v2881
    %v3242 = vpack.c.b16 %v2894, %v2882
    %v3243 = vpack.c.b16 %v2895, %v2883
    %v3244 = vpack.c.b16 %v2896, %v2884
    %v3245 = vpack.c.b16 %v2897, %v2885
    %v3246 = vpack.c.b16 %v2898, %v2886
    %v3247 = vpack.c.b16 %v2899, %v2887
    %v3248 = vpack.c.b16 %v2900, %v2888
    %v3249 = vpack.c.b16 %v2901, %v2889
    %v3250 = vpack.c.b16 %v2902, %v2890
    %v3251 = vpack.c.b16 %v2903, %v2891
    %v3252 = vpack.c.b16 %v2904, %v2892
    %v3253 = vpack.c.b16 %v2917, %v2905
    %v3254 = vpack.c.b16 %v2918, %v2906
    %v3255 = vpack.c.b16 %v2919, %v2907
    %v3256 = vpack.c.b16 %v2920, %v2908
    %v3257 = vpack.c.b16 %v2921, %v2909
    %v3258 = vpack.c.b16 %v2922, %v2910
    %v3259 = vpack.c.b16 %v2923, %v2911
    %v3260 = vpack.c.b16 %v2924, %v2912
    %v3261 = vpack.c.b16 %v2925, %v2913
    %v3262 = vpack.c.b16 %v2926, %v2914
    %v3263 = vpack.c.b16 %v2927, %v2915
    %v3264 = vpack.c.b16 %v2928, %v2916
    %v3265 = vpack.c.b16 %v2941, %v2929
    %v3266 = vpack.c.b16 %v2942, %v2930
    %v3267 = vpack.c.b16 %v2943, %v2931
    %v3268 = vpack.c.b16 %v2944, %v2932
    %v3269 = vpack.c.b16 %v2945, %v2933
    %v3270 = vpack.c.b16 %v2946, %v2934
    %v3271 = vpack.c.b16 %v2947, %v2935
    %v3272 = vpack.c.b16 %v2948, %v2936
    %v3273 = vpack.c.b16 %v2949, %v2937
    %v3274 = vpack.c.b16 %v2950, %v2938
    %v3275 = vpack.c.b16 %v2951, %v2939
    %v3276 = vpack.c.b16 %v2952, %v2940
    %v3277 = vpack.c.b16 %v2965, %v2953
    %v3278 = vpack.c.b16 %v2966, %v2954
    %v3279 = vpack.c.b16 %v2967, %v2955
    %v3280 = vpack.c.b16 %v2968, %v2956
    %v3281 = vpack.c.b16 %v2969, %v2957
    %v3282 = vpack.c.b16 %v2970, %v2958
    %v3283 = vpack.c.b16 %v2971, %v2959
    %v3284 = vpack.c.b16 %v2972, %v2960
    %v3285 = vpack.c.b16 %v2973, %v2961
    %v3286 = vpack.c.b16 %v2974, %v2962
    %v3287 = vpack.c.b16 %v2975, %v2963
    %v3288 = vpack.c.b16 %v2976, %v2964
    %v3289 = vpack.c.b16 %v2989, %v2977
    %v3290 = vpack.c.b16 %v2990, %v2978
    %v3291 = vpack.c.b16 %v2991, %v2979
    %v3292 = vpack.c.b16 %v2992, %v2980
    %v3293 = vpack.c.b16 %v2993, %v2981
    %v3294 = vpack.c.b16 %v2994, %v2982
    %v3295 = vpack.c.b16 %v2995, %v2983
    %v3296 = vpack.c.b16 %v2996, %v2984
    %v3297 = vpack.c.b16 %v2997, %v2985
    %v3298 = vpack.c.b16 %v2998, %v2986
    %v3299 = vpack.c.b16 %v2999, %v2987
    %v3300 = vpack.c.b16 %v3000, %v2988
    %v3301 = vpack.c.b16 %v3013, %v3001
    %v3302 = vpack.c.b16 %v3014, %v3002
    %v3303 = vpack.c.b16 %v3015, %v3003
    %v3304 = vpack.c.b16 %v3016, %v3004
    %v3305 = vpack.c.b16 %v3017, %v3005
    %v3306 = vpack.c.b16 %v3018, %v3006
    %v3307 = vpack.c.b16 %v3019, %v3007
    %v3308 = vpack.c.b16 %v3020, %v3008
    %v3309 = vpack.c.b16 %v3021, %v3009
    %v3310 = vpack.c.b16 %v3022, %v3010
    %v3311 = vpack.c.b16 %v3023, %v3011
    %v3312 = vpack.c.b16 %v3024, %v3012
    %3601 = vmatprep.subr.bf16.mxu0 %v3026
    %3602 = vmatpush1.bf16.msra.mxu0 %v3025
    %3603 = vmatprep.subr.bf16.mxu0 %v3038
    %3604 = vmatpush1.bf16.msra.mxu0 %v3037
    %3605 = vmatprep.subr.bf16.mxu0 %v3050
    %3606 = vmatpush1.bf16.msra.mxu0 %v3049
    %3607 = vmatprep.subr.bf16.mxu0 %v3062
    %3608 = vmatpush1.bf16.msra.mxu0 %v3061
    %3609 = vmatprep.subr.bf16.mxu0 %v3074
    %3610 = vmatpush1.bf16.msra.mxu0 %v3073
    %3611 = vmatprep.subr.bf16.mxu0 %v3086
    %3612 = vmatpush1.bf16.msra.mxu0 %v3085
    %3613 = vmatprep.subr.bf16.mxu0 %v3098
    %3614 = vmatpush1.bf16.msra.mxu0 %v3097
    %3615 = vmatprep.subr.bf16.mxu0 %v3110
    %3616 = vmatpush1.bf16.msra.mxu0 %v3109
    %3617 = vmatprep.subr.bf16.mxu0 %v3122
    %3618 = vmatpush1.bf16.msra.mxu0 %v3121
    %3619 = vmatprep.subr.bf16.mxu0 %v3134
    %3620 = vmatpush1.bf16.msra.mxu0 %v3133
    %3621 = vmatprep.subr.bf16.mxu0 %v3146
    %3622 = vmatpush1.bf16.msra.mxu0 %v3145
    %3623 = vmatprep.subr.bf16.mxu0 %v3158
    %3624 = vmatpush1.bf16.msra.mxu0 %v3157
    %3625 = vmatprep.subr.bf16.mxu0 %v3170
    %3626 = vmatpush1.bf16.msra.mxu0 %v3169
    %3627 = vmatprep.subr.bf16.mxu0 %v3182
    %3628 = vmatpush1.bf16.msra.mxu0 %v3181
    %3629 = vmatprep.subr.bf16.mxu0 %v3194
    %3630 = vmatpush1.bf16.msra.mxu0 %v3193
    %3631 = vmatprep.subr.bf16.mxu0 %v3206
    %3632 = vmatpush1.bf16.msra.mxu0 %v3205
    %3633 = vmatprep.mubr.bf16.mxu0 %v1807
    %3634 = vmatmul.mubr.bf16.gmra.mrb[0].mxu0 %v1806
    %v3635 = vpop.f32.mrb[0].mxu0
    %v3636 = vadd.f32 %v2104, %v3635
    %v3637 = vpop.f32.mrb[0].mxu0
    %v3638 = vadd.f32 %v2108, %v3637
    %v3639 = vpop.f32.mrb[0].mxu0
    %v3640 = vadd.f32 %v2104, %v3639
    %v3641 = vpop.f32.mrb[0].mxu0
    %v3642 = vadd.f32 %v2108, %v3641
    %3643 = vdwg.mxu0
    %3644 = vmatprep.subr.bf16.mxu0 %v3218
    %3645 = vmatpush1.bf16.msra.mxu0 %v3217
    %3646 = vmatprep.subr.bf16.mxu0 %v3230
    %3647 = vmatpush1.bf16.msra.mxu0 %v3229
    %3648 = vmatprep.subr.bf16.mxu0 %v3242
    %3649 = vmatpush1.bf16.msra.mxu0 %v3241
    %3650 = vmatprep.subr.bf16.mxu0 %v3254
    %3651 = vmatpush1.bf16.msra.mxu0 %v3253
    %3652 = vmatprep.subr.bf16.mxu0 %v3266
    %3653 = vmatpush1.bf16.msra.mxu0 %v3265
    %3654 = vmatprep.subr.bf16.mxu0 %v3278
    %3655 = vmatpush1.bf16.msra.mxu0 %v3277
    %3656 = vmatprep.subr.bf16.mxu0 %v3290
    %3657 = vmatpush1.bf16.msra.mxu0 %v3289
    %3658 = vmatprep.subr.bf16.mxu0 %v3302
    %3659 = vmatpush1.bf16.msra.mxu0 %v3301
    %3660 = vmatprep.subr.bf16.mxu0 0
    %3661 = vmatpush1.bf16.msra.mxu0 0
    %3662 = vmatprep.subr.bf16.mxu0 0
    %3663 = vmatpush1.bf16.msra.mxu0 0
    %3664 = vmatprep.subr.bf16.mxu0 0
    %3665 = vmatpush1.bf16.msra.mxu0 0
    %3666 = vmatprep.subr.bf16.mxu0 0
    %3667 = vmatpush1.bf16.msra.mxu0 0
    %3668 = vmatprep.subr.bf16.mxu0 0
    %3669 = vmatpush1.bf16.msra.mxu0 0
    %3670 = vmatprep.subr.bf16.mxu0 0
    %3671 = vmatpush1.bf16.msra.mxu0 0
    %3672 = vmatprep.subr.bf16.mxu0 0
    %3673 = vmatpush1.bf16.msra.mxu0 0
    %3674 = vmatprep.subr.bf16.mxu0 0
    %3675 = vmatpush1.bf16.msra.mxu0 0
    %3676 = vmatprep.mubr.bf16.mxu0 0
    %3677 = vmatmul.mubr.bf16.gmra.mrb[0].mxu0 %v1808
    %v3678 = vpop.f32.mrb[0].mxu0
    %v3679 = vadd.f32 %v3636, %v3678
    %v3680 = vpop.f32.mrb[0].mxu0
    %v3681 = vadd.f32 %v3638, %v3680
    %v3682 = vpop.f32.mrb[0].mxu0
    %v3683 = vadd.f32 %v3640, %v3682
    %v3684 = vpop.f32.mrb[0].mxu0
    %v3685 = vadd.f32 %v3642, %v3684
    %3686 = vdwg.mxu0
    %3687 = vmatprep.subr.bf16.mxu0 %v3028
    %3688 = vmatpush1.bf16.msra.mxu0 %v3027
    %3689 = vmatprep.subr.bf16.mxu0 %v3040
    %3690 = vmatpush1.bf16.msra.mxu0 %v3039
    %3691 = vmatprep.subr.bf16.mxu0 %v3052
    %3692 = vmatpush1.bf16.msra.mxu0 %v3051
    %3693 = vmatprep.subr.bf16.mxu0 %v3064
    %3694 = vmatpush1.bf16.msra.mxu0 %v3063
    %3695 = vmatprep.subr.bf16.mxu0 %v3076
    %3696 = vmatpush1.bf16.msra.mxu0 %v3075
    %3697 = vmatprep.subr.bf16.mxu0 %v3088
    %3698 = vmatpush1.bf16.msra.mxu0 %v3087
    %3699 = vmatprep.subr.bf16.mxu0 %v3100
    %3700 = vmatpush1.bf16.msra.mxu0 %v3099
    %3701 = vmatprep.subr.bf16.mxu0 %v3112
    %3702 = vmatpush1.bf16.msra.mxu0 %v3111
    %3703 = vmatprep.subr.bf16.mxu0 %v3124
    %3704 = vmatpush1.bf16.msra.mxu0 %v3123
    %3705 = vmatprep.subr.bf16.mxu0 %v3136
    %3706 = vmatpush1.bf16.msra.mxu0 %v3135
    %3707 = vmatprep.subr.bf16.mxu0 %v3148
    %3708 = vmatpush1.bf16.msra.mxu0 %v3147
    %3709 = vmatprep.subr.bf16.mxu0 %v3160
    %3710 = vmatpush1.bf16.msra.mxu0 %v3159
    %3711 = vmatprep.subr.bf16.mxu0 %v3172
    %3712 = vmatpush1.bf16.msra.mxu0 %v3171
    %3713 = vmatprep.subr.bf16.mxu0 %v3184
    %3714 = vmatpush1.bf16.msra.mxu0 %v3183
    %3715 = vmatprep.subr.bf16.mxu0 %v3196
    %3716 = vmatpush1.bf16.msra.mxu0 %v3195
    %3717 = vmatprep.subr.bf16.mxu0 %v3208
    %3718 = vmatpush1.bf16.msra.mxu0 %v3207
    %3719 = vmatprep.mubr.bf16.mxu0 %v1807
    %3720 = vmatmul.mubr.bf16.gmra.mrb[0].mxu0 %v1806
    %v3721 = vpop.f32.mrb[0].mxu0
    %v3722 = vadd.f32 %v2112, %v3721
    %v3723 = vpop.f32.mrb[0].mxu0
    %v3724 = vadd.f32 %v2116, %v3723
    %v3725 = vpop.f32.mrb[0].mxu0
    %v3726 = vadd.f32 %v2112, %v3725
    %v3727 = vpop.f32.mrb[0].mxu0
    %v3728 = vadd.f32 %v2116, %v3727
    %3729 = vdwg.mxu0
    %3730 = vmatprep.subr.bf16.mxu0 %v3220
    %3731 = vmatpush1.bf16.msra.mxu0 %v3219
    %3732 = vmatprep.subr.bf16.mxu0 %v3232
    %3733 = vmatpush1.bf16.msra.mxu0 %v3231
    %3734 = vmatprep.subr.bf16.mxu0 %v3244
    %3735 = vmatpush1.bf16.msra.mxu0 %v3243
    %3736 = vmatprep.subr.bf16.mxu0 %v3256
    %3737 = vmatpush1.bf16.msra.mxu0 %v3255
    %3738 = vmatprep.subr.bf16.mxu0 %v3268
    %3739 = vmatpush1.bf16.msra.mxu0 %v3267
    %3740 = vmatprep.subr.bf16.mxu0 %v3280
    %3741 = vmatpush1.bf16.msra.mxu0 %v3279
    %3742 = vmatprep.subr.bf16.mxu0 %v3292
    %3743 = vmatpush1.bf16.msra.mxu0 %v3291
    %3744 = vmatprep.subr.bf16.mxu0 %v3304
    %3745 = vmatpush1.bf16.msra.mxu0 %v3303
    %3746 = vmatprep.subr.bf16.mxu0 0
    %3747 = vmatpush1.bf16.msra.mxu0 0
    %3748 = vmatprep.subr.bf16.mxu0 0
    %3749 = vmatpush1.bf16.msra.mxu0 0
    %3750 = vmatprep.subr.bf16.mxu0 0
    %3751 = vmatpush1.bf16.msra.mxu0 0
    %3752 = vmatprep.subr.bf16.mxu0 0
    %3753 = vmatpush1.bf16.msra.mxu0 0
    %3754 = vmatprep.subr.bf16.mxu0 0
    %3755 = vmatpush1.bf16.msra.mxu0 0
    %3756 = vmatprep.subr.bf16.mxu0 0
    %3757 = vmatpush1.bf16.msra.mxu0 0
    %3758 = vmatprep.subr.bf16.mxu0 0
    %3759 = vmatpush1.bf16.msra.mxu0 0
    %3760 = vmatprep.subr.bf16.mxu0 0
    %3761 = vmatpush1.bf16.msra.mxu0 0
    %3762 = vmatprep.mubr.bf16.mxu0 0
    %3763 = vmatmul.mubr.bf16.gmra.mrb[0].mxu0 %v1808
    %v3764 = vpop.f32.mrb[0].mxu0
    %v3765 = vadd.f32 %v3722, %v3764
    %v3766 = vpop.f32.mrb[0].mxu0
    %v3767 = vadd.f32 %v3724, %v3766
    %v3768 = vpop.f32.mrb[0].mxu0
    %v3769 = vadd.f32 %v3726, %v3768
    %v3770 = vpop.f32.mrb[0].mxu0
    %v3771 = vadd.f32 %v3728, %v3770
    %3772 = vdwg.mxu0
    %3773 = vmatprep.subr.bf16.mxu0 %v3030
    %3774 = vmatpush1.bf16.msra.mxu0 %v3029
    %3775 = vmatprep.subr.bf16.mxu0 %v3042
    %3776 = vmatpush1.bf16.msra.mxu0 %v3041
    %3777 = vmatprep.subr.bf16.mxu0 %v3054
    %3778 = vmatpush1.bf16.msra.mxu0 %v3053
    %3779 = vmatprep.subr.bf16.mxu0 %v3066
    %3780 = vmatpush1.bf16.msra.mxu0 %v3065
    %3781 = vmatprep.subr.bf16.mxu0 %v3078
    %3782 = vmatpush1.bf16.msra.mxu0 %v3077
    %3783 = vmatprep.subr.bf16.mxu0 %v3090
    %3784 = vmatpush1.bf16.msra.mxu0 %v3089
    %3785 = vmatprep.subr.bf16.mxu0 %v3102
    %3786 = vmatpush1.bf16.msra.mxu0 %v3101
    %3787 = vmatprep.subr.bf16.mxu0 %v3114
    %3788 = vmatpush1.bf16.msra.mxu0 %v3113
    %3789 = vmatprep.subr.bf16.mxu0 %v3126
    %3790 = vmatpush1.bf16.msra.mxu0 %v3125
    %3791 = vmatprep.subr.bf16.mxu0 %v3138
    %3792 = vmatpush1.bf16.msra.mxu0 %v3137
    %3793 = vmatprep.subr.bf16.mxu0 %v3150
    %3794 = vmatpush1.bf16.msra.mxu0 %v3149
    %3795 = vmatprep.subr.bf16.mxu0 %v3162
    %3796 = vmatpush1.bf16.msra.mxu0 %v3161
    %3797 = vmatprep.subr.bf16.mxu0 %v3174
    %3798 = vmatpush1.bf16.msra.mxu0 %v3173
    %3799 = vmatprep.subr.bf16.mxu0 %v3186
    %3800 = vmatpush1.bf16.msra.mxu0 %v3185
    %3801 = vmatprep.subr.bf16.mxu0 %v3198
    %3802 = vmatpush1.bf16.msra.mxu0 %v3197
    %3803 = vmatprep.subr.bf16.mxu0 %v3210
    %3804 = vmatpush1.bf16.msra.mxu0 %v3209
    %3805 = vmatprep.mubr.bf16.mxu0 %v1807
    %3806 = vmatmul.mubr.bf16.gmra.mrb[0].mxu0 %v1806
    %v3807 = vpop.f32.mrb[0].mxu0
    %v3808 = vadd.f32 %v2120, %v3807
    %v3809 = vpop.f32.mrb[0].mxu0
    %v3810 = vadd.f32 %v2124, %v3809
    %v3811 = vpop.f32.mrb[0].mxu0
    %v3812 = vadd.f32 %v2120, %v3811
    %v3813 = vpop.f32.mrb[0].mxu0
    %v3814 = vadd.f32 %v2124, %v3813
    %3815 = vdwg.mxu0
    %3816 = vmatprep.subr.bf16.mxu0 %v3222
    %3817 = vmatpush1.bf16.msra.mxu0 %v3221
    %3818 = vmatprep.subr.bf16.mxu0 %v3234
    %3819 = vmatpush1.bf16.msra.mxu0 %v3233
    %3820 = vmatprep.subr.bf16.mxu0 %v3246
    %3821 = vmatpush1.bf16.msra.mxu0 %v3245
    %3822 = vmatprep.subr.bf16.mxu0 %v3258
    %3823 = vmatpush1.bf16.msra.mxu0 %v3257
    %3824 = vmatprep.subr.bf16.mxu0 %v3270
    %3825 = vmatpush1.bf16.msra.mxu0 %v3269
    %3826 = vmatprep.subr.bf16.mxu0 %v3282
    %3827 = vmatpush1.bf16.msra.mxu0 %v3281
    %3828 = vmatprep.subr.bf16.mxu0 %v3294
    %3829 = vmatpush1.bf16.msra.mxu0 %v3293
    %3830 = vmatprep.subr.bf16.mxu0 %v3306
    %3831 = vmatpush1.bf16.msra.mxu0 %v3305
    %3832 = vmatprep.subr.bf16.mxu0 0
    %3833 = vmatpush1.bf16.msra.mxu0 0
    %3834 = vmatprep.subr.bf16.mxu0 0
    %3835 = vmatpush1.bf16.msra.mxu0 0
    %3836 = vmatprep.subr.bf16.mxu0 0
    %3837 = vmatpush1.bf16.msra.mxu0 0
    %3838 = vmatprep.subr.bf16.mxu0 0
    %3839 = vmatpush1.bf16.msra.mxu0 0
    %3840 = vmatprep.subr.bf16.mxu0 0
    %3841 = vmatpush1.bf16.msra.mxu0 0
    %3842 = vmatprep.subr.bf16.mxu0 0
    %3843 = vmatpush1.bf16.msra.mxu0 0
    %3844 = vmatprep.subr.bf16.mxu0 0
    %3845 = vmatpush1.bf16.msra.mxu0 0
    %3846 = vmatprep.subr.bf16.mxu0 0
    %3847 = vmatpush1.bf16.msra.mxu0 0
    %3848 = vmatprep.mubr.bf16.mxu0 0
    %3849 = vmatmul.mubr.bf16.gmra.mrb[0].mxu0 %v1808
    %v3850 = vpop.f32.mrb[0].mxu0
    %v3851 = vadd.f32 %v3808, %v3850
    %v3852 = vpop.f32.mrb[0].mxu0
    %v3853 = vadd.f32 %v3810, %v3852
    %v3854 = vpop.f32.mrb[0].mxu0
    %v3855 = vadd.f32 %v3812, %v3854
    %v3856 = vpop.f32.mrb[0].mxu0
    %v3857 = vadd.f32 %v3814, %v3856
    %3858 = vdwg.mxu0
    %3859 = vmatprep.subr.bf16.mxu0 %v3032
    %3860 = vmatpush1.bf16.msra.mxu0 %v3031
    %3861 = vmatprep.subr.bf16.mxu0 %v3044
    %3862 = vmatpush1.bf16.msra.mxu0 %v3043
    %3863 = vmatprep.subr.bf16.mxu0 %v3056
    %3864 = vmatpush1.bf16.msra.mxu0 %v3055
    %3865 = vmatprep.subr.bf16.mxu0 %v3068
    %3866 = vmatpush1.bf16.msra.mxu0 %v3067
    %3867 = vmatprep.subr.bf16.mxu0 %v3080
    %3868 = vmatpush1.bf16.msra.mxu0 %v3079
    %3869 = vmatprep.subr.bf16.mxu0 %v3092
    %3870 = vmatpush1.bf16.msra.mxu0 %v3091
    %3871 = vmatprep.subr.bf16.mxu0 %v3104
    %3872 = vmatpush1.bf16.msra.mxu0 %v3103
    %3873 = vmatprep.subr.bf16.mxu0 %v3116
    %3874 = vmatpush1.bf16.msra.mxu0 %v3115
    %3875 = vmatprep.subr.bf16.mxu0 %v3128
    %3876 = vmatpush1.bf16.msra.mxu0 %v3127
    %3877 = vmatprep.subr.bf16.mxu0 %v3140
    %3878 = vmatpush1.bf16.msra.mxu0 %v3139
    %3879 = vmatprep.subr.bf16.mxu0 %v3152
    %3880 = vmatpush1.bf16.msra.mxu0 %v3151
    %3881 = vmatprep.subr.bf16.mxu0 %v3164
    %3882 = vmatpush1.bf16.msra.mxu0 %v3163
    %3883 = vmatprep.subr.bf16.mxu0 %v3176
    %3884 = vmatpush1.bf16.msra.mxu0 %v3175
    %3885 = vmatprep.subr.bf16.mxu0 %v3188
    %3886 = vmatpush1.bf16.msra.mxu0 %v3187
    %3887 = vmatprep.subr.bf16.mxu0 %v3200
    %3888 = vmatpush1.bf16.msra.mxu0 %v3199
    %3889 = vmatprep.subr.bf16.mxu0 %v3212
    %3890 = vmatpush1.bf16.msra.mxu0 %v3211
    %3891 = vmatprep.mubr.bf16.mxu0 %v1807
    %3892 = vmatmul.mubr.bf16.gmra.mrb[0].mxu0 %v1806
    %v3893 = vpop.f32.mrb[0].mxu0
    %v3894 = vadd.f32 %v2128, %v3893
    %v3895 = vpop.f32.mrb[0].mxu0
    %v3896 = vadd.f32 %v2132, %v3895
    %v3897 = vpop.f32.mrb[0].mxu0
    %v3898 = vadd.f32 %v2128, %v3897
    %v3899 = vpop.f32.mrb[0].mxu0
    %v3900 = vadd.f32 %v2132, %v3899
    %3901 = vdwg.mxu0
    %3902 = vmatprep.subr.bf16.mxu0 %v3224
    %3903 = vmatpush1.bf16.msra.mxu0 %v3223
    %3904 = vmatprep.subr.bf16.mxu0 %v3236
    %3905 = vmatpush1.bf16.msra.mxu0 %v3235
    %3906 = vmatprep.subr.bf16.mxu0 %v3248
    %3907 = vmatpush1.bf16.msra.mxu0 %v3247
    %3908 = vmatprep.subr.bf16.mxu0 %v3260
    %3909 = vmatpush1.bf16.msra.mxu0 %v3259
    %3910 = vmatprep.subr.bf16.mxu0 %v3272
    %3911 = vmatpush1.bf16.msra.mxu0 %v3271
    %3912 = vmatprep.subr.bf16.mxu0 %v3284
    %3913 = vmatpush1.bf16.msra.mxu0 %v3283
    %3914 = vmatprep.subr.bf16.mxu0 %v3296
    %3915 = vmatpush1.bf16.msra.mxu0 %v3295
    %3916 = vmatprep.subr.bf16.mxu0 %v3308
    %3917 = vmatpush1.bf16.msra.mxu0 %v3307
    %3918 = vmatprep.subr.bf16.mxu0 0
    %3919 = vmatpush1.bf16.msra.mxu0 0
    %3920 = vmatprep.subr.bf16.mxu0 0
    %3921 = vmatpush1.bf16.msra.mxu0 0
    %3922 = vmatprep.subr.bf16.mxu0 0
    %3923 = vmatpush1.bf16.msra.mxu0 0
    %3924 = vmatprep.subr.bf16.mxu0 0
    %3925 = vmatpush1.bf16.msra.mxu0 0
    %3926 = vmatprep.subr.bf16.mxu0 0
    %3927 = vmatpush1.bf16.msra.mxu0 0
    %3928 = vmatprep.subr.bf16.mxu0 0
    %3929 = vmatpush1.bf16.msra.mxu0 0
    %3930 = vmatprep.subr.bf16.mxu0 0
    %3931 = vmatpush1.bf16.msra.mxu0 0
    %3932 = vmatprep.subr.bf16.mxu0 0
    %3933 = vmatpush1.bf16.msra.mxu0 0
    %3934 = vmatprep.mubr.bf16.mxu0 0
    %3935 = vmatmul.mubr.bf16.gmra.mrb[0].mxu0 %v1808
    %v3936 = vpop.f32.mrb[0].mxu0
    %v3937 = vadd.f32 %v3894, %v3936
    %v3938 = vpop.f32.mrb[0].mxu0
    %v3939 = vadd.f32 %v3896, %v3938
    %v3940 = vpop.f32.mrb[0].mxu0
    %v3941 = vadd.f32 %v3898, %v3940
    %v3942 = vpop.f32.mrb[0].mxu0
    %v3943 = vadd.f32 %v3900, %v3942
    %3944 = vdwg.mxu0
    %3945 = vmatprep.subr.bf16.mxu0 %v3034
    %3946 = vmatpush1.bf16.msra.mxu0 %v3033
    %3947 = vmatprep.subr.bf16.mxu0 %v3046
    %3948 = vmatpush1.bf16.msra.mxu0 %v3045
    %3949 = vmatprep.subr.bf16.mxu0 %v3058
    %3950 = vmatpush1.bf16.msra.mxu0 %v3057
    %3951 = vmatprep.subr.bf16.mxu0 %v3070
    %3952 = vmatpush1.bf16.msra.mxu0 %v3069
    %3953 = vmatprep.subr.bf16.mxu0 %v3082
    %3954 = vmatpush1.bf16.msra.mxu0 %v3081
    %3955 = vmatprep.subr.bf16.mxu0 %v3094
    %3956 = vmatpush1.bf16.msra.mxu0 %v3093
    %3957 = vmatprep.subr.bf16.mxu0 %v3106
    %3958 = vmatpush1.bf16.msra.mxu0 %v3105
    %3959 = vmatprep.subr.bf16.mxu0 %v3118
    %3960 = vmatpush1.bf16.msra.mxu0 %v3117
    %3961 = vmatprep.subr.bf16.mxu0 %v3130
    %3962 = vmatpush1.bf16.msra.mxu0 %v3129
    %3963 = vmatprep.subr.bf16.mxu0 %v3142
    %3964 = vmatpush1.bf16.msra.mxu0 %v3141
    %3965 = vmatprep.subr.bf16.mxu0 %v3154
    %3966 = vmatpush1.bf16.msra.mxu0 %v3153
    %3967 = vmatprep.subr.bf16.mxu0 %v3166
    %3968 = vmatpush1.bf16.msra.mxu0 %v3165
    %3969 = vmatprep.subr.bf16.mxu0 %v3178
    %3970 = vmatpush1.bf16.msra.mxu0 %v3177
    %3971 = vmatprep.subr.bf16.mxu0 %v3190
    %3972 = vmatpush1.bf16.msra.mxu0 %v3189
    %3973 = vmatprep.subr.bf16.mxu0 %v3202
    %3974 = vmatpush1.bf16.msra.mxu0 %v3201
    %3975 = vmatprep.subr.bf16.mxu0 %v3214
    %3976 = vmatpush1.bf16.msra.mxu0 %v3213
    %3977 = vmatprep.mubr.bf16.mxu0 %v1807
    %3978 = vmatmul.mubr.bf16.gmra.mrb[0].mxu0 %v1806
    %v3979 = vpop.f32.mrb[0].mxu0
    %v3980 = vadd.f32 %v2136, %v3979
    %v3981 = vpop.f32.mrb[0].mxu0
    %v3982 = vadd.f32 %v2140, %v3981
    %v3983 = vpop.f32.mrb[0].mxu0
    %v3984 = vadd.f32 %v2136, %v3983
    %v3985 = vpop.f32.mrb[0].mxu0
    %v3986 = vadd.f32 %v2140, %v3985
    %3987 = vdwg.mxu0
    %3988 = vmatprep.subr.bf16.mxu0 %v3226
    %3989 = vmatpush1.bf16.msra.mxu0 %v3225
    %3990 = vmatprep.subr.bf16.mxu0 %v3238
    %3991 = vmatpush1.bf16.msra.mxu0 %v3237
    %3992 = vmatprep.subr.bf16.mxu0 %v3250
    %3993 = vmatpush1.bf16.msra.mxu0 %v3249
    %3994 = vmatprep.subr.bf16.mxu0 %v3262
    %3995 = vmatpush1.bf16.msra.mxu0 %v3261
    %3996 = vmatprep.subr.bf16.mxu0 %v3274
    %3997 = vmatpush1.bf16.msra.mxu0 %v3273
    %3998 = vmatprep.subr.bf16.mxu0 %v3286
    %3999 = vmatpush1.bf16.msra.mxu0 %v3285
    %4000 = vmatprep.subr.bf16.mxu0 %v3298
    %4001 = vmatpush1.bf16.msra.mxu0 %v3297
    %4002 = vmatprep.subr.bf16.mxu0 %v3310
    %4003 = vmatpush1.bf16.msra.mxu0 %v3309
    %4004 = vmatprep.subr.bf16.mxu0 0
    %4005 = vmatpush1.bf16.msra.mxu0 0
    %4006 = vmatprep.subr.bf16.mxu0 0
    %4007 = vmatpush1.bf16.msra.mxu0 0
    %4008 = vmatprep.subr.bf16.mxu0 0
    %4009 = vmatpush1.bf16.msra.mxu0 0
    %4010 = vmatprep.subr.bf16.mxu0 0
    %4011 = vmatpush1.bf16.msra.mxu0 0
    %4012 = vmatprep.subr.bf16.mxu0 0
    %4013 = vmatpush1.bf16.msra.mxu0 0
    %4014 = vmatprep.subr.bf16.mxu0 0
    %4015 = vmatpush1.bf16.msra.mxu0 0
    %4016 = vmatprep.subr.bf16.mxu0 0
    %4017 = vmatpush1.bf16.msra.mxu0 0
    %4018 = vmatprep.subr.bf16.mxu0 0
    %4019 = vmatpush1.bf16.msra.mxu0 0
    %4020 = vmatprep.mubr.bf16.mxu0 0
    %4021 = vmatmul.mubr.bf16.gmra.mrb[0].mxu0 %v1808
    %v4022 = vpop.f32.mrb[0].mxu0
    %v4023 = vadd.f32 %v3980, %v4022
    %v4024 = vpop.f32.mrb[0].mxu0
    %v4025 = vadd.f32 %v3982, %v4024
    %v4026 = vpop.f32.mrb[0].mxu0
    %v4027 = vadd.f32 %v3984, %v4026
    %v4028 = vpop.f32.mrb[0].mxu0
    %v4029 = vadd.f32 %v3986, %v4028
    %4030 = vdwg.mxu0
    %4031 = vmatprep.subr.bf16.mxu0 %v3036
    %4032 = vmatpush1.bf16.msra.mxu0 %v3035
    %4033 = vmatprep.subr.bf16.mxu0 %v3048
    %4034 = vmatpush1.bf16.msra.mxu0 %v3047
    %4035 = vmatprep.subr.bf16.mxu0 %v3060
    %4036 = vmatpush1.bf16.msra.mxu0 %v3059
    %4037 = vmatprep.subr.bf16.mxu0 %v3072
    %4038 = vmatpush1.bf16.msra.mxu0 %v3071
    %4039 = vmatprep.subr.bf16.mxu0 %v3084
    %4040 = vmatpush1.bf16.msra.mxu0 %v3083
    %4041 = vmatprep.subr.bf16.mxu0 %v3096
    %4042 = vmatpush1.bf16.msra.mxu0 %v3095
    %4043 = vmatprep.subr.bf16.mxu0 %v3108
    %4044 = vmatpush1.bf16.msra.mxu0 %v3107
    %4045 = vmatprep.subr.bf16.mxu0 %v3120
    %4046 = vmatpush1.bf16.msra.mxu0 %v3119
    %4047 = vmatprep.subr.bf16.mxu0 %v3132
    %4048 = vmatpush1.bf16.msra.mxu0 %v3131
    %4049 = vmatprep.subr.bf16.mxu0 %v3144
    %4050 = vmatpush1.bf16.msra.mxu0 %v3143
    %4051 = vmatprep.subr.bf16.mxu0 %v3156
    %4052 = vmatpush1.bf16.msra.mxu0 %v3155
    %4053 = vmatprep.subr.bf16.mxu0 %v3168
    %4054 = vmatpush1.bf16.msra.mxu0 %v3167
    %4055 = vmatprep.subr.bf16.mxu0 %v3180
    %4056 = vmatpush1.bf16.msra.mxu0 %v3179
    %4057 = vmatprep.subr.bf16.mxu0 %v3192
    %4058 = vmatpush1.bf16.msra.mxu0 %v3191
    %4059 = vmatprep.subr.bf16.mxu0 %v3204
    %4060 = vmatpush1.bf16.msra.mxu0 %v3203
    %4061 = vmatprep.subr.bf16.mxu0 %v3216
    %4062 = vmatpush1.bf16.msra.mxu0 %v3215
    %4063 = vmatprep.mubr.bf16.mxu0 %v1807
    %4064 = vmatmul.mubr.bf16.gmra.mrb[0].mxu0 %v1806
    %v4065 = vpop.f32.mrb[0].mxu0
    %v4066 = vadd.f32 %v2144, %v4065
    %v4067 = vpop.f32.mrb[0].mxu0
    %v4068 = vadd.f32 %v2148, %v4067
    %v4069 = vpop.f32.mrb[0].mxu0
    %v4070 = vadd.f32 %v2144, %v4069
    %v4071 = vpop.f32.mrb[0].mxu0
    %v4072 = vadd.f32 %v2148, %v4071
    %4073 = vdwg.mxu0
    %4074 = vmatprep.subr.bf16.mxu0 %v3228
    %4075 = vmatpush1.bf16.msra.mxu0 %v3227
    %4076 = vmatprep.subr.bf16.mxu0 %v3240
    %4077 = vmatpush1.bf16.msra.mxu0 %v3239
    %4078 = vmatprep.subr.bf16.mxu0 %v3252
    %4079 = vmatpush1.bf16.msra.mxu0 %v3251
    %4080 = vmatprep.subr.bf16.mxu0 %v3264
    %4081 = vmatpush1.bf16.msra.mxu0 %v3263
    %4082 = vmatprep.subr.bf16.mxu0 %v3276
    %4083 = vmatpush1.bf16.msra.mxu0 %v3275
    %4084 = vmatprep.subr.bf16.mxu0 %v3288
    %4085 = vmatpush1.bf16.msra.mxu0 %v3287
    %4086 = vmatprep.subr.bf16.mxu0 %v3300
    %4087 = vmatpush1.bf16.msra.mxu0 %v3299
    %4088 = vmatprep.subr.bf16.mxu0 %v3312
    %4089 = vmatpush1.bf16.msra.mxu0 %v3311
    %4090 = vmatprep.subr.bf16.mxu0 0
    %4091 = vmatpush1.bf16.msra.mxu0 0
    %4092 = vmatprep.subr.bf16.mxu0 0
    %4093 = vmatpush1.bf16.msra.mxu0 0
    %4094 = vmatprep.subr.bf16.mxu0 0
    %4095 = vmatpush1.bf16.msra.mxu0 0
    %4096 = vmatprep.subr.bf16.mxu0 0
    %4097 = vmatpush1.bf16.msra.mxu0 0
    %4098 = vmatprep.subr.bf16.mxu0 0
    %4099 = vmatpush1.bf16.msra.mxu0 0
    %4100 = vmatprep.subr.bf16.mxu0 0
    %4101 = vmatpush1.bf16.msra.mxu0 0
    %4102 = vmatprep.subr.bf16.mxu0 0
    %4103 = vmatpush1.bf16.msra.mxu0 0
    %4104 = vmatprep.subr.bf16.mxu0 0
    %4105 = vmatpush1.bf16.msra.mxu0 0
    %4106 = vmatprep.mubr.bf16.mxu0 0
    %4107 = vmatmul.mubr.bf16.gmra.mrb[0].mxu0 %v1808
    %v4108 = vpop.f32.mrb[0].mxu0
    %v4109 = vadd.f32 %v4066, %v4108
    %v4110 = vpop.f32.mrb[0].mxu0
    %v4111 = vadd.f32 %v4068, %v4110
    %v4112 = vpop.f32.mrb[0].mxu0
    %v4113 = vadd.f32 %v4070, %v4112
    %v4114 = vpop.f32.mrb[0].mxu0
    %v4115 = vadd.f32 %v4072, %v4114
    %4116 = vdwg.mxu0
    %v4117 = vld [vmem:[#allocation7] sm:$0xff]
    %v4118 = vld [vmem:[#allocation7 + $0x8] sm:$0xff]
    %v4119 = vld [vmem:[#allocation7 + $0x10] sm:$0xff]
    %v4120 = vld [vmem:[#allocation7 + $0x18] sm:$0xff]
    %v4121 = vld [vmem:[#allocation7 + $0x20] sm:$0xff]
    %v4122 = vld [vmem:[#allocation7 + $0x28] sm:$0xff]
    %v4123 = vld [vmem:[#allocation7 + $0x30] sm:$0xff]
    %v4124 = vld [vmem:[#allocation7 + $0x38] sm:$0xff]
    %v4125 = vld [vmem:[#allocation7 + $0x40] sm:$0xff]
    %v4126 = vld [vmem:[#allocation7 + $0x48] sm:$0xff]
    %v4127 = vld [vmem:[#allocation7 + $0x50] sm:$0xff]
    %v4128 = vld [vmem:[#allocation7 + $0x58] sm:$0xff]
    %v4129 = vld [vmem:[#allocation7 + $0x60] sm:$0xff]
    %v4130 = vld [vmem:[#allocation7 + $0x68] sm:$0xff]
    %v4131 = vld [vmem:[#allocation7 + $0x70] sm:$0xff]
    %v4132 = vld [vmem:[#allocation7 + $0x78] sm:$0xff]
    %v4133 = vld [vmem:[#allocation7 + $0x80] sm:$0xff]
    %v4134 = vld [vmem:[#allocation7 + $0x88] sm:$0xff]
    %v4135 = vld [vmem:[#allocation7 + $0x90] sm:$0xff]
    %v4136 = vld [vmem:[#allocation7 + $0x98] sm:$0xff]
    %v4137 = vld [vmem:[#allocation7 + $0xa0] sm:$0xff]
    %v4138 = vld [vmem:[#allocation7 + $0xa8] sm:$0xff]
    %v4139 = vld [vmem:[#allocation7 + $0xb0] sm:$0xff]
    %v4140 = vld [vmem:[#allocation7 + $0xb8] sm:$0xff]
    %v4141 = vld [vmem:[#allocation7 + $0xc0] sm:$0xff]
    %v4142 = vld [vmem:[#allocation7 + $0xc8] sm:$0xff]
    %v4143 = vld [vmem:[#allocation7 + $0xd0] sm:$0xff]
    %v4144 = vld [vmem:[#allocation7 + $0xd8] sm:$0xff]
    %v4145 = vld [vmem:[#allocation7 + $0xe0] sm:$0xff]
    %v4146 = vld [vmem:[#allocation7 + $0xe8] sm:$0xff]
    %v4147 = vld [vmem:[#allocation7 + $0xf0] sm:$0xff]
    %v4148 = vld [vmem:[#allocation7 + $0xf8] sm:$0xff]
    %v4149 = vld [vmem:[#allocation7 + $0x100] sm:$0xff]
    %v4150 = vld [vmem:[#allocation7 + $0x108] sm:$0xff]
    %v4151 = vld [vmem:[#allocation7 + $0x110] sm:$0xff]
    %v4152 = vld [vmem:[#allocation7 + $0x118] sm:$0xff]
    %v4153 = vld [vmem:[#allocation7 + $0x120] sm:$0xff]
    %v4154 = vld [vmem:[#allocation7 + $0x128] sm:$0xff]
    %v4155 = vld [vmem:[#allocation7 + $0x130] sm:$0xff]
    %v4156 = vld [vmem:[#allocation7 + $0x138] sm:$0xff]
    %v4157 = vld [vmem:[#allocation7 + $0x140] sm:$0xff]
    %v4158 = vld [vmem:[#allocation7 + $0x148] sm:$0xff]
    %v4159 = vld [vmem:[#allocation7 + $0x150] sm:$0xff]
    %v4160 = vld [vmem:[#allocation7 + $0x158] sm:$0xff]
    %v4161 = vld [vmem:[#allocation7 + $0x160] sm:$0xff]
    %v4162 = vld [vmem:[#allocation7 + $0x168] sm:$0xff]
    %v4163 = vld [vmem:[#allocation7 + $0x170] sm:$0xff]
    %v4164 = vld [vmem:[#allocation7 + $0x178] sm:$0xff]
    %v4165 = vld [vmem:[#allocation7 + $0x180] sm:$0xff]
    %v4166 = vld [vmem:[#allocation7 + $0x188] sm:$0xff]
    %v4167 = vld [vmem:[#allocation7 + $0x190] sm:$0xff]
    %v4168 = vld [vmem:[#allocation7 + $0x198] sm:$0xff]
    %v4169 = vld [vmem:[#allocation7 + $0x1a0] sm:$0xff]
    %v4170 = vld [vmem:[#allocation7 + $0x1a8] sm:$0xff]
    %v4171 = vld [vmem:[#allocation7 + $0x1b0] sm:$0xff]
    %v4172 = vld [vmem:[#allocation7 + $0x1b8] sm:$0xff]
    %v4173 = vld [vmem:[#allocation7 + $0x1c0] sm:$0xff]
    %v4174 = vld [vmem:[#allocation7 + $0x1c8] sm:$0xff]
    %v4175 = vld [vmem:[#allocation7 + $0x1d0] sm:$0xff]
    %v4176 = vld [vmem:[#allocation7 + $0x1d8] sm:$0xff]
    %v4177 = vld [vmem:[#allocation7 + $0x1e0] sm:$0xff]
    %v4178 = vld [vmem:[#allocation7 + $0x1e8] sm:$0xff]
    %v4179 = vld [vmem:[#allocation7 + $0x1f0] sm:$0xff]
    %v4180 = vld [vmem:[#allocation7 + $0x1f8] sm:$0xff]
    %v4181 = vld [vmem:[#allocation7 + $0x200] sm:$0xff]
    %v4182 = vld [vmem:[#allocation7 + $0x208] sm:$0xff]
    %v4183 = vld [vmem:[#allocation7 + $0x210] sm:$0xff]
    %v4184 = vld [vmem:[#allocation7 + $0x218] sm:$0xff]
    %v4185 = vld [vmem:[#allocation7 + $0x220] sm:$0xff]
    %v4186 = vld [vmem:[#allocation7 + $0x228] sm:$0xff]
    %v4187 = vld [vmem:[#allocation7 + $0x230] sm:$0xff]
    %v4188 = vld [vmem:[#allocation7 + $0x238] sm:$0xff]
    %v4189 = vld [vmem:[#allocation7 + $0x240] sm:$0xff]
    %v4190 = vld [vmem:[#allocation7 + $0x248] sm:$0xff]
    %v4191 = vld [vmem:[#allocation7 + $0x250] sm:$0xff]
    %v4192 = vld [vmem:[#allocation7 + $0x258] sm:$0xff]
    %v4193 = vld [vmem:[#allocation7 + $0x260] sm:$0xff]
    %v4194 = vld [vmem:[#allocation7 + $0x268] sm:$0xff]
    %v4195 = vld [vmem:[#allocation7 + $0x270] sm:$0xff]
    %v4196 = vld [vmem:[#allocation7 + $0x278] sm:$0xff]
    %v4197 = vld [vmem:[#allocation7 + $0x280] sm:$0xff]
    %v4198 = vld [vmem:[#allocation7 + $0x288] sm:$0xff]
    %v4199 = vld [vmem:[#allocation7 + $0x290] sm:$0xff]
    %v4200 = vld [vmem:[#allocation7 + $0x298] sm:$0xff]
    %v4201 = vld [vmem:[#allocation7 + $0x2a0] sm:$0xff]
    %v4202 = vld [vmem:[#allocation7 + $0x2a8] sm:$0xff]
    %v4203 = vld [vmem:[#allocation7 + $0x2b0] sm:$0xff]
    %v4204 = vld [vmem:[#allocation7 + $0x2b8] sm:$0xff]
    %v4205 = vld [vmem:[#allocation7 + $0x2c0] sm:$0xff]
    %v4206 = vld [vmem:[#allocation7 + $0x2c8] sm:$0xff]
    %v4207 = vld [vmem:[#allocation7 + $0x2d0] sm:$0xff]
    %v4208 = vld [vmem:[#allocation7 + $0x2d8] sm:$0xff]
    %v4209 = vld [vmem:[#allocation7 + $0x2e0] sm:$0xff]
    %v4210 = vld [vmem:[#allocation7 + $0x2e8] sm:$0xff]
    %v4211 = vld [vmem:[#allocation7 + $0x2f0] sm:$0xff]
    %v4212 = vld [vmem:[#allocation7 + $0x2f8] sm:$0xff]
    %v4213 = vld [vmem:[#allocation7 + $0x300] sm:$0xff]
    %v4214 = vld [vmem:[#allocation7 + $0x308] sm:$0xff]
    %v4215 = vld [vmem:[#allocation7 + $0x310] sm:$0xff]
    %v4216 = vld [vmem:[#allocation7 + $0x318] sm:$0xff]
    %v4217 = vld [vmem:[#allocation7 + $0x320] sm:$0xff]
    %v4218 = vld [vmem:[#allocation7 + $0x328] sm:$0xff]
    %v4219 = vld [vmem:[#allocation7 + $0x330] sm:$0xff]
    %v4220 = vld [vmem:[#allocation7 + $0x338] sm:$0xff]
    %v4221 = vld [vmem:[#allocation7 + $0x340] sm:$0xff]
    %v4222 = vld [vmem:[#allocation7 + $0x348] sm:$0xff]
    %v4223 = vld [vmem:[#allocation7 + $0x350] sm:$0xff]
    %v4224 = vld [vmem:[#allocation7 + $0x358] sm:$0xff]
    %v4225 = vld [vmem:[#allocation7 + $0x360] sm:$0xff]
    %v4226 = vld [vmem:[#allocation7 + $0x368] sm:$0xff]
    %v4227 = vld [vmem:[#allocation7 + $0x370] sm:$0xff]
    %v4228 = vld [vmem:[#allocation7 + $0x378] sm:$0xff]
    %v4229 = vld [vmem:[#allocation7 + $0x380] sm:$0xff]
    %v4230 = vld [vmem:[#allocation7 + $0x388] sm:$0xff]
    %v4231 = vld [vmem:[#allocation7 + $0x390] sm:$0xff]
    %v4232 = vld [vmem:[#allocation7 + $0x398] sm:$0xff]
    %v4233 = vld [vmem:[#allocation7 + $0x3a0] sm:$0xff]
    %v4234 = vld [vmem:[#allocation7 + $0x3a8] sm:$0xff]
    %v4235 = vld [vmem:[#allocation7 + $0x3b0] sm:$0xff]
    %v4236 = vld [vmem:[#allocation7 + $0x3b8] sm:$0xff]
    %v4237 = vld [vmem:[#allocation7 + $0x3c0] sm:$0xff]
    %v4238 = vld [vmem:[#allocation7 + $0x3c8] sm:$0xff]
    %v4239 = vld [vmem:[#allocation7 + $0x3d0] sm:$0xff]
    %v4240 = vld [vmem:[#allocation7 + $0x3d8] sm:$0xff]
    %v4241 = vld [vmem:[#allocation7 + $0x3e0] sm:$0xff]
    %v4242 = vld [vmem:[#allocation7 + $0x3e8] sm:$0xff]
    %v4243 = vld [vmem:[#allocation7 + $0x3f0] sm:$0xff]
    %v4244 = vld [vmem:[#allocation7 + $0x3f8] sm:$0xff]
    %v4245 = vld [vmem:[#allocation7 + $0x400] sm:$0xff]
    %v4246 = vld [vmem:[#allocation7 + $0x408] sm:$0xff]
    %v4247 = vld [vmem:[#allocation7 + $0x410] sm:$0xff]
    %v4248 = vld [vmem:[#allocation7 + $0x418] sm:$0xff]
    %v4249 = vld [vmem:[#allocation7 + $0x420] sm:$0xff]
    %v4250 = vld [vmem:[#allocation7 + $0x428] sm:$0xff]
    %v4251 = vld [vmem:[#allocation7 + $0x430] sm:$0xff]
    %v4252 = vld [vmem:[#allocation7 + $0x438] sm:$0xff]
    %v4253 = vld [vmem:[#allocation7 + $0x440] sm:$0xff]
    %v4254 = vld [vmem:[#allocation7 + $0x448] sm:$0xff]
    %v4255 = vld [vmem:[#allocation7 + $0x450] sm:$0xff]
    %v4256 = vld [vmem:[#allocation7 + $0x458] sm:$0xff]
    %v4257 = vld [vmem:[#allocation7 + $0x460] sm:$0xff]
    %v4258 = vld [vmem:[#allocation7 + $0x468] sm:$0xff]
    %v4259 = vld [vmem:[#allocation7 + $0x470] sm:$0xff]
    %v4260 = vld [vmem:[#allocation7 + $0x478] sm:$0xff]
    %v4261 = vld [vmem:[#allocation14] sm:$0x3f]
    %v4263 = vlaneseq
    %v4264 = vshrl.u32 %v4263, 7
    %v4265 = vsub.s32 0, %v4264
    %v4266 = vrot.slane %v4261, %v4265
    %v4267 = vlaneseq
    %v4268 = vshrl.u32 %v4267, 7
    %v4269 = vsub.s32 1, %v4268
    %v4270 = vrot.slane %v4261, %v4269
    %v4271 = vlaneseq
    %v4272 = vshrl.u32 %v4271, 7
    %v4273 = vsub.s32 2, %v4272
    %v4274 = vrot.slane %v4261, %v4273
    %v4275 = vlaneseq
    %v4276 = vshrl.u32 %v4275, 7
    %v4277 = vsub.s32 3, %v4276
    %v4278 = vrot.slane %v4261, %v4277
    %v4279 = vlaneseq
    %v4280 = vshrl.u32 %v4279, 7
    %v4281 = vsub.s32 4, %v4280
    %v4282 = vrot.slane %v4261, %v4281
    %v4283 = vlaneseq
    %v4284 = vshrl.u32 %v4283, 7
    %v4285 = vsub.s32 5, %v4284
    %v4286 = vrot.slane %v4261, %v4285
    %v4437 = vunpack.c.l.b16 %v4117
    %v4438 = vunpack.c.h.b16 %v4117
    %v4439 = vunpack.c.l.b16 %v4118
    %v4440 = vunpack.c.h.b16 %v4118
    %v4441 = vunpack.c.l.b16 %v4119
    %v4442 = vunpack.c.h.b16 %v4119
    %v4443 = vunpack.c.l.b16 %v4120
    %v4444 = vunpack.c.h.b16 %v4120
    %v4445 = vunpack.c.l.b16 %v4121
    %v4446 = vunpack.c.h.b16 %v4121
    %v4447 = vunpack.c.l.b16 %v4122
    %v4448 = vunpack.c.h.b16 %v4122
    %v4449 = vunpack.c.l.b16 %v4123
    %v4450 = vunpack.c.h.b16 %v4123
    %v4451 = vunpack.c.l.b16 %v4124
    %v4452 = vunpack.c.h.b16 %v4124
    %v4453 = vunpack.c.l.b16 %v4125
    %v4454 = vunpack.c.h.b16 %v4125
    %v4455 = vunpack.c.l.b16 %v4126
    %v4456 = vunpack.c.h.b16 %v4126
    %v4457 = vunpack.c.l.b16 %v4127
    %v4458 = vunpack.c.h.b16 %v4127
    %v4459 = vunpack.c.l.b16 %v4128
    %v4460 = vunpack.c.h.b16 %v4128
    %v4461 = vunpack.c.l.b16 %v4129
    %v4462 = vunpack.c.h.b16 %v4129
    %v4463 = vunpack.c.l.b16 %v4130
    %v4464 = vunpack.c.h.b16 %v4130
    %v4465 = vunpack.c.l.b16 %v4131
    %v4466 = vunpack.c.h.b16 %v4131
    %v4467 = vunpack.c.l.b16 %v4132
    %v4468 = vunpack.c.h.b16 %v4132
    %v4469 = vunpack.c.l.b16 %v4133
    %v4470 = vunpack.c.h.b16 %v4133
    %v4471 = vunpack.c.l.b16 %v4134
    %v4472 = vunpack.c.h.b16 %v4134
    %v4473 = vunpack.c.l.b16 %v4135
    %v4474 = vunpack.c.h.b16 %v4135
    %v4475 = vunpack.c.l.b16 %v4136
    %v4476 = vunpack.c.h.b16 %v4136
    %v4477 = vunpack.c.l.b16 %v4137
    %v4478 = vunpack.c.h.b16 %v4137
    %v4479 = vunpack.c.l.b16 %v4138
    %v4480 = vunpack.c.h.b16 %v4138
    %v4481 = vunpack.c.l.b16 %v4139
    %v4482 = vunpack.c.h.b16 %v4139
    %v4483 = vunpack.c.l.b16 %v4140
    %v4484 = vunpack.c.h.b16 %v4140
    %v4485 = vunpack.c.l.b16 %v4141
    %v4486 = vunpack.c.h.b16 %v4141
    %v4487 = vunpack.c.l.b16 %v4142
    %v4488 = vunpack.c.h.b16 %v4142
    %v4489 = vunpack.c.l.b16 %v4143
    %v4490 = vunpack.c.h.b16 %v4143
    %v4491 = vunpack.c.l.b16 %v4144
    %v4492 = vunpack.c.h.b16 %v4144
    %v4493 = vunpack.c.l.b16 %v4145
    %v4494 = vunpack.c.h.b16 %v4145
    %v4495 = vunpack.c.l.b16 %v4146
    %v4496 = vunpack.c.h.b16 %v4146
    %v4497 = vunpack.c.l.b16 %v4147
    %v4498 = vunpack.c.h.b16 %v4147
    %v4499 = vunpack.c.l.b16 %v4148
    %v4500 = vunpack.c.h.b16 %v4148
    %v4501 = vunpack.c.l.b16 %v4149
    %v4502 = vunpack.c.h.b16 %v4149
    %v4503 = vunpack.c.l.b16 %v4150
    %v4504 = vunpack.c.h.b16 %v4150
    %v4505 = vunpack.c.l.b16 %v4151
    %v4506 = vunpack.c.h.b16 %v4151
    %v4507 = vunpack.c.l.b16 %v4152
    %v4508 = vunpack.c.h.b16 %v4152
    %v4509 = vunpack.c.l.b16 %v4153
    %v4510 = vunpack.c.h.b16 %v4153
    %v4511 = vunpack.c.l.b16 %v4154
    %v4512 = vunpack.c.h.b16 %v4154
    %v4513 = vunpack.c.l.b16 %v4155
    %v4514 = vunpack.c.h.b16 %v4155
    %v4515 = vunpack.c.l.b16 %v4156
    %v4516 = vunpack.c.h.b16 %v4156
    %v4517 = vunpack.c.l.b16 %v4157
    %v4518 = vunpack.c.h.b16 %v4157
    %v4519 = vunpack.c.l.b16 %v4158
    %v4520 = vunpack.c.h.b16 %v4158
    %v4521 = vunpack.c.l.b16 %v4159
    %v4522 = vunpack.c.h.b16 %v4159
    %v4523 = vunpack.c.l.b16 %v4160
    %v4524 = vunpack.c.h.b16 %v4160
    %v4525 = vunpack.c.l.b16 %v4161
    %v4526 = vunpack.c.h.b16 %v4161
    %v4527 = vunpack.c.l.b16 %v4162
    %v4528 = vunpack.c.h.b16 %v4162
    %v4529 = vunpack.c.l.b16 %v4163
    %v4530 = vunpack.c.h.b16 %v4163
    %v4531 = vunpack.c.l.b16 %v4164
    %v4532 = vunpack.c.h.b16 %v4164
    %v4533 = vunpack.c.l.b16 %v4165
    %v4534 = vunpack.c.h.b16 %v4165
    %v4535 = vunpack.c.l.b16 %v4166
    %v4536 = vunpack.c.h.b16 %v4166
    %v4537 = vunpack.c.l.b16 %v4167
    %v4538 = vunpack.c.h.b16 %v4167
    %v4539 = vunpack.c.l.b16 %v4168
    %v4540 = vunpack.c.h.b16 %v4168
    %v4541 = vunpack.c.l.b16 %v4169
    %v4542 = vunpack.c.h.b16 %v4169
    %v4543 = vunpack.c.l.b16 %v4170
    %v4544 = vunpack.c.h.b16 %v4170
    %v4545 = vunpack.c.l.b16 %v4171
    %v4546 = vunpack.c.h.b16 %v4171
    %v4547 = vunpack.c.l.b16 %v4172
    %v4548 = vunpack.c.h.b16 %v4172
    %v4549 = vunpack.c.l.b16 %v4173
    %v4550 = vunpack.c.h.b16 %v4173
    %v4551 = vunpack.c.l.b16 %v4174
    %v4552 = vunpack.c.h.b16 %v4174
    %v4553 = vunpack.c.l.b16 %v4175
    %v4554 = vunpack.c.h.b16 %v4175
    %v4555 = vunpack.c.l.b16 %v4176
    %v4556 = vunpack.c.h.b16 %v4176
    %v4557 = vunpack.c.l.b16 %v4177
    %v4558 = vunpack.c.h.b16 %v4177
    %v4559 = vunpack.c.l.b16 %v4178
    %v4560 = vunpack.c.h.b16 %v4178
    %v4561 = vunpack.c.l.b16 %v4179
    %v4562 = vunpack.c.h.b16 %v4179
    %v4563 = vunpack.c.l.b16 %v4180
    %v4564 = vunpack.c.h.b16 %v4180
    %v4565 = vunpack.c.l.b16 %v4181
    %v4566 = vunpack.c.h.b16 %v4181
    %v4567 = vunpack.c.l.b16 %v4182
    %v4568 = vunpack.c.h.b16 %v4182
    %v4569 = vunpack.c.l.b16 %v4183
    %v4570 = vunpack.c.h.b16 %v4183
    %v4571 = vunpack.c.l.b16 %v4184
    %v4572 = vunpack.c.h.b16 %v4184
    %v4573 = vunpack.c.l.b16 %v4185
    %v4574 = vunpack.c.h.b16 %v4185
    %v4575 = vunpack.c.l.b16 %v4186
    %v4576 = vunpack.c.h.b16 %v4186
    %v4577 = vunpack.c.l.b16 %v4187
    %v4578 = vunpack.c.h.b16 %v4187
    %v4579 = vunpack.c.l.b16 %v4188
    %v4580 = vunpack.c.h.b16 %v4188
    %v4581 = vunpack.c.l.b16 %v4189
    %v4582 = vunpack.c.h.b16 %v4189
    %v4583 = vunpack.c.l.b16 %v4190
    %v4584 = vunpack.c.h.b16 %v4190
    %v4585 = vunpack.c.l.b16 %v4191
    %v4586 = vunpack.c.h.b16 %v4191
    %v4587 = vunpack.c.l.b16 %v4192
    %v4588 = vunpack.c.h.b16 %v4192
    %v4589 = vunpack.c.l.b16 %v4193
    %v4590 = vunpack.c.h.b16 %v4193
    %v4591 = vunpack.c.l.b16 %v4194
    %v4592 = vunpack.c.h.b16 %v4194
    %v4593 = vunpack.c.l.b16 %v4195
    %v4594 = vunpack.c.h.b16 %v4195
    %v4595 = vunpack.c.l.b16 %v4196
    %v4596 = vunpack.c.h.b16 %v4196
    %v4597 = vunpack.c.l.b16 %v4197
    %v4598 = vunpack.c.h.b16 %v4197
    %v4599 = vunpack.c.l.b16 %v4198
    %v4600 = vunpack.c.h.b16 %v4198
    %v4601 = vunpack.c.l.b16 %v4199
    %v4602 = vunpack.c.h.b16 %v4199
    %v4603 = vunpack.c.l.b16 %v4200
    %v4604 = vunpack.c.h.b16 %v4200
    %v4605 = vunpack.c.l.b16 %v4201
    %v4606 = vunpack.c.h.b16 %v4201
    %v4607 = vunpack.c.l.b16 %v4202
    %v4608 = vunpack.c.h.b16 %v4202
    %v4609 = vunpack.c.l.b16 %v4203
    %v4610 = vunpack.c.h.b16 %v4203
    %v4611 = vunpack.c.l.b16 %v4204
    %v4612 = vunpack.c.h.b16 %v4204
    %v4613 = vunpack.c.l.b16 %v4205
    %v4614 = vunpack.c.h.b16 %v4205
    %v4615 = vunpack.c.l.b16 %v4206
    %v4616 = vunpack.c.h.b16 %v4206
    %v4617 = vunpack.c.l.b16 %v4207
    %v4618 = vunpack.c.h.b16 %v4207
    %v4619 = vunpack.c.l.b16 %v4208
    %v4620 = vunpack.c.h.b16 %v4208
    %v4621 = vunpack.c.l.b16 %v4209
    %v4622 = vunpack.c.h.b16 %v4209
    %v4623 = vunpack.c.l.b16 %v4210
    %v4624 = vunpack.c.h.b16 %v4210
    %v4625 = vunpack.c.l.b16 %v4211
    %v4626 = vunpack.c.h.b16 %v4211
    %v4627 = vunpack.c.l.b16 %v4212
    %v4628 = vunpack.c.h.b16 %v4212
    %v4629 = vunpack.c.l.b16 %v4213
    %v4630 = vunpack.c.h.b16 %v4213
    %v4631 = vunpack.c.l.b16 %v4214
    %v4632 = vunpack.c.h.b16 %v4214
    %v4633 = vunpack.c.l.b16 %v4215
    %v4634 = vunpack.c.h.b16 %v4215
    %v4635 = vunpack.c.l.b16 %v4216
    %v4636 = vunpack.c.h.b16 %v4216
    %v4637 = vunpack.c.l.b16 %v4217
    %v4638 = vunpack.c.h.b16 %v4217
    %v4639 = vunpack.c.l.b16 %v4218
    %v4640 = vunpack.c.h.b16 %v4218
    %v4641 = vunpack.c.l.b16 %v4219
    %v4642 = vunpack.c.h.b16 %v4219
    %v4643 = vunpack.c.l.b16 %v4220
    %v4644 = vunpack.c.h.b16 %v4220
    %v4645 = vunpack.c.l.b16 %v4221
    %v4646 = vunpack.c.h.b16 %v4221
    %v4647 = vunpack.c.l.b16 %v4222
    %v4648 = vunpack.c.h.b16 %v4222
    %v4649 = vunpack.c.l.b16 %v4223
    %v4650 = vunpack.c.h.b16 %v4223
    %v4651 = vunpack.c.l.b16 %v4224
    %v4652 = vunpack.c.h.b16 %v4224
    %v4653 = vunpack.c.l.b16 %v4225
    %v4654 = vunpack.c.h.b16 %v4225
    %v4655 = vunpack.c.l.b16 %v4226
    %v4656 = vunpack.c.h.b16 %v4226
    %v4657 = vunpack.c.l.b16 %v4227
    %v4658 = vunpack.c.h.b16 %v4227
    %v4659 = vunpack.c.l.b16 %v4228
    %v4660 = vunpack.c.h.b16 %v4228
    %v4661 = vunpack.c.l.b16 %v4229
    %v4662 = vunpack.c.h.b16 %v4229
    %v4663 = vunpack.c.l.b16 %v4230
    %v4664 = vunpack.c.h.b16 %v4230
    %v4665 = vunpack.c.l.b16 %v4231
    %v4666 = vunpack.c.h.b16 %v4231
    %v4667 = vunpack.c.l.b16 %v4232
    %v4668 = vunpack.c.h.b16 %v4232
    %v4669 = vunpack.c.l.b16 %v4233
    %v4670 = vunpack.c.h.b16 %v4233
    %v4671 = vunpack.c.l.b16 %v4234
    %v4672 = vunpack.c.h.b16 %v4234
    %v4673 = vunpack.c.l.b16 %v4235
    %v4674 = vunpack.c.h.b16 %v4235
    %v4675 = vunpack.c.l.b16 %v4236
    %v4676 = vunpack.c.h.b16 %v4236
    %v4677 = vunpack.c.l.b16 %v4237
    %v4678 = vunpack.c.h.b16 %v4237
    %v4679 = vunpack.c.l.b16 %v4238
    %v4680 = vunpack.c.h.b16 %v4238
    %v4681 = vunpack.c.l.b16 %v4239
    %v4682 = vunpack.c.h.b16 %v4239
    %v4683 = vunpack.c.l.b16 %v4240
    %v4684 = vunpack.c.h.b16 %v4240
    %v4685 = vunpack.c.l.b16 %v4241
    %v4686 = vunpack.c.h.b16 %v4241
    %v4687 = vunpack.c.l.b16 %v4242
    %v4688 = vunpack.c.h.b16 %v4242
    %v4689 = vunpack.c.l.b16 %v4243
    %v4690 = vunpack.c.h.b16 %v4243
    %v4691 = vunpack.c.l.b16 %v4244
    %v4692 = vunpack.c.h.b16 %v4244
    %v4693 = vunpack.c.l.b16 %v4245
    %v4694 = vunpack.c.h.b16 %v4245
    %v4695 = vunpack.c.l.b16 %v4246
    %v4696 = vunpack.c.h.b16 %v4246
    %v4697 = vunpack.c.l.b16 %v4247
    %v4698 = vunpack.c.h.b16 %v4247
    %v4699 = vunpack.c.l.b16 %v4248
    %v4700 = vunpack.c.h.b16 %v4248
    %v4701 = vunpack.c.l.b16 %v4249
    %v4702 = vunpack.c.h.b16 %v4249
    %v4703 = vunpack.c.l.b16 %v4250
    %v4704 = vunpack.c.h.b16 %v4250
    %v4705 = vunpack.c.l.b16 %v4251
    %v4706 = vunpack.c.h.b16 %v4251
    %v4707 = vunpack.c.l.b16 %v4252
    %v4708 = vunpack.c.h.b16 %v4252
    %v4709 = vunpack.c.l.b16 %v4253
    %v4710 = vunpack.c.h.b16 %v4253
    %v4711 = vunpack.c.l.b16 %v4254
    %v4712 = vunpack.c.h.b16 %v4254
    %v4713 = vunpack.c.l.b16 %v4255
    %v4714 = vunpack.c.h.b16 %v4255
    %v4715 = vunpack.c.l.b16 %v4256
    %v4716 = vunpack.c.h.b16 %v4256
    %v4717 = vunpack.c.l.b16 %v4257
    %v4718 = vunpack.c.h.b16 %v4257
    %v4719 = vunpack.c.l.b16 %v4258
    %v4720 = vunpack.c.h.b16 %v4258
    %v4721 = vunpack.c.l.b16 %v4259
    %v4722 = vunpack.c.h.b16 %v4259
    %v4723 = vunpack.c.l.b16 %v4260
    %v4724 = vunpack.c.h.b16 %v4260
    %v4725 = vpack.c.b16 %v4443, %v4437
    %v4726 = vpack.c.b16 %v4444, %v4438
    %v4727 = vpack.c.b16 %v4445, %v4439
    %v4728 = vpack.c.b16 %v4446, %v4440
    %v4729 = vpack.c.b16 %v4447, %v4441
    %v4730 = vpack.c.b16 %v4448, %v4442
    %v4731 = vpack.c.b16 %v4455, %v4449
    %v4732 = vpack.c.b16 %v4456, %v4450
    %v4733 = vpack.c.b16 %v4457, %v4451
    %v4734 = vpack.c.b16 %v4458, %v4452
    %v4735 = vpack.c.b16 %v4459, %v4453
    %v4736 = vpack.c.b16 %v4460, %v4454
    %v4737 = vpack.c.b16 %v4467, %v4461
    %v4738 = vpack.c.b16 %v4468, %v4462
    %v4739 = vpack.c.b16 %v4469, %v4463
    %v4740 = vpack.c.b16 %v4470, %v4464
    %v4741 = vpack.c.b16 %v4471, %v4465
    %v4742 = vpack.c.b16 %v4472, %v4466
    %v4743 = vpack.c.b16 %v4479, %v4473
    %v4744 = vpack.c.b16 %v4480, %v4474
    %v4745 = vpack.c.b16 %v4481, %v4475
    %v4746 = vpack.c.b16 %v4482, %v4476
    %v4747 = vpack.c.b16 %v4483, %v4477
    %v4748 = vpack.c.b16 %v4484, %v4478
    %v4749 = vpack.c.b16 %v4491, %v4485
    %v4750 = vpack.c.b16 %v4492, %v4486
    %v4751 = vpack.c.b16 %v4493, %v4487
    %v4752 = vpack.c.b16 %v4494, %v4488
    %v4753 = vpack.c.b16 %v4495, %v4489
    %v4754 = vpack.c.b16 %v4496, %v4490
    %v4755 = vpack.c.b16 %v4503, %v4497
    %v4756 = vpack.c.b16 %v4504, %v4498
    %v4757 = vpack.c.b16 %v4505, %v4499
    %v4758 = vpack.c.b16 %v4506, %v4500
    %v4759 = vpack.c.b16 %v4507, %v4501
    %v4760 = vpack.c.b16 %v4508, %v4502
    %v4761 = vpack.c.b16 %v4515, %v4509
    %v4762 = vpack.c.b16 %v4516, %v4510
    %v4763 = vpack.c.b16 %v4517, %v4511
    %v4764 = vpack.c.b16 %v4518, %v4512
    %v4765 = vpack.c.b16 %v4519, %v4513
    %v4766 = vpack.c.b16 %v4520, %v4514
    %v4767 = vpack.c.b16 %v4527, %v4521
    %v4768 = vpack.c.b16 %v4528, %v4522
    %v4769 = vpack.c.b16 %v4529, %v4523
    %v4770 = vpack.c.b16 %v4530, %v4524
    %v4771 = vpack.c.b16 %v4531, %v4525
    %v4772 = vpack.c.b16 %v4532, %v4526
    %v4773 = vpack.c.b16 %v4539, %v4533
    %v4774 = vpack.c.b16 %v4540, %v4534
    %v4775 = vpack.c.b16 %v4541, %v4535
    %v4776 = vpack.c.b16 %v4542, %v4536
    %v4777 = vpack.c.b16 %v4543, %v4537
    %v4778 = vpack.c.b16 %v4544, %v4538
    %v4779 = vpack.c.b16 %v4551, %v4545
    %v4780 = vpack.c.b16 %v4552, %v4546
    %v4781 = vpack.c.b16 %v4553, %v4547
    %v4782 = vpack.c.b16 %v4554, %v4548
    %v4783 = vpack.c.b16 %v4555, %v4549
    %v4784 = vpack.c.b16 %v4556, %v4550
    %v4785 = vpack.c.b16 %v4563, %v4557
    %v4786 = vpack.c.b16 %v4564, %v4558
    %v4787 = vpack.c.b16 %v4565, %v4559
    %v4788 = vpack.c.b16 %v4566, %v4560
    %v4789 = vpack.c.b16 %v4567, %v4561
    %v4790 = vpack.c.b16 %v4568, %v4562
    %v4791 = vpack.c.b16 %v4575, %v4569
    %v4792 = vpack.c.b16 %v4576, %v4570
    %v4793 = vpack.c.b16 %v4577, %v4571
    %v4794 = vpack.c.b16 %v4578, %v4572
    %v4795 = vpack.c.b16 %v4579, %v4573
    %v4796 = vpack.c.b16 %v4580, %v4574
    %v4797 = vpack.c.b16 %v4587, %v4581
    %v4798 = vpack.c.b16 %v4588, %v4582
    %v4799 = vpack.c.b16 %v4589, %v4583
    %v4800 = vpack.c.b16 %v4590, %v4584
    %v4801 = vpack.c.b16 %v4591, %v4585
    %v4802 = vpack.c.b16 %v4592, %v4586
    %v4803 = vpack.c.b16 %v4599, %v4593
    %v4804 = vpack.c.b16 %v4600, %v4594
    %v4805 = vpack.c.b16 %v4601, %v4595
    %v4806 = vpack.c.b16 %v4602, %v4596
    %v4807 = vpack.c.b16 %v4603, %v4597
    %v4808 = vpack.c.b16 %v4604, %v4598
    %v4809 = vpack.c.b16 %v4611, %v4605
    %v4810 = vpack.c.b16 %v4612, %v4606
    %v4811 = vpack.c.b16 %v4613, %v4607
    %v4812 = vpack.c.b16 %v4614, %v4608
    %v4813 = vpack.c.b16 %v4615, %v4609
    %v4814 = vpack.c.b16 %v4616, %v4610
    %v4815 = vpack.c.b16 %v4623, %v4617
    %v4816 = vpack.c.b16 %v4624, %v4618
    %v4817 = vpack.c.b16 %v4625, %v4619
    %v4818 = vpack.c.b16 %v4626, %v4620
    %v4819 = vpack.c.b16 %v4627, %v4621
    %v4820 = vpack.c.b16 %v4628, %v4622
    %v4821 = vpack.c.b16 %v4635, %v4629
    %v4822 = vpack.c.b16 %v4636, %v4630
    %v4823 = vpack.c.b16 %v4637, %v4631
    %v4824 = vpack.c.b16 %v4638, %v4632
    %v4825 = vpack.c.b16 %v4639, %v4633
    %v4826 = vpack.c.b16 %v4640, %v4634
    %v4827 = vpack.c.b16 %v4647, %v4641
    %v4828 = vpack.c.b16 %v4648, %v4642
    %v4829 = vpack.c.b16 %v4649, %v4643
    %v4830 = vpack.c.b16 %v4650, %v4644
    %v4831 = vpack.c.b16 %v4651, %v4645
    %v4832 = vpack.c.b16 %v4652, %v4646
    %v4833 = vpack.c.b16 %v4659, %v4653
    %v4834 = vpack.c.b16 %v4660, %v4654
    %v4835 = vpack.c.b16 %v4661, %v4655
    %v4836 = vpack.c.b16 %v4662, %v4656
    %v4837 = vpack.c.b16 %v4663, %v4657
    %v4838 = vpack.c.b16 %v4664, %v4658
    %v4839 = vpack.c.b16 %v4671, %v4665
    %v4840 = vpack.c.b16 %v4672, %v4666
    %v4841 = vpack.c.b16 %v4673, %v4667
    %v4842 = vpack.c.b16 %v4674, %v4668
    %v4843 = vpack.c.b16 %v4675, %v4669
    %v4844 = vpack.c.b16 %v4676, %v4670
    %v4845 = vpack.c.b16 %v4683, %v4677
    %v4846 = vpack.c.b16 %v4684, %v4678
    %v4847 = vpack.c.b16 %v4685, %v4679
    %v4848 = vpack.c.b16 %v4686, %v4680
    %v4849 = vpack.c.b16 %v4687, %v4681
    %v4850 = vpack.c.b16 %v4688, %v4682
    %v4851 = vpack.c.b16 %v4695, %v4689
    %v4852 = vpack.c.b16 %v4696, %v4690
    %v4853 = vpack.c.b16 %v4697, %v4691
    %v4854 = vpack.c.b16 %v4698, %v4692
    %v4855 = vpack.c.b16 %v4699, %v4693
    %v4856 = vpack.c.b16 %v4700, %v4694
    %v4857 = vpack.c.b16 %v4707, %v4701
    %v4858 = vpack.c.b16 %v4708, %v4702
    %v4859 = vpack.c.b16 %v4709, %v4703
    %v4860 = vpack.c.b16 %v4710, %v4704
    %v4861 = vpack.c.b16 %v4711, %v4705
    %v4862 = vpack.c.b16 %v4712, %v4706
    %v4863 = vpack.c.b16 %v4719, %v4713
    %v4864 = vpack.c.b16 %v4720, %v4714
    %v4865 = vpack.c.b16 %v4721, %v4715
    %v4866 = vpack.c.b16 %v4722, %v4716
    %v4867 = vpack.c.b16 %v4723, %v4717
    %v4868 = vpack.c.b16 %v4724, %v4718
    %5013 = vmatprep.subr.bf16.mxu0 %v4726
    %5014 = vmatpush1.bf16.msra.mxu0 %v4725
    %5015 = vmatprep.subr.bf16.mxu0 %v4732
    %5016 = vmatpush1.bf16.msra.mxu0 %v4731
    %5017 = vmatprep.subr.bf16.mxu0 %v4738
    %5018 = vmatpush1.bf16.msra.mxu0 %v4737
    %5019 = vmatprep.subr.bf16.mxu0 %v4744
    %5020 = vmatpush1.bf16.msra.mxu0 %v4743
    %5021 = vmatprep.subr.bf16.mxu0 %v4750
    %5022 = vmatpush1.bf16.msra.mxu0 %v4749
    %5023 = vmatprep.subr.bf16.mxu0 %v4756
    %5024 = vmatpush1.bf16.msra.mxu0 %v4755
    %5025 = vmatprep.subr.bf16.mxu0 %v4762
    %5026 = vmatpush1.bf16.msra.mxu0 %v4761
    %5027 = vmatprep.subr.bf16.mxu0 %v4768
    %5028 = vmatpush1.bf16.msra.mxu0 %v4767
    %5029 = vmatprep.subr.bf16.mxu0 %v4774
    %5030 = vmatpush1.bf16.msra.mxu0 %v4773
    %5031 = vmatprep.subr.bf16.mxu0 %v4780
    %5032 = vmatpush1.bf16.msra.mxu0 %v4779
    %5033 = vmatprep.subr.bf16.mxu0 %v4786
    %5034 = vmatpush1.bf16.msra.mxu0 %v4785
    %5035 = vmatprep.subr.bf16.mxu0 %v4792
    %5036 = vmatpush1.bf16.msra.mxu0 %v4791
    %5037 = vmatprep.subr.bf16.mxu0 %v4798
    %5038 = vmatpush1.bf16.msra.mxu0 %v4797
    %5039 = vmatprep.subr.bf16.mxu0 %v4804
    %5040 = vmatpush1.bf16.msra.mxu0 %v4803
    %5041 = vmatprep.subr.bf16.mxu0 %v4810
    %5042 = vmatpush1.bf16.msra.mxu0 %v4809
    %5043 = vmatprep.subr.bf16.mxu0 %v4816
    %5044 = vmatpush1.bf16.msra.mxu0 %v4815
    %5045 = vmatprep.mubr.bf16.mxu0 %v177
    %5046 = vmatmul.mubr.bf16.gmra.mrb[0].mxu0 %v176
    %v5047 = vpop.f32.mrb[0].mxu0
    %v5048 = vadd.f32 %v4266, %v5047
    %v5049 = vpop.f32.mrb[0].mxu0
    %v5050 = vadd.f32 %v4270, %v5049
    %v5051 = vpop.f32.mrb[0].mxu0
    %v5052 = vadd.f32 %v4266, %v5051
    %v5053 = vpop.f32.mrb[0].mxu0
    %v5054 = vadd.f32 %v4270, %v5053
    %5055 = vdwg.mxu0
    %5056 = vmatprep.subr.bf16.mxu0 %v4822
    %5057 = vmatpush1.bf16.msra.mxu0 %v4821
    %5058 = vmatprep.subr.bf16.mxu0 %v4828
    %5059 = vmatpush1.bf16.msra.mxu0 %v4827
    %5060 = vmatprep.subr.bf16.mxu0 %v4834
    %5061 = vmatpush1.bf16.msra.mxu0 %v4833
    %5062 = vmatprep.subr.bf16.mxu0 %v4840
    %5063 = vmatpush1.bf16.msra.mxu0 %v4839
    %5064 = vmatprep.subr.bf16.mxu0 %v4846
    %5065 = vmatpush1.bf16.msra.mxu0 %v4845
    %5066 = vmatprep.subr.bf16.mxu0 %v4852
    %5067 = vmatpush1.bf16.msra.mxu0 %v4851
    %5068 = vmatprep.subr.bf16.mxu0 %v4858
    %5069 = vmatpush1.bf16.msra.mxu0 %v4857
    %5070 = vmatprep.subr.bf16.mxu0 %v4864
    %5071 = vmatpush1.bf16.msra.mxu0 %v4863
    %5072 = vmatprep.subr.bf16.mxu0 0
    %5073 = vmatpush1.bf16.msra.mxu0 0
    %5074 = vmatprep.subr.bf16.mxu0 0
    %5075 = vmatpush1.bf16.msra.mxu0 0
    %5076 = vmatprep.subr.bf16.mxu0 0
    %5077 = vmatpush1.bf16.msra.mxu0 0
    %5078 = vmatprep.subr.bf16.mxu0 0
    %5079 = vmatpush1.bf16.msra.mxu0 0
    %5080 = vmatprep.subr.bf16.mxu0 0
    %5081 = vmatpush1.bf16.msra.mxu0 0
    %5082 = vmatprep.subr.bf16.mxu0 0
    %5083 = vmatpush1.bf16.msra.mxu0 0
    %5084 = vmatprep.subr.bf16.mxu0 0
    %5085 = vmatpush1.bf16.msra.mxu0 0
    %5086 = vmatprep.subr.bf16.mxu0 0
    %5087 = vmatpush1.bf16.msra.mxu0 0
    %5088 = vmatprep.mubr.bf16.mxu0 0
    %5089 = vmatmul.mubr.bf16.gmra.mrb[0].mxu0 %v178
    %v5090 = vpop.f32.mrb[0].mxu0
    %v5091 = vadd.f32 %v5048, %v5090
    %v5092 = vpop.f32.mrb[0].mxu0
    %v5093 = vadd.f32 %v5050, %v5092
    %v5094 = vpop.f32.mrb[0].mxu0
    %v5095 = vadd.f32 %v5052, %v5094
    %v5096 = vpop.f32.mrb[0].mxu0
    %v5097 = vadd.f32 %v5054, %v5096
    %5098 = vdwg.mxu0
    %5099 = vmatprep.subr.bf16.mxu0 %v4728
    %5100 = vmatpush1.bf16.msra.mxu0 %v4727
    %5101 = vmatprep.subr.bf16.mxu0 %v4734
    %5102 = vmatpush1.bf16.msra.mxu0 %v4733
    %5103 = vmatprep.subr.bf16.mxu0 %v4740
    %5104 = vmatpush1.bf16.msra.mxu0 %v4739
    %5105 = vmatprep.subr.bf16.mxu0 %v4746
    %5106 = vmatpush1.bf16.msra.mxu0 %v4745
    %5107 = vmatprep.subr.bf16.mxu0 %v4752
    %5108 = vmatpush1.bf16.msra.mxu0 %v4751
    %5109 = vmatprep.subr.bf16.mxu0 %v4758
    %5110 = vmatpush1.bf16.msra.mxu0 %v4757
    %5111 = vmatprep.subr.bf16.mxu0 %v4764
    %5112 = vmatpush1.bf16.msra.mxu0 %v4763
    %5113 = vmatprep.subr.bf16.mxu0 %v4770
    %5114 = vmatpush1.bf16.msra.mxu0 %v4769
    %5115 = vmatprep.subr.bf16.mxu0 %v4776
    %5116 = vmatpush1.bf16.msra.mxu0 %v4775
    %5117 = vmatprep.subr.bf16.mxu0 %v4782
    %5118 = vmatpush1.bf16.msra.mxu0 %v4781
    %5119 = vmatprep.subr.bf16.mxu0 %v4788
    %5120 = vmatpush1.bf16.msra.mxu0 %v4787
    %5121 = vmatprep.subr.bf16.mxu0 %v4794
    %5122 = vmatpush1.bf16.msra.mxu0 %v4793
    %5123 = vmatprep.subr.bf16.mxu0 %v4800
    %5124 = vmatpush1.bf16.msra.mxu0 %v4799
    %5125 = vmatprep.subr.bf16.mxu0 %v4806
    %5126 = vmatpush1.bf16.msra.mxu0 %v4805
    %5127 = vmatprep.subr.bf16.mxu0 %v4812
    %5128 = vmatpush1.bf16.msra.mxu0 %v4811
    %5129 = vmatprep.subr.bf16.mxu0 %v4818
    %5130 = vmatpush1.bf16.msra.mxu0 %v4817
    %5131 = vmatprep.mubr.bf16.mxu0 %v177
    %5132 = vmatmul.mubr.bf16.gmra.mrb[0].mxu0 %v176
    %v5133 = vpop.f32.mrb[0].mxu0
    %v5134 = vadd.f32 %v4274, %v5133
    %v5135 = vpop.f32.mrb[0].mxu0
    %v5136 = vadd.f32 %v4278, %v5135
    %v5137 = vpop.f32.mrb[0].mxu0
    %v5138 = vadd.f32 %v4274, %v5137
    %v5139 = vpop.f32.mrb[0].mxu0
    %v5140 = vadd.f32 %v4278, %v5139
    %5141 = vdwg.mxu0
    %5142 = vmatprep.subr.bf16.mxu0 %v4824
    %5143 = vmatpush1.bf16.msra.mxu0 %v4823
    %5144 = vmatprep.subr.bf16.mxu0 %v4830
    %5145 = vmatpush1.bf16.msra.mxu0 %v4829
    %5146 = vmatprep.subr.bf16.mxu0 %v4836
    %5147 = vmatpush1.bf16.msra.mxu0 %v4835
    %5148 = vmatprep.subr.bf16.mxu0 %v4842
    %5149 = vmatpush1.bf16.msra.mxu0 %v4841
    %5150 = vmatprep.subr.bf16.mxu0 %v4848
    %5151 = vmatpush1.bf16.msra.mxu0 %v4847
    %5152 = vmatprep.subr.bf16.mxu0 %v4854
    %5153 = vmatpush1.bf16.msra.mxu0 %v4853
    %5154 = vmatprep.subr.bf16.mxu0 %v4860
    %5155 = vmatpush1.bf16.msra.mxu0 %v4859
    %5156 = vmatprep.subr.bf16.mxu0 %v4866
    %5157 = vmatpush1.bf16.msra.mxu0 %v4865
    %5158 = vmatprep.subr.bf16.mxu0 0
    %5159 = vmatpush1.bf16.msra.mxu0 0
    %5160 = vmatprep.subr.bf16.mxu0 0
    %5161 = vmatpush1.bf16.msra.mxu0 0
    %5162 = vmatprep.subr.bf16.mxu0 0
    %5163 = vmatpush1.bf16.msra.mxu0 0
    %5164 = vmatprep.subr.bf16.mxu0 0
    %5165 = vmatpush1.bf16.msra.mxu0 0
    %5166 = vmatprep.subr.bf16.mxu0 0
    %5167 = vmatpush1.bf16.msra.mxu0 0
    %5168 = vmatprep.subr.bf16.mxu0 0
    %5169 = vmatpush1.bf16.msra.mxu0 0
    %5170 = vmatprep.subr.bf16.mxu0 0
    %5171 = vmatpush1.bf16.msra.mxu0 0
    %5172 = vmatprep.subr.bf16.mxu0 0
    %5173 = vmatpush1.bf16.msra.mxu0 0
    %5174 = vmatprep.mubr.bf16.mxu0 0
    %5175 = vmatmul.mubr.bf16.gmra.mrb[0].mxu0 %v178
    %v5176 = vpop.f32.mrb[0].mxu0
    %v5177 = vadd.f32 %v5134, %v5176
    %v5178 = vpop.f32.mrb[0].mxu0
    %v5179 = vadd.f32 %v5136, %v5178
    %v5180 = vpop.f32.mrb[0].mxu0
    %v5181 = vadd.f32 %v5138, %v5180
    %v5182 = vpop.f32.mrb[0].mxu0
    %v5183 = vadd.f32 %v5140, %v5182
    %5184 = vdwg.mxu0
    %5185 = vmatprep.subr.bf16.mxu0 %v4730
    %5186 = vmatpush1.bf16.msra.mxu0 %v4729
    %5187 = vmatprep.subr.bf16.mxu0 %v4736
    %5188 = vmatpush1.bf16.msra.mxu0 %v4735
    %5189 = vmatprep.subr.bf16.mxu0 %v4742
    %5190 = vmatpush1.bf16.msra.mxu0 %v4741
    %5191 = vmatprep.subr.bf16.mxu0 %v4748
    %5192 = vmatpush1.bf16.msra.mxu0 %v4747
    %5193 = vmatprep.subr.bf16.mxu0 %v4754
    %5194 = vmatpush1.bf16.msra.mxu0 %v4753
    %5195 = vmatprep.subr.bf16.mxu0 %v4760
    %5196 = vmatpush1.bf16.msra.mxu0 %v4759
    %5197 = vmatprep.subr.bf16.mxu0 %v4766
    %5198 = vmatpush1.bf16.msra.mxu0 %v4765
    %5199 = vmatprep.subr.bf16.mxu0 %v4772
    %5200 = vmatpush1.bf16.msra.mxu0 %v4771
    %5201 = vmatprep.subr.bf16.mxu0 %v4778
    %5202 = vmatpush1.bf16.msra.mxu0 %v4777
    %5203 = vmatprep.subr.bf16.mxu0 %v4784
    %5204 = vmatpush1.bf16.msra.mxu0 %v4783
    %5205 = vmatprep.subr.bf16.mxu0 %v4790
    %5206 = vmatpush1.bf16.msra.mxu0 %v4789
    %5207 = vmatprep.subr.bf16.mxu0 %v4796
    %5208 = vmatpush1.bf16.msra.mxu0 %v4795
    %5209 = vmatprep.subr.bf16.mxu0 %v4802
    %5210 = vmatpush1.bf16.msra.mxu0 %v4801
    %5211 = vmatprep.subr.bf16.mxu0 %v4808
    %5212 = vmatpush1.bf16.msra.mxu0 %v4807
    %5213 = vmatprep.subr.bf16.mxu0 %v4814
    %5214 = vmatpush1.bf16.msra.mxu0 %v4813
    %5215 = vmatprep.subr.bf16.mxu0 %v4820
    %5216 = vmatpush1.bf16.msra.mxu0 %v4819
    %5217 = vmatprep.mubr.bf16.mxu0 %v177
    %5218 = vmatmul.mubr.bf16.gmra.mrb[0].mxu0 %v176
    %v5219 = vpop.f32.mrb[0].mxu0
    %v5220 = vadd.f32 %v4282, %v5219
    %v5221 = vpop.f32.mrb[0].mxu0
    %v5222 = vadd.f32 %v4286, %v5221
    %v5223 = vpop.f32.mrb[0].mxu0
    %v5224 = vadd.f32 %v4282, %v5223
    %v5225 = vpop.f32.mrb[0].mxu0
    %v5226 = vadd.f32 %v4286, %v5225
    %5227 = vdwg.mxu0
    %5228 = vmatprep.subr.bf16.mxu0 %v4826
    %5229 = vmatpush1.bf16.msra.mxu0 %v4825
    %5230 = vmatprep.subr.bf16.mxu0 %v4832
    %5231 = vmatpush1.bf16.msra.mxu0 %v4831
    %5232 = vmatprep.subr.bf16.mxu0 %v4838
    %5233 = vmatpush1.bf16.msra.mxu0 %v4837
    %5234 = vmatprep.subr.bf16.mxu0 %v4844
    %5235 = vmatpush1.bf16.msra.mxu0 %v4843
    %5236 = vmatprep.subr.bf16.mxu0 %v4850
    %5237 = vmatpush1.bf16.msra.mxu0 %v4849
    %5238 = vmatprep.subr.bf16.mxu0 %v4856
    %5239 = vmatpush1.bf16.msra.mxu0 %v4855
    %5240 = vmatprep.subr.bf16.mxu0 %v4862
    %5241 = vmatpush1.bf16.msra.mxu0 %v4861
    %5242 = vmatprep.subr.bf16.mxu0 %v4868
    %5243 = vmatpush1.bf16.msra.mxu0 %v4867
    %5244 = vmatprep.subr.bf16.mxu0 0
    %5245 = vmatpush1.bf16.msra.mxu0 0
    %5246 = vmatprep.subr.bf16.mxu0 0
    %5247 = vmatpush1.bf16.msra.mxu0 0
    %5248 = vmatprep.subr.bf16.mxu0 0
    %5249 = vmatpush1.bf16.msra.mxu0 0
    %5250 = vmatprep.subr.bf16.mxu0 0
    %5251 = vmatpush1.bf16.msra.mxu0 0
    %5252 = vmatprep.subr.bf16.mxu0 0
    %5253 = vmatpush1.bf16.msra.mxu0 0
    %5254 = vmatprep.subr.bf16.mxu0 0
    %5255 = vmatpush1.bf16.msra.mxu0 0
    %5256 = vmatprep.subr.bf16.mxu0 0
    %5257 = vmatpush1.bf16.msra.mxu0 0
    %5258 = vmatprep.subr.bf16.mxu0 0
    %5259 = vmatpush1.bf16.msra.mxu0 0
    %5260 = vmatprep.mubr.bf16.mxu0 0
    %5261 = vmatmul.mubr.bf16.gmra.mrb[0].mxu0 %v178
    %v5262 = vpop.f32.mrb[0].mxu0
    %v5263 = vadd.f32 %v5220, %v5262
    %v5264 = vpop.f32.mrb[0].mxu0
    %v5265 = vadd.f32 %v5222, %v5264
    %v5266 = vpop.f32.mrb[0].mxu0
    %v5267 = vadd.f32 %v5224, %v5266
    %v5268 = vpop.f32.mrb[0].mxu0
    %v5269 = vadd.f32 %v5226, %v5268
    %5270 = vdwg.mxu0
    %v5271 = vld [vmem:[%s5] sm:$0xff]
    %v5272 = vld [vmem:[%s5 + $0x8] sm:$0xff]
    %5274 = vset.pattern.permute.xlu0 2
    %5275 = vperm.xlu0 %5274, %v5271
    %v5276 = vpop.permute.xlu0 %5275
    %5279 = vset.pattern.permute.xlu0 2
    %5280 = vperm.xlu0 %5279, %v5272
    %v5281 = vpop.permute.xlu0 %5280
    %v5284 = vlaneseq
    %v5285 = vshrl.u32 %v5284, 7
    %v5286 = vsub.s32 0, %v5285
    %v5287 = vrot.slane %v185, %v5286
    %v5288 = vlaneseq
    %v5289 = vshrl.u32 %v5288, 7
    %v5290 = vsub.s32 1, %v5289
    %v5291 = vrot.slane %v185, %v5290
    %v5292 = vlaneseq
    %v5293 = vshrl.u32 %v5292, 7
    %v5294 = vsub.s32 2, %v5293
    %v5295 = vrot.slane %v185, %v5294
    %v5299 = vmul.f32 %v5276, %v5287
    %v5300 = vmul.f32 %v5276, %v5291
    %v5301 = vmul.f32 %v5276, %v5295
    %v5302 = vmul.f32 %v5281, %v5287
    %v5303 = vmul.f32 %v5281, %v5291
    %v5304 = vmul.f32 %v5281, %v5295
    %v5311 = vrot.slane %v5299, 4
    %v5312 = vrot.slane %v5300, 4
    %v5313 = vrot.slane %v5301, 4
    %v5314 = vrot.slane %v5302, 4
    %v5315 = vrot.slane %v5303, 4
    %v5316 = vrot.slane %v5304, 4
    %v5323 = vadd.f32 %v5091, %v5311
    %v5324 = vadd.f32 %v5093, %v5312
    %v5325 = vadd.f32 %v5177, %v5313
    %v5326 = vadd.f32 %v5095, %v5314
    %v5327 = vadd.f32 %v5097, %v5315
    %v5328 = vadd.f32 %v5181, %v5316
    %v5329 = vld [vmem:[%s2] sm:$0xff]
    %v5330 = vld [vmem:[%s2 + $0x8] sm:$0xff]
    %v5331 = vld [vmem:[%s2 + $0x10] sm:$0xff]
    %v5332 = vld [vmem:[%s2 + $0x18] sm:$0xff]
    %v5333 = vld [vmem:[%s2 + $0x20] sm:$0xff]
    %v5334 = vld [vmem:[%s2 + $0x28] sm:$0xff]
    %v5335 = vld [vmem:[%s2 + $0x30] sm:$0xff]
    %v5336 = vld [vmem:[%s2 + $0x38] sm:$0xff]
    %v5337 = vld [vmem:[%s2 + $0x40] sm:$0xff]
    %v5338 = vld [vmem:[%s2 + $0x48] sm:$0xff]
    %v5339 = vld [vmem:[%s2 + $0x50] sm:$0xff]
    %v5340 = vld [vmem:[%s2 + $0x58] sm:$0xff]
    %v5341 = vpack.c.bf16 %v5332, %v5329
    %v5342 = vpack.c.bf16 %v5333, %v5330
    %v5343 = vpack.c.bf16 %v5334, %v5331
    %v5344 = vpack.c.bf16 %v5338, %v5335
    %v5345 = vpack.c.bf16 %v5339, %v5336
    %v5346 = vpack.c.bf16 %v5340, %v5337
    %v5347 = vld [vmem:[#allocation10] sm:$0xff]
    %v5348 = vld [vmem:[#allocation10 + $0x8] sm:$0xf]
    %v5349 = vld [vmem:[#allocation10 + $0xc] sm:$0xff]
    %v5350 = vld [vmem:[#allocation10 + $0x14] sm:$0xf]
    %v5351 = vld [vmem:[#allocation10 + $0x18] sm:$0xff]
    %v5352 = vld [vmem:[#allocation10 + $0x20] sm:$0xf]
    %v5353 = vld [vmem:[#allocation10 + $0x24] sm:$0xff]
    %v5354 = vld [vmem:[#allocation10 + $0x2c] sm:$0xf]
    %v5355 = vld [vmem:[#allocation10 + $0x30] sm:$0xff]
    %v5356 = vld [vmem:[#allocation10 + $0x38] sm:$0xf]
    %v5357 = vld [vmem:[#allocation10 + $0x3c] sm:$0xff]
    %v5358 = vld [vmem:[#allocation10 + $0x44] sm:$0xf]
    %v5359 = vld [vmem:[#allocation10 + $0x48] sm:$0xff]
    %v5360 = vld [vmem:[#allocation10 + $0x50] sm:$0xf]
    %v5361 = vld [vmem:[#allocation10 + $0x54] sm:$0xff]
    %v5362 = vld [vmem:[#allocation10 + $0x5c] sm:$0xf]
    %v5363 = vld [vmem:[#allocation10 + $0x60] sm:$0xff]
    %v5364 = vld [vmem:[#allocation10 + $0x68] sm:$0xf]
    %v5365 = vld [vmem:[#allocation10 + $0x6c] sm:$0xff]
    %v5366 = vld [vmem:[#allocation10 + $0x74] sm:$0xf]
    %v5367 = vld [vmem:[#allocation10 + $0x78] sm:$0xff]
    %v5368 = vld [vmem:[#allocation10 + $0x80] sm:$0xf]
    %v5369 = vld [vmem:[#allocation10 + $0x84] sm:$0xff]
    %v5370 = vld [vmem:[#allocation10 + $0x8c] sm:$0xf]
    %v5371 = vld [vmem:[#allocation10 + $0x90] sm:$0xff]
    %v5372 = vld [vmem:[#allocation10 + $0x98] sm:$0xf]
    %v5373 = vld [vmem:[#allocation10 + $0x9c] sm:$0xff]
    %v5374 = vld [vmem:[#allocation10 + $0xa4] sm:$0xf]
    %v5375 = vld [vmem:[#allocation10 + $0xa8] sm:$0xff]
    %v5376 = vld [vmem:[#allocation10 + $0xb0] sm:$0xf]
    %v5377 = vld [vmem:[#allocation10 + $0xb4] sm:$0xff]
    %v5378 = vld [vmem:[#allocation10 + $0xbc] sm:$0xf]
    %v5379 = vld [vmem:[#allocation10 + $0xc0] sm:$0xff]
    %v5380 = vld [vmem:[#allocation10 + $0xc8] sm:$0xf]
    %v5381 = vld [vmem:[#allocation10 + $0xcc] sm:$0xff]
    %v5382 = vld [vmem:[#allocation10 + $0xd4] sm:$0xf]
    %v5383 = vld [vmem:[#allocation10 + $0xd8] sm:$0xff]
    %v5384 = vld [vmem:[#allocation10 + $0xe0] sm:$0xf]
    %v5385 = vld [vmem:[#allocation10 + $0xe4] sm:$0xff]
    %v5386 = vld [vmem:[#allocation10 + $0xec] sm:$0xf]
    %v5387 = vld [vmem:[#allocation10 + $0xf0] sm:$0xff]
    %v5388 = vld [vmem:[#allocation10 + $0xf8] sm:$0xf]
    %v5389 = vld [vmem:[#allocation10 + $0xfc] sm:$0xff]
    %v5390 = vld [vmem:[#allocation10 + $0x104] sm:$0xf]
    %v5391 = vld [vmem:[#allocation10 + $0x108] sm:$0xff]
    %v5392 = vld [vmem:[#allocation10 + $0x110] sm:$0xf]
    %v5393 = vld [vmem:[#allocation10 + $0x114] sm:$0xff]
    %v5394 = vld [vmem:[#allocation10 + $0x11c] sm:$0xf]
    %v5395 = vld [vmem:[#allocation10 + $0x120] sm:$0xff]
    %v5396 = vld [vmem:[#allocation10 + $0x128] sm:$0xf]
    %v5397 = vld [vmem:[#allocation10 + $0x12c] sm:$0xff]
    %v5398 = vld [vmem:[#allocation10 + $0x134] sm:$0xf]
    %v5399 = vld [vmem:[#allocation10 + $0x138] sm:$0xff]
    %v5400 = vld [vmem:[#allocation10 + $0x140] sm:$0xf]
    %v5401 = vld [vmem:[#allocation10 + $0x144] sm:$0xff]
    %v5402 = vld [vmem:[#allocation10 + $0x14c] sm:$0xf]
    %v5403 = vld [vmem:[#allocation10 + $0x150] sm:$0xff]
    %v5404 = vld [vmem:[#allocation10 + $0x158] sm:$0xf]
    %v5405 = vld [vmem:[#allocation10 + $0x15c] sm:$0xff]
    %v5406 = vld [vmem:[#allocation10 + $0x164] sm:$0xf]
    %v5407 = vld [vmem:[#allocation10 + $0x168] sm:$0xff]
    %v5408 = vld [vmem:[#allocation10 + $0x170] sm:$0xf]
    %v5409 = vld [vmem:[#allocation10 + $0x174] sm:$0xff]
    %v5410 = vld [vmem:[#allocation10 + $0x17c] sm:$0xf]
    %v5411 = vld [vmem:[#allocation10 + $0x180] sm:$0xff]
    %v5412 = vld [vmem:[#allocation10 + $0x188] sm:$0xf]
    %v5413 = vld [vmem:[#allocation10 + $0x18c] sm:$0xff]
    %v5414 = vld [vmem:[#allocation10 + $0x194] sm:$0xf]
    %v5415 = vld [vmem:[#allocation10 + $0x198] sm:$0xff]
    %v5416 = vld [vmem:[#allocation10 + $0x1a0] sm:$0xf]
    %v5417 = vld [vmem:[#allocation10 + $0x1a4] sm:$0xff]
    %v5418 = vld [vmem:[#allocation10 + $0x1ac] sm:$0xf]
    %v5419 = vld [vmem:[#allocation10 + $0x1b0] sm:$0xff]
    %v5420 = vld [vmem:[#allocation10 + $0x1b8] sm:$0xf]
    %v5421 = vld [vmem:[#allocation10 + $0x1bc] sm:$0xff]
    %v5422 = vld [vmem:[#allocation10 + $0x1c4] sm:$0xf]
    %v5423 = vld [vmem:[#allocation10 + $0x1c8] sm:$0xff]
    %v5424 = vld [vmem:[#allocation10 + $0x1d0] sm:$0xf]
    %v5425 = vld [vmem:[#allocation10 + $0x1d4] sm:$0xff]
    %v5426 = vld [vmem:[#allocation10 + $0x1dc] sm:$0xf]
    %v5427 = vld [vmem:[#allocation10 + $0x1e0] sm:$0xff]
    %v5428 = vld [vmem:[#allocation10 + $0x1e8] sm:$0xf]
    %v5429 = vld [vmem:[#allocation10 + $0x1ec] sm:$0xff]
    %v5430 = vld [vmem:[#allocation10 + $0x1f4] sm:$0xf]
    %v5431 = vld [vmem:[#allocation10 + $0x1f8] sm:$0xff]
    %v5432 = vld [vmem:[#allocation10 + $0x200] sm:$0xf]
    %v5433 = vld [vmem:[#allocation10 + $0x204] sm:$0xff]
    %v5434 = vld [vmem:[#allocation10 + $0x20c] sm:$0xf]
    %v5435 = vld [vmem:[#allocation10 + $0x210] sm:$0xff]
    %v5436 = vld [vmem:[#allocation10 + $0x218] sm:$0xf]
    %v5437 = vld [vmem:[#allocation10 + $0x21c] sm:$0xff]
    %v5438 = vld [vmem:[#allocation10 + $0x224] sm:$0xf]
    %v5439 = vld [vmem:[#allocation10 + $0x228] sm:$0xff]
    %v5440 = vld [vmem:[#allocation10 + $0x230] sm:$0xf]
    %v5441 = vld [vmem:[#allocation10 + $0x234] sm:$0xff]
    %v5442 = vld [vmem:[#allocation10 + $0x23c] sm:$0xf]
    %v5444 = vlaneseq
    %v5445 = vshrl.u32 %v5444, 7
    %v5446 = vsub.s32 0, %v5445
    %v5447 = vrot.slane %v187, %v5446
    %v5448 = vlaneseq
    %v5449 = vshrl.u32 %v5448, 7
    %v5450 = vsub.s32 1, %v5449
    %v5451 = vrot.slane %v187, %v5450
    %v5452 = vlaneseq
    %v5453 = vshrl.u32 %v5452, 7
    %v5454 = vsub.s32 2, %v5453
    %v5455 = vrot.slane %v187, %v5454
    %v5555 = vunpack.c.l.b16 %v5347
    %v5556 = vunpack.c.h.b16 %v5347
    %v5557 = vunpack.c.l.b16 %v5348
    %v5558 = vunpack.c.l.b16 %v5349
    %v5559 = vunpack.c.h.b16 %v5349
    %v5560 = vunpack.c.l.b16 %v5350
    %v5561 = vunpack.c.l.b16 %v5351
    %v5562 = vunpack.c.h.b16 %v5351
    %v5563 = vunpack.c.l.b16 %v5352
    %v5564 = vunpack.c.l.b16 %v5353
    %v5565 = vunpack.c.h.b16 %v5353
    %v5566 = vunpack.c.l.b16 %v5354
    %v5567 = vunpack.c.l.b16 %v5355
    %v5568 = vunpack.c.h.b16 %v5355
    %v5569 = vunpack.c.l.b16 %v5356
    %v5570 = vunpack.c.l.b16 %v5357
    %v5571 = vunpack.c.h.b16 %v5357
    %v5572 = vunpack.c.l.b16 %v5358
    %v5573 = vunpack.c.l.b16 %v5359
    %v5574 = vunpack.c.h.b16 %v5359
    %v5575 = vunpack.c.l.b16 %v5360
    %v5576 = vunpack.c.l.b16 %v5361
    %v5577 = vunpack.c.h.b16 %v5361
    %v5578 = vunpack.c.l.b16 %v5362
    %v5579 = vunpack.c.l.b16 %v5363
    %v5580 = vunpack.c.h.b16 %v5363
    %v5581 = vunpack.c.l.b16 %v5364
    %v5582 = vunpack.c.l.b16 %v5365
    %v5583 = vunpack.c.h.b16 %v5365
    %v5584 = vunpack.c.l.b16 %v5366
    %v5585 = vunpack.c.l.b16 %v5367
    %v5586 = vunpack.c.h.b16 %v5367
    %v5587 = vunpack.c.l.b16 %v5368
    %v5588 = vunpack.c.l.b16 %v5369
    %v5589 = vunpack.c.h.b16 %v5369
    %v5590 = vunpack.c.l.b16 %v5370
    %v5591 = vunpack.c.l.b16 %v5371
    %v5592 = vunpack.c.h.b16 %v5371
    %v5593 = vunpack.c.l.b16 %v5372
    %v5594 = vunpack.c.l.b16 %v5373
    %v5595 = vunpack.c.h.b16 %v5373
    %v5596 = vunpack.c.l.b16 %v5374
    %v5597 = vunpack.c.l.b16 %v5375
    %v5598 = vunpack.c.h.b16 %v5375
    %v5599 = vunpack.c.l.b16 %v5376
    %v5600 = vunpack.c.l.b16 %v5377
    %v5601 = vunpack.c.h.b16 %v5377
    %v5602 = vunpack.c.l.b16 %v5378
    %v5603 = vunpack.c.l.b16 %v5379
    %v5604 = vunpack.c.h.b16 %v5379
    %v5605 = vunpack.c.l.b16 %v5380
    %v5606 = vunpack.c.l.b16 %v5381
    %v5607 = vunpack.c.h.b16 %v5381
    %v5608 = vunpack.c.l.b16 %v5382
    %v5609 = vunpack.c.l.b16 %v5383
    %v5610 = vunpack.c.h.b16 %v5383
    %v5611 = vunpack.c.l.b16 %v5384
    %v5612 = vunpack.c.l.b16 %v5385
    %v5613 = vunpack.c.h.b16 %v5385
    %v5614 = vunpack.c.l.b16 %v5386
    %v5615 = vunpack.c.l.b16 %v5387
    %v5616 = vunpack.c.h.b16 %v5387
    %v5617 = vunpack.c.l.b16 %v5388
    %v5618 = vunpack.c.l.b16 %v5389
    %v5619 = vunpack.c.h.b16 %v5389
    %v5620 = vunpack.c.l.b16 %v5390
    %v5621 = vunpack.c.l.b16 %v5391
    %v5622 = vunpack.c.h.b16 %v5391
    %v5623 = vunpack.c.l.b16 %v5392
    %v5624 = vunpack.c.l.b16 %v5393
    %v5625 = vunpack.c.h.b16 %v5393
    %v5626 = vunpack.c.l.b16 %v5394
    %v5627 = vunpack.c.l.b16 %v5395
    %v5628 = vunpack.c.h.b16 %v5395
    %v5629 = vunpack.c.l.b16 %v5396
    %v5630 = vunpack.c.l.b16 %v5397
    %v5631 = vunpack.c.h.b16 %v5397
    %v5632 = vunpack.c.l.b16 %v5398
    %v5633 = vunpack.c.l.b16 %v5399
    %v5634 = vunpack.c.h.b16 %v5399
    %v5635 = vunpack.c.l.b16 %v5400
    %v5636 = vunpack.c.l.b16 %v5401
    %v5637 = vunpack.c.h.b16 %v5401
    %v5638 = vunpack.c.l.b16 %v5402
    %v5639 = vunpack.c.l.b16 %v5403
    %v5640 = vunpack.c.h.b16 %v5403
    %v5641 = vunpack.c.l.b16 %v5404
    %v5642 = vunpack.c.l.b16 %v5405
    %v5643 = vunpack.c.h.b16 %v5405
    %v5644 = vunpack.c.l.b16 %v5406
    %v5645 = vunpack.c.l.b16 %v5407
    %v5646 = vunpack.c.h.b16 %v5407
    %v5647 = vunpack.c.l.b16 %v5408
    %v5648 = vunpack.c.l.b16 %v5409
    %v5649 = vunpack.c.h.b16 %v5409
    %v5650 = vunpack.c.l.b16 %v5410
    %v5651 = vunpack.c.l.b16 %v5411
    %v5652 = vunpack.c.h.b16 %v5411
    %v5653 = vunpack.c.l.b16 %v5412
    %v5654 = vunpack.c.l.b16 %v5413
    %v5655 = vunpack.c.h.b16 %v5413
    %v5656 = vunpack.c.l.b16 %v5414
    %v5657 = vunpack.c.l.b16 %v5415
    %v5658 = vunpack.c.h.b16 %v5415
    %v5659 = vunpack.c.l.b16 %v5416
    %v5660 = vunpack.c.l.b16 %v5417
    %v5661 = vunpack.c.h.b16 %v5417
    %v5662 = vunpack.c.l.b16 %v5418
    %v5663 = vunpack.c.l.b16 %v5419
    %v5664 = vunpack.c.h.b16 %v5419
    %v5665 = vunpack.c.l.b16 %v5420
    %v5666 = vunpack.c.l.b16 %v5421
    %v5667 = vunpack.c.h.b16 %v5421
    %v5668 = vunpack.c.l.b16 %v5422
    %v5669 = vunpack.c.l.b16 %v5423
    %v5670 = vunpack.c.h.b16 %v5423
    %v5671 = vunpack.c.l.b16 %v5424
    %v5672 = vunpack.c.l.b16 %v5425
    %v5673 = vunpack.c.h.b16 %v5425
    %v5674 = vunpack.c.l.b16 %v5426
    %v5675 = vunpack.c.l.b16 %v5427
    %v5676 = vunpack.c.h.b16 %v5427
    %v5677 = vunpack.c.l.b16 %v5428
    %v5678 = vunpack.c.l.b16 %v5429
    %v5679 = vunpack.c.h.b16 %v5429
    %v5680 = vunpack.c.l.b16 %v5430
    %v5681 = vunpack.c.l.b16 %v5431
    %v5682 = vunpack.c.h.b16 %v5431
    %v5683 = vunpack.c.l.b16 %v5432
    %v5684 = vunpack.c.l.b16 %v5433
    %v5685 = vunpack.c.h.b16 %v5433
    %v5686 = vunpack.c.l.b16 %v5434
    %v5687 = vunpack.c.l.b16 %v5435
    %v5688 = vunpack.c.h.b16 %v5435
    %v5689 = vunpack.c.l.b16 %v5436
    %v5690 = vunpack.c.l.b16 %v5437
    %v5691 = vunpack.c.h.b16 %v5437
    %v5692 = vunpack.c.l.b16 %v5438
    %v5693 = vunpack.c.l.b16 %v5439
    %v5694 = vunpack.c.h.b16 %v5439
    %v5695 = vunpack.c.l.b16 %v5440
    %v5696 = vunpack.c.l.b16 %v5441
    %v5697 = vunpack.c.h.b16 %v5441
    %v5698 = vunpack.c.l.b16 %v5442
    %v5699 = vpack.c.b16 %v5558, %v5555
    %v5700 = vpack.c.b16 %v5559, %v5556
    %v5701 = vpack.c.b16 %v5560, %v5557
    %v5702 = vpack.c.b16 %v5564, %v5561
    %v5703 = vpack.c.b16 %v5565, %v5562
    %v5704 = vpack.c.b16 %v5566, %v5563
    %v5705 = vpack.c.b16 %v5570, %v5567
    %v5706 = vpack.c.b16 %v5571, %v5568
    %v5707 = vpack.c.b16 %v5572, %v5569
    %v5708 = vpack.c.b16 %v5576, %v5573
    %v5709 = vpack.c.b16 %v5577, %v5574
    %v5710 = vpack.c.b16 %v5578, %v5575
    %v5711 = vpack.c.b16 %v5582, %v5579
    %v5712 = vpack.c.b16 %v5583, %v5580
    %v5713 = vpack.c.b16 %v5584, %v5581
    %v5714 = vpack.c.b16 %v5588, %v5585
    %v5715 = vpack.c.b16 %v5589, %v5586
    %v5716 = vpack.c.b16 %v5590, %v5587
    %v5717 = vpack.c.b16 %v5594, %v5591
    %v5718 = vpack.c.b16 %v5595, %v5592
    %v5719 = vpack.c.b16 %v5596, %v5593
    %v5720 = vpack.c.b16 %v5600, %v5597
    %v5721 = vpack.c.b16 %v5601, %v5598
    %v5722 = vpack.c.b16 %v5602, %v5599
    %v5723 = vpack.c.b16 %v5606, %v5603
    %v5724 = vpack.c.b16 %v5607, %v5604
    %v5725 = vpack.c.b16 %v5608, %v5605
    %v5726 = vpack.c.b16 %v5612, %v5609
    %v5727 = vpack.c.b16 %v5613, %v5610
    %v5728 = vpack.c.b16 %v5614, %v5611
    %v5729 = vpack.c.b16 %v5618, %v5615
    %v5730 = vpack.c.b16 %v5619, %v5616
    %v5731 = vpack.c.b16 %v5620, %v5617
    %v5732 = vpack.c.b16 %v5624, %v5621
    %v5733 = vpack.c.b16 %v5625, %v5622
    %v5734 = vpack.c.b16 %v5626, %v5623
    %v5735 = vpack.c.b16 %v5630, %v5627
    %v5736 = vpack.c.b16 %v5631, %v5628
    %v5737 = vpack.c.b16 %v5632, %v5629
    %v5738 = vpack.c.b16 %v5636, %v5633
    %v5739 = vpack.c.b16 %v5637, %v5634
    %v5740 = vpack.c.b16 %v5638, %v5635
    %v5741 = vpack.c.b16 %v5642, %v5639
    %v5742 = vpack.c.b16 %v5643, %v5640
    %v5743 = vpack.c.b16 %v5644, %v5641
    %v5744 = vpack.c.b16 %v5648, %v5645
    %v5745 = vpack.c.b16 %v5649, %v5646
    %v5746 = vpack.c.b16 %v5650, %v5647
    %v5747 = vpack.c.b16 %v5654, %v5651
    %v5748 = vpack.c.b16 %v5655, %v5652
    %v5749 = vpack.c.b16 %v5656, %v5653
    %v5750 = vpack.c.b16 %v5660, %v5657
    %v5751 = vpack.c.b16 %v5661, %v5658
    %v5752 = vpack.c.b16 %v5662, %v5659
    %v5753 = vpack.c.b16 %v5666, %v5663
    %v5754 = vpack.c.b16 %v5667, %v5664
    %v5755 = vpack.c.b16 %v5668, %v5665
    %v5756 = vpack.c.b16 %v5672, %v5669
    %v5757 = vpack.c.b16 %v5673, %v5670
    %v5758 = vpack.c.b16 %v5674, %v5671
    %v5759 = vpack.c.b16 %v5678, %v5675
    %v5760 = vpack.c.b16 %v5679, %v5676
    %v5761 = vpack.c.b16 %v5680, %v5677
    %v5762 = vpack.c.b16 %v5684, %v5681
    %v5763 = vpack.c.b16 %v5685, %v5682
    %v5764 = vpack.c.b16 %v5686, %v5683
    %v5765 = vpack.c.b16 %v5690, %v5687
    %v5766 = vpack.c.b16 %v5691, %v5688
    %v5767 = vpack.c.b16 %v5692, %v5689
    %v5768 = vpack.c.b16 %v5696, %v5693
    %v5769 = vpack.c.b16 %v5697, %v5694
    %v5770 = vpack.c.b16 %v5698, %v5695
    %5843 = vmatprep.subr.bf16.mxu0 %v5700
    %5844 = vmatpush1.bf16.msra.mxu0 %v5699
    %5845 = vmatprep.subr.bf16.mxu0 %v5703
    %5846 = vmatpush1.bf16.msra.mxu0 %v5702
    %5847 = vmatprep.subr.bf16.mxu0 %v5706
    %5848 = vmatpush1.bf16.msra.mxu0 %v5705
    %5849 = vmatprep.subr.bf16.mxu0 %v5709
    %5850 = vmatpush1.bf16.msra.mxu0 %v5708
    %5851 = vmatprep.subr.bf16.mxu0 %v5712
    %5852 = vmatpush1.bf16.msra.mxu0 %v5711
    %5853 = vmatprep.subr.bf16.mxu0 %v5715
    %5854 = vmatpush1.bf16.msra.mxu0 %v5714
    %5855 = vmatprep.subr.bf16.mxu0 %v5718
    %5856 = vmatpush1.bf16.msra.mxu0 %v5717
    %5857 = vmatprep.subr.bf16.mxu0 %v5721
    %5858 = vmatpush1.bf16.msra.mxu0 %v5720
    %5859 = vmatprep.subr.bf16.mxu0 %v5724
    %5860 = vmatpush1.bf16.msra.mxu0 %v5723
    %5861 = vmatprep.subr.bf16.mxu0 %v5727
    %5862 = vmatpush1.bf16.msra.mxu0 %v5726
    %5863 = vmatprep.subr.bf16.mxu0 %v5730
    %5864 = vmatpush1.bf16.msra.mxu0 %v5729
    %5865 = vmatprep.subr.bf16.mxu0 %v5733
    %5866 = vmatpush1.bf16.msra.mxu0 %v5732
    %5867 = vmatprep.subr.bf16.mxu0 %v5736
    %5868 = vmatpush1.bf16.msra.mxu0 %v5735
    %5869 = vmatprep.subr.bf16.mxu0 %v5739
    %5870 = vmatpush1.bf16.msra.mxu0 %v5738
    %5871 = vmatprep.subr.bf16.mxu0 %v5742
    %5872 = vmatpush1.bf16.msra.mxu0 %v5741
    %5873 = vmatprep.subr.bf16.mxu0 %v5745
    %5874 = vmatpush1.bf16.msra.mxu0 %v5744
    %5875 = vmatprep.mubr.bf16.mxu0 %v5342
    %5876 = vmatmul.mubr.bf16.gmra.mrb[0].mxu0 %v5341
    %v5877 = vpop.f32.mrb[0].mxu0
    %v5878 = vadd.f32 %v5447, %v5877
    %v5879 = vpop.f32.mrb[0].mxu0
    %v5880 = vadd.f32 %v5451, %v5879
    %v5881 = vpop.f32.mrb[0].mxu0
    %v5882 = vadd.f32 %v5447, %v5881
    %v5883 = vpop.f32.mrb[0].mxu0
    %v5884 = vadd.f32 %v5451, %v5883
    %5885 = vmatprep.mubr.bf16.mxu0 %v5345
    %5886 = vmatmul.mubr.bf16.gmra.mrb[0].mxu0 %v5344
    %v5887 = vpop.f32.mrb[0].mxu0
    %v5888 = vadd.f32 %v5447, %v5887
    %v5889 = vpop.f32.mrb[0].mxu0
    %v5890 = vadd.f32 %v5451, %v5889
    %v5891 = vpop.f32.mrb[0].mxu0
    %v5892 = vadd.f32 %v5447, %v5891
    %v5893 = vpop.f32.mrb[0].mxu0
    %v5894 = vadd.f32 %v5451, %v5893
    %5895 = vdwg.mxu0
    %5896 = vmatprep.subr.bf16.mxu0 %v5748
    %5897 = vmatpush1.bf16.msra.mxu0 %v5747
    %5898 = vmatprep.subr.bf16.mxu0 %v5751
    %5899 = vmatpush1.bf16.msra.mxu0 %v5750
    %5900 = vmatprep.subr.bf16.mxu0 %v5754
    %5901 = vmatpush1.bf16.msra.mxu0 %v5753
    %5902 = vmatprep.subr.bf16.mxu0 %v5757
    %5903 = vmatpush1.bf16.msra.mxu0 %v5756
    %5904 = vmatprep.subr.bf16.mxu0 %v5760
    %5905 = vmatpush1.bf16.msra.mxu0 %v5759
    %5906 = vmatprep.subr.bf16.mxu0 %v5763
    %5907 = vmatpush1.bf16.msra.mxu0 %v5762
    %5908 = vmatprep.subr.bf16.mxu0 %v5766
    %5909 = vmatpush1.bf16.msra.mxu0 %v5765
    %5910 = vmatprep.subr.bf16.mxu0 %v5769
    %5911 = vmatpush1.bf16.msra.mxu0 %v5768
    %5912 = vmatprep.subr.bf16.mxu0 0
    %5913 = vmatpush1.bf16.msra.mxu0 0
    %5914 = vmatprep.subr.bf16.mxu0 0
    %5915 = vmatpush1.bf16.msra.mxu0 0
    %5916 = vmatprep.subr.bf16.mxu0 0
    %5917 = vmatpush1.bf16.msra.mxu0 0
    %5918 = vmatprep.subr.bf16.mxu0 0
    %5919 = vmatpush1.bf16.msra.mxu0 0
    %5920 = vmatprep.subr.bf16.mxu0 0
    %5921 = vmatpush1.bf16.msra.mxu0 0
    %5922 = vmatprep.subr.bf16.mxu0 0
    %5923 = vmatpush1.bf16.msra.mxu0 0
    %5924 = vmatprep.subr.bf16.mxu0 0
    %5925 = vmatpush1.bf16.msra.mxu0 0
    %5926 = vmatprep.subr.bf16.mxu0 0
    %5927 = vmatpush1.bf16.msra.mxu0 0
    %5928 = vmatprep.mubr.bf16.mxu0 0
    %5929 = vmatmul.mubr.bf16.gmra.mrb[0].mxu0 %v5343
    %v5930 = vpop.f32.mrb[0].mxu0
    %v5931 = vadd.f32 %v5878, %v5930
    %v5932 = vpop.f32.mrb[0].mxu0
    %v5933 = vadd.f32 %v5880, %v5932
    %v5934 = vpop.f32.mrb[0].mxu0
    %v5935 = vadd.f32 %v5882, %v5934
    %v5936 = vpop.f32.mrb[0].mxu0
    %v5937 = vadd.f32 %v5884, %v5936
    %5938 = vmatprep.mubr.bf16.mxu0 0
    %5939 = vmatmul.mubr.bf16.gmra.mrb[0].mxu0 %v5346
    %v5940 = vpop.f32.mrb[0].mxu0
    %v5941 = vadd.f32 %v5888, %v5940
    %v5942 = vpop.f32.mrb[0].mxu0
    %v5943 = vadd.f32 %v5890, %v5942
    %v5944 = vpop.f32.mrb[0].mxu0
    %v5945 = vadd.f32 %v5892, %v5944
    %v5946 = vpop.f32.mrb[0].mxu0
    %v5947 = vadd.f32 %v5894, %v5946
    %5948 = vdwg.mxu0
    %5949 = vmatprep.subr.bf16.mxu0 0
    %5950 = vmatpush1.bf16.msra.mxu0 %v5701
    %5951 = vmatprep.subr.bf16.mxu0 0
    %5952 = vmatpush1.bf16.msra.mxu0 %v5704
    %5953 = vmatprep.subr.bf16.mxu0 0
    %5954 = vmatpush1.bf16.msra.mxu0 %v5707
    %5955 = vmatprep.subr.bf16.mxu0 0
    %5956 = vmatpush1.bf16.msra.mxu0 %v5710
    %5957 = vmatprep.subr.bf16.mxu0 0
    %5958 = vmatpush1.bf16.msra.mxu0 %v5713
    %5959 = vmatprep.subr.bf16.mxu0 0
    %5960 = vmatpush1.bf16.msra.mxu0 %v5716
    %5961 = vmatprep.subr.bf16.mxu0 0
    %5962 = vmatpush1.bf16.msra.mxu0 %v5719
    %5963 = vmatprep.subr.bf16.mxu0 0
    %5964 = vmatpush1.bf16.msra.mxu0 %v5722
    %5965 = vmatprep.subr.bf16.mxu0 0
    %5966 = vmatpush1.bf16.msra.mxu0 %v5725
    %5967 = vmatprep.subr.bf16.mxu0 0
    %5968 = vmatpush1.bf16.msra.mxu0 %v5728
    %5969 = vmatprep.subr.bf16.mxu0 0
    %5970 = vmatpush1.bf16.msra.mxu0 %v5731
    %5971 = vmatprep.subr.bf16.mxu0 0
    %5972 = vmatpush1.bf16.msra.mxu0 %v5734
    %5973 = vmatprep.subr.bf16.mxu0 0
    %5974 = vmatpush1.bf16.msra.mxu0 %v5737
    %5975 = vmatprep.subr.bf16.mxu0 0
    %5976 = vmatpush1.bf16.msra.mxu0 %v5740
    %5977 = vmatprep.subr.bf16.mxu0 0
    %5978 = vmatpush1.bf16.msra.mxu0 %v5743
    %5979 = vmatprep.subr.bf16.mxu0 0
    %5980 = vmatpush1.bf16.msra.mxu0 %v5746
    %5981 = vmatprep.mubr.bf16.mxu0 %v5342
    %5982 = vmatmul.mubr.bf16.gmra.mrb[0].mxu0 %v5341
    %v5983 = vpop.f32.mrb[0].mxu0
    %v5984 = vadd.f32 %v5455, %v5983
    %v5985 = vpop.f32.mrb[0].mxu0
    %v5986 = vpop.f32.mrb[0].mxu0
    %v5987 = vadd.f32 %v5455, %v5986
    %v5988 = vpop.f32.mrb[0].mxu0
    %5989 = vmatprep.mubr.bf16.mxu0 %v5345
    %5990 = vmatmul.mubr.bf16.gmra.mrb[0].mxu0 %v5344
    %v5991 = vpop.f32.mrb[0].mxu0
    %v5992 = vadd.f32 %v5455, %v5991
    %v5993 = vpop.f32.mrb[0].mxu0
    %v5994 = vpop.f32.mrb[0].mxu0
    %v5995 = vadd.f32 %v5455, %v5994
    %v5996 = vpop.f32.mrb[0].mxu0
    %5997 = vdwg.mxu0
    %5998 = vmatprep.subr.bf16.mxu0 0
    %5999 = vmatpush1.bf16.msra.mxu0 %v5749
    %6000 = vmatprep.subr.bf16.mxu0 0
    %6001 = vmatpush1.bf16.msra.mxu0 %v5752
    %6002 = vmatprep.subr.bf16.mxu0 0
    %6003 = vmatpush1.bf16.msra.mxu0 %v5755
    %6004 = vmatprep.subr.bf16.mxu0 0
    %6005 = vmatpush1.bf16.msra.mxu0 %v5758
    %6006 = vmatprep.subr.bf16.mxu0 0
    %6007 = vmatpush1.bf16.msra.mxu0 %v5761
    %6008 = vmatprep.subr.bf16.mxu0 0
    %6009 = vmatpush1.bf16.msra.mxu0 %v5764
    %6010 = vmatprep.subr.bf16.mxu0 0
    %6011 = vmatpush1.bf16.msra.mxu0 %v5767
    %6012 = vmatprep.subr.bf16.mxu0 0
    %6013 = vmatpush1.bf16.msra.mxu0 %v5770
    %6014 = vmatprep.subr.bf16.mxu0 0
    %6015 = vmatpush1.bf16.msra.mxu0 0
    %6016 = vmatprep.subr.bf16.mxu0 0
    %6017 = vmatpush1.bf16.msra.mxu0 0
    %6018 = vmatprep.subr.bf16.mxu0 0
    %6019 = vmatpush1.bf16.msra.mxu0 0
    %6020 = vmatprep.subr.bf16.mxu0 0
    %6021 = vmatpush1.bf16.msra.mxu0 0
    %6022 = vmatprep.subr.bf16.mxu0 0
    %6023 = vmatpush1.bf16.msra.mxu0 0
    %6024 = vmatprep.subr.bf16.mxu0 0
    %6025 = vmatpush1.bf16.msra.mxu0 0
    %6026 = vmatprep.subr.bf16.mxu0 0
    %6027 = vmatpush1.bf16.msra.mxu0 0
    %6028 = vmatprep.subr.bf16.mxu0 0
    %6029 = vmatpush1.bf16.msra.mxu0 0
    %6030 = vmatprep.mubr.bf16.mxu0 0
    %6031 = vmatmul.mubr.bf16.gmra.mrb[0].mxu0 %v5343
    %v6032 = vpop.f32.mrb[0].mxu0
    %v6033 = vadd.f32 %v5984, %v6032
    %v6034 = vpop.f32.mrb[0].mxu0
    %v6035 = vpop.f32.mrb[0].mxu0
    %v6036 = vadd.f32 %v5987, %v6035
    %v6037 = vpop.f32.mrb[0].mxu0
    %6038 = vmatprep.mubr.bf16.mxu0 0
    %6039 = vmatmul.mubr.bf16.gmra.mrb[0].mxu0 %v5346
    %v6040 = vpop.f32.mrb[0].mxu0
    %v6041 = vadd.f32 %v5992, %v6040
    %v6042 = vpop.f32.mrb[0].mxu0
    %v6043 = vpop.f32.mrb[0].mxu0
    %v6044 = vadd.f32 %v5995, %v6043
    %v6045 = vpop.f32.mrb[0].mxu0
    %6046 = vdwg.mxu0
    %v6047 = vld [vmem:[%s3] sm:$0xff]
    %v6048 = vld [vmem:[%s3 + $0x8] sm:$0xff]
    %v6049 = vld [vmem:[%s3 + $0x10] sm:$0xff]
    %v6050 = vld [vmem:[%s3 + $0x18] sm:$0xff]
    %v6051 = vld [vmem:[%s3 + $0x20] sm:$0xff]
    %v6052 = vld [vmem:[%s3 + $0x28] sm:$0xff]
    %v6053 = vld [vmem:[%s3 + $0x30] sm:$0xff]
    %v6054 = vld [vmem:[%s3 + $0x38] sm:$0xff]
    %v6055 = vld [vmem:[%s3 + $0x40] sm:$0xff]
    %v6056 = vld [vmem:[%s3 + $0x48] sm:$0xff]
    %v6057 = vld [vmem:[%s3 + $0x50] sm:$0xff]
    %v6058 = vld [vmem:[%s3 + $0x58] sm:$0xff]
    %v6059 = vpack.c.bf16 %v6050, %v6047
    %v6060 = vpack.c.bf16 %v6051, %v6048
    %v6061 = vpack.c.bf16 %v6052, %v6049
    %v6062 = vpack.c.bf16 %v6056, %v6053
    %v6063 = vpack.c.bf16 %v6057, %v6054
    %v6064 = vpack.c.bf16 %v6058, %v6055
    %v6065 = vld [vmem:[#allocation11] sm:$0xff]
    %v6066 = vld [vmem:[#allocation11 + $0x8] sm:$0xf]
    %v6067 = vld [vmem:[#allocation11 + $0xc] sm:$0xff]
    %v6068 = vld [vmem:[#allocation11 + $0x14] sm:$0xf]
    %v6069 = vld [vmem:[#allocation11 + $0x18] sm:$0xff]
    %v6070 = vld [vmem:[#allocation11 + $0x20] sm:$0xf]
    %v6071 = vld [vmem:[#allocation11 + $0x24] sm:$0xff]
    %v6072 = vld [vmem:[#allocation11 + $0x2c] sm:$0xf]
    %v6073 = vld [vmem:[#allocation11 + $0x30] sm:$0xff]
    %v6074 = vld [vmem:[#allocation11 + $0x38] sm:$0xf]
    %v6075 = vld [vmem:[#allocation11 + $0x3c] sm:$0xff]
    %v6076 = vld [vmem:[#allocation11 + $0x44] sm:$0xf]
    %v6077 = vld [vmem:[#allocation11 + $0x48] sm:$0xff]
    %v6078 = vld [vmem:[#allocation11 + $0x50] sm:$0xf]
    %v6079 = vld [vmem:[#allocation11 + $0x54] sm:$0xff]
    %v6080 = vld [vmem:[#allocation11 + $0x5c] sm:$0xf]
    %v6081 = vld [vmem:[#allocation11 + $0x60] sm:$0xff]
    %v6082 = vld [vmem:[#allocation11 + $0x68] sm:$0xf]
    %v6083 = vld [vmem:[#allocation11 + $0x6c] sm:$0xff]
    %v6084 = vld [vmem:[#allocation11 + $0x74] sm:$0xf]
    %v6085 = vld [vmem:[#allocation11 + $0x78] sm:$0xff]
    %v6086 = vld [vmem:[#allocation11 + $0x80] sm:$0xf]
    %v6087 = vld [vmem:[#allocation11 + $0x84] sm:$0xff]
    %v6088 = vld [vmem:[#allocation11 + $0x8c] sm:$0xf]
    %v6089 = vld [vmem:[#allocation11 + $0x90] sm:$0xff]
    %v6090 = vld [vmem:[#allocation11 + $0x98] sm:$0xf]
    %v6091 = vld [vmem:[#allocation11 + $0x9c] sm:$0xff]
    %v6092 = vld [vmem:[#allocation11 + $0xa4] sm:$0xf]
    %v6093 = vld [vmem:[#allocation11 + $0xa8] sm:$0xff]
    %v6094 = vld [vmem:[#allocation11 + $0xb0] sm:$0xf]
    %v6095 = vld [vmem:[#allocation11 + $0xb4] sm:$0xff]
    %v6096 = vld [vmem:[#allocation11 + $0xbc] sm:$0xf]
    %v6097 = vld [vmem:[#allocation11 + $0xc0] sm:$0xff]
    %v6098 = vld [vmem:[#allocation11 + $0xc8] sm:$0xf]
    %v6099 = vld [vmem:[#allocation11 + $0xcc] sm:$0xff]
    %v6100 = vld [vmem:[#allocation11 + $0xd4] sm:$0xf]
    %v6101 = vld [vmem:[#allocation11 + $0xd8] sm:$0xff]
    %v6102 = vld [vmem:[#allocation11 + $0xe0] sm:$0xf]
    %v6103 = vld [vmem:[#allocation11 + $0xe4] sm:$0xff]
    %v6104 = vld [vmem:[#allocation11 + $0xec] sm:$0xf]
    %v6105 = vld [vmem:[#allocation11 + $0xf0] sm:$0xff]
    %v6106 = vld [vmem:[#allocation11 + $0xf8] sm:$0xf]
    %v6107 = vld [vmem:[#allocation11 + $0xfc] sm:$0xff]
    %v6108 = vld [vmem:[#allocation11 + $0x104] sm:$0xf]
    %v6109 = vld [vmem:[#allocation11 + $0x108] sm:$0xff]
    %v6110 = vld [vmem:[#allocation11 + $0x110] sm:$0xf]
    %v6111 = vld [vmem:[#allocation11 + $0x114] sm:$0xff]
    %v6112 = vld [vmem:[#allocation11 + $0x11c] sm:$0xf]
    %v6113 = vld [vmem:[#allocation11 + $0x120] sm:$0xff]
    %v6114 = vld [vmem:[#allocation11 + $0x128] sm:$0xf]
    %v6115 = vld [vmem:[#allocation11 + $0x12c] sm:$0xff]
    %v6116 = vld [vmem:[#allocation11 + $0x134] sm:$0xf]
    %v6117 = vld [vmem:[#allocation11 + $0x138] sm:$0xff]
    %v6118 = vld [vmem:[#allocation11 + $0x140] sm:$0xf]
    %v6119 = vld [vmem:[#allocation11 + $0x144] sm:$0xff]
    %v6120 = vld [vmem:[#allocation11 + $0x14c] sm:$0xf]
    %v6121 = vld [vmem:[#allocation11 + $0x150] sm:$0xff]
    %v6122 = vld [vmem:[#allocation11 + $0x158] sm:$0xf]
    %v6123 = vld [vmem:[#allocation11 + $0x15c] sm:$0xff]
    %v6124 = vld [vmem:[#allocation11 + $0x164] sm:$0xf]
    %v6125 = vld [vmem:[#allocation11 + $0x168] sm:$0xff]
    %v6126 = vld [vmem:[#allocation11 + $0x170] sm:$0xf]
    %v6127 = vld [vmem:[#allocation11 + $0x174] sm:$0xff]
    %v6128 = vld [vmem:[#allocation11 + $0x17c] sm:$0xf]
    %v6129 = vld [vmem:[#allocation11 + $0x180] sm:$0xff]
    %v6130 = vld [vmem:[#allocation11 + $0x188] sm:$0xf]
    %v6131 = vld [vmem:[#allocation11 + $0x18c] sm:$0xff]
    %v6132 = vld [vmem:[#allocation11 + $0x194] sm:$0xf]
    %v6133 = vld [vmem:[#allocation11 + $0x198] sm:$0xff]
    %v6134 = vld [vmem:[#allocation11 + $0x1a0] sm:$0xf]
    %v6135 = vld [vmem:[#allocation11 + $0x1a4] sm:$0xff]
    %v6136 = vld [vmem:[#allocation11 + $0x1ac] sm:$0xf]
    %v6137 = vld [vmem:[#allocation11 + $0x1b0] sm:$0xff]
    %v6138 = vld [vmem:[#allocation11 + $0x1b8] sm:$0xf]
    %v6139 = vld [vmem:[#allocation11 + $0x1bc] sm:$0xff]
    %v6140 = vld [vmem:[#allocation11 + $0x1c4] sm:$0xf]
    %v6141 = vld [vmem:[#allocation11 + $0x1c8] sm:$0xff]
    %v6142 = vld [vmem:[#allocation11 + $0x1d0] sm:$0xf]
    %v6143 = vld [vmem:[#allocation11 + $0x1d4] sm:$0xff]
    %v6144 = vld [vmem:[#allocation11 + $0x1dc] sm:$0xf]
    %v6145 = vld [vmem:[#allocation11 + $0x1e0] sm:$0xff]
    %v6146 = vld [vmem:[#allocation11 + $0x1e8] sm:$0xf]
    %v6147 = vld [vmem:[#allocation11 + $0x1ec] sm:$0xff]
    %v6148 = vld [vmem:[#allocation11 + $0x1f4] sm:$0xf]
    %v6149 = vld [vmem:[#allocation11 + $0x1f8] sm:$0xff]
    %v6150 = vld [vmem:[#allocation11 + $0x200] sm:$0xf]
    %v6151 = vld [vmem:[#allocation11 + $0x204] sm:$0xff]
    %v6152 = vld [vmem:[#allocation11 + $0x20c] sm:$0xf]
    %v6153 = vld [vmem:[#allocation11 + $0x210] sm:$0xff]
    %v6154 = vld [vmem:[#allocation11 + $0x218] sm:$0xf]
    %v6155 = vld [vmem:[#allocation11 + $0x21c] sm:$0xff]
    %v6156 = vld [vmem:[#allocation11 + $0x224] sm:$0xf]
    %v6157 = vld [vmem:[#allocation11 + $0x228] sm:$0xff]
    %v6158 = vld [vmem:[#allocation11 + $0x230] sm:$0xf]
    %v6159 = vld [vmem:[#allocation11 + $0x234] sm:$0xff]
    %v6160 = vld [vmem:[#allocation11 + $0x23c] sm:$0xf]
    %v6162 = vlaneseq
    %v6163 = vshrl.u32 %v6162, 7
    %v6164 = vsub.s32 0, %v6163
    %v6165 = vrot.slane %v189, %v6164
    %v6166 = vlaneseq
    %v6167 = vshrl.u32 %v6166, 7
    %v6168 = vsub.s32 1, %v6167
    %v6169 = vrot.slane %v189, %v6168
    %v6170 = vlaneseq
    %v6171 = vshrl.u32 %v6170, 7
    %v6172 = vsub.s32 2, %v6171
    %v6173 = vrot.slane %v189, %v6172
    %v6273 = vunpack.c.l.b16 %v6065
    %v6274 = vunpack.c.h.b16 %v6065
    %v6275 = vunpack.c.l.b16 %v6066
    %v6276 = vunpack.c.l.b16 %v6067
    %v6277 = vunpack.c.h.b16 %v6067
    %v6278 = vunpack.c.l.b16 %v6068
    %v6279 = vunpack.c.l.b16 %v6069
    %v6280 = vunpack.c.h.b16 %v6069
    %v6281 = vunpack.c.l.b16 %v6070
    %v6282 = vunpack.c.l.b16 %v6071
    %v6283 = vunpack.c.h.b16 %v6071
    %v6284 = vunpack.c.l.b16 %v6072
    %v6285 = vunpack.c.l.b16 %v6073
    %v6286 = vunpack.c.h.b16 %v6073
    %v6287 = vunpack.c.l.b16 %v6074
    %v6288 = vunpack.c.l.b16 %v6075
    %v6289 = vunpack.c.h.b16 %v6075
    %v6290 = vunpack.c.l.b16 %v6076
    %v6291 = vunpack.c.l.b16 %v6077
    %v6292 = vunpack.c.h.b16 %v6077
    %v6293 = vunpack.c.l.b16 %v6078
    %v6294 = vunpack.c.l.b16 %v6079
    %v6295 = vunpack.c.h.b16 %v6079
    %v6296 = vunpack.c.l.b16 %v6080
    %v6297 = vunpack.c.l.b16 %v6081
    %v6298 = vunpack.c.h.b16 %v6081
    %v6299 = vunpack.c.l.b16 %v6082
    %v6300 = vunpack.c.l.b16 %v6083
    %v6301 = vunpack.c.h.b16 %v6083
    %v6302 = vunpack.c.l.b16 %v6084
    %v6303 = vunpack.c.l.b16 %v6085
    %v6304 = vunpack.c.h.b16 %v6085
    %v6305 = vunpack.c.l.b16 %v6086
    %v6306 = vunpack.c.l.b16 %v6087
    %v6307 = vunpack.c.h.b16 %v6087
    %v6308 = vunpack.c.l.b16 %v6088
    %v6309 = vunpack.c.l.b16 %v6089
    %v6310 = vunpack.c.h.b16 %v6089
    %v6311 = vunpack.c.l.b16 %v6090
    %v6312 = vunpack.c.l.b16 %v6091
    %v6313 = vunpack.c.h.b16 %v6091
    %v6314 = vunpack.c.l.b16 %v6092
    %v6315 = vunpack.c.l.b16 %v6093
    %v6316 = vunpack.c.h.b16 %v6093
    %v6317 = vunpack.c.l.b16 %v6094
    %v6318 = vunpack.c.l.b16 %v6095
    %v6319 = vunpack.c.h.b16 %v6095
    %v6320 = vunpack.c.l.b16 %v6096
    %v6321 = vunpack.c.l.b16 %v6097
    %v6322 = vunpack.c.h.b16 %v6097
    %v6323 = vunpack.c.l.b16 %v6098
    %v6324 = vunpack.c.l.b16 %v6099
    %v6325 = vunpack.c.h.b16 %v6099
    %v6326 = vunpack.c.l.b16 %v6100
    %v6327 = vunpack.c.l.b16 %v6101
    %v6328 = vunpack.c.h.b16 %v6101
    %v6329 = vunpack.c.l.b16 %v6102
    %v6330 = vunpack.c.l.b16 %v6103
    %v6331 = vunpack.c.h.b16 %v6103
    %v6332 = vunpack.c.l.b16 %v6104
    %v6333 = vunpack.c.l.b16 %v6105
    %v6334 = vunpack.c.h.b16 %v6105
    %v6335 = vunpack.c.l.b16 %v6106
    %v6336 = vunpack.c.l.b16 %v6107
    %v6337 = vunpack.c.h.b16 %v6107
    %v6338 = vunpack.c.l.b16 %v6108
    %v6339 = vunpack.c.l.b16 %v6109
    %v6340 = vunpack.c.h.b16 %v6109
    %v6341 = vunpack.c.l.b16 %v6110
    %v6342 = vunpack.c.l.b16 %v6111
    %v6343 = vunpack.c.h.b16 %v6111
    %v6344 = vunpack.c.l.b16 %v6112
    %v6345 = vunpack.c.l.b16 %v6113
    %v6346 = vunpack.c.h.b16 %v6113
    %v6347 = vunpack.c.l.b16 %v6114
    %v6348 = vunpack.c.l.b16 %v6115
    %v6349 = vunpack.c.h.b16 %v6115
    %v6350 = vunpack.c.l.b16 %v6116
    %v6351 = vunpack.c.l.b16 %v6117
    %v6352 = vunpack.c.h.b16 %v6117
    %v6353 = vunpack.c.l.b16 %v6118
    %v6354 = vunpack.c.l.b16 %v6119
    %v6355 = vunpack.c.h.b16 %v6119
    %v6356 = vunpack.c.l.b16 %v6120
    %v6357 = vunpack.c.l.b16 %v6121
    %v6358 = vunpack.c.h.b16 %v6121
    %v6359 = vunpack.c.l.b16 %v6122
    %v6360 = vunpack.c.l.b16 %v6123
    %v6361 = vunpack.c.h.b16 %v6123
    %v6362 = vunpack.c.l.b16 %v6124
    %v6363 = vunpack.c.l.b16 %v6125
    %v6364 = vunpack.c.h.b16 %v6125
    %v6365 = vunpack.c.l.b16 %v6126
    %v6366 = vunpack.c.l.b16 %v6127
    %v6367 = vunpack.c.h.b16 %v6127
    %v6368 = vunpack.c.l.b16 %v6128
    %v6369 = vunpack.c.l.b16 %v6129
    %v6370 = vunpack.c.h.b16 %v6129
    %v6371 = vunpack.c.l.b16 %v6130
    %v6372 = vunpack.c.l.b16 %v6131
    %v6373 = vunpack.c.h.b16 %v6131
    %v6374 = vunpack.c.l.b16 %v6132
    %v6375 = vunpack.c.l.b16 %v6133
    %v6376 = vunpack.c.h.b16 %v6133
    %v6377 = vunpack.c.l.b16 %v6134
    %v6378 = vunpack.c.l.b16 %v6135
    %v6379 = vunpack.c.h.b16 %v6135
    %v6380 = vunpack.c.l.b16 %v6136
    %v6381 = vunpack.c.l.b16 %v6137
    %v6382 = vunpack.c.h.b16 %v6137
    %v6383 = vunpack.c.l.b16 %v6138
    %v6384 = vunpack.c.l.b16 %v6139
    %v6385 = vunpack.c.h.b16 %v6139
    %v6386 = vunpack.c.l.b16 %v6140
    %v6387 = vunpack.c.l.b16 %v6141
    %v6388 = vunpack.c.h.b16 %v6141
    %v6389 = vunpack.c.l.b16 %v6142
    %v6390 = vunpack.c.l.b16 %v6143
    %v6391 = vunpack.c.h.b16 %v6143
    %v6392 = vunpack.c.l.b16 %v6144
    %v6393 = vunpack.c.l.b16 %v6145
    %v6394 = vunpack.c.h.b16 %v6145
    %v6395 = vunpack.c.l.b16 %v6146
    %v6396 = vunpack.c.l.b16 %v6147
    %v6397 = vunpack.c.h.b16 %v6147
    %v6398 = vunpack.c.l.b16 %v6148
    %v6399 = vunpack.c.l.b16 %v6149
    %v6400 = vunpack.c.h.b16 %v6149
    %v6401 = vunpack.c.l.b16 %v6150
    %v6402 = vunpack.c.l.b16 %v6151
    %v6403 = vunpack.c.h.b16 %v6151
    %v6404 = vunpack.c.l.b16 %v6152
    %v6405 = vunpack.c.l.b16 %v6153
    %v6406 = vunpack.c.h.b16 %v6153
    %v6407 = vunpack.c.l.b16 %v6154
    %v6408 = vunpack.c.l.b16 %v6155
    %v6409 = vunpack.c.h.b16 %v6155
    %v6410 = vunpack.c.l.b16 %v6156
    %v6411 = vunpack.c.l.b16 %v6157
    %v6412 = vunpack.c.h.b16 %v6157
    %v6413 = vunpack.c.l.b16 %v6158
    %v6414 = vunpack.c.l.b16 %v6159
    %v6415 = vunpack.c.h.b16 %v6159
    %v6416 = vunpack.c.l.b16 %v6160
    %v6417 = vpack.c.b16 %v6276, %v6273
    %v6418 = vpack.c.b16 %v6277, %v6274
    %v6419 = vpack.c.b16 %v6278, %v6275
    %v6420 = vpack.c.b16 %v6282, %v6279
    %v6421 = vpack.c.b16 %v6283, %v6280
    %v6422 = vpack.c.b16 %v6284, %v6281
    %v6423 = vpack.c.b16 %v6288, %v6285
    %v6424 = vpack.c.b16 %v6289, %v6286
    %v6425 = vpack.c.b16 %v6290, %v6287
    %v6426 = vpack.c.b16 %v6294, %v6291
    %v6427 = vpack.c.b16 %v6295, %v6292
    %v6428 = vpack.c.b16 %v6296, %v6293
    %v6429 = vpack.c.b16 %v6300, %v6297
    %v6430 = vpack.c.b16 %v6301, %v6298
    %v6431 = vpack.c.b16 %v6302, %v6299
    %v6432 = vpack.c.b16 %v6306, %v6303
    %v6433 = vpack.c.b16 %v6307, %v6304
    %v6434 = vpack.c.b16 %v6308, %v6305
    %v6435 = vpack.c.b16 %v6312, %v6309
    %v6436 = vpack.c.b16 %v6313, %v6310
    %v6437 = vpack.c.b16 %v6314, %v6311
    %v6438 = vpack.c.b16 %v6318, %v6315
    %v6439 = vpack.c.b16 %v6319, %v6316
    %v6440 = vpack.c.b16 %v6320, %v6317
    %v6441 = vpack.c.b16 %v6324, %v6321
    %v6442 = vpack.c.b16 %v6325, %v6322
    %v6443 = vpack.c.b16 %v6326, %v6323
    %v6444 = vpack.c.b16 %v6330, %v6327
    %v6445 = vpack.c.b16 %v6331, %v6328
    %v6446 = vpack.c.b16 %v6332, %v6329
    %v6447 = vpack.c.b16 %v6336, %v6333
    %v6448 = vpack.c.b16 %v6337, %v6334
    %v6449 = vpack.c.b16 %v6338, %v6335
    %v6450 = vpack.c.b16 %v6342, %v6339
    %v6451 = vpack.c.b16 %v6343, %v6340
    %v6452 = vpack.c.b16 %v6344, %v6341
    %v6453 = vpack.c.b16 %v6348, %v6345
    %v6454 = vpack.c.b16 %v6349, %v6346
    %v6455 = vpack.c.b16 %v6350, %v6347
    %v6456 = vpack.c.b16 %v6354, %v6351
    %v6457 = vpack.c.b16 %v6355, %v6352
    %v6458 = vpack.c.b16 %v6356, %v6353
    %v6459 = vpack.c.b16 %v6360, %v6357
    %v6460 = vpack.c.b16 %v6361, %v6358
    %v6461 = vpack.c.b16 %v6362, %v6359
    %v6462 = vpack.c.b16 %v6366, %v6363
    %v6463 = vpack.c.b16 %v6367, %v6364
    %v6464 = vpack.c.b16 %v6368, %v6365
    %v6465 = vpack.c.b16 %v6372, %v6369
    %v6466 = vpack.c.b16 %v6373, %v6370
    %v6467 = vpack.c.b16 %v6374, %v6371
    %v6468 = vpack.c.b16 %v6378, %v6375
    %v6469 = vpack.c.b16 %v6379, %v6376
    %v6470 = vpack.c.b16 %v6380, %v6377
    %v6471 = vpack.c.b16 %v6384, %v6381
    %v6472 = vpack.c.b16 %v6385, %v6382
    %v6473 = vpack.c.b16 %v6386, %v6383
    %v6474 = vpack.c.b16 %v6390, %v6387
    %v6475 = vpack.c.b16 %v6391, %v6388
    %v6476 = vpack.c.b16 %v6392, %v6389
    %v6477 = vpack.c.b16 %v6396, %v6393
    %v6478 = vpack.c.b16 %v6397, %v6394
    %v6479 = vpack.c.b16 %v6398, %v6395
    %v6480 = vpack.c.b16 %v6402, %v6399
    %v6481 = vpack.c.b16 %v6403, %v6400
    %v6482 = vpack.c.b16 %v6404, %v6401
    %v6483 = vpack.c.b16 %v6408, %v6405
    %v6484 = vpack.c.b16 %v6409, %v6406
    %v6485 = vpack.c.b16 %v6410, %v6407
    %v6486 = vpack.c.b16 %v6414, %v6411
    %v6487 = vpack.c.b16 %v6415, %v6412
    %v6488 = vpack.c.b16 %v6416, %v6413
    %6561 = vmatprep.subr.bf16.mxu0 %v6418
    %6562 = vmatpush1.bf16.msra.mxu0 %v6417
    %6563 = vmatprep.subr.bf16.mxu0 %v6421
    %6564 = vmatpush1.bf16.msra.mxu0 %v6420
    %6565 = vmatprep.subr.bf16.mxu0 %v6424
    %6566 = vmatpush1.bf16.msra.mxu0 %v6423
    %6567 = vmatprep.subr.bf16.mxu0 %v6427
    %6568 = vmatpush1.bf16.msra.mxu0 %v6426
    %6569 = vmatprep.subr.bf16.mxu0 %v6430
    %6570 = vmatpush1.bf16.msra.mxu0 %v6429
    %6571 = vmatprep.subr.bf16.mxu0 %v6433
    %6572 = vmatpush1.bf16.msra.mxu0 %v6432
    %6573 = vmatprep.subr.bf16.mxu0 %v6436
    %6574 = vmatpush1.bf16.msra.mxu0 %v6435
    %6575 = vmatprep.subr.bf16.mxu0 %v6439
    %6576 = vmatpush1.bf16.msra.mxu0 %v6438
    %6577 = vmatprep.subr.bf16.mxu0 %v6442
    %6578 = vmatpush1.bf16.msra.mxu0 %v6441
    %6579 = vmatprep.subr.bf16.mxu0 %v6445
    %6580 = vmatpush1.bf16.msra.mxu0 %v6444
    %6581 = vmatprep.subr.bf16.mxu0 %v6448
    %6582 = vmatpush1.bf16.msra.mxu0 %v6447
    %6583 = vmatprep.subr.bf16.mxu0 %v6451
    %6584 = vmatpush1.bf16.msra.mxu0 %v6450
    %6585 = vmatprep.subr.bf16.mxu0 %v6454
    %6586 = vmatpush1.bf16.msra.mxu0 %v6453
    %6587 = vmatprep.subr.bf16.mxu0 %v6457
    %6588 = vmatpush1.bf16.msra.mxu0 %v6456
    %6589 = vmatprep.subr.bf16.mxu0 %v6460
    %6590 = vmatpush1.bf16.msra.mxu0 %v6459
    %6591 = vmatprep.subr.bf16.mxu0 %v6463
    %6592 = vmatpush1.bf16.msra.mxu0 %v6462
    %6593 = vmatprep.mubr.bf16.mxu0 %v6060
    %6594 = vmatmul.mubr.bf16.gmra.mrb[0].mxu0 %v6059
    %v6595 = vpop.f32.mrb[0].mxu0
    %v6596 = vadd.f32 %v6165, %v6595
    %v6597 = vpop.f32.mrb[0].mxu0
    %v6598 = vadd.f32 %v6169, %v6597
    %v6599 = vpop.f32.mrb[0].mxu0
    %v6600 = vadd.f32 %v6165, %v6599
    %v6601 = vpop.f32.mrb[0].mxu0
    %v6602 = vadd.f32 %v6169, %v6601
    %6603 = vmatprep.mubr.bf16.mxu0 %v6063
    %6604 = vmatmul.mubr.bf16.gmra.mrb[0].mxu0 %v6062
    %v6605 = vpop.f32.mrb[0].mxu0
    %v6606 = vadd.f32 %v6165, %v6605
    %v6607 = vpop.f32.mrb[0].mxu0
    %v6608 = vadd.f32 %v6169, %v6607
    %v6609 = vpop.f32.mrb[0].mxu0
    %v6610 = vadd.f32 %v6165, %v6609
    %v6611 = vpop.f32.mrb[0].mxu0
    %v6612 = vadd.f32 %v6169, %v6611
    %6613 = vdwg.mxu0
    %6614 = vmatprep.subr.bf16.mxu0 %v6466
    %6615 = vmatpush1.bf16.msra.mxu0 %v6465
    %6616 = vmatprep.subr.bf16.mxu0 %v6469
    %6617 = vmatpush1.bf16.msra.mxu0 %v6468
    %6618 = vmatprep.subr.bf16.mxu0 %v6472
    %6619 = vmatpush1.bf16.msra.mxu0 %v6471
    %6620 = vmatprep.subr.bf16.mxu0 %v6475
    %6621 = vmatpush1.bf16.msra.mxu0 %v6474
    %6622 = vmatprep.subr.bf16.mxu0 %v6478
    %6623 = vmatpush1.bf16.msra.mxu0 %v6477
    %6624 = vmatprep.subr.bf16.mxu0 %v6481
    %6625 = vmatpush1.bf16.msra.mxu0 %v6480
    %6626 = vmatprep.subr.bf16.mxu0 %v6484
    %6627 = vmatpush1.bf16.msra.mxu0 %v6483
    %6628 = vmatprep.subr.bf16.mxu0 %v6487
    %6629 = vmatpush1.bf16.msra.mxu0 %v6486
    %6630 = vmatprep.subr.bf16.mxu0 0
    %6631 = vmatpush1.bf16.msra.mxu0 0
    %6632 = vmatprep.subr.bf16.mxu0 0
    %6633 = vmatpush1.bf16.msra.mxu0 0
    %6634 = vmatprep.subr.bf16.mxu0 0
    %6635 = vmatpush1.bf16.msra.mxu0 0
    %6636 = vmatprep.subr.bf16.mxu0 0
    %6637 = vmatpush1.bf16.msra.mxu0 0
    %6638 = vmatprep.subr.bf16.mxu0 0
    %6639 = vmatpush1.bf16.msra.mxu0 0
    %6640 = vmatprep.subr.bf16.mxu0 0
    %6641 = vmatpush1.bf16.msra.mxu0 0
    %6642 = vmatprep.subr.bf16.mxu0 0
    %6643 = vmatpush1.bf16.msra.mxu0 0
    %6644 = vmatprep.subr.bf16.mxu0 0
    %6645 = vmatpush1.bf16.msra.mxu0 0
    %6646 = vmatprep.mubr.bf16.mxu0 0
    %6647 = vmatmul.mubr.bf16.gmra.mrb[0].mxu0 %v6061
    %v6648 = vpop.f32.mrb[0].mxu0
    %v6649 = vadd.f32 %v6596, %v6648
    %v6650 = vpop.f32.mrb[0].mxu0
    %v6651 = vadd.f32 %v6598, %v6650
    %v6652 = vpop.f32.mrb[0].mxu0
    %v6653 = vadd.f32 %v6600, %v6652
    %v6654 = vpop.f32.mrb[0].mxu0
    %v6655 = vadd.f32 %v6602, %v6654
    %6656 = vmatprep.mubr.bf16.mxu0 0
    %6657 = vmatmul.mubr.bf16.gmra.mrb[0].mxu0 %v6064
    %v6658 = vpop.f32.mrb[0].mxu0
    %v6659 = vadd.f32 %v6606, %v6658
    %v6660 = vpop.f32.mrb[0].mxu0
    %v6661 = vadd.f32 %v6608, %v6660
    %v6662 = vpop.f32.mrb[0].mxu0
    %v6663 = vadd.f32 %v6610, %v6662
    %v6664 = vpop.f32.mrb[0].mxu0
    %v6665 = vadd.f32 %v6612, %v6664
    %6666 = vdwg.mxu0
    %6667 = vmatprep.subr.bf16.mxu0 0
    %6668 = vmatpush1.bf16.msra.mxu0 %v6419
    %6669 = vmatprep.subr.bf16.mxu0 0
    %6670 = vmatpush1.bf16.msra.mxu0 %v6422
    %6671 = vmatprep.subr.bf16.mxu0 0
    %6672 = vmatpush1.bf16.msra.mxu0 %v6425
    %6673 = vmatprep.subr.bf16.mxu0 0
    %6674 = vmatpush1.bf16.msra.mxu0 %v6428
    %6675 = vmatprep.subr.bf16.mxu0 0
    %6676 = vmatpush1.bf16.msra.mxu0 %v6431
    %6677 = vmatprep.subr.bf16.mxu0 0
    %6678 = vmatpush1.bf16.msra.mxu0 %v6434
    %6679 = vmatprep.subr.bf16.mxu0 0
    %6680 = vmatpush1.bf16.msra.mxu0 %v6437
    %6681 = vmatprep.subr.bf16.mxu0 0
    %6682 = vmatpush1.bf16.msra.mxu0 %v6440
    %6683 = vmatprep.subr.bf16.mxu0 0
    %6684 = vmatpush1.bf16.msra.mxu0 %v6443
    %6685 = vmatprep.subr.bf16.mxu0 0
    %6686 = vmatpush1.bf16.msra.mxu0 %v6446
    %6687 = vmatprep.subr.bf16.mxu0 0
    %6688 = vmatpush1.bf16.msra.mxu0 %v6449
    %6689 = vmatprep.subr.bf16.mxu0 0
    %6690 = vmatpush1.bf16.msra.mxu0 %v6452
    %6691 = vmatprep.subr.bf16.mxu0 0
    %6692 = vmatpush1.bf16.msra.mxu0 %v6455
    %6693 = vmatprep.subr.bf16.mxu0 0
    %6694 = vmatpush1.bf16.msra.mxu0 %v6458
    %6695 = vmatprep.subr.bf16.mxu0 0
    %6696 = vmatpush1.bf16.msra.mxu0 %v6461
    %6697 = vmatprep.subr.bf16.mxu0 0
    %6698 = vmatpush1.bf16.msra.mxu0 %v6464
    %6699 = vmatprep.mubr.bf16.mxu0 %v6060
    %6700 = vmatmul.mubr.bf16.gmra.mrb[0].mxu0 %v6059
    %v6701 = vpop.f32.mrb[0].mxu0
    %v6702 = vadd.f32 %v6173, %v6701
    %v6703 = vpop.f32.mrb[0].mxu0
    %v6704 = vpop.f32.mrb[0].mxu0
    %v6705 = vadd.f32 %v6173, %v6704
    %v6706 = vpop.f32.mrb[0].mxu0
    %6707 = vmatprep.mubr.bf16.mxu0 %v6063
    %6708 = vmatmul.mubr.bf16.gmra.mrb[0].mxu0 %v6062
    %v6709 = vpop.f32.mrb[0].mxu0
    %v6710 = vadd.f32 %v6173, %v6709
    %v6711 = vpop.f32.mrb[0].mxu0
    %v6712 = vpop.f32.mrb[0].mxu0
    %v6713 = vadd.f32 %v6173, %v6712
    %v6714 = vpop.f32.mrb[0].mxu0
    %6715 = vdwg.mxu0
    %6716 = vmatprep.subr.bf16.mxu0 0
    %6717 = vmatpush1.bf16.msra.mxu0 %v6467
    %6718 = vmatprep.subr.bf16.mxu0 0
    %6719 = vmatpush1.bf16.msra.mxu0 %v6470
    %6720 = vmatprep.subr.bf16.mxu0 0
    %6721 = vmatpush1.bf16.msra.mxu0 %v6473
    %6722 = vmatprep.subr.bf16.mxu0 0
    %6723 = vmatpush1.bf16.msra.mxu0 %v6476
    %6724 = vmatprep.subr.bf16.mxu0 0
    %6725 = vmatpush1.bf16.msra.mxu0 %v6479
    %6726 = vmatprep.subr.bf16.mxu0 0
    %6727 = vmatpush1.bf16.msra.mxu0 %v6482
    %6728 = vmatprep.subr.bf16.mxu0 0
    %6729 = vmatpush1.bf16.msra.mxu0 %v6485
    %6730 = vmatprep.subr.bf16.mxu0 0
    %6731 = vmatpush1.bf16.msra.mxu0 %v6488
    %6732 = vmatprep.subr.bf16.mxu0 0
    %6733 = vmatpush1.bf16.msra.mxu0 0
    %6734 = vmatprep.subr.bf16.mxu0 0
    %6735 = vmatpush1.bf16.msra.mxu0 0
    %6736 = vmatprep.subr.bf16.mxu0 0
    %6737 = vmatpush1.bf16.msra.mxu0 0
    %6738 = vmatprep.subr.bf16.mxu0 0
    %6739 = vmatpush1.bf16.msra.mxu0 0
    %6740 = vmatprep.subr.bf16.mxu0 0
    %6741 = vmatpush1.bf16.msra.mxu0 0
    %6742 = vmatprep.subr.bf16.mxu0 0
    %6743 = vmatpush1.bf16.msra.mxu0 0
    %6744 = vmatprep.subr.bf16.mxu0 0
    %6745 = vmatpush1.bf16.msra.mxu0 0
    %6746 = vmatprep.subr.bf16.mxu0 0
    %6747 = vmatpush1.bf16.msra.mxu0 0
    %6748 = vmatprep.mubr.bf16.mxu0 0
    %6749 = vmatmul.mubr.bf16.gmra.mrb[0].mxu0 %v6061
    %v6750 = vpop.f32.mrb[0].mxu0
    %v6751 = vadd.f32 %v6702, %v6750
    %v6752 = vpop.f32.mrb[0].mxu0
    %v6753 = vpop.f32.mrb[0].mxu0
    %v6754 = vadd.f32 %v6705, %v6753
    %v6755 = vpop.f32.mrb[0].mxu0
    %6756 = vmatprep.mubr.bf16.mxu0 0
    %6757 = vmatmul.mubr.bf16.gmra.mrb[0].mxu0 %v6064
    %v6758 = vpop.f32.mrb[0].mxu0
    %v6759 = vadd.f32 %v6710, %v6758
    %v6760 = vpop.f32.mrb[0].mxu0
    %v6761 = vpop.f32.mrb[0].mxu0
    %v6762 = vadd.f32 %v6713, %v6761
    %v6763 = vpop.f32.mrb[0].mxu0
    %6764 = vdwg.mxu0
    %6765 = vrot.lane.b32.xlu0 %v5271, 127
    %v6766 = vpop.permute.xlu0 %6765
    %6767 = vrot.lane.b32.xlu0 %v5272, 127
    %v6768 = vpop.permute.xlu0 %6767
    %v6771 = vadd.f32 %v5271, %v6766
    %v6772 = vadd.f32 %v5272, %v6768
    %v6773 = vadd.f32 %v3679, %v5931
    %v6774 = vadd.f32 %v3681, %v5933
    %v6775 = vadd.f32 %v3765, %v6033
    %v6776 = vadd.f32 %v3683, %v5941
    %v6777 = vadd.f32 %v3685, %v5943
    %v6778 = vadd.f32 %v3769, %v6041
    %6779 = vset.pattern.permute.xlu0 0
    %6780 = vperm.xlu0 %6779, %v5271
    %v6781 = vpop.permute.xlu0 %6780
    %6783 = vset.pattern.permute.xlu0 0
    %6784 = vperm.xlu0 %6783, %v5272
    %v6785 = vpop.permute.xlu0 %6784
    %v6787 = vmul.f32 %v6773, %v6781
    %v6788 = vmul.f32 %v6774, %v6781
    %v6789 = vmul.f32 %v6775, %v6781
    %v6790 = vmul.f32 %v6776, %v6785
    %v6791 = vmul.f32 %v6777, %v6785
    %v6792 = vmul.f32 %v6778, %v6785
    %v6793 = vadd.f32 %v3679, %v5935
    %v6794 = vadd.f32 %v3681, %v5937
    %v6795 = vadd.f32 %v3765, %v6036
    %v6796 = vadd.f32 %v3683, %v5945
    %v6797 = vadd.f32 %v3685, %v5947
    %v6798 = vadd.f32 %v3769, %v6044
    %6799 = vset.pattern.permute.xlu0 1
    %6800 = vperm.xlu0 %6799, %v5271
    %v6801 = vpop.permute.xlu0 %6800
    %6803 = vset.pattern.permute.xlu0 1
    %6804 = vperm.xlu0 %6803, %v5272
    %v6805 = vpop.permute.xlu0 %6804
    %v6807 = vmul.f32 %v6793, %v6801
    %v6808 = vmul.f32 %v6794, %v6801
    %v6809 = vmul.f32 %v6795, %v6801
    %v6810 = vmul.f32 %v6796, %v6805
    %v6811 = vmul.f32 %v6797, %v6805
    %v6812 = vmul.f32 %v6798, %v6805
    %v6813 = vadd.f32 %v6787, %v6807
    %v6814 = vadd.f32 %v6788, %v6808
    %v6815 = vadd.f32 %v6789, %v6809
    %v6816 = vadd.f32 %v6790, %v6810
    %v6817 = vadd.f32 %v6791, %v6811
    %v6818 = vadd.f32 %v6792, %v6812
    %v6819 = vlaneseq
    %v6820 = vshrl.u32 %v6819, 7
    %v6821 = vsub.s32 4, %v6820
    %v6822 = vrot.slane %v5323, %v6821
    %v6823 = vlaneseq
    %v6824 = vshrl.u32 %v6823, 7
    %v6825 = vsub.s32 4, %v6824
    %v6826 = vrot.slane %v5324, %v6825
    %v6827 = vlaneseq
    %v6828 = vshrl.u32 %v6827, 7
    %v6829 = vsub.s32 4, %v6828
    %v6830 = vrot.slane %v5325, %v6829
    %v6831 = vlaneseq
    %v6832 = vshrl.u32 %v6831, 7
    %v6833 = vsub.s32 4, %v6832
    %v6834 = vrot.slane %v5326, %v6833
    %v6835 = vlaneseq
    %v6836 = vshrl.u32 %v6835, 7
    %v6837 = vsub.s32 4, %v6836
    %v6838 = vrot.slane %v5327, %v6837
    %v6839 = vlaneseq
    %v6840 = vshrl.u32 %v6839, 7
    %v6841 = vsub.s32 4, %v6840
    %v6842 = vrot.slane %v5328, %v6841
    %v6843 = vmul.f32 %v6813, %v6822
    %v6844 = vmul.f32 %v6814, %v6826
    %v6845 = vmul.f32 %v6815, %v6830
    %v6846 = vmul.f32 %v6816, %v6834
    %v6847 = vmul.f32 %v6817, %v6838
    %v6848 = vmul.f32 %v6818, %v6842
    %v6849 = vadd.f32 %v6843, %v6844
    %v6850 = vadd.f32 %v6849, %v6845
    %6851 = vadd.xlane.f32.xlu0 %v6850
    %v6852 = vpop.xlane.xlu0 %6851
    %v6853 = vadd.f32 %v6846, %v6847
    %v6854 = vadd.f32 %v6853, %v6848
    %6855 = vadd.xlane.f32.xlu0 %v6854
    %v6856 = vpop.xlane.xlu0 %6855
    %v6857 = vmul.f32 %v6852, 0.057735026
    %v6858 = vmul.f32 %v6856, 0.057735026
    %vm6859 = vcmp.eq.f32.partialorder %v6771, 0.0
    %vm6860 = vcmp.eq.f32.partialorder %v6772, 0.0
    %v6861 = vsel %vm6859, -1e+09, %v6857
    %v6862 = vsel %vm6860, -1e+09, %v6858
    %vm6863 = vcmask 7168
    %v6864 = vsel %vm6863, %v6861, -inf
    %v6865 = vrot.slane %v6864, 4
    %v6866 = vmax.f32 %v6864, %v6865
    %v6867 = vrot.slane %v6866, 2
    %v6868 = vmax.f32 %v6866, %v6867
    %v6869 = vrot.slane %v6868, 1
    %v6870 = vmax.f32 %v6868, %v6869
    %v6871 = vsel %vm6863, %v6862, -inf
    %v6872 = vrot.slane %v6871, 4
    %v6873 = vmax.f32 %v6871, %v6872
    %v6874 = vrot.slane %v6873, 2
    %v6875 = vmax.f32 %v6873, %v6874
    %v6876 = vrot.slane %v6875, 1
    %v6877 = vmax.f32 %v6875, %v6876
    %v6878 = vsub.f32 %v6861, %v6870
    %v6879 = vsub.f32 %v6862, %v6877
    %v6880 = vmul.f32 %v6878, 1.442695
    %v6881 = vpow.pop %v6880
    %v6882 = vmul.f32 %v6879, 1.442695
    %v6883 = vpow.pop %v6882
    %v6884 = vsel %vm6863, %v6881, 0.0
    %v6885 = vrot.slane %v6884, 4
    %v6886 = vadd.f32 %v6884, %v6885
    %v6887 = vrot.slane %v6886, 2
    %v6888 = vadd.f32 %v6886, %v6887
    %v6889 = vrot.slane %v6888, 1
    %v6890 = vadd.f32 %v6888, %v6889
    %v6891 = vsel %vm6863, %v6883, 0.0
    %v6892 = vrot.slane %v6891, 4
    %v6893 = vadd.f32 %v6891, %v6892
    %v6894 = vrot.slane %v6893, 2
    %v6895 = vadd.f32 %v6893, %v6894
    %v6896 = vrot.slane %v6895, 1
    %v6897 = vadd.f32 %v6895, %v6896
    %v6898 = vrcp.pop %v6890
    %v6899 = vmul.f32 %v6881, %v6898
    %v6900 = vrcp.pop %v6897
    %v6901 = vmul.f32 %v6883, %v6900
    %v6902 = vmul.f32 %v6899, %v5271
    %v6903 = vmul.f32 %v6901, %v5272
    %v6904 = vmul.f32 %v6899, %v6766
    %v6905 = vmul.f32 %v6901, %v6768
    %v6906 = vadd.f32 %v6902, %v6904
    %v6907 = vadd.f32 %v6903, %v6905
    %6909 = vset.pattern.permute.xlu0 0
    %6910 = vperm.xlu0 %6909, %v6906
    %v6911 = vpop.permute.xlu0 %6910
    %6914 = vset.pattern.permute.xlu0 0
    %6915 = vperm.xlu0 %6914, %v6907
    %v6916 = vpop.permute.xlu0 %6915
    %v6918 = vmul.f32 %v6911, %v6822
    %v6919 = vmul.f32 %v6911, %v6826
    %v6920 = vmul.f32 %v6911, %v6830
    %v6921 = vmul.f32 %v6916, %v6834
    %v6922 = vmul.f32 %v6916, %v6838
    %v6923 = vmul.f32 %v6916, %v6842
    %v6924 = vadd.f32 %v3767, %v5931
    %v6925 = vadd.f32 %v3851, %v5933
    %v6926 = vadd.f32 %v3853, %v6033
    %v6927 = vadd.f32 %v3771, %v5941
    %v6928 = vadd.f32 %v3855, %v5943
    %v6929 = vadd.f32 %v3857, %v6041
    %6931 = vset.pattern.permute.xlu0 0
    %6932 = vperm.xlu0 %6931, %v6902
    %v6933 = vpop.permute.xlu0 %6932
    %6936 = vset.pattern.permute.xlu0 0
    %6937 = vperm.xlu0 %6936, %v6903
    %v6938 = vpop.permute.xlu0 %6937
    %v6940 = vmul.f32 %v6933, %v6924
    %v6941 = vmul.f32 %v6933, %v6925
    %v6942 = vmul.f32 %v6933, %v6926
    %v6943 = vmul.f32 %v6938, %v6927
    %v6944 = vmul.f32 %v6938, %v6928
    %v6945 = vmul.f32 %v6938, %v6929
    %v6946 = vadd.f32 %v6918, %v6940
    %v6947 = vadd.f32 %v6919, %v6941
    %v6948 = vadd.f32 %v6920, %v6942
    %v6949 = vadd.f32 %v6921, %v6943
    %v6950 = vadd.f32 %v6922, %v6944
    %v6951 = vadd.f32 %v6923, %v6945
    %v6952 = vadd.f32 %v3767, %v5935
    %v6953 = vadd.f32 %v3851, %v5937
    %v6954 = vadd.f32 %v3853, %v6036
    %v6955 = vadd.f32 %v3771, %v5945
    %v6956 = vadd.f32 %v3855, %v5947
    %v6957 = vadd.f32 %v3857, %v6044
    %6959 = vset.pattern.permute.xlu0 0
    %6960 = vperm.xlu0 %6959, %v6904
    %v6961 = vpop.permute.xlu0 %6960
    %6964 = vset.pattern.permute.xlu0 0
    %6965 = vperm.xlu0 %6964, %v6905
    %v6966 = vpop.permute.xlu0 %6965
    %v6968 = vmul.f32 %v6961, %v6952
    %v6969 = vmul.f32 %v6961, %v6953
    %v6970 = vmul.f32 %v6961, %v6954
    %v6971 = vmul.f32 %v6966, %v6955
    %v6972 = vmul.f32 %v6966, %v6956
    %v6973 = vmul.f32 %v6966, %v6957
    %v6974 = vadd.f32 %v6946, %v6968
    %v6975 = vadd.f32 %v6947, %v6969
    %v6976 = vadd.f32 %v6948, %v6970
    %v6977 = vadd.f32 %v6949, %v6971
    %v6978 = vadd.f32 %v6950, %v6972
    %v6979 = vadd.f32 %v6951, %v6973
    %v6980 = vadd.f32 %v3937, %v6649
    %v6981 = vadd.f32 %v3939, %v6651
    %v6982 = vadd.f32 %v4023, %v6751
    %v6983 = vadd.f32 %v3941, %v6659
    %v6984 = vadd.f32 %v3943, %v6661
    %v6985 = vadd.f32 %v4027, %v6759
    %v6986 = vmul.f32 %v6980, %v6781
    %v6987 = vmul.f32 %v6981, %v6781
    %v6988 = vmul.f32 %v6982, %v6781
    %v6989 = vmul.f32 %v6983, %v6785
    %v6990 = vmul.f32 %v6984, %v6785
    %v6991 = vmul.f32 %v6985, %v6785
    %v6992 = vadd.f32 %v3937, %v6653
    %v6993 = vadd.f32 %v3939, %v6655
    %v6994 = vadd.f32 %v4023, %v6754
    %v6995 = vadd.f32 %v3941, %v6663
    %v6996 = vadd.f32 %v3943, %v6665
    %v6997 = vadd.f32 %v4027, %v6762
    %v6998 = vmul.f32 %v6992, %v6801
    %v6999 = vmul.f32 %v6993, %v6801
    %v7000 = vmul.f32 %v6994, %v6801
    %v7001 = vmul.f32 %v6995, %v6805
    %v7002 = vmul.f32 %v6996, %v6805
    %v7003 = vmul.f32 %v6997, %v6805
    %v7004 = vadd.f32 %v6986, %v6998
    %v7005 = vadd.f32 %v6987, %v6999
    %v7006 = vadd.f32 %v6988, %v7000
    %v7007 = vadd.f32 %v6989, %v7001
    %v7008 = vadd.f32 %v6990, %v7002
    %v7009 = vadd.f32 %v6991, %v7003
    %v7010 = vlaneseq
    %v7011 = vshrl.u32 %v7010, 7
    %v7012 = vsub.s32 4, %v7011
    %v7013 = vrot.slane %v5179, %v7012
    %v7014 = vlaneseq
    %v7015 = vshrl.u32 %v7014, 7
    %v7016 = vsub.s32 4, %v7015
    %v7017 = vrot.slane %v5263, %v7016
    %v7018 = vlaneseq
    %v7019 = vshrl.u32 %v7018, 7
    %v7020 = vsub.s32 4, %v7019
    %v7021 = vrot.slane %v5265, %v7020
    %v7022 = vlaneseq
    %v7023 = vshrl.u32 %v7022, 7
    %v7024 = vsub.s32 4, %v7023
    %v7025 = vrot.slane %v5183, %v7024
    %v7026 = vlaneseq
    %v7027 = vshrl.u32 %v7026, 7
    %v7028 = vsub.s32 4, %v7027
    %v7029 = vrot.slane %v5267, %v7028
    %v7030 = vlaneseq
    %v7031 = vshrl.u32 %v7030, 7
    %v7032 = vsub.s32 4, %v7031
    %v7033 = vrot.slane %v5269, %v7032
    %v7034 = vmul.f32 %v7004, %v7013
    %v7035 = vmul.f32 %v7005, %v7017
    %v7036 = vmul.f32 %v7006, %v7021
    %v7037 = vmul.f32 %v7007, %v7025
    %v7038 = vmul.f32 %v7008, %v7029
    %v7039 = vmul.f32 %v7009, %v7033
    %v7040 = vadd.f32 %v7034, %v7035
    %v7041 = vadd.f32 %v7040, %v7036
    %7042 = vadd.xlane.f32.xlu0 %v7041
    %v7043 = vpop.xlane.xlu0 %7042
    %v7044 = vadd.f32 %v7037, %v7038
    %v7045 = vadd.f32 %v7044, %v7039
    %7046 = vadd.xlane.f32.xlu0 %v7045
    %v7047 = vpop.xlane.xlu0 %7046
    %v7048 = vmul.f32 %v7043, 0.057735026
    %v7049 = vmul.f32 %v7047, 0.057735026
    %v7050 = vsel %vm6859, -1e+09, %v7048
    %v7051 = vsel %vm6860, -1e+09, %v7049
    %v7052 = vsel %vm6863, %v7050, -inf
    %v7053 = vrot.slane %v7052, 4
    %v7054 = vmax.f32 %v7052, %v7053
    %v7055 = vrot.slane %v7054, 2
    %v7056 = vmax.f32 %v7054, %v7055
    %v7057 = vrot.slane %v7056, 1
    %v7058 = vmax.f32 %v7056, %v7057
    %v7059 = vsel %vm6863, %v7051, -inf
    %v7060 = vrot.slane %v7059, 4
    %v7061 = vmax.f32 %v7059, %v7060
    %v7062 = vrot.slane %v7061, 2
    %v7063 = vmax.f32 %v7061, %v7062
    %v7064 = vrot.slane %v7063, 1
    %v7065 = vmax.f32 %v7063, %v7064
    %v7066 = vsub.f32 %v7050, %v7058
    %v7067 = vsub.f32 %v7051, %v7065
    %v7068 = vmul.f32 %v7066, 1.442695
    %v7069 = vpow.pop %v7068
    %v7070 = vmul.f32 %v7067, 1.442695
    %v7071 = vpow.pop %v7070
    %v7072 = vsel %vm6863, %v7069, 0.0
    %v7073 = vrot.slane %v7072, 4
    %v7074 = vadd.f32 %v7072, %v7073
    %v7075 = vrot.slane %v7074, 2
    %v7076 = vadd.f32 %v7074, %v7075
    %v7077 = vrot.slane %v7076, 1
    %v7078 = vadd.f32 %v7076, %v7077
    %v7079 = vsel %vm6863, %v7071, 0.0
    %v7080 = vrot.slane %v7079, 4
    %v7081 = vadd.f32 %v7079, %v7080
    %v7082 = vrot.slane %v7081, 2
    %v7083 = vadd.f32 %v7081, %v7082
    %v7084 = vrot.slane %v7083, 1
    %v7085 = vadd.f32 %v7083, %v7084
    %v7086 = vrcp.pop %v7078
    %v7087 = vmul.f32 %v7069, %v7086
    %v7088 = vrcp.pop %v7085
    %v7089 = vmul.f32 %v7071, %v7088
    %v7090 = vmul.f32 %v7087, %v5271
    %v7091 = vmul.f32 %v7089, %v5272
    %v7092 = vmul.f32 %v7087, %v6766
    %v7093 = vmul.f32 %v7089, %v6768
    %v7094 = vadd.f32 %v7090, %v7092
    %v7095 = vadd.f32 %v7091, %v7093
    %7097 = vset.pattern.permute.xlu0 0
    %7098 = vperm.xlu0 %7097, %v7094
    %v7099 = vpop.permute.xlu0 %7098
    %7102 = vset.pattern.permute.xlu0 0
    %7103 = vperm.xlu0 %7102, %v7095
    %v7104 = vpop.permute.xlu0 %7103
    %v7106 = vmul.f32 %v7099, %v7013
    %v7107 = vmul.f32 %v7099, %v7017
    %v7108 = vmul.f32 %v7099, %v7021
    %v7109 = vmul.f32 %v7104, %v7025
    %v7110 = vmul.f32 %v7104, %v7029
    %v7111 = vmul.f32 %v7104, %v7033
    %v7112 = vadd.f32 %v4025, %v6649
    %v7113 = vadd.f32 %v4109, %v6651
    %v7114 = vadd.f32 %v4111, %v6751
    %v7115 = vadd.f32 %v4029, %v6659
    %v7116 = vadd.f32 %v4113, %v6661
    %v7117 = vadd.f32 %v4115, %v6759
    %7119 = vset.pattern.permute.xlu0 0
    %7120 = vperm.xlu0 %7119, %v7090
    %v7121 = vpop.permute.xlu0 %7120
    %7124 = vset.pattern.permute.xlu0 0
    %7125 = vperm.xlu0 %7124, %v7091
    %v7126 = vpop.permute.xlu0 %7125
    %v7128 = vmul.f32 %v7121, %v7112
    %v7129 = vmul.f32 %v7121, %v7113
    %v7130 = vmul.f32 %v7121, %v7114
    %v7131 = vmul.f32 %v7126, %v7115
    %v7132 = vmul.f32 %v7126, %v7116
    %v7133 = vmul.f32 %v7126, %v7117
    %v7134 = vadd.f32 %v7106, %v7128
    %v7135 = vadd.f32 %v7107, %v7129
    %v7136 = vadd.f32 %v7108, %v7130
    %v7137 = vadd.f32 %v7109, %v7131
    %v7138 = vadd.f32 %v7110, %v7132
    %v7139 = vadd.f32 %v7111, %v7133
    %v7140 = vadd.f32 %v4025, %v6653
    %v7141 = vadd.f32 %v4109, %v6655
    %v7142 = vadd.f32 %v4111, %v6754
    %v7143 = vadd.f32 %v4029, %v6663
    %v7144 = vadd.f32 %v4113, %v6665
    %v7145 = vadd.f32 %v4115, %v6762
    %7147 = vset.pattern.permute.xlu0 0
    %7148 = vperm.xlu0 %7147, %v7092
    %v7149 = vpop.permute.xlu0 %7148
    %7152 = vset.pattern.permute.xlu0 0
    %7153 = vperm.xlu0 %7152, %v7093
    %v7154 = vpop.permute.xlu0 %7153
    %v7156 = vmul.f32 %v7149, %v7140
    %v7157 = vmul.f32 %v7149, %v7141
    %v7158 = vmul.f32 %v7149, %v7142
    %v7159 = vmul.f32 %v7154, %v7143
    %v7160 = vmul.f32 %v7154, %v7144
    %v7161 = vmul.f32 %v7154, %v7145
    %v7162 = vadd.f32 %v7134, %v7156
    %v7163 = vadd.f32 %v7135, %v7157
    %v7164 = vadd.f32 %v7136, %v7158
    %v7165 = vadd.f32 %v7137, %v7159
    %v7166 = vadd.f32 %v7138, %v7160
    %v7167 = vadd.f32 %v7139, %v7161
    %v7168 = vadd.f32 %v1721, %v170
    %v7169 = vadd.f32 %v1723, %v171
    %v7170 = vadd.f32 %v1798, %v172
    %v7171 = vadd.f32 %v1727, %v173
    %v7172 = vadd.f32 %v1729, %v174
    %v7173 = vadd.f32 %v1803, %v175
    %v7174 = vadd.f32 %v7168, %v6974
    %v7175 = vadd.f32 %v7169, %v6975
    %v7176 = vadd.f32 %v7170, %v6976
    %v7177 = vadd.f32 %v7171, %v6977
    %v7178 = vadd.f32 %v7172, %v6978
    %v7179 = vadd.f32 %v7173, %v6979
    %v7180 = vadd.f32 %v7174, %v7162
    %v7181 = vadd.f32 %v7175, %v7163
    %v7182 = vadd.f32 %v7176, %v7164
    %v7183 = vadd.f32 %v7177, %v7165
    %v7184 = vadd.f32 %v7178, %v7166
    %v7185 = vadd.f32 %v7179, %v7167
    %v7186 = vmax.f32 %v7180, 0.0
    %v7187 = vmax.f32 %v7181, 0.0
    %v7188 = vmax.f32 %v7182, 0.0
    %v7189 = vmax.f32 %v7183, 0.0
    %v7190 = vmax.f32 %v7184, 0.0
    %v7191 = vmax.f32 %v7185, 0.0
    %7192 = vst [vmem:[#allocation17] sm:$0xff] %v7186
    %7193 = vst [vmem:[#allocation17 + $0x8] sm:$0xff] %v7187
    %7194 = vst [vmem:[#allocation17 + $0x10] sm:$0xff] %v7188
    %7195 = vst [vmem:[#allocation17 + $0x18] sm:$0xff] %v7189
    %7196 = vst [vmem:[#allocation17 + $0x20] sm:$0xff] %v7190
    %7197 = vst [vmem:[#allocation17 + $0x28] sm:$0xff] %v7191
    %7200 = vrot.lane.b32.xlu0 %v7087, 1
    %v7201 = vpop.permute.xlu0 %7200
    %7202 = vrot.lane.b32.xlu0 %v7089, 1
    %v7203 = vpop.permute.xlu0 %7202
    %v7206 = vsel %vm6863, %v6899, %v7201
    %v7207 = vsel %vm6863, %v6901, %v7203
    %vm7208 = vcmask 15360
    %7209 = vst.msk [vmem:[%s16] sm:$0xff] %vm7208, %v7206
    %7210 = vst.msk [vmem:[%s16 + $0x8] sm:$0xff] %vm7208, %v7207
    // Predicated region
    $region98: #{interaction_forward.1} parent=1 // pred_check
      _
    $region99: #{interaction_forward.1} parent=1 // pred_check_branch
      %7212 = sbr.rel (0) target = $region101
    $region100: #{interaction_forward.1} parent=1 // pred_region
      %s7214 = ssub.s32 768, 768
      %7215 = vsyncadd [#allocation4], %s7214
      %s7216 = sshll.u32 [#allocation17], 4
      %s7217 = int_to_ptr.vmem [resolvable:$true] %s7216
      %7222 = dma.vmem_to_hbm [thread:$0]  %s7217, 768, %s15, [#allocation4], 384, 384, 24
    $region101: #{interaction_forward.1} parent=1 // pred_fallthru
      _
    // Predicated region
    $region102: #{interaction_forward.1} parent=1 // pred_check
      _
    $region103: #{interaction_forward.1} parent=1 // pred_check_branch
      %7224 = sbr.rel (0) target = $region105
    $region104: #{interaction_forward.1} parent=1 // pred_region
      _
    $region105: #{interaction_forward.1} parent=1 // pred_fallthru
      _
    // Predicated region
    $region106: #{interaction_forward.1} parent=1 // pred_check
      _
    $region107: #{interaction_forward.1} parent=1 // pred_check_branch
      %7226 = sbr.rel (0) target = $region109
    $region108: #{interaction_forward.1} parent=1 // pred_region
      %7227 = dma.done [#allocation4], 768
    $region109: #{interaction_forward.1} parent=1 // pred_fallthru
      _
    // Predicated region
    $region110: #{interaction_forward.1} parent=1 // pred_check
      _
    $region111: #{interaction_forward.1} parent=1 // pred_check_branch
      %7229 = sbr.rel (0) target = $region113
    $region112: #{interaction_forward.1} parent=1 // pred_region
      _
    $region113: #{interaction_forward.1} parent=1 // pred_fallthru
      _
    %7230 = vsyncpa [#allocation3], 1
    %7231 = vsyncpa [#allocation6], 1
    %7232 = vsyncpa [#allocation9], 1
    %7233 = vsyncpa [#allocation12], 1
    %7234 = vsyncpa [#allocation15], 1
    %7235 = vsyncpa [#allocation4], 1

</llo_original>
